<compile_context>
chip_gen: v5e
topology: v5e:2x2
jax: 0.10.0
libtpu: 0.0.40
codegen_flags: <defaults>
</compile_context>

<pallas_src>
import functools
import numpy as np
import jax
import jax.numpy as jnp
from jax import lax
from jax.experimental import pallas as pl
from jax.experimental.pallas import tpu as pltpu


# ----------------------------------------------------------------------------
# Fused conv3x3(pad=1) + bias + ReLU + maxpool2x2 kernel
# ----------------------------------------------------------------------------
def conv_pool_kernel(x_ref, k_ref, b_ref, ee_ref, eo_ref, o_ref, *, W, TH, Cout):
    THW = TH * W
    # One MXU dot per tile: taps/channels are pre-packed into the lane dim and
    # border zeros are baked into the packed input (no masking here).
    acc = jnp.dot(x_ref[0], k_ref[...], preferred_element_type=jnp.float32)
    y = jnp.maximum(acc + b_ref[...], 0.0)                       # (THW, Cout)

    # Vertical 2:1 pair max over contiguous, sublane-aligned row groups.
    y3 = y.reshape(TH // 2, 2 * W, Cout)
    vmax = jnp.maximum(y3[:, :W, :], y3[:, W:, :]).reshape(THW // 2, Cout)

    # Horizontal 2:1 pair max via constant even/odd row-selection matmuls
    # (global even/odd structure: pooled row p reads vmax rows 2p and 2p+1).
    pooled = jnp.maximum(
        jnp.dot(ee_ref[...], vmax, preferred_element_type=jnp.float32),
        jnp.dot(eo_ref[...], vmax, preferred_element_type=jnp.float32))
    o_ref[0] = pooled


def pool_selectors(TH, W):
    """0/1 selection matrices: pooled row p <- vmax rows 2p (even) / 2p+1 (odd)."""
    P = (TH // 2) * (W // 2)
    Q = (TH // 2) * W
    cols = jnp.arange(Q)[None, :]
    rows = jnp.arange(P)[:, None]
    e_even = (cols == 2 * rows).astype(jnp.float32)
    e_odd = (cols == 2 * rows + 1).astype(jnp.float32)
    return e_even, e_odd


def conv_relu_pool(x_pack, kmat, bias, *, H, W, Cin, Cout, TH):
    B, L, KP = x_pack.shape
    assert L == H * W and KP == 9 * Cin
    assert H % TH == 0 and TH % 2 == 0 and W % 2 == 0 and (TH * W) % 8 == 0
    THW = TH * W
    out_rows = (H // 2) * (W // 2)
    blk_rows = (TH // 2) * (W // 2)
    e_even, e_odd = pool_selectors(TH, W)

    kernel = functools.partial(conv_pool_kernel, W=W, TH=TH, Cout=Cout)
    flops = (2 * B * H * W * (9 * Cin) * Cout                       # conv
             + B * (H // TH) * 2 * 2 * blk_rows * (THW // 2) * Cout)  # pool selects
    bytes_accessed = 4 * (x_pack.size + kmat.size + bias.size
                          + e_even.size + e_odd.size + B * out_rows * Cout)

    return pl.pallas_call(
        kernel,
        out_shape=jax.ShapeDtypeStruct((B, out_rows, Cout), jnp.float32),
        grid_spec=pltpu.PrefetchScalarGridSpec(
            num_scalar_prefetch=0,
            grid=(B, H // TH),
            in_specs=[
                pl.BlockSpec((1, THW, 9 * Cin), lambda b, t: (b, t, 0)),
                pl.BlockSpec((9 * Cin, Cout), lambda b, t: (0, 0)),
                pl.BlockSpec((1, Cout), lambda b, t: (0, 0)),
                pl.BlockSpec((blk_rows, THW // 2), lambda b, t: (0, 0)),
                pl.BlockSpec((blk_rows, THW // 2), lambda b, t: (0, 0)),
            ],
            out_specs=pl.BlockSpec((1, blk_rows, Cout), lambda b, t: (b, t, 0)),
        ),
        compiler_params=pltpu.CompilerParams(
            dimension_semantics=("parallel", "arbitrary")),
        cost_estimate=pl.CostEstimate(flops=int(flops), transcendentals=0,
                                      bytes_accessed=int(bytes_accessed)),
    )(x_pack, kmat, bias, e_even, e_odd)


# ----------------------------------------------------------------------------
# fc1 (+bias, ReLU) + fc2 partial-logit kernel
#   grid = (n_splits, K//tk): parallel split of fc1 output columns (both v7x
#   TensorCores stream half of the bf16 w1 each), K-reduction tiled last.
# ----------------------------------------------------------------------------
def fc_kernel(x_ref, w1_ref, b1_ref, w2_ref, o_ref, acc_ref):
    k = pl.program_id(1)

    @pl.when(k == 0)
    def _init():
        acc_ref[...] = jnp.zeros_like(acc_ref)

    # bf16 x bf16 matmul with f32 accumulation (w1 is stored in bf16).
    acc_ref[...] += jnp.dot(x_ref[...].astype(jnp.bfloat16), w1_ref[...],
                            preferred_element_type=jnp.float32)

    @pl.when(k == pl.num_programs(1) - 1)
    def _finish():
        h = jnp.maximum(acc_ref[...] + b1_ref[...], 0.0)       # f32 epilogue
        o_ref[0] = jnp.dot(h, w2_ref[...], preferred_element_type=jnp.float32)


def fc_head(x, w1, b1, w2, *, tk=2048, n_splits=2):
    """Returns per-split partial logits (n_splits, B, nc); caller sums them,
    adds the fc2 bias and applies softmax (20 floats of work)."""
    B, K = x.shape
    Kin, Kh = w1.shape
    Kh2, nc = w2.shape
    assert Kin == K and Kh2 == Kh
    assert K % tk == 0 and Kh % n_splits == 0
    kh_blk = Kh // n_splits
    assert kh_blk % 128 == 0

    flops = 2 * B * K * Kh + 2 * B * Kh * nc
    bytes_accessed = (w1.size * 2                                   # bf16 stream
                      + 4 * (x.size * n_splits + b1.size + w2.size
                             + n_splits * B * nc))

    return pl.pallas_call(
        fc_kernel,
        out_shape=jax.ShapeDtypeStruct((n_splits, B, nc), jnp.float32),
        grid_spec=pltpu.PrefetchScalarGridSpec(
            num_scalar_prefetch=0,
            grid=(n_splits, K // tk),
            in_specs=[
                pl.BlockSpec((B, tk), lambda n, k: (0, k)),
                pl.BlockSpec((tk, kh_blk), lambda n, k: (k, n)),
                pl.BlockSpec((1, kh_blk), lambda n, k: (0, n)),
                pl.BlockSpec((kh_blk, nc), lambda n, k: (n, 0)),
            ],
            out_specs=pl.BlockSpec((1, B, nc), lambda n, k: (n, 0, 0)),
            scratch_shapes=[pltpu.VMEM((B, kh_blk), jnp.float32)],
        ),
        compiler_params=pltpu.CompilerParams(
            dimension_semantics=("parallel", "arbitrary")),
        cost_estimate=pl.CostEstimate(flops=int(flops), transcendentals=0,
                                      bytes_accessed=int(bytes_accessed)),
    )(x, w1, b1, w2)


# ----------------------------------------------------------------------------
# Glue: layout packing and parameter setup (plain JAX)
# ----------------------------------------------------------------------------
def pack_conv_input(x_nhwc):
    """(B,H,W,C) -> (B,H*W,9*C): all 9 zero-padded 3x3 taps gathered into lanes.
    Border zeroing is baked in here, so the kernel does no masking."""
    B, H, W, C = x_nhwc.shape
    xp = jnp.pad(x_nhwc, ((0, 0), (1, 1), (1, 1), (0, 0)))
    taps = [xp[:, dy:dy + H, dx:dx + W, :] for dy in range(3) for dx in range(3)]
    return jnp.concatenate(taps, axis=3).reshape(B, H * W, 9 * C)


def init_params(key, in_ch, num_classes):
    ks = jax.random.split(key, 8)
    return {
        "conv1_w": 0.2 * jax.random.normal(ks[0], (16, in_ch, 3, 3), jnp.float32),
        "conv1_b": 0.1 * jax.random.normal(ks[1], (16,), jnp.float32),
        "conv2_w": 0.08 * jax.random.normal(ks[2], (32, 16, 3, 3), jnp.float32),
        "conv2_b": 0.1 * jax.random.normal(ks[3], (32,), jnp.float32),
        "fc1_w": 0.02 * jax.random.normal(ks[4], (512, 32 * 16 * 16), jnp.float32),
        "fc1_b": 0.05 * jax.random.normal(ks[5], (512,), jnp.float32),
        "fc2_w": 0.06 * jax.random.normal(ks[6], (num_classes, 512), jnp.float32),
        "fc2_b": 0.05 * jax.random.normal(ks[7], (num_classes,), jnp.float32),
    }


def to_kernel_params(p, num_classes):
    def conv_k(w):  # (Co,Ci,3,3) -> (9*Ci, Co), row index (dy*3+dx)*Ci + ci
        Co, Ci = w.shape[0], w.shape[1]
        return jnp.transpose(w, (2, 3, 1, 0)).reshape(9 * Ci, Co)
    k1 = conv_k(p["conv1_w"]); b1 = p["conv1_b"].reshape(1, 16)
    k2 = conv_k(p["conv2_w"]); b2 = p["conv2_b"].reshape(1, 32)
    # fc1: PyTorch consumes NCHW-flattened features (c*256 + h*16 + w);
    # the kernel consumes HWC-flattened features ((h*16 + w)*32 + c).
    # Stored as bf16 to halve the dominant HBM stream (f32 accumulation in-kernel).
    w1 = jnp.transpose(p["fc1_w"].reshape(512, 32, 16, 16),
                       (2, 3, 1, 0)).reshape(32 * 16 * 16, 512).astype(jnp.bfloat16)
    b1f = p["fc1_b"].reshape(1, 512)
    w2 = jnp.transpose(p["fc2_w"])                      # (512, nc), kept f32
    b2f = p["fc2_b"].reshape(1, num_classes)
    return k1, b1, k2, b2, w1, b1f, w2, b2f


def cnn_forward(x_nchw, params, num_classes):
    B, C, H, W = x_nchw.shape
    assert (H, W) == (64, 64), "fc1 expects 32*16*16 features => 64x64 input"
    k1, b1, k2, b2, w1, b1f, w2, b2f = to_kernel_params(params, num_classes)
    x = jnp.transpose(x_nchw, (0, 2, 3, 1)).astype(jnp.float32)    # NHWC
    p1 = conv_relu_pool(pack_conv_input(x), k1, b1,
                        H=64, W=64, Cin=C, Cout=16, TH=8)          # (B, 1024, 16)
    x2 = p1.reshape(B, 32, 32, 16)
    p2 = conv_relu_pool(pack_conv_input(x2), k2, b2,
                        H=32, W=32, Cin=16, Cout=32, TH=8)         # (B, 256, 32)
    feat = p2.reshape(B, 32 * 16 * 16)                             # HWC flat
    partial = fc_head(feat, w1, b1f, w2, tk=2048, n_splits=2)      # (2, B, nc)
    z = jnp.sum(partial, axis=0) + b2f                             # combine splits
    return jax.nn.softmax(z, axis=-1)


# ----------------------------------------------------------------------------
# Pure-JAX reference of the PyTorch forward (NCHW), for validation
# ----------------------------------------------------------------------------
def reference_forward(x_nchw, p):
    dn = ("NCHW", "OIHW", "NCHW")
    hp = lax.Precision.HIGHEST
    y = lax.conv_general_dilated(x_nchw, p["conv1_w"], (1, 1), ((1, 1), (1, 1)),
                                 dimension_numbers=dn, precision=hp)
    y = jnp.maximum(y + p["conv1_b"][None, :, None, None], 0.0)
    y = lax.reduce_window(y, -jnp.inf, lax.max, (1, 1, 2, 2), (1, 1, 2, 2), "VALID")
    y = lax.conv_general_dilated(y, p["conv2_w"], (1, 1), ((1, 1), (1, 1)),
                                 dimension_numbers=dn, precision=hp)
    y = jnp.maximum(y + p["conv2_b"][None, :, None, None], 0.0)
    y = lax.reduce_window(y, -jnp.inf, lax.max, (1, 1, 2, 2), (1, 1, 2, 2), "VALID")
    f = y.reshape(y.shape[0], -1)
    h = jnp.maximum(jnp.matmul(f, p["fc1_w"].T, precision=hp) + p["fc1_b"], 0.0)
    z = jnp.matmul(h, p["fc2_w"].T, precision=hp) + p["fc2_b"]
    return jax.nn.softmax(z, axis=1)


if __name__ == "__main__":
    B, C, H, W = 2, 4, 64, 64     # fc1 expects 32*16*16 features => 64x64 input
    NUM_CLASSES = 10
    key = jax.random.PRNGKey(0)
    kx, kp = jax.random.split(key)
    x = jax.random.normal(kx, (B, C, H, W), jnp.float32)
    params = init_params(kp, C, NUM_CLASSES)

    forward = jax.jit(cnn_forward, static_argnums=2)
    out = jax.block_until_ready(forward(x, params, NUM_CLASSES))
    ref = jax.block_until_ready(reference_forward(x, params))

    assert out.shape == (B, NUM_CLASSES)
    np.testing.assert_allclose(np.asarray(out), np.asarray(ref), atol=1e-2, rtol=0)
    print("KERNEL_OK")
</pallas_src>

<mosaic_0001>
module attributes {stable_mosaic.version = 11 : i64} {
  func.func @conv_pool_kernel(%arg0: i32, %arg1: i32, %arg2: memref<1x512x36xf32, #tpu.memory_space<vmem>>, %arg3: memref<36x16xf32, #tpu.memory_space<vmem>>, %arg4: memref<1x16xf32, #tpu.memory_space<vmem>>, %arg5: memref<128x256xf32, #tpu.memory_space<vmem>>, %arg6: memref<128x256xf32, #tpu.memory_space<vmem>>, %arg7: memref<1x128x16xf32, #tpu.memory_space<vmem>>) attributes {dimension_semantics = [#tpu.dimension_semantics<parallel>, #tpu.dimension_semantics<arbitrary>], iteration_bounds = array<i64: 2, 8>, scalar_prefetch = 0 : i64, scratch_operands = 0 : i64, tpu.core_type = #tpu.core_type<tc>, window_params = [{transform_indices = @transform_0, window_bounds = array<i64: 1, 512, 36>}, {pipeline_mode = #tpu.pipeline_mode<synchronous>, transform_indices = @transform_1, window_bounds = array<i64: 36, 16>}, {pipeline_mode = #tpu.pipeline_mode<synchronous>, transform_indices = @transform_2, window_bounds = array<i64: 1, 16>}, {pipeline_mode = #tpu.pipeline_mode<synchronous>, transform_indices = @transform_3, window_bounds = array<i64: 128, 256>}, {pipeline_mode = #tpu.pipeline_mode<synchronous>, transform_indices = @transform_4, window_bounds = array<i64: 128, 256>}, {transform_indices = @transform_5, window_bounds = array<i64: 1, 128, 16>}]} {
    %c0 = arith.constant 0 : index
    %c0_0 = arith.constant 0 : index
    %c0_1 = arith.constant 0 : index
    %0 = vector.load %arg2[%c0, %c0_0, %c0_1] : memref<1x512x36xf32, #tpu.memory_space<vmem>>, vector<1x512x36xf32>
    %1 = vector.shape_cast %0 : vector<1x512x36xf32> to vector<512x36xf32>
    %c0_2 = arith.constant 0 : index
    %c0_3 = arith.constant 0 : index
    %2 = vector.load %arg3[%c0_2, %c0_3] : memref<36x16xf32, #tpu.memory_space<vmem>>, vector<36x16xf32>
    %cst = arith.constant dense<0.000000e+00> : vector<512x16xf32>
    %3 = tpu.matmul %1, %2, %cst {dimension_numbers = #tpu.dot_dimension_numbers<[1], [0], [0], [1], [0, 0, 1, 1], [], []>} : vector<512x36xf32>, vector<36x16xf32>, vector<512x16xf32> -> vector<512x16xf32>
    %c0_4 = arith.constant 0 : index
    %c0_5 = arith.constant 0 : index
    %4 = vector.load %arg4[%c0_4, %c0_5] : memref<1x16xf32, #tpu.memory_space<vmem>>, vector<1x16xf32>
    %5 = vector.broadcast %4 : vector<1x16xf32> to vector<512x16xf32>
    %6 = arith.addf %3, %5 : vector<512x16xf32>
    %cst_6 = arith.constant 0.000000e+00 : f32
    %7 = vector.broadcast %cst_6 : f32 to vector<512x16xf32>
    %8 = arith.maximumf %6, %7 : vector<512x16xf32>
    %9 = vector.shape_cast %8 : vector<512x16xf32> to vector<4x128x16xf32>
    %10 = vector.extract_strided_slice %9 {offsets = [0, 0, 0], sizes = [4, 64, 16], strides = [1, 1, 1]} : vector<4x128x16xf32> to vector<4x64x16xf32>
    %11 = vector.extract_strided_slice %9 {offsets = [0, 64, 0], sizes = [4, 64, 16], strides = [1, 1, 1]} : vector<4x128x16xf32> to vector<4x64x16xf32>
    %12 = arith.maximumf %10, %11 : vector<4x64x16xf32>
    %13 = vector.shape_cast %12 : vector<4x64x16xf32> to vector<256x16xf32>
    %c0_7 = arith.constant 0 : index
    %c0_8 = arith.constant 0 : index
    %14 = vector.load %arg5[%c0_7, %c0_8] : memref<128x256xf32, #tpu.memory_space<vmem>>, vector<128x256xf32>
    %cst_9 = arith.constant dense<0.000000e+00> : vector<128x16xf32>
    %15 = tpu.matmul %14, %13, %cst_9 {dimension_numbers = #tpu.dot_dimension_numbers<[1], [0], [0], [1], [0, 0, 1, 1], [], []>} : vector<128x256xf32>, vector<256x16xf32>, vector<128x16xf32> -> vector<128x16xf32>
    %c0_10 = arith.constant 0 : index
    %c0_11 = arith.constant 0 : index
    %16 = vector.load %arg6[%c0_10, %c0_11] : memref<128x256xf32, #tpu.memory_space<vmem>>, vector<128x256xf32>
    %cst_12 = arith.constant dense<0.000000e+00> : vector<128x16xf32>
    %17 = tpu.matmul %16, %13, %cst_12 {dimension_numbers = #tpu.dot_dimension_numbers<[1], [0], [0], [1], [0, 0, 1, 1], [], []>} : vector<128x256xf32>, vector<256x16xf32>, vector<128x16xf32> -> vector<128x16xf32>
    %18 = arith.maximumf %15, %17 : vector<128x16xf32>
    %c0_13 = arith.constant 0 : index
    %c0_14 = arith.constant 0 : index
    %c0_15 = arith.constant 0 : index
    %19 = vector.load %arg7[%c0_13, %c0_14, %c0_15] : memref<1x128x16xf32, #tpu.memory_space<vmem>>, vector<1x128x16xf32>
    %20 = vector.shape_cast %19 : vector<1x128x16xf32> to vector<128x16xf32>
    %21 = vector.shape_cast %18 : vector<128x16xf32> to vector<1x128x16xf32>
    tpu.vector_store %arg7[%c0_13, %c0_14, %c0_15], %21 {strides = array<i32>} : memref<1x128x16xf32, #tpu.memory_space<vmem>>, vector<1x128x16xf32>,
    return
  }
  func.func @transform_0(%arg0: i32, %arg1: i32) -> (i32, i32, i32) {
    %c0_i32 = arith.constant 0 : i32
    %c0_i32_0 = arith.constant 0 : i32
    return %arg0, %arg1, %c0_i32 : i32, i32, i32
  }
  func.func @transform_1(%arg0: i32, %arg1: i32) -> (i32, i32) {
    %c0_i32 = arith.constant 0 : i32
    %c0_i32_0 = arith.constant 0 : i32
    %c0_i32_1 = arith.constant 0 : i32
    return %c0_i32, %c0_i32_0 : i32, i32
  }
  func.func @transform_2(%arg0: i32, %arg1: i32) -> (i32, i32) {
    %c0_i32 = arith.constant 0 : i32
    %c0_i32_0 = arith.constant 0 : i32
    %c0_i32_1 = arith.constant 0 : i32
    return %c0_i32, %c0_i32_0 : i32, i32
  }
  func.func @transform_3(%arg0: i32, %arg1: i32) -> (i32, i32) {
    %c0_i32 = arith.constant 0 : i32
    %c0_i32_0 = arith.constant 0 : i32
    %c0_i32_1 = arith.constant 0 : i32
    return %c0_i32, %c0_i32_0 : i32, i32
  }
  func.func @transform_4(%arg0: i32, %arg1: i32) -> (i32, i32) {
    %c0_i32 = arith.constant 0 : i32
    %c0_i32_0 = arith.constant 0 : i32
    %c0_i32_1 = arith.constant 0 : i32
    return %c0_i32, %c0_i32_0 : i32, i32
  }
  func.func @transform_5(%arg0: i32, %arg1: i32) -> (i32, i32, i32) {
    %c0_i32 = arith.constant 0 : i32
    %c0_i32_0 = arith.constant 0 : i32
    return %arg0, %arg1, %c0_i32 : i32, i32, i32
  }
}

module attributes {stable_mosaic.version = 11 : i64} {
  func.func @conv_pool_kernel(%arg0: i32, %arg1: i32, %arg2: memref<1x256x144xf32, #tpu.memory_space<vmem>>, %arg3: memref<144x32xf32, #tpu.memory_space<vmem>>, %arg4: memref<1x32xf32, #tpu.memory_space<vmem>>, %arg5: memref<64x128xf32, #tpu.memory_space<vmem>>, %arg6: memref<64x128xf32, #tpu.memory_space<vmem>>, %arg7: memref<1x64x32xf32, #tpu.memory_space<vmem>>) attributes {dimension_semantics = [#tpu.dimension_semantics<parallel>, #tpu.dimension_semantics<arbitrary>], iteration_bounds = array<i64: 2, 4>, scalar_prefetch = 0 : i64, scratch_operands = 0 : i64, tpu.core_type = #tpu.core_type<tc>, window_params = [{transform_indices = @transform_0, window_bounds = array<i64: 1, 256, 144>}, {pipeline_mode = #tpu.pipeline_mode<synchronous>, transform_indices = @transform_1, window_bounds = array<i64: 144, 32>}, {pipeline_mode = #tpu.pipeline_mode<synchronous>, transform_indices = @transform_2, window_bounds = array<i64: 1, 32>}, {pipeline_mode = #tpu.pipeline_mode<synchronous>, transform_indices = @transform_3, window_bounds = array<i64: 64, 128>}, {pipeline_mode = #tpu.pipeline_mode<synchronous>, transform_indices = @transform_4, window_bounds = array<i64: 64, 128>}, {transform_indices = @transform_5, window_bounds = array<i64: 1, 64, 32>}]} {
    %c0 = arith.constant 0 : index
    %c0_0 = arith.constant 0 : index
    %c0_1 = arith.constant 0 : index
    %0 = vector.load %arg2[%c0, %c0_0, %c0_1] : memref<1x256x144xf32, #tpu.memory_space<vmem>>, vector<1x256x144xf32>
    %1 = vector.shape_cast %0 : vector<1x256x144xf32> to vector<256x144xf32>
    %c0_2 = arith.constant 0 : index
    %c0_3 = arith.constant 0 : index
    %2 = vector.load %arg3[%c0_2, %c0_3] : memref<144x32xf32, #tpu.memory_space<vmem>>, vector<144x32xf32>
    %cst = arith.constant dense<0.000000e+00> : vector<256x32xf32>
    %3 = tpu.matmul %1, %2, %cst {dimension_numbers = #tpu.dot_dimension_numbers<[1], [0], [0], [1], [0, 0, 1, 1], [], []>} : vector<256x144xf32>, vector<144x32xf32>, vector<256x32xf32> -> vector<256x32xf32>
    %c0_4 = arith.constant 0 : index
    %c0_5 = arith.constant 0 : index
    %4 = vector.load %arg4[%c0_4, %c0_5] : memref<1x32xf32, #tpu.memory_space<vmem>>, vector<1x32xf32>
    %5 = vector.broadcast %4 : vector<1x32xf32> to vector<256x32xf32>
    %6 = arith.addf %3, %5 : vector<256x32xf32>
    %cst_6 = arith.constant 0.000000e+00 : f32
    %7 = vector.broadcast %cst_6 : f32 to vector<256x32xf32>
    %8 = arith.maximumf %6, %7 : vector<256x32xf32>
    %9 = vector.shape_cast %8 : vector<256x32xf32> to vector<4x64x32xf32>
    %10 = vector.extract_strided_slice %9 {offsets = [0, 0, 0], sizes = [4, 32, 32], strides = [1, 1, 1]} : vector<4x64x32xf32> to vector<4x32x32xf32>
    %11 = vector.extract_strided_slice %9 {offsets = [0, 32, 0], sizes = [4, 32, 32], strides = [1, 1, 1]} : vector<4x64x32xf32> to vector<4x32x32xf32>
    %12 = arith.maximumf %10, %11 : vector<4x32x32xf32>
    %13 = vector.shape_cast %12 : vector<4x32x32xf32> to vector<128x32xf32>
    %c0_7 = arith.constant 0 : index
    %c0_8 = arith.constant 0 : index
    %14 = vector.load %arg5[%c0_7, %c0_8] : memref<64x128xf32, #tpu.memory_space<vmem>>, vector<64x128xf32>
    %cst_9 = arith.constant dense<0.000000e+00> : vector<64x32xf32>
    %15 = tpu.matmul %14, %13, %cst_9 {dimension_numbers = #tpu.dot_dimension_numbers<[1], [0], [0], [1], [0, 0, 1, 1], [], []>} : vector<64x128xf32>, vector<128x32xf32>, vector<64x32xf32> -> vector<64x32xf32>
    %c0_10 = arith.constant 0 : index
    %c0_11 = arith.constant 0 : index
    %16 = vector.load %arg6[%c0_10, %c0_11] : memref<64x128xf32, #tpu.memory_space<vmem>>, vector<64x128xf32>
    %cst_12 = arith.constant dense<0.000000e+00> : vector<64x32xf32>
    %17 = tpu.matmul %16, %13, %cst_12 {dimension_numbers = #tpu.dot_dimension_numbers<[1], [0], [0], [1], [0, 0, 1, 1], [], []>} : vector<64x128xf32>, vector<128x32xf32>, vector<64x32xf32> -> vector<64x32xf32>
    %18 = arith.maximumf %15, %17 : vector<64x32xf32>
    %c0_13 = arith.constant 0 : index
    %c0_14 = arith.constant 0 : index
    %c0_15 = arith.constant 0 : index
    %19 = vector.load %arg7[%c0_13, %c0_14, %c0_15] : memref<1x64x32xf32, #tpu.memory_space<vmem>>, vector<1x64x32xf32>
    %20 = vector.shape_cast %19 : vector<1x64x32xf32> to vector<64x32xf32>
    %21 = vector.shape_cast %18 : vector<64x32xf32> to vector<1x64x32xf32>
    tpu.vector_store %arg7[%c0_13, %c0_14, %c0_15], %21 {strides = array<i32>} : memref<1x64x32xf32, #tpu.memory_space<vmem>>, vector<1x64x32xf32>,
    return
  }
  func.func @transform_0(%arg0: i32, %arg1: i32) -> (i32, i32, i32) {
    %c0_i32 = arith.constant 0 : i32
    %c0_i32_0 = arith.constant 0 : i32
    return %arg0, %arg1, %c0_i32 : i32, i32, i32
  }
  func.func @transform_1(%arg0: i32, %arg1: i32) -> (i32, i32) {
    %c0_i32 = arith.constant 0 : i32
    %c0_i32_0 = arith.constant 0 : i32
    %c0_i32_1 = arith.constant 0 : i32
    return %c0_i32, %c0_i32_0 : i32, i32
  }
  func.func @transform_2(%arg0: i32, %arg1: i32) -> (i32, i32) {
    %c0_i32 = arith.constant 0 : i32
    %c0_i32_0 = arith.constant 0 : i32
    %c0_i32_1 = arith.constant 0 : i32
    return %c0_i32, %c0_i32_0 : i32, i32
  }
  func.func @transform_3(%arg0: i32, %arg1: i32) -> (i32, i32) {
    %c0_i32 = arith.constant 0 : i32
    %c0_i32_0 = arith.constant 0 : i32
    %c0_i32_1 = arith.constant 0 : i32
    return %c0_i32, %c0_i32_0 : i32, i32
  }
  func.func @transform_4(%arg0: i32, %arg1: i32) -> (i32, i32) {
    %c0_i32 = arith.constant 0 : i32
    %c0_i32_0 = arith.constant 0 : i32
    %c0_i32_1 = arith.constant 0 : i32
    return %c0_i32, %c0_i32_0 : i32, i32
  }
  func.func @transform_5(%arg0: i32, %arg1: i32) -> (i32, i32, i32) {
    %c0_i32 = arith.constant 0 : i32
    %c0_i32_0 = arith.constant 0 : i32
    return %arg0, %arg1, %c0_i32 : i32, i32, i32
  }
}

module attributes {stable_mosaic.version = 11 : i64} {
  func.func @fc_kernel(%arg0: i32, %arg1: i32, %arg2: memref<2x2048xf32, #tpu.memory_space<vmem>>, %arg3: memref<2048x256xbf16, #tpu.memory_space<vmem>>, %arg4: memref<1x256xf32, #tpu.memory_space<vmem>>, %arg5: memref<256x10xf32, #tpu.memory_space<vmem>>, %arg6: memref<1x2x10xf32, #tpu.memory_space<vmem>>, %arg7: memref<2x256xf32, #tpu.memory_space<vmem>>) attributes {dimension_semantics = [#tpu.dimension_semantics<parallel>, #tpu.dimension_semantics<arbitrary>], iteration_bounds = array<i64: 2, 4>, scalar_prefetch = 0 : i64, scratch_operands = 1 : i64, tpu.core_type = #tpu.core_type<tc>, window_params = [{transform_indices = @transform_0, window_bounds = array<i64: 2, 2048>}, {transform_indices = @transform_1, window_bounds = array<i64: 2048, 256>}, {transform_indices = @transform_2, window_bounds = array<i64: 1, 256>}, {transform_indices = @transform_3, window_bounds = array<i64: 256, 10>}, {transform_indices = @transform_4, window_bounds = array<i64: 1, 2, 10>}]} {
    %c0_i32 = arith.constant 0 : i32
    %0 = arith.cmpi eq, %arg1, %c0_i32 : i32
    %1 = arith.extui %0 : i1 to i32
    %c0_i32_0 = arith.constant 0 : i32
    %2 = arith.cmpi ne, %1, %c0_i32_0 : i32
    scf.if %2 {
      %cst_9 = arith.constant 0.000000e+00 : f32
      %13 = vector.broadcast %cst_9 : f32 to vector<2x256xf32>
      %c0_10 = arith.constant 0 : index
      %c0_11 = arith.constant 0 : index
      %14 = vector.load %arg7[%c0_10, %c0_11] : memref<2x256xf32, #tpu.memory_space<vmem>>, vector<2x256xf32>
      tpu.vector_store %arg7[%c0_10, %c0_11], %13 {strides = array<i32>} : memref<2x256xf32, #tpu.memory_space<vmem>>, vector<2x256xf32>,
    } else {
    }
    %c0 = arith.constant 0 : index
    %c0_1 = arith.constant 0 : index
    %3 = vector.load %arg7[%c0, %c0_1] : memref<2x256xf32, #tpu.memory_space<vmem>>, vector<2x256xf32>
    %c0_2 = arith.constant 0 : index
    %c0_3 = arith.constant 0 : index
    %4 = vector.load %arg2[%c0_2, %c0_3] : memref<2x2048xf32, #tpu.memory_space<vmem>>, vector<2x2048xf32>
    %5 = arith.truncf %4 : vector<2x2048xf32> to vector<2x2048xbf16>
    %c0_4 = arith.constant 0 : index
    %c0_5 = arith.constant 0 : index
    %6 = vector.load %arg3[%c0_4, %c0_5] : memref<2048x256xbf16, #tpu.memory_space<vmem>>, vector<2048x256xbf16>
    %cst = arith.constant dense<0.000000e+00> : vector<2x256xf32>
    %7 = tpu.matmul %5, %6, %cst {dimension_numbers = #tpu.dot_dimension_numbers<[1], [0], [0], [1], [0, 0, 1, 1], [], []>} : vector<2x2048xbf16>, vector<2048x256xbf16>, vector<2x256xf32> -> vector<2x256xf32>
    %8 = arith.addf %3, %7 : vector<2x256xf32>
    %c0_6 = arith.constant 0 : index
    %c0_7 = arith.constant 0 : index
    %9 = vector.load %arg7[%c0_6, %c0_7] : memref<2x256xf32, #tpu.memory_space<vmem>>, vector<2x256xf32>
    tpu.vector_store %arg7[%c0_6, %c0_7], %8 {strides = array<i32>} : memref<2x256xf32, #tpu.memory_space<vmem>>, vector<2x256xf32>,
    %c3_i32 = arith.constant 3 : i32
    %10 = arith.cmpi eq, %arg1, %c3_i32 : i32
    %11 = arith.extui %10 : i1 to i32
    %c0_i32_8 = arith.constant 0 : i32
    %12 = arith.cmpi ne, %11, %c0_i32_8 : i32
    scf.if %12 {
      %c0_9 = arith.constant 0 : index
      %c0_10 = arith.constant 0 : index
      %13 = vector.load %arg7[%c0_9, %c0_10] : memref<2x256xf32, #tpu.memory_space<vmem>>, vector<2x256xf32>
      %c0_11 = arith.constant 0 : index
      %c0_12 = arith.constant 0 : index
      %14 = vector.load %arg4[%c0_11, %c0_12] : memref<1x256xf32, #tpu.memory_space<vmem>>, vector<1x256xf32>
      %15 = vector.broadcast %14 : vector<1x256xf32> to vector<2x256xf32>
      %16 = arith.addf %13, %15 : vector<2x256xf32>
      %cst_13 = arith.constant 0.000000e+00 : f32
      %17 = vector.broadcast %cst_13 : f32 to vector<2x256xf32>
      %18 = arith.maximumf %16, %17 : vector<2x256xf32>
      %c0_14 = arith.constant 0 : index
      %c0_15 = arith.constant 0 : index
      %19 = vector.load %arg5[%c0_14, %c0_15] : memref<256x10xf32, #tpu.memory_space<vmem>>, vector<256x10xf32>
      %cst_16 = arith.constant dense<0.000000e+00> : vector<2x10xf32>
      %20 = tpu.matmul %18, %19, %cst_16 {dimension_numbers = #tpu.dot_dimension_numbers<[1], [0], [0], [1], [0, 0, 1, 1], [], []>} : vector<2x256xf32>, vector<256x10xf32>, vector<2x10xf32> -> vector<2x10xf32>
      %c0_17 = arith.constant 0 : index
      %c0_18 = arith.constant 0 : index
      %c0_19 = arith.constant 0 : index
      %21 = vector.load %arg6[%c0_17, %c0_18, %c0_19] : memref<1x2x10xf32, #tpu.memory_space<vmem>>, vector<1x2x10xf32>
      %22 = vector.shape_cast %21 : vector<1x2x10xf32> to vector<2x10xf32>
      %23 = vector.shape_cast %20 : vector<2x10xf32> to vector<1x2x10xf32>
      tpu.vector_store %arg6[%c0_17, %c0_18, %c0_19], %23 {strides = array<i32>} : memref<1x2x10xf32, #tpu.memory_space<vmem>>, vector<1x2x10xf32>,
    } else {
    }
    return
  }
  func.func @transform_0(%arg0: i32, %arg1: i32) -> (i32, i32) {
    %c0_i32 = arith.constant 0 : i32
    %c0_i32_0 = arith.constant 0 : i32
    return %c0_i32, %arg1 : i32, i32
  }
  func.func @transform_1(%arg0: i32, %arg1: i32) -> (i32, i32) {
    %c0_i32 = arith.constant 0 : i32
    return %arg1, %arg0 : i32, i32
  }
  func.func @transform_2(%arg0: i32, %arg1: i32) -> (i32, i32) {
    %c0_i32 = arith.constant 0 : i32
    %c0_i32_0 = arith.constant 0 : i32
    return %c0_i32, %arg0 : i32, i32
  }
  func.func @transform_3(%arg0: i32, %arg1: i32) -> (i32, i32) {
    %c0_i32 = arith.constant 0 : i32
    %c0_i32_0 = arith.constant 0 : i32
    return %arg0, %c0_i32 : i32, i32
  }
  func.func @transform_4(%arg0: i32, %arg1: i32) -> (i32, i32, i32) {
    %c0_i32 = arith.constant 0 : i32
    %c0_i32_0 = arith.constant 0 : i32
    %c0_i32_1 = arith.constant 0 : i32
    return %arg0, %c0_i32, %c0_i32_0 : i32, i32, i32
  }
}

</mosaic_0001>

<llo_original>
// kernel: cnn_forward.3
$region0: #{cnn_forward.3}
  #allocation0 [shape = 'u32[]', space=smem, size = 0x4, offset = 0x4, fixed_abs, tag = 'smem constant byte address 0x4 - core index']
  #allocation1 [shape = 'u32[72,128]{1,0:T(1,128)}', space=vmem, size = 0x9000, scoped, tag = 'internal scratch']
  %s0 = inlined_call_operand.vmem [shape: f32[2,4096,36], index: 0, kind: input, shape index: {}]
  %s1 = inlined_call_operand.vmem [shape: f32[36,16], index: 1, kind: input, shape index: {}]
  %s2 = inlined_call_operand.vmem [shape: f32[1,16], index: 2, kind: input, shape index: {}]
  %s3 = inlined_call_operand.vmem [shape: f32[128,256], index: 3, kind: input, shape index: {}]
  %s4 = inlined_call_operand.vmem [shape: f32[128,256], index: 4, kind: input, shape index: {}]
  %s5 = inlined_call_operand.vmem [shape: f32[2,1024,16], index: 5, kind: output, shape index: {}]
  %s6 = sld [smem:[#allocation0]]
  $region53: #{cnn_forward.3} parent=0
    _
  %s8 = ssub.s32 1, %s6
  %s9 = scalar_select 0, %s8, %s6
  loop: start=0, step=1, limit=18
  $region2: #{cnn_forward.3} parent=0 // loop_pre_header
    _
  $region3: #{cnn_forward.3} parent=0 // loop_header
    %s11 = sphi 0, %s15
    %p12 = scmp.ge.s32.totalorder %s11, 18
    %s18 = sphi 0, %s30
    %s19 = sphi 0, %s26
    %s20 = sphi 0, %s18
    %s21 = sphi 0, %s19
    %s22 = sphi 0, %s20
    %s23 = sphi 0, %s21
    %s35 = sphi 0, %s37
    %s38 = sphi 0, %s35
    %s39 = sphi 0, %s38
    %s55 = sphi 0, %s39
    %s59 = sphi 0, %s59
    %s61 = sphi 0, %s59
    %s62 = sphi 0, %s61
    %s76 = sphi 0, %s62
    %s80 = sphi 0, %s80
    %s82 = sphi 0, %s80
    %s83 = sphi 0, %s82
    %s97 = sphi 0, %s83
    %s101 = sphi 0, %s101
    %s103 = sphi 0, %s101
    %s104 = sphi 0, %s103
    %s118 = sphi 0, %s104
    %s122 = sphi 0, %s122
    %s124 = sphi 0, %s122
    %s125 = sphi 0, %s124
    %s139 = sphi 0, %s125
    %s147 = sphi 0, %s149
    %s150 = sphi 0, %s147
    %s151 = sphi 0, %s150
    %s167 = sphi 0, %s151
  $region4: #{cnn_forward.3} parent=0 // loop_header_branch
    %14 = sbr.rel (%p12) target = $region8
  $region5: #{cnn_forward.3} parent=0 // loop_body
    %s16 = ssub.s32 %s11, 1
    %s17 = ssub.s32 %s11, 2
    %s24 = sadd.s32 1, %s19
    %p25 = scmp.ge.s32.totalorder %s24, 8
    %s26 = scalar_select %p25, 0, %s24
    %s27 = sadd.s32 1, %s18
    %s28 = scalar_select %p25, %s27, %s18
    %p29 = scmp.ge.s32.totalorder %s28, 2
    %s30 = scalar_select %p29, 0, %s28
    %s31 = ssub.s32 %s18, %s30
    %s32 = ssub.s32 %s19, %s26
    %s33 = sor.u32 %s31, %s32
    %p34 = scmp.eq.s32.totalorder %s33, 0
    %s36 = sadd.s32 %s35, 1
    %s37 = scalar_select %p34, %s35, %s36
    %p40 = pneg %p34
    %p41 = scmp.eq.s32.totalorder %s11, 15
    %p42 = por %p40, %p41
    %p43 = scmp.ne.s32.totalorder %s35, %s38
    %p44 = scmp.eq.s32.totalorder %s11, 0
    %p45 = por %p43, %p44
    %p46 = scmp.ne.s32.totalorder %s35, %s38
    %p47 = scmp.eq.s32.totalorder %s16, 15
    %p48 = por %p46, %p47
    %p49 = scmp.ne.s32.totalorder %s38, %s39
    %p50 = scmp.eq.s32.totalorder %s16, 0
    %p51 = por %p49, %p50
    %p52 = scmp.ne.s32.totalorder %s38, %s39
    %p53 = scmp.eq.s32.totalorder %s17, 15
    %p54 = por %p52, %p53
    %p56 = scmp.ne.s32.totalorder %s39, %s55
    %p57 = scmp.eq.s32.totalorder %s17, 0
    %p58 = por %p56, %p57
    %s60 = sadd.s32 %s59, 1
    %p63 = scmp.eq.s32.totalorder %s11, 15
    %p64 = scmp.ne.s32.totalorder %s59, %s61
    %p65 = scmp.eq.s32.totalorder %s11, 0
    %p66 = por %p64, %p65
    %p67 = scmp.ne.s32.totalorder %s59, %s61
    %p68 = scmp.eq.s32.totalorder %s16, 15
    %p69 = por %p67, %p68
    %p70 = scmp.ne.s32.totalorder %s61, %s62
    %p71 = scmp.eq.s32.totalorder %s16, 0
    %p72 = por %p70, %p71
    %p73 = scmp.ne.s32.totalorder %s61, %s62
    %p74 = scmp.eq.s32.totalorder %s17, 15
    %p75 = por %p73, %p74
    %p77 = scmp.ne.s32.totalorder %s62, %s76
    %p78 = scmp.eq.s32.totalorder %s17, 0
    %p79 = por %p77, %p78
    %s81 = sadd.s32 %s80, 1
    %p84 = scmp.eq.s32.totalorder %s11, 15
    %p85 = scmp.ne.s32.totalorder %s80, %s82
    %p86 = scmp.eq.s32.totalorder %s11, 0
    %p87 = por %p85, %p86
    %p88 = scmp.ne.s32.totalorder %s80, %s82
    %p89 = scmp.eq.s32.totalorder %s16, 15
    %p90 = por %p88, %p89
    %p91 = scmp.ne.s32.totalorder %s82, %s83
    %p92 = scmp.eq.s32.totalorder %s16, 0
    %p93 = por %p91, %p92
    %p94 = scmp.ne.s32.totalorder %s82, %s83
    %p95 = scmp.eq.s32.totalorder %s17, 15
    %p96 = por %p94, %p95
    %p98 = scmp.ne.s32.totalorder %s83, %s97
    %p99 = scmp.eq.s32.totalorder %s17, 0
    %p100 = por %p98, %p99
    %s102 = sadd.s32 %s101, 1
    %p105 = scmp.eq.s32.totalorder %s11, 15
    %p106 = scmp.ne.s32.totalorder %s101, %s103
    %p107 = scmp.eq.s32.totalorder %s11, 0
    %p108 = por %p106, %p107
    %p109 = scmp.ne.s32.totalorder %s101, %s103
    %p110 = scmp.eq.s32.totalorder %s16, 15
    %p111 = por %p109, %p110
    %p112 = scmp.ne.s32.totalorder %s103, %s104
    %p113 = scmp.eq.s32.totalorder %s16, 0
    %p114 = por %p112, %p113
    %p115 = scmp.ne.s32.totalorder %s103, %s104
    %p116 = scmp.eq.s32.totalorder %s17, 15
    %p117 = por %p115, %p116
    %p119 = scmp.ne.s32.totalorder %s104, %s118
    %p120 = scmp.eq.s32.totalorder %s17, 0
    %p121 = por %p119, %p120
    %s123 = sadd.s32 %s122, 1
    %p126 = scmp.eq.s32.totalorder %s11, 15
    %p127 = scmp.ne.s32.totalorder %s122, %s124
    %p128 = scmp.eq.s32.totalorder %s11, 0
    %p129 = por %p127, %p128
    %p130 = scmp.ne.s32.totalorder %s122, %s124
    %p131 = scmp.eq.s32.totalorder %s16, 15
    %p132 = por %p130, %p131
    %p133 = scmp.ne.s32.totalorder %s124, %s125
    %p134 = scmp.eq.s32.totalorder %s16, 0
    %p135 = por %p133, %p134
    %p136 = scmp.ne.s32.totalorder %s124, %s125
    %p137 = scmp.eq.s32.totalorder %s17, 15
    %p138 = por %p136, %p137
    %p140 = scmp.ne.s32.totalorder %s125, %s139
    %p141 = scmp.eq.s32.totalorder %s17, 0
    %p142 = por %p140, %p141
    %s143 = ssub.s32 %s18, %s30
    %s144 = ssub.s32 %s19, %s26
    %s145 = sor.u32 %s143, %s144
    %p146 = scmp.eq.s32.totalorder %s145, 0
    %s148 = sadd.s32 %s147, 1
    %s149 = scalar_select %p146, %s147, %s148
    %p152 = pneg %p146
    %p153 = scmp.eq.s32.totalorder %s11, 15
    %p154 = por %p152, %p153
    %p155 = scmp.ne.s32.totalorder %s147, %s150
    %p156 = scmp.eq.s32.totalorder %s11, 0
    %p157 = por %p155, %p156
    %p158 = scmp.ne.s32.totalorder %s147, %s150
    %p159 = scmp.eq.s32.totalorder %s16, 15
    %p160 = por %p158, %p159
    %p161 = scmp.ne.s32.totalorder %s150, %s151
    %p162 = scmp.eq.s32.totalorder %s16, 0
    %p163 = por %p161, %p162
    %p164 = scmp.ne.s32.totalorder %s150, %s151
    %p165 = scmp.eq.s32.totalorder %s17, 15
    %p166 = por %p164, %p165
    %p168 = scmp.ne.s32.totalorder %s151, %s167
    %p169 = scmp.eq.s32.totalorder %s17, 0
    %p170 = por %p168, %p169
    %p171 = scmp.le.s32.totalorder 1, %s11
    %p172 = scmp.lt.s32.totalorder %s11, 17
    %p173 = pnand %p171, %p172
    %p174 = pneg %p173
    // Predicated region
    $region9: #{cnn_forward.3} parent=5 // pred_check
      _
    $region10: #{cnn_forward.3} parent=5 // pred_check_branch
      %176 = sbr.rel (%p173) target = $region12
    $region11: #{cnn_forward.3} parent=5 // pred_region
      %s177 = ssub.s32 %s11, 1
      // Predicated region
      $region13: #{cnn_forward.3} parent=11 // pred_check
        %p178 = pneg %p72
      $region14: #{cnn_forward.3} parent=11 // pred_check_branch
        %180 = sbr.rel (%p178) target = $region16
      $region15: #{cnn_forward.3} parent=11 // pred_region
        _
      $region16: #{cnn_forward.3} parent=11 // pred_fallthru
        _
      // Predicated region
      $region17: #{cnn_forward.3} parent=11 // pred_check
        %p181 = pneg %p93
      $region18: #{cnn_forward.3} parent=11 // pred_check_branch
        %183 = sbr.rel (%p181) target = $region20
      $region19: #{cnn_forward.3} parent=11 // pred_region
        _
      $region20: #{cnn_forward.3} parent=11 // pred_fallthru
        _
      // Predicated region
      $region21: #{cnn_forward.3} parent=11 // pred_check
        %p184 = pneg %p114
      $region22: #{cnn_forward.3} parent=11 // pred_check_branch
        %186 = sbr.rel (%p184) target = $region24
      $region23: #{cnn_forward.3} parent=11 // pred_region
        _
      $region24: #{cnn_forward.3} parent=11 // pred_fallthru
        _
      // Predicated region
      $region25: #{cnn_forward.3} parent=11 // pred_check
        %p187 = pneg %p135
      $region26: #{cnn_forward.3} parent=11 // pred_check_branch
        %189 = sbr.rel (%p187) target = $region28
      $region27: #{cnn_forward.3} parent=11 // pred_region
        _
      $region28: #{cnn_forward.3} parent=11 // pred_fallthru
        _
    $region12: #{cnn_forward.3} parent=5 // pred_fallthru
      _
    %p190 = scmp.lt.s32.totalorder %s11, 16
    // Predicated region
    $region29: #{cnn_forward.3} parent=5 // pred_check
      %p191 = pneg %p190
    $region30: #{cnn_forward.3} parent=5 // pred_check_branch
      %193 = sbr.rel (%p191) target = $region32
    $region31: #{cnn_forward.3} parent=5 // pred_region
      // Predicated region
      $region33: #{cnn_forward.3} parent=31 // pred_check
        %p194 = pneg %p45
      $region34: #{cnn_forward.3} parent=31 // pred_check_branch
        %196 = sbr.rel (%p194) target = $region36
      $region35: #{cnn_forward.3} parent=31 // pred_region
        %s197 = smul.u32 64, %s19
        %p198 = scmp.lt.s32.totalorder %s18, 1
        %s199 = scalar_select %p198, %s18, 1
        %p200 = scmp.lt.s32.totalorder %s197, 511
        %s201 = scalar_select %p200, %s197, 511
        %s202 = smul.addr %s199, 512
        %s203 = sadd.s32 %s201, %s202
        %s204 = smul.addr %s203, 8
        %s205 = scalar_lea.vmem %s0, %s204
        %s206 = smul.u32 64, %s19
      $region36: #{cnn_forward.3} parent=31 // pred_fallthru
        _
    $region32: #{cnn_forward.3} parent=5 // pred_fallthru
      _
    %p207 = scmp.le.s32.totalorder 1, %s11
    %p208 = scmp.lt.s32.totalorder %s11, 17
    %p209 = pnand %p207, %p208
    %p210 = pneg %p209
    // Predicated region
    $region37: #{cnn_forward.3} parent=5 // pred_check
      _
    $region38: #{cnn_forward.3} parent=5 // pred_check_branch
      %212 = sbr.rel (%p209) target = $region40
    $region39: #{cnn_forward.3} parent=5 // pred_region
      %s213 = ssub.s32 %s11, 1
      %s214 = smul.u32 64, %s21
      %p215 = scmp.lt.s32.totalorder %s20, 1
      %s216 = scalar_select %p215, %s20, 1
      %p217 = scmp.lt.s32.totalorder %s214, 511
      %s218 = scalar_select %p217, %s214, 511
      %s219 = smul.addr %s216, 512
      %s220 = sadd.s32 %s218, %s219
      %s221 = smul.addr %s220, 8
      %s222 = scalar_lea.vmem %s0, %s221
      %p223 = pneg %p51
      %p224 = pneg %p48
      %p225 = pneg %p72
      %p226 = pneg %p69
      %p227 = pneg %p93
      %p228 = pneg %p90
      %p229 = pneg %p114
      %p230 = pneg %p111
      %p231 = pneg %p135
      %p232 = pneg %p132
      %p233 = pneg %p163
      %p234 = pneg %p160
      %s235 = smul.u32 16, %s21
      %p236 = scmp.lt.s32.totalorder %s20, 1
      %s237 = scalar_select %p236, %s20, 1
      %p238 = scmp.lt.s32.totalorder %s235, 127
      %s239 = scalar_select %p238, %s235, 127
      %s240 = smul.addr %s237, 128
      %s241 = sadd.s32 %s239, %s240
      %s242 = smul.addr %s241, 8
      %s243 = scalar_lea.vmem %s5, %s242
      %s244 = smul.u32 64, %s21
      %p245 = scmp.lt.s32.totalorder %s20, 1
      %s246 = scalar_select %p245, %s20, 1
      %p247 = scmp.lt.s32.totalorder %s244, 511
      %s248 = scalar_select %p247, %s244, 511
      %s249 = smul.addr %s246, 512
      %s250 = sadd.s32 %s248, %s249
      %s251 = smul.addr %s250, 8
      %s252 = scalar_lea.vmem %s0, %s251
      %s253 = smul.u32 64, %s21
      %s254 = smul.u32 16, %s21
      %p255 = scmp.lt.s32.totalorder %s20, 1
      %s256 = scalar_select %p255, %s20, 1
      %p257 = scmp.lt.s32.totalorder %s254, 127
      %s258 = scalar_select %p257, %s254, 127
      %s259 = smul.addr %s256, 128
      %s260 = sadd.s32 %s258, %s259
      %s261 = smul.addr %s260, 8
      %s262 = scalar_lea.vmem %s5, %s261
      %s263 = smul.u32 16, %s21
      %v264 = vld [vmem:[%s252] sm:$0xff]
      %v265 = vld [vmem:[%s252 + $0x8] sm:$0xff]
      %v266 = vld [vmem:[%s252 + $0x10] sm:$0xff]
      %v267 = vld [vmem:[%s252 + $0x18] sm:$0xff]
      %v268 = vld [vmem:[%s252 + $0x20] sm:$0xff]
      %v269 = vld [vmem:[%s252 + $0x28] sm:$0xff]
      %v270 = vld [vmem:[%s252 + $0x30] sm:$0xff]
      %v271 = vld [vmem:[%s252 + $0x38] sm:$0xff]
      %v272 = vld [vmem:[%s252 + $0x40] sm:$0xff]
      %v273 = vld [vmem:[%s252 + $0x48] sm:$0xff]
      %v274 = vld [vmem:[%s252 + $0x50] sm:$0xff]
      %v275 = vld [vmem:[%s252 + $0x58] sm:$0xff]
      %v276 = vld [vmem:[%s252 + $0x60] sm:$0xff]
      %v277 = vld [vmem:[%s252 + $0x68] sm:$0xff]
      %v278 = vld [vmem:[%s252 + $0x70] sm:$0xff]
      %v279 = vld [vmem:[%s252 + $0x78] sm:$0xff]
      %v280 = vld [vmem:[%s252 + $0x80] sm:$0xff]
      %v281 = vld [vmem:[%s252 + $0x88] sm:$0xff]
      %v282 = vld [vmem:[%s252 + $0x90] sm:$0xff]
      %v283 = vld [vmem:[%s252 + $0x98] sm:$0xff]
      %v284 = vld [vmem:[%s252 + $0xa0] sm:$0xff]
      %v285 = vld [vmem:[%s252 + $0xa8] sm:$0xff]
      %v286 = vld [vmem:[%s252 + $0xb0] sm:$0xff]
      %v287 = vld [vmem:[%s252 + $0xb8] sm:$0xff]
      %v288 = vld [vmem:[%s252 + $0xc0] sm:$0xff]
      %v289 = vld [vmem:[%s252 + $0xc8] sm:$0xff]
      %v290 = vld [vmem:[%s252 + $0xd0] sm:$0xff]
      %v291 = vld [vmem:[%s252 + $0xd8] sm:$0xff]
      %v292 = vld [vmem:[%s252 + $0xe0] sm:$0xff]
      %v293 = vld [vmem:[%s252 + $0xe8] sm:$0xff]
      %v294 = vld [vmem:[%s252 + $0xf0] sm:$0xff]
      %v295 = vld [vmem:[%s252 + $0xf8] sm:$0xff]
      %v296 = vld [vmem:[%s252 + $0x100] sm:$0xff]
      %v297 = vld [vmem:[%s252 + $0x108] sm:$0xff]
      %v298 = vld [vmem:[%s252 + $0x110] sm:$0xff]
      %v299 = vld [vmem:[%s252 + $0x118] sm:$0xff]
      %v300 = vld [vmem:[%s252 + $0x120] sm:$0xff]
      %v301 = vld [vmem:[%s252 + $0x128] sm:$0xff]
      %v302 = vld [vmem:[%s252 + $0x130] sm:$0xff]
      %v303 = vld [vmem:[%s252 + $0x138] sm:$0xff]
      %v304 = vld [vmem:[%s252 + $0x140] sm:$0xff]
      %v305 = vld [vmem:[%s252 + $0x148] sm:$0xff]
      %v306 = vld [vmem:[%s252 + $0x150] sm:$0xff]
      %v307 = vld [vmem:[%s252 + $0x158] sm:$0xff]
      %v308 = vld [vmem:[%s252 + $0x160] sm:$0xff]
      %v309 = vld [vmem:[%s252 + $0x168] sm:$0xff]
      %v310 = vld [vmem:[%s252 + $0x170] sm:$0xff]
      %v311 = vld [vmem:[%s252 + $0x178] sm:$0xff]
      %v312 = vld [vmem:[%s252 + $0x180] sm:$0xff]
      %v313 = vld [vmem:[%s252 + $0x188] sm:$0xff]
      %v314 = vld [vmem:[%s252 + $0x190] sm:$0xff]
      %v315 = vld [vmem:[%s252 + $0x198] sm:$0xff]
      %v316 = vld [vmem:[%s252 + $0x1a0] sm:$0xff]
      %v317 = vld [vmem:[%s252 + $0x1a8] sm:$0xff]
      %v318 = vld [vmem:[%s252 + $0x1b0] sm:$0xff]
      %v319 = vld [vmem:[%s252 + $0x1b8] sm:$0xff]
      %v320 = vld [vmem:[%s252 + $0x1c0] sm:$0xff]
      %v321 = vld [vmem:[%s252 + $0x1c8] sm:$0xff]
      %v322 = vld [vmem:[%s252 + $0x1d0] sm:$0xff]
      %v323 = vld [vmem:[%s252 + $0x1d8] sm:$0xff]
      %v324 = vld [vmem:[%s252 + $0x1e0] sm:$0xff]
      %v325 = vld [vmem:[%s252 + $0x1e8] sm:$0xff]
      %v326 = vld [vmem:[%s252 + $0x1f0] sm:$0xff]
      %v327 = vld [vmem:[%s252 + $0x1f8] sm:$0xff]
      %v328 = vld [vmem:[%s1] sm:$0xff]
      %v329 = vld [vmem:[%s1 + $0x8] sm:$0xff]
      %v330 = vld [vmem:[%s1 + $0x10] sm:$0xff]
      %v331 = vld [vmem:[%s1 + $0x18] sm:$0xff]
      %v332 = vld [vmem:[%s1 + $0x20] sm:$0xf]
      %v333 = vld [vmem:[%s2] sm:$0x1]
      %v335 = vperm.slane %v333, 0
      %vm337 = vcmask 293888
      %v339 = vsel %vm337, %v264, 0
      %v342 = vsel %vm337, %v265, 0
      %v345 = vsel %vm337, %v266, 0
      %v348 = vsel %vm337, %v267, 0
      %v351 = vsel %vm337, %v268, 0
      %v354 = vsel %vm337, %v269, 0
      %v357 = vsel %vm337, %v270, 0
      %v360 = vsel %vm337, %v271, 0
      %v363 = vsel %vm337, %v272, 0
      %v366 = vsel %vm337, %v273, 0
      %v369 = vsel %vm337, %v274, 0
      %v372 = vsel %vm337, %v275, 0
      %v375 = vsel %vm337, %v276, 0
      %v378 = vsel %vm337, %v277, 0
      %v381 = vsel %vm337, %v278, 0
      %v384 = vsel %vm337, %v279, 0
      %v387 = vsel %vm337, %v280, 0
      %v390 = vsel %vm337, %v281, 0
      %v393 = vsel %vm337, %v282, 0
      %v396 = vsel %vm337, %v283, 0
      %v399 = vsel %vm337, %v284, 0
      %v402 = vsel %vm337, %v285, 0
      %v405 = vsel %vm337, %v286, 0
      %v408 = vsel %vm337, %v287, 0
      %v411 = vsel %vm337, %v288, 0
      %v414 = vsel %vm337, %v289, 0
      %v417 = vsel %vm337, %v290, 0
      %v420 = vsel %vm337, %v291, 0
      %v423 = vsel %vm337, %v292, 0
      %v426 = vsel %vm337, %v293, 0
      %v429 = vsel %vm337, %v294, 0
      %v432 = vsel %vm337, %v295, 0
      %v435 = vsel %vm337, %v296, 0
      %v438 = vsel %vm337, %v297, 0
      %v441 = vsel %vm337, %v298, 0
      %v444 = vsel %vm337, %v299, 0
      %v447 = vsel %vm337, %v300, 0
      %v450 = vsel %vm337, %v301, 0
      %v453 = vsel %vm337, %v302, 0
      %v456 = vsel %vm337, %v303, 0
      %v459 = vsel %vm337, %v304, 0
      %v462 = vsel %vm337, %v305, 0
      %v465 = vsel %vm337, %v306, 0
      %v468 = vsel %vm337, %v307, 0
      %v471 = vsel %vm337, %v308, 0
      %v474 = vsel %vm337, %v309, 0
      %v477 = vsel %vm337, %v310, 0
      %v480 = vsel %vm337, %v311, 0
      %v483 = vsel %vm337, %v312, 0
      %v486 = vsel %vm337, %v313, 0
      %v489 = vsel %vm337, %v314, 0
      %v492 = vsel %vm337, %v315, 0
      %v495 = vsel %vm337, %v316, 0
      %v498 = vsel %vm337, %v317, 0
      %v501 = vsel %vm337, %v318, 0
      %v504 = vsel %vm337, %v319, 0
      %v507 = vsel %vm337, %v320, 0
      %v510 = vsel %vm337, %v321, 0
      %v513 = vsel %vm337, %v322, 0
      %v516 = vsel %vm337, %v323, 0
      %v519 = vsel %vm337, %v324, 0
      %v522 = vsel %vm337, %v325, 0
      %v525 = vsel %vm337, %v326, 0
      %v528 = vsel %vm337, %v327, 0
      %vm530 = vcmask 1043456
      %v532 = vsel %vm530, %v332, 0
      %534 = vmatpush.msra.mxu0 0.0
      %535 = vmatpush.msra.mxu0 0.0
      %536 = vmatpush.msra.mxu0 0.0
      %537 = vmatpush.msra.mxu0 0.0
      %538 = vmatpush.msra.mxu0 0.0
      %539 = vmatpush.msra.mxu0 0.0
      %540 = vmatpush.msra.mxu0 0.0
      %541 = vmatpush.msra.mxu0 0.0
      %542 = vmatpush.msra.mxu0 0.0
      %543 = vmatpush.msra.mxu0 0.0
      %544 = vmatpush.msra.mxu0 0.0
      %545 = vmatpush.msra.mxu0 %v532
      %546 = vmatpush.msra.mxu0 %v331
      %547 = vmatpush.msra.mxu0 %v330
      %548 = vmatpush.msra.mxu0 %v329
      %549 = vmatpush.msra.mxu0 %v328
      %550 = vmatmul.f32.gmra.mxu0 %v339
      %v551 = vpop.f32.mrf.mxu0
      %v552 = vadd.f32 %v335, %v551
      %553 = vmatmul.f32.gmra.mxu0 %v342
      %v554 = vpop.f32.mrf.mxu0
      %v555 = vadd.f32 %v335, %v554
      %556 = vmatmul.f32.gmra.mxu0 %v345
      %v557 = vpop.f32.mrf.mxu0
      %v558 = vadd.f32 %v335, %v557
      %559 = vmatmul.f32.gmra.mxu0 %v348
      %v560 = vpop.f32.mrf.mxu0
      %v561 = vadd.f32 %v335, %v560
      %562 = vmatmul.f32.gmra.mxu0 %v351
      %v563 = vpop.f32.mrf.mxu0
      %v564 = vadd.f32 %v335, %v563
      %565 = vmatmul.f32.gmra.mxu0 %v354
      %v566 = vpop.f32.mrf.mxu0
      %v567 = vadd.f32 %v335, %v566
      %568 = vmatmul.f32.gmra.mxu0 %v357
      %v569 = vpop.f32.mrf.mxu0
      %v570 = vadd.f32 %v335, %v569
      %571 = vmatmul.f32.gmra.mxu0 %v360
      %v572 = vpop.f32.mrf.mxu0
      %v573 = vadd.f32 %v335, %v572
      %574 = vmatmul.f32.gmra.mxu0 %v363
      %v575 = vpop.f32.mrf.mxu0
      %v576 = vadd.f32 %v335, %v575
      %577 = vmatmul.f32.gmra.mxu0 %v366
      %v578 = vpop.f32.mrf.mxu0
      %v579 = vadd.f32 %v335, %v578
      %580 = vmatmul.f32.gmra.mxu0 %v369
      %v581 = vpop.f32.mrf.mxu0
      %v582 = vadd.f32 %v335, %v581
      %583 = vmatmul.f32.gmra.mxu0 %v372
      %v584 = vpop.f32.mrf.mxu0
      %v585 = vadd.f32 %v335, %v584
      %586 = vmatmul.f32.gmra.mxu0 %v375
      %v587 = vpop.f32.mrf.mxu0
      %v588 = vadd.f32 %v335, %v587
      %589 = vmatmul.f32.gmra.mxu0 %v378
      %v590 = vpop.f32.mrf.mxu0
      %v591 = vadd.f32 %v335, %v590
      %592 = vmatmul.f32.gmra.mxu0 %v381
      %v593 = vpop.f32.mrf.mxu0
      %v594 = vadd.f32 %v335, %v593
      %595 = vmatmul.f32.gmra.mxu0 %v384
      %v596 = vpop.f32.mrf.mxu0
      %v597 = vadd.f32 %v335, %v596
      %598 = vmatmul.f32.gmra.mxu0 %v387
      %v599 = vpop.f32.mrf.mxu0
      %v600 = vadd.f32 %v335, %v599
      %601 = vmatmul.f32.gmra.mxu0 %v390
      %v602 = vpop.f32.mrf.mxu0
      %v603 = vadd.f32 %v335, %v602
      %604 = vmatmul.f32.gmra.mxu0 %v393
      %v605 = vpop.f32.mrf.mxu0
      %v606 = vadd.f32 %v335, %v605
      %607 = vmatmul.f32.gmra.mxu0 %v396
      %v608 = vpop.f32.mrf.mxu0
      %v609 = vadd.f32 %v335, %v608
      %610 = vmatmul.f32.gmra.mxu0 %v399
      %v611 = vpop.f32.mrf.mxu0
      %v612 = vadd.f32 %v335, %v611
      %613 = vmatmul.f32.gmra.mxu0 %v402
      %v614 = vpop.f32.mrf.mxu0
      %v615 = vadd.f32 %v335, %v614
      %616 = vmatmul.f32.gmra.mxu0 %v405
      %v617 = vpop.f32.mrf.mxu0
      %v618 = vadd.f32 %v335, %v617
      %619 = vmatmul.f32.gmra.mxu0 %v408
      %v620 = vpop.f32.mrf.mxu0
      %v621 = vadd.f32 %v335, %v620
      %622 = vmatmul.f32.gmra.mxu0 %v411
      %v623 = vpop.f32.mrf.mxu0
      %v624 = vadd.f32 %v335, %v623
      %625 = vmatmul.f32.gmra.mxu0 %v414
      %v626 = vpop.f32.mrf.mxu0
      %v627 = vadd.f32 %v335, %v626
      %628 = vmatmul.f32.gmra.mxu0 %v417
      %v629 = vpop.f32.mrf.mxu0
      %v630 = vadd.f32 %v335, %v629
      %631 = vmatmul.f32.gmra.mxu0 %v420
      %v632 = vpop.f32.mrf.mxu0
      %v633 = vadd.f32 %v335, %v632
      %634 = vmatmul.f32.gmra.mxu0 %v423
      %v635 = vpop.f32.mrf.mxu0
      %v636 = vadd.f32 %v335, %v635
      %637 = vmatmul.f32.gmra.mxu0 %v426
      %v638 = vpop.f32.mrf.mxu0
      %v639 = vadd.f32 %v335, %v638
      %640 = vmatmul.f32.gmra.mxu0 %v429
      %v641 = vpop.f32.mrf.mxu0
      %v642 = vadd.f32 %v335, %v641
      %643 = vmatmul.f32.gmra.mxu0 %v432
      %v644 = vpop.f32.mrf.mxu0
      %v645 = vadd.f32 %v335, %v644
      %646 = vmatmul.f32.gmra.mxu0 %v435
      %v647 = vpop.f32.mrf.mxu0
      %v648 = vadd.f32 %v335, %v647
      %649 = vmatmul.f32.gmra.mxu0 %v438
      %v650 = vpop.f32.mrf.mxu0
      %v651 = vadd.f32 %v335, %v650
      %652 = vmatmul.f32.gmra.mxu0 %v441
      %v653 = vpop.f32.mrf.mxu0
      %v654 = vadd.f32 %v335, %v653
      %655 = vmatmul.f32.gmra.mxu0 %v444
      %v656 = vpop.f32.mrf.mxu0
      %v657 = vadd.f32 %v335, %v656
      %658 = vmatmul.f32.gmra.mxu0 %v447
      %v659 = vpop.f32.mrf.mxu0
      %v660 = vadd.f32 %v335, %v659
      %661 = vmatmul.f32.gmra.mxu0 %v450
      %v662 = vpop.f32.mrf.mxu0
      %v663 = vadd.f32 %v335, %v662
      %664 = vmatmul.f32.gmra.mxu0 %v453
      %v665 = vpop.f32.mrf.mxu0
      %v666 = vadd.f32 %v335, %v665
      %667 = vmatmul.f32.gmra.mxu0 %v456
      %v668 = vpop.f32.mrf.mxu0
      %v669 = vadd.f32 %v335, %v668
      %670 = vmatmul.f32.gmra.mxu0 %v459
      %v671 = vpop.f32.mrf.mxu0
      %v672 = vadd.f32 %v335, %v671
      %673 = vmatmul.f32.gmra.mxu0 %v462
      %v674 = vpop.f32.mrf.mxu0
      %v675 = vadd.f32 %v335, %v674
      %676 = vmatmul.f32.gmra.mxu0 %v465
      %v677 = vpop.f32.mrf.mxu0
      %v678 = vadd.f32 %v335, %v677
      %679 = vmatmul.f32.gmra.mxu0 %v468
      %v680 = vpop.f32.mrf.mxu0
      %v681 = vadd.f32 %v335, %v680
      %682 = vmatmul.f32.gmra.mxu0 %v471
      %v683 = vpop.f32.mrf.mxu0
      %v684 = vadd.f32 %v335, %v683
      %685 = vmatmul.f32.gmra.mxu0 %v474
      %v686 = vpop.f32.mrf.mxu0
      %v687 = vadd.f32 %v335, %v686
      %688 = vmatmul.f32.gmra.mxu0 %v477
      %v689 = vpop.f32.mrf.mxu0
      %v690 = vadd.f32 %v335, %v689
      %691 = vmatmul.f32.gmra.mxu0 %v480
      %v692 = vpop.f32.mrf.mxu0
      %v693 = vadd.f32 %v335, %v692
      %694 = vmatmul.f32.gmra.mxu0 %v483
      %v695 = vpop.f32.mrf.mxu0
      %v696 = vadd.f32 %v335, %v695
      %697 = vmatmul.f32.gmra.mxu0 %v486
      %v698 = vpop.f32.mrf.mxu0
      %v699 = vadd.f32 %v335, %v698
      %700 = vmatmul.f32.gmra.mxu0 %v489
      %v701 = vpop.f32.mrf.mxu0
      %v702 = vadd.f32 %v335, %v701
      %703 = vmatmul.f32.gmra.mxu0 %v492
      %v704 = vpop.f32.mrf.mxu0
      %v705 = vadd.f32 %v335, %v704
      %706 = vmatmul.f32.gmra.mxu0 %v495
      %v707 = vpop.f32.mrf.mxu0
      %v708 = vadd.f32 %v335, %v707
      %709 = vmatmul.f32.gmra.mxu0 %v498
      %v710 = vpop.f32.mrf.mxu0
      %v711 = vadd.f32 %v335, %v710
      %712 = vmatmul.f32.gmra.mxu0 %v501
      %v713 = vpop.f32.mrf.mxu0
      %v714 = vadd.f32 %v335, %v713
      %715 = vmatmul.f32.gmra.mxu0 %v504
      %v716 = vpop.f32.mrf.mxu0
      %v717 = vadd.f32 %v335, %v716
      %718 = vmatmul.f32.gmra.mxu0 %v507
      %v719 = vpop.f32.mrf.mxu0
      %v720 = vadd.f32 %v335, %v719
      %721 = vmatmul.f32.gmra.mxu0 %v510
      %v722 = vpop.f32.mrf.mxu0
      %v723 = vadd.f32 %v335, %v722
      %724 = vmatmul.f32.gmra.mxu0 %v513
      %v725 = vpop.f32.mrf.mxu0
      %v726 = vadd.f32 %v335, %v725
      %727 = vmatmul.f32.gmra.mxu0 %v516
      %v728 = vpop.f32.mrf.mxu0
      %v729 = vadd.f32 %v335, %v728
      %730 = vmatmul.f32.gmra.mxu0 %v519
      %v731 = vpop.f32.mrf.mxu0
      %v732 = vadd.f32 %v335, %v731
      %733 = vmatmul.f32.gmra.mxu0 %v522
      %v734 = vpop.f32.mrf.mxu0
      %v735 = vadd.f32 %v335, %v734
      %736 = vmatmul.f32.gmra.mxu0 %v525
      %v737 = vpop.f32.mrf.mxu0
      %v738 = vadd.f32 %v335, %v737
      %739 = vmatmul.f32.gmra.mxu0 %v528
      %v740 = vpop.f32.mrf.mxu0
      %v741 = vadd.f32 %v335, %v740
      %742 = vdwg.mxu0
      %v743 = vmax.f32 %v552, 0.0
      %v744 = vmax.f32 %v555, 0.0
      %v745 = vmax.f32 %v558, 0.0
      %v746 = vmax.f32 %v561, 0.0
      %v747 = vmax.f32 %v564, 0.0
      %v748 = vmax.f32 %v567, 0.0
      %v749 = vmax.f32 %v570, 0.0
      %v750 = vmax.f32 %v573, 0.0
      %v751 = vmax.f32 %v576, 0.0
      %v752 = vmax.f32 %v579, 0.0
      %v753 = vmax.f32 %v582, 0.0
      %v754 = vmax.f32 %v585, 0.0
      %v755 = vmax.f32 %v588, 0.0
      %v756 = vmax.f32 %v591, 0.0
      %v757 = vmax.f32 %v594, 0.0
      %v758 = vmax.f32 %v597, 0.0
      %v759 = vmax.f32 %v600, 0.0
      %v760 = vmax.f32 %v603, 0.0
      %v761 = vmax.f32 %v606, 0.0
      %v762 = vmax.f32 %v609, 0.0
      %v763 = vmax.f32 %v612, 0.0
      %v764 = vmax.f32 %v615, 0.0
      %v765 = vmax.f32 %v618, 0.0
      %v766 = vmax.f32 %v621, 0.0
      %v767 = vmax.f32 %v624, 0.0
      %v768 = vmax.f32 %v627, 0.0
      %v769 = vmax.f32 %v630, 0.0
      %v770 = vmax.f32 %v633, 0.0
      %v771 = vmax.f32 %v636, 0.0
      %v772 = vmax.f32 %v639, 0.0
      %v773 = vmax.f32 %v642, 0.0
      %v774 = vmax.f32 %v645, 0.0
      %v775 = vmax.f32 %v648, 0.0
      %v776 = vmax.f32 %v651, 0.0
      %v777 = vmax.f32 %v654, 0.0
      %v778 = vmax.f32 %v657, 0.0
      %v779 = vmax.f32 %v660, 0.0
      %v780 = vmax.f32 %v663, 0.0
      %v781 = vmax.f32 %v666, 0.0
      %v782 = vmax.f32 %v669, 0.0
      %v783 = vmax.f32 %v672, 0.0
      %v784 = vmax.f32 %v675, 0.0
      %v785 = vmax.f32 %v678, 0.0
      %v786 = vmax.f32 %v681, 0.0
      %v787 = vmax.f32 %v684, 0.0
      %v788 = vmax.f32 %v687, 0.0
      %v789 = vmax.f32 %v690, 0.0
      %v790 = vmax.f32 %v693, 0.0
      %v791 = vmax.f32 %v696, 0.0
      %v792 = vmax.f32 %v699, 0.0
      %v793 = vmax.f32 %v702, 0.0
      %v794 = vmax.f32 %v705, 0.0
      %v795 = vmax.f32 %v708, 0.0
      %v796 = vmax.f32 %v711, 0.0
      %v797 = vmax.f32 %v714, 0.0
      %v798 = vmax.f32 %v717, 0.0
      %v799 = vmax.f32 %v720, 0.0
      %v800 = vmax.f32 %v723, 0.0
      %v801 = vmax.f32 %v726, 0.0
      %v802 = vmax.f32 %v729, 0.0
      %v803 = vmax.f32 %v732, 0.0
      %v804 = vmax.f32 %v735, 0.0
      %v805 = vmax.f32 %v738, 0.0
      %v806 = vmax.f32 %v741, 0.0
      %v807 = vmax.f32 %v743, %v751
      %v808 = vmax.f32 %v744, %v752
      %v809 = vmax.f32 %v745, %v753
      %v810 = vmax.f32 %v746, %v754
      %v811 = vmax.f32 %v747, %v755
      %v812 = vmax.f32 %v748, %v756
      %v813 = vmax.f32 %v749, %v757
      %v814 = vmax.f32 %v750, %v758
      %v815 = vmax.f32 %v759, %v767
      %v816 = vmax.f32 %v760, %v768
      %v817 = vmax.f32 %v761, %v769
      %v818 = vmax.f32 %v762, %v770
      %v819 = vmax.f32 %v763, %v771
      %v820 = vmax.f32 %v764, %v772
      %v821 = vmax.f32 %v765, %v773
      %v822 = vmax.f32 %v766, %v774
      %v823 = vmax.f32 %v775, %v783
      %v824 = vmax.f32 %v776, %v784
      %v825 = vmax.f32 %v777, %v785
      %v826 = vmax.f32 %v778, %v786
      %v827 = vmax.f32 %v779, %v787
      %v828 = vmax.f32 %v780, %v788
      %v829 = vmax.f32 %v781, %v789
      %v830 = vmax.f32 %v782, %v790
      %v831 = vmax.f32 %v791, %v799
      %v832 = vmax.f32 %v792, %v800
      %v833 = vmax.f32 %v793, %v801
      %v834 = vmax.f32 %v794, %v802
      %v835 = vmax.f32 %v795, %v803
      %v836 = vmax.f32 %v796, %v804
      %v837 = vmax.f32 %v797, %v805
      %v838 = vmax.f32 %v798, %v806
      %v839 = vld [vmem:[%s3] sm:$0xff]
      %v840 = vld [vmem:[%s3 + $0x8] sm:$0xff]
      %v841 = vld [vmem:[%s3 + $0x10] sm:$0xff]
      %v842 = vld [vmem:[%s3 + $0x18] sm:$0xff]
      %v843 = vld [vmem:[%s3 + $0x20] sm:$0xff]
      %v844 = vld [vmem:[%s3 + $0x28] sm:$0xff]
      %v845 = vld [vmem:[%s3 + $0x30] sm:$0xff]
      %v846 = vld [vmem:[%s3 + $0x38] sm:$0xff]
      %v847 = vld [vmem:[%s3 + $0x40] sm:$0xff]
      %v848 = vld [vmem:[%s3 + $0x48] sm:$0xff]
      %v849 = vld [vmem:[%s3 + $0x50] sm:$0xff]
      %v850 = vld [vmem:[%s3 + $0x58] sm:$0xff]
      %v851 = vld [vmem:[%s3 + $0x60] sm:$0xff]
      %v852 = vld [vmem:[%s3 + $0x68] sm:$0xff]
      %v853 = vld [vmem:[%s3 + $0x70] sm:$0xff]
      %v854 = vld [vmem:[%s3 + $0x78] sm:$0xff]
      %v855 = vld [vmem:[%s3 + $0x80] sm:$0xff]
      %v856 = vld [vmem:[%s3 + $0x88] sm:$0xff]
      %v857 = vld [vmem:[%s3 + $0x90] sm:$0xff]
      %v858 = vld [vmem:[%s3 + $0x98] sm:$0xff]
      %v859 = vld [vmem:[%s3 + $0xa0] sm:$0xff]
      %v860 = vld [vmem:[%s3 + $0xa8] sm:$0xff]
      %v861 = vld [vmem:[%s3 + $0xb0] sm:$0xff]
      %v862 = vld [vmem:[%s3 + $0xb8] sm:$0xff]
      %v863 = vld [vmem:[%s3 + $0xc0] sm:$0xff]
      %v864 = vld [vmem:[%s3 + $0xc8] sm:$0xff]
      %v865 = vld [vmem:[%s3 + $0xd0] sm:$0xff]
      %v866 = vld [vmem:[%s3 + $0xd8] sm:$0xff]
      %v867 = vld [vmem:[%s3 + $0xe0] sm:$0xff]
      %v868 = vld [vmem:[%s3 + $0xe8] sm:$0xff]
      %v869 = vld [vmem:[%s3 + $0xf0] sm:$0xff]
      %v870 = vld [vmem:[%s3 + $0xf8] sm:$0xff]
      %871 = vmatpush.msra.mxu0 %v822
      %872 = vmatpush.msra.mxu0 %v821
      %873 = vmatpush.msra.mxu0 %v820
      %874 = vmatpush.msra.mxu0 %v819
      %875 = vmatpush.msra.mxu0 %v818
      %876 = vmatpush.msra.mxu0 %v817
      %877 = vmatpush.msra.mxu0 %v816
      %878 = vmatpush.msra.mxu0 %v815
      %879 = vmatpush.msra.mxu0 %v814
      %880 = vmatpush.msra.mxu0 %v813
      %881 = vmatpush.msra.mxu0 %v812
      %882 = vmatpush.msra.mxu0 %v811
      %883 = vmatpush.msra.mxu0 %v810
      %884 = vmatpush.msra.mxu0 %v809
      %885 = vmatpush.msra.mxu0 %v808
      %886 = vmatpush.msra.mxu0 %v807
      %887 = vmatmul.f32.gmra.mxu0 %v839
      %v888 = vpop.f32.mrf.mxu0
      %v889 = vadd.f32 0.0, %v888
      %890 = vmatmul.f32.gmra.mxu0 %v841
      %v891 = vpop.f32.mrf.mxu0
      %v892 = vadd.f32 0.0, %v891
      %893 = vmatmul.f32.gmra.mxu0 %v843
      %v894 = vpop.f32.mrf.mxu0
      %v895 = vadd.f32 0.0, %v894
      %896 = vmatmul.f32.gmra.mxu0 %v845
      %v897 = vpop.f32.mrf.mxu0
      %v898 = vadd.f32 0.0, %v897
      %899 = vmatmul.f32.gmra.mxu0 %v847
      %v900 = vpop.f32.mrf.mxu0
      %v901 = vadd.f32 0.0, %v900
      %902 = vmatmul.f32.gmra.mxu0 %v849
      %v903 = vpop.f32.mrf.mxu0
      %v904 = vadd.f32 0.0, %v903
      %905 = vmatmul.f32.gmra.mxu0 %v851
      %v906 = vpop.f32.mrf.mxu0
      %v907 = vadd.f32 0.0, %v906
      %908 = vmatmul.f32.gmra.mxu0 %v853
      %v909 = vpop.f32.mrf.mxu0
      %v910 = vadd.f32 0.0, %v909
      %911 = vmatmul.f32.gmra.mxu0 %v855
      %v912 = vpop.f32.mrf.mxu0
      %v913 = vadd.f32 0.0, %v912
      %914 = vmatmul.f32.gmra.mxu0 %v857
      %v915 = vpop.f32.mrf.mxu0
      %v916 = vadd.f32 0.0, %v915
      %917 = vmatmul.f32.gmra.mxu0 %v859
      %v918 = vpop.f32.mrf.mxu0
      %v919 = vadd.f32 0.0, %v918
      %920 = vmatmul.f32.gmra.mxu0 %v861
      %v921 = vpop.f32.mrf.mxu0
      %v922 = vadd.f32 0.0, %v921
      %923 = vmatmul.f32.gmra.mxu0 %v863
      %v924 = vpop.f32.mrf.mxu0
      %v925 = vadd.f32 0.0, %v924
      %926 = vmatmul.f32.gmra.mxu0 %v865
      %v927 = vpop.f32.mrf.mxu0
      %v928 = vadd.f32 0.0, %v927
      %929 = vmatmul.f32.gmra.mxu0 %v867
      %v930 = vpop.f32.mrf.mxu0
      %v931 = vadd.f32 0.0, %v930
      %932 = vmatmul.f32.gmra.mxu0 %v869
      %v933 = vpop.f32.mrf.mxu0
      %v934 = vadd.f32 0.0, %v933
      %935 = vdwg.mxu0
      %936 = vmatpush.msra.mxu0 %v838
      %937 = vmatpush.msra.mxu0 %v837
      %938 = vmatpush.msra.mxu0 %v836
      %939 = vmatpush.msra.mxu0 %v835
      %940 = vmatpush.msra.mxu0 %v834
      %941 = vmatpush.msra.mxu0 %v833
      %942 = vmatpush.msra.mxu0 %v832
      %943 = vmatpush.msra.mxu0 %v831
      %944 = vmatpush.msra.mxu0 %v830
      %945 = vmatpush.msra.mxu0 %v829
      %946 = vmatpush.msra.mxu0 %v828
      %947 = vmatpush.msra.mxu0 %v827
      %948 = vmatpush.msra.mxu0 %v826
      %949 = vmatpush.msra.mxu0 %v825
      %950 = vmatpush.msra.mxu0 %v824
      %951 = vmatpush.msra.mxu0 %v823
      %952 = vmatmul.f32.gmra.mxu0 %v840
      %v953 = vpop.f32.mrf.mxu0
      %v954 = vadd.f32 %v889, %v953
      %955 = vmatmul.f32.gmra.mxu0 %v842
      %v956 = vpop.f32.mrf.mxu0
      %v957 = vadd.f32 %v892, %v956
      %958 = vmatmul.f32.gmra.mxu0 %v844
      %v959 = vpop.f32.mrf.mxu0
      %v960 = vadd.f32 %v895, %v959
      %961 = vmatmul.f32.gmra.mxu0 %v846
      %v962 = vpop.f32.mrf.mxu0
      %v963 = vadd.f32 %v898, %v962
      %964 = vmatmul.f32.gmra.mxu0 %v848
      %v965 = vpop.f32.mrf.mxu0
      %v966 = vadd.f32 %v901, %v965
      %967 = vmatmul.f32.gmra.mxu0 %v850
      %v968 = vpop.f32.mrf.mxu0
      %v969 = vadd.f32 %v904, %v968
      %970 = vmatmul.f32.gmra.mxu0 %v852
      %v971 = vpop.f32.mrf.mxu0
      %v972 = vadd.f32 %v907, %v971
      %973 = vmatmul.f32.gmra.mxu0 %v854
      %v974 = vpop.f32.mrf.mxu0
      %v975 = vadd.f32 %v910, %v974
      %976 = vmatmul.f32.gmra.mxu0 %v856
      %v977 = vpop.f32.mrf.mxu0
      %v978 = vadd.f32 %v913, %v977
      %979 = vmatmul.f32.gmra.mxu0 %v858
      %v980 = vpop.f32.mrf.mxu0
      %v981 = vadd.f32 %v916, %v980
      %982 = vmatmul.f32.gmra.mxu0 %v860
      %v983 = vpop.f32.mrf.mxu0
      %v984 = vadd.f32 %v919, %v983
      %985 = vmatmul.f32.gmra.mxu0 %v862
      %v986 = vpop.f32.mrf.mxu0
      %v987 = vadd.f32 %v922, %v986
      %988 = vmatmul.f32.gmra.mxu0 %v864
      %v989 = vpop.f32.mrf.mxu0
      %v990 = vadd.f32 %v925, %v989
      %991 = vmatmul.f32.gmra.mxu0 %v866
      %v992 = vpop.f32.mrf.mxu0
      %v993 = vadd.f32 %v928, %v992
      %994 = vmatmul.f32.gmra.mxu0 %v868
      %v995 = vpop.f32.mrf.mxu0
      %v996 = vadd.f32 %v931, %v995
      %997 = vmatmul.f32.gmra.mxu0 %v870
      %v998 = vpop.f32.mrf.mxu0
      %v999 = vadd.f32 %v934, %v998
      %1000 = vdwg.mxu0
      %v1001 = vld [vmem:[%s4] sm:$0xff]
      %v1002 = vld [vmem:[%s4 + $0x8] sm:$0xff]
      %v1003 = vld [vmem:[%s4 + $0x10] sm:$0xff]
      %v1004 = vld [vmem:[%s4 + $0x18] sm:$0xff]
      %v1005 = vld [vmem:[%s4 + $0x20] sm:$0xff]
      %v1006 = vld [vmem:[%s4 + $0x28] sm:$0xff]
      %v1007 = vld [vmem:[%s4 + $0x30] sm:$0xff]
      %v1008 = vld [vmem:[%s4 + $0x38] sm:$0xff]
      %v1009 = vld [vmem:[%s4 + $0x40] sm:$0xff]
      %v1010 = vld [vmem:[%s4 + $0x48] sm:$0xff]
      %v1011 = vld [vmem:[%s4 + $0x50] sm:$0xff]
      %v1012 = vld [vmem:[%s4 + $0x58] sm:$0xff]
      %v1013 = vld [vmem:[%s4 + $0x60] sm:$0xff]
      %v1014 = vld [vmem:[%s4 + $0x68] sm:$0xff]
      %v1015 = vld [vmem:[%s4 + $0x70] sm:$0xff]
      %v1016 = vld [vmem:[%s4 + $0x78] sm:$0xff]
      %v1017 = vld [vmem:[%s4 + $0x80] sm:$0xff]
      %v1018 = vld [vmem:[%s4 + $0x88] sm:$0xff]
      %v1019 = vld [vmem:[%s4 + $0x90] sm:$0xff]
      %v1020 = vld [vmem:[%s4 + $0x98] sm:$0xff]
      %v1021 = vld [vmem:[%s4 + $0xa0] sm:$0xff]
      %v1022 = vld [vmem:[%s4 + $0xa8] sm:$0xff]
      %v1023 = vld [vmem:[%s4 + $0xb0] sm:$0xff]
      %v1024 = vld [vmem:[%s4 + $0xb8] sm:$0xff]
      %v1025 = vld [vmem:[%s4 + $0xc0] sm:$0xff]
      %v1026 = vld [vmem:[%s4 + $0xc8] sm:$0xff]
      %v1027 = vld [vmem:[%s4 + $0xd0] sm:$0xff]
      %v1028 = vld [vmem:[%s4 + $0xd8] sm:$0xff]
      %v1029 = vld [vmem:[%s4 + $0xe0] sm:$0xff]
      %v1030 = vld [vmem:[%s4 + $0xe8] sm:$0xff]
      %v1031 = vld [vmem:[%s4 + $0xf0] sm:$0xff]
      %v1032 = vld [vmem:[%s4 + $0xf8] sm:$0xff]
      %1033 = vmatpush.msra.mxu0 %v822
      %1034 = vmatpush.msra.mxu0 %v821
      %1035 = vmatpush.msra.mxu0 %v820
      %1036 = vmatpush.msra.mxu0 %v819
      %1037 = vmatpush.msra.mxu0 %v818
      %1038 = vmatpush.msra.mxu0 %v817
      %1039 = vmatpush.msra.mxu0 %v816
      %1040 = vmatpush.msra.mxu0 %v815
      %1041 = vmatpush.msra.mxu0 %v814
      %1042 = vmatpush.msra.mxu0 %v813
      %1043 = vmatpush.msra.mxu0 %v812
      %1044 = vmatpush.msra.mxu0 %v811
      %1045 = vmatpush.msra.mxu0 %v810
      %1046 = vmatpush.msra.mxu0 %v809
      %1047 = vmatpush.msra.mxu0 %v808
      %1048 = vmatpush.msra.mxu0 %v807
      %1049 = vmatmul.f32.gmra.mxu0 %v1001
      %v1050 = vpop.f32.mrf.mxu0
      %v1051 = vadd.f32 0.0, %v1050
      %1052 = vmatmul.f32.gmra.mxu0 %v1003
      %v1053 = vpop.f32.mrf.mxu0
      %v1054 = vadd.f32 0.0, %v1053
      %1055 = vmatmul.f32.gmra.mxu0 %v1005
      %v1056 = vpop.f32.mrf.mxu0
      %v1057 = vadd.f32 0.0, %v1056
      %1058 = vmatmul.f32.gmra.mxu0 %v1007
      %v1059 = vpop.f32.mrf.mxu0
      %v1060 = vadd.f32 0.0, %v1059
      %1061 = vmatmul.f32.gmra.mxu0 %v1009
      %v1062 = vpop.f32.mrf.mxu0
      %v1063 = vadd.f32 0.0, %v1062
      %1064 = vmatmul.f32.gmra.mxu0 %v1011
      %v1065 = vpop.f32.mrf.mxu0
      %v1066 = vadd.f32 0.0, %v1065
      %1067 = vmatmul.f32.gmra.mxu0 %v1013
      %v1068 = vpop.f32.mrf.mxu0
      %v1069 = vadd.f32 0.0, %v1068
      %1070 = vmatmul.f32.gmra.mxu0 %v1015
      %v1071 = vpop.f32.mrf.mxu0
      %v1072 = vadd.f32 0.0, %v1071
      %1073 = vmatmul.f32.gmra.mxu0 %v1017
      %v1074 = vpop.f32.mrf.mxu0
      %v1075 = vadd.f32 0.0, %v1074
      %1076 = vmatmul.f32.gmra.mxu0 %v1019
      %v1077 = vpop.f32.mrf.mxu0
      %v1078 = vadd.f32 0.0, %v1077
      %1079 = vmatmul.f32.gmra.mxu0 %v1021
      %v1080 = vpop.f32.mrf.mxu0
      %v1081 = vadd.f32 0.0, %v1080
      %1082 = vmatmul.f32.gmra.mxu0 %v1023
      %v1083 = vpop.f32.mrf.mxu0
      %v1084 = vadd.f32 0.0, %v1083
      %1085 = vmatmul.f32.gmra.mxu0 %v1025
      %v1086 = vpop.f32.mrf.mxu0
      %v1087 = vadd.f32 0.0, %v1086
      %1088 = vmatmul.f32.gmra.mxu0 %v1027
      %v1089 = vpop.f32.mrf.mxu0
      %v1090 = vadd.f32 0.0, %v1089
      %1091 = vmatmul.f32.gmra.mxu0 %v1029
      %v1092 = vpop.f32.mrf.mxu0
      %v1093 = vadd.f32 0.0, %v1092
      %1094 = vmatmul.f32.gmra.mxu0 %v1031
      %v1095 = vpop.f32.mrf.mxu0
      %v1096 = vadd.f32 0.0, %v1095
      %1097 = vdwg.mxu0
      %1098 = vmatpush.msra.mxu0 %v838
      %1099 = vmatpush.msra.mxu0 %v837
      %1100 = vmatpush.msra.mxu0 %v836
      %1101 = vmatpush.msra.mxu0 %v835
      %1102 = vmatpush.msra.mxu0 %v834
      %1103 = vmatpush.msra.mxu0 %v833
      %1104 = vmatpush.msra.mxu0 %v832
      %1105 = vmatpush.msra.mxu0 %v831
      %1106 = vmatpush.msra.mxu0 %v830
      %1107 = vmatpush.msra.mxu0 %v829
      %1108 = vmatpush.msra.mxu0 %v828
      %1109 = vmatpush.msra.mxu0 %v827
      %1110 = vmatpush.msra.mxu0 %v826
      %1111 = vmatpush.msra.mxu0 %v825
      %1112 = vmatpush.msra.mxu0 %v824
      %1113 = vmatpush.msra.mxu0 %v823
      %1114 = vmatmul.f32.gmra.mxu0 %v1002
      %v1115 = vpop.f32.mrf.mxu0
      %v1116 = vadd.f32 %v1051, %v1115
      %1117 = vmatmul.f32.gmra.mxu0 %v1004
      %v1118 = vpop.f32.mrf.mxu0
      %v1119 = vadd.f32 %v1054, %v1118
      %1120 = vmatmul.f32.gmra.mxu0 %v1006
      %v1121 = vpop.f32.mrf.mxu0
      %v1122 = vadd.f32 %v1057, %v1121
      %1123 = vmatmul.f32.gmra.mxu0 %v1008
      %v1124 = vpop.f32.mrf.mxu0
      %v1125 = vadd.f32 %v1060, %v1124
      %1126 = vmatmul.f32.gmra.mxu0 %v1010
      %v1127 = vpop.f32.mrf.mxu0
      %v1128 = vadd.f32 %v1063, %v1127
      %1129 = vmatmul.f32.gmra.mxu0 %v1012
      %v1130 = vpop.f32.mrf.mxu0
      %v1131 = vadd.f32 %v1066, %v1130
      %1132 = vmatmul.f32.gmra.mxu0 %v1014
      %v1133 = vpop.f32.mrf.mxu0
      %v1134 = vadd.f32 %v1069, %v1133
      %1135 = vmatmul.f32.gmra.mxu0 %v1016
      %v1136 = vpop.f32.mrf.mxu0
      %v1137 = vadd.f32 %v1072, %v1136
      %1138 = vmatmul.f32.gmra.mxu0 %v1018
      %v1139 = vpop.f32.mrf.mxu0
      %v1140 = vadd.f32 %v1075, %v1139
      %1141 = vmatmul.f32.gmra.mxu0 %v1020
      %v1142 = vpop.f32.mrf.mxu0
      %v1143 = vadd.f32 %v1078, %v1142
      %1144 = vmatmul.f32.gmra.mxu0 %v1022
      %v1145 = vpop.f32.mrf.mxu0
      %v1146 = vadd.f32 %v1081, %v1145
      %1147 = vmatmul.f32.gmra.mxu0 %v1024
      %v1148 = vpop.f32.mrf.mxu0
      %v1149 = vadd.f32 %v1084, %v1148
      %1150 = vmatmul.f32.gmra.mxu0 %v1026
      %v1151 = vpop.f32.mrf.mxu0
      %v1152 = vadd.f32 %v1087, %v1151
      %1153 = vmatmul.f32.gmra.mxu0 %v1028
      %v1154 = vpop.f32.mrf.mxu0
      %v1155 = vadd.f32 %v1090, %v1154
      %1156 = vmatmul.f32.gmra.mxu0 %v1030
      %v1157 = vpop.f32.mrf.mxu0
      %v1158 = vadd.f32 %v1093, %v1157
      %1159 = vmatmul.f32.gmra.mxu0 %v1032
      %v1160 = vpop.f32.mrf.mxu0
      %v1161 = vadd.f32 %v1096, %v1160
      %1162 = vdwg.mxu0
      %v1163 = vmax.f32 %v954, %v1116
      %v1164 = vmax.f32 %v957, %v1119
      %v1165 = vmax.f32 %v960, %v1122
      %v1166 = vmax.f32 %v963, %v1125
      %v1167 = vmax.f32 %v966, %v1128
      %v1168 = vmax.f32 %v969, %v1131
      %v1169 = vmax.f32 %v972, %v1134
      %v1170 = vmax.f32 %v975, %v1137
      %v1171 = vmax.f32 %v978, %v1140
      %v1172 = vmax.f32 %v981, %v1143
      %v1173 = vmax.f32 %v984, %v1146
      %v1174 = vmax.f32 %v987, %v1149
      %v1175 = vmax.f32 %v990, %v1152
      %v1176 = vmax.f32 %v993, %v1155
      %v1177 = vmax.f32 %v996, %v1158
      %v1178 = vmax.f32 %v999, %v1161
      %vm1179 = vcmask 130048
      %1180 = vst.msk [vmem:[%s262] sm:$0xff] %vm1179, %v1163
      %1181 = vst.msk [vmem:[%s262 + $0x8] sm:$0xff] %vm1179, %v1164
      %1182 = vst.msk [vmem:[%s262 + $0x10] sm:$0xff] %vm1179, %v1165
      %1183 = vst.msk [vmem:[%s262 + $0x18] sm:$0xff] %vm1179, %v1166
      %1184 = vst.msk [vmem:[%s262 + $0x20] sm:$0xff] %vm1179, %v1167
      %1185 = vst.msk [vmem:[%s262 + $0x28] sm:$0xff] %vm1179, %v1168
      %1186 = vst.msk [vmem:[%s262 + $0x30] sm:$0xff] %vm1179, %v1169
      %1187 = vst.msk [vmem:[%s262 + $0x38] sm:$0xff] %vm1179, %v1170
      %1188 = vst.msk [vmem:[%s262 + $0x40] sm:$0xff] %vm1179, %v1171
      %1189 = vst.msk [vmem:[%s262 + $0x48] sm:$0xff] %vm1179, %v1172
      %1190 = vst.msk [vmem:[%s262 + $0x50] sm:$0xff] %vm1179, %v1173
      %1191 = vst.msk [vmem:[%s262 + $0x58] sm:$0xff] %vm1179, %v1174
      %1192 = vst.msk [vmem:[%s262 + $0x60] sm:$0xff] %vm1179, %v1175
      %1193 = vst.msk [vmem:[%s262 + $0x68] sm:$0xff] %vm1179, %v1176
      %1194 = vst.msk [vmem:[%s262 + $0x70] sm:$0xff] %vm1179, %v1177
      %1195 = vst.msk [vmem:[%s262 + $0x78] sm:$0xff] %vm1179, %v1178
      %s1196 = smul.u32 16, %s21
      %p1197 = scmp.lt.s32.totalorder %s20, 1
      %s1198 = scalar_select %p1197, %s20, 1
      %p1199 = scmp.lt.s32.totalorder %s1196, 127
      %s1200 = scalar_select %p1199, %s1196, 127
      %s1201 = smul.addr %s1198, 128
      %s1202 = sadd.s32 %s1200, %s1201
      %s1203 = smul.addr %s1202, 8
      %s1204 = scalar_lea.vmem %s5, %s1203
      // Predicated region
      $region41: #{cnn_forward.3} parent=39 // pred_check
        %p1205 = pneg %p160
      $region42: #{cnn_forward.3} parent=39 // pred_check_branch
        %1207 = sbr.rel (%p1205) target = $region44
      $region43: #{cnn_forward.3} parent=39 // pred_region
        %s1208 = smul.u32 16, %s21
      $region44: #{cnn_forward.3} parent=39 // pred_fallthru
        _
    $region40: #{cnn_forward.3} parent=5 // pred_fallthru
      _
    %p1209 = scmp.le.s32.totalorder 2, %s11
    // Predicated region
    $region45: #{cnn_forward.3} parent=5 // pred_check
      %p1210 = pneg %p1209
    $region46: #{cnn_forward.3} parent=5 // pred_check_branch
      %1212 = sbr.rel (%p1210) target = $region48
    $region47: #{cnn_forward.3} parent=5 // pred_region
      %s1213 = ssub.s32 %s11, 2
      // Predicated region
      $region49: #{cnn_forward.3} parent=47 // pred_check
        %p1214 = pneg %p166
      $region50: #{cnn_forward.3} parent=47 // pred_check_branch
        %1216 = sbr.rel (%p1214) target = $region52
      $region51: #{cnn_forward.3} parent=47 // pred_region
        %s1217 = smul.u32 16, %s23
        %p1218 = scmp.lt.s32.totalorder %s22, 1
        %s1219 = scalar_select %p1218, %s22, 1
        %p1220 = scmp.lt.s32.totalorder %s1217, 127
        %s1221 = scalar_select %p1220, %s1217, 127
        %s1222 = smul.addr %s1219, 128
        %s1223 = sadd.s32 %s1221, %s1222
        %s1224 = smul.addr %s1223, 8
        %s1225 = scalar_lea.vmem %s5, %s1224
      $region52: #{cnn_forward.3} parent=47 // pred_fallthru
        _
    $region48: #{cnn_forward.3} parent=5 // pred_fallthru
      _
  $region6: #{cnn_forward.3} parent=0 // loop_footer
    %s15 = sadd.s32 1, %s11
  $region7: #{cnn_forward.3} parent=0 // loop_footer_branch
    %10 = sbr.rel target = $region3
  $region8: #{cnn_forward.3} parent=0 // loop_exit
    _

// kernel: cnn_forward.4
$region0: #{cnn_forward.4}
  #allocation0 [shape = 'u32[]', space=smem, size = 0x4, offset = 0x4, fixed_abs, tag = 'smem constant byte address 0x4 - core index']
  #allocation1 [shape = 'u32[72,128]{1,0:T(1,128)}', space=vmem, size = 0x9000, scoped, tag = 'internal scratch']
  %s0 = inlined_call_operand.vmem [shape: f32[2,1024,144], index: 0, kind: input, shape index: {}]
  %s1 = inlined_call_operand.vmem [shape: f32[144,32], index: 1, kind: input, shape index: {}]
  %s2 = inlined_call_operand.vmem [shape: f32[1,32], index: 2, kind: input, shape index: {}]
  %s3 = inlined_call_operand.vmem [shape: f32[64,128], index: 3, kind: input, shape index: {}]
  %s4 = inlined_call_operand.vmem [shape: f32[64,128], index: 4, kind: input, shape index: {}]
  %s5 = inlined_call_operand.vmem [shape: f32[2,256,32], index: 5, kind: output, shape index: {}]
  %s6 = sld [smem:[#allocation0]]
  $region53: #{cnn_forward.4} parent=0
    _
  %s8 = ssub.s32 1, %s6
  %s9 = scalar_select 0, %s8, %s6
  loop: start=0, step=1, limit=10
  $region2: #{cnn_forward.4} parent=0 // loop_pre_header
    _
  $region3: #{cnn_forward.4} parent=0 // loop_header
    %s11 = sphi 0, %s15
    %p12 = scmp.ge.s32.totalorder %s11, 10
    %s18 = sphi 0, %s30
    %s19 = sphi 0, %s26
    %s20 = sphi 0, %s18
    %s21 = sphi 0, %s19
    %s22 = sphi 0, %s20
    %s23 = sphi 0, %s21
    %s35 = sphi 0, %s37
    %s38 = sphi 0, %s35
    %s39 = sphi 0, %s38
    %s55 = sphi 0, %s39
    %s59 = sphi 0, %s59
    %s61 = sphi 0, %s59
    %s62 = sphi 0, %s61
    %s76 = sphi 0, %s62
    %s80 = sphi 0, %s80
    %s82 = sphi 0, %s80
    %s83 = sphi 0, %s82
    %s97 = sphi 0, %s83
    %s101 = sphi 0, %s101
    %s103 = sphi 0, %s101
    %s104 = sphi 0, %s103
    %s118 = sphi 0, %s104
    %s122 = sphi 0, %s122
    %s124 = sphi 0, %s122
    %s125 = sphi 0, %s124
    %s139 = sphi 0, %s125
    %s147 = sphi 0, %s149
    %s150 = sphi 0, %s147
    %s151 = sphi 0, %s150
    %s167 = sphi 0, %s151
  $region4: #{cnn_forward.4} parent=0 // loop_header_branch
    %14 = sbr.rel (%p12) target = $region8
  $region5: #{cnn_forward.4} parent=0 // loop_body
    %s16 = ssub.s32 %s11, 1
    %s17 = ssub.s32 %s11, 2
    %s24 = sadd.s32 1, %s19
    %p25 = scmp.ge.s32.totalorder %s24, 4
    %s26 = scalar_select %p25, 0, %s24
    %s27 = sadd.s32 1, %s18
    %s28 = scalar_select %p25, %s27, %s18
    %p29 = scmp.ge.s32.totalorder %s28, 2
    %s30 = scalar_select %p29, 0, %s28
    %s31 = ssub.s32 %s18, %s30
    %s32 = ssub.s32 %s19, %s26
    %s33 = sor.u32 %s31, %s32
    %p34 = scmp.eq.s32.totalorder %s33, 0
    %s36 = sadd.s32 %s35, 1
    %s37 = scalar_select %p34, %s35, %s36
    %p40 = pneg %p34
    %p41 = scmp.eq.s32.totalorder %s11, 7
    %p42 = por %p40, %p41
    %p43 = scmp.ne.s32.totalorder %s35, %s38
    %p44 = scmp.eq.s32.totalorder %s11, 0
    %p45 = por %p43, %p44
    %p46 = scmp.ne.s32.totalorder %s35, %s38
    %p47 = scmp.eq.s32.totalorder %s16, 7
    %p48 = por %p46, %p47
    %p49 = scmp.ne.s32.totalorder %s38, %s39
    %p50 = scmp.eq.s32.totalorder %s16, 0
    %p51 = por %p49, %p50
    %p52 = scmp.ne.s32.totalorder %s38, %s39
    %p53 = scmp.eq.s32.totalorder %s17, 7
    %p54 = por %p52, %p53
    %p56 = scmp.ne.s32.totalorder %s39, %s55
    %p57 = scmp.eq.s32.totalorder %s17, 0
    %p58 = por %p56, %p57
    %s60 = sadd.s32 %s59, 1
    %p63 = scmp.eq.s32.totalorder %s11, 7
    %p64 = scmp.ne.s32.totalorder %s59, %s61
    %p65 = scmp.eq.s32.totalorder %s11, 0
    %p66 = por %p64, %p65
    %p67 = scmp.ne.s32.totalorder %s59, %s61
    %p68 = scmp.eq.s32.totalorder %s16, 7
    %p69 = por %p67, %p68
    %p70 = scmp.ne.s32.totalorder %s61, %s62
    %p71 = scmp.eq.s32.totalorder %s16, 0
    %p72 = por %p70, %p71
    %p73 = scmp.ne.s32.totalorder %s61, %s62
    %p74 = scmp.eq.s32.totalorder %s17, 7
    %p75 = por %p73, %p74
    %p77 = scmp.ne.s32.totalorder %s62, %s76
    %p78 = scmp.eq.s32.totalorder %s17, 0
    %p79 = por %p77, %p78
    %s81 = sadd.s32 %s80, 1
    %p84 = scmp.eq.s32.totalorder %s11, 7
    %p85 = scmp.ne.s32.totalorder %s80, %s82
    %p86 = scmp.eq.s32.totalorder %s11, 0
    %p87 = por %p85, %p86
    %p88 = scmp.ne.s32.totalorder %s80, %s82
    %p89 = scmp.eq.s32.totalorder %s16, 7
    %p90 = por %p88, %p89
    %p91 = scmp.ne.s32.totalorder %s82, %s83
    %p92 = scmp.eq.s32.totalorder %s16, 0
    %p93 = por %p91, %p92
    %p94 = scmp.ne.s32.totalorder %s82, %s83
    %p95 = scmp.eq.s32.totalorder %s17, 7
    %p96 = por %p94, %p95
    %p98 = scmp.ne.s32.totalorder %s83, %s97
    %p99 = scmp.eq.s32.totalorder %s17, 0
    %p100 = por %p98, %p99
    %s102 = sadd.s32 %s101, 1
    %p105 = scmp.eq.s32.totalorder %s11, 7
    %p106 = scmp.ne.s32.totalorder %s101, %s103
    %p107 = scmp.eq.s32.totalorder %s11, 0
    %p108 = por %p106, %p107
    %p109 = scmp.ne.s32.totalorder %s101, %s103
    %p110 = scmp.eq.s32.totalorder %s16, 7
    %p111 = por %p109, %p110
    %p112 = scmp.ne.s32.totalorder %s103, %s104
    %p113 = scmp.eq.s32.totalorder %s16, 0
    %p114 = por %p112, %p113
    %p115 = scmp.ne.s32.totalorder %s103, %s104
    %p116 = scmp.eq.s32.totalorder %s17, 7
    %p117 = por %p115, %p116
    %p119 = scmp.ne.s32.totalorder %s104, %s118
    %p120 = scmp.eq.s32.totalorder %s17, 0
    %p121 = por %p119, %p120
    %s123 = sadd.s32 %s122, 1
    %p126 = scmp.eq.s32.totalorder %s11, 7
    %p127 = scmp.ne.s32.totalorder %s122, %s124
    %p128 = scmp.eq.s32.totalorder %s11, 0
    %p129 = por %p127, %p128
    %p130 = scmp.ne.s32.totalorder %s122, %s124
    %p131 = scmp.eq.s32.totalorder %s16, 7
    %p132 = por %p130, %p131
    %p133 = scmp.ne.s32.totalorder %s124, %s125
    %p134 = scmp.eq.s32.totalorder %s16, 0
    %p135 = por %p133, %p134
    %p136 = scmp.ne.s32.totalorder %s124, %s125
    %p137 = scmp.eq.s32.totalorder %s17, 7
    %p138 = por %p136, %p137
    %p140 = scmp.ne.s32.totalorder %s125, %s139
    %p141 = scmp.eq.s32.totalorder %s17, 0
    %p142 = por %p140, %p141
    %s143 = ssub.s32 %s18, %s30
    %s144 = ssub.s32 %s19, %s26
    %s145 = sor.u32 %s143, %s144
    %p146 = scmp.eq.s32.totalorder %s145, 0
    %s148 = sadd.s32 %s147, 1
    %s149 = scalar_select %p146, %s147, %s148
    %p152 = pneg %p146
    %p153 = scmp.eq.s32.totalorder %s11, 7
    %p154 = por %p152, %p153
    %p155 = scmp.ne.s32.totalorder %s147, %s150
    %p156 = scmp.eq.s32.totalorder %s11, 0
    %p157 = por %p155, %p156
    %p158 = scmp.ne.s32.totalorder %s147, %s150
    %p159 = scmp.eq.s32.totalorder %s16, 7
    %p160 = por %p158, %p159
    %p161 = scmp.ne.s32.totalorder %s150, %s151
    %p162 = scmp.eq.s32.totalorder %s16, 0
    %p163 = por %p161, %p162
    %p164 = scmp.ne.s32.totalorder %s150, %s151
    %p165 = scmp.eq.s32.totalorder %s17, 7
    %p166 = por %p164, %p165
    %p168 = scmp.ne.s32.totalorder %s151, %s167
    %p169 = scmp.eq.s32.totalorder %s17, 0
    %p170 = por %p168, %p169
    %p171 = scmp.le.s32.totalorder 1, %s11
    %p172 = scmp.lt.s32.totalorder %s11, 9
    %p173 = pnand %p171, %p172
    %p174 = pneg %p173
    // Predicated region
    $region9: #{cnn_forward.4} parent=5 // pred_check
      _
    $region10: #{cnn_forward.4} parent=5 // pred_check_branch
      %176 = sbr.rel (%p173) target = $region12
    $region11: #{cnn_forward.4} parent=5 // pred_region
      %s177 = ssub.s32 %s11, 1
      // Predicated region
      $region13: #{cnn_forward.4} parent=11 // pred_check
        %p178 = pneg %p72
      $region14: #{cnn_forward.4} parent=11 // pred_check_branch
        %180 = sbr.rel (%p178) target = $region16
      $region15: #{cnn_forward.4} parent=11 // pred_region
        _
      $region16: #{cnn_forward.4} parent=11 // pred_fallthru
        _
      // Predicated region
      $region17: #{cnn_forward.4} parent=11 // pred_check
        %p181 = pneg %p93
      $region18: #{cnn_forward.4} parent=11 // pred_check_branch
        %183 = sbr.rel (%p181) target = $region20
      $region19: #{cnn_forward.4} parent=11 // pred_region
        _
      $region20: #{cnn_forward.4} parent=11 // pred_fallthru
        _
      // Predicated region
      $region21: #{cnn_forward.4} parent=11 // pred_check
        %p184 = pneg %p114
      $region22: #{cnn_forward.4} parent=11 // pred_check_branch
        %186 = sbr.rel (%p184) target = $region24
      $region23: #{cnn_forward.4} parent=11 // pred_region
        _
      $region24: #{cnn_forward.4} parent=11 // pred_fallthru
        _
      // Predicated region
      $region25: #{cnn_forward.4} parent=11 // pred_check
        %p187 = pneg %p135
      $region26: #{cnn_forward.4} parent=11 // pred_check_branch
        %189 = sbr.rel (%p187) target = $region28
      $region27: #{cnn_forward.4} parent=11 // pred_region
        _
      $region28: #{cnn_forward.4} parent=11 // pred_fallthru
        _
    $region12: #{cnn_forward.4} parent=5 // pred_fallthru
      _
    %p190 = scmp.lt.s32.totalorder %s11, 8
    // Predicated region
    $region29: #{cnn_forward.4} parent=5 // pred_check
      %p191 = pneg %p190
    $region30: #{cnn_forward.4} parent=5 // pred_check_branch
      %193 = sbr.rel (%p191) target = $region32
    $region31: #{cnn_forward.4} parent=5 // pred_region
      // Predicated region
      $region33: #{cnn_forward.4} parent=31 // pred_check
        %p194 = pneg %p45
      $region34: #{cnn_forward.4} parent=31 // pred_check_branch
        %196 = sbr.rel (%p194) target = $region36
      $region35: #{cnn_forward.4} parent=31 // pred_region
        %s197 = smul.u32 32, %s19
        %p198 = scmp.lt.s32.totalorder %s18, 1
        %s199 = scalar_select %p198, %s18, 1
        %p200 = scmp.lt.s32.totalorder %s197, 127
        %s201 = scalar_select %p200, %s197, 127
        %s202 = smul.addr %s201, 2
        %s203 = smul.addr %s199, 256
        %s204 = sadd.s32 %s202, %s203
        %s205 = smul.addr %s204, 8
        %s206 = scalar_lea.vmem %s0, %s205
        %s207 = smul.u32 32, %s19
      $region36: #{cnn_forward.4} parent=31 // pred_fallthru
        _
    $region32: #{cnn_forward.4} parent=5 // pred_fallthru
      _
    %p208 = scmp.le.s32.totalorder 1, %s11
    %p209 = scmp.lt.s32.totalorder %s11, 9
    %p210 = pnand %p208, %p209
    %p211 = pneg %p210
    // Predicated region
    $region37: #{cnn_forward.4} parent=5 // pred_check
      _
    $region38: #{cnn_forward.4} parent=5 // pred_check_branch
      %213 = sbr.rel (%p210) target = $region40
    $region39: #{cnn_forward.4} parent=5 // pred_region
      %s214 = ssub.s32 %s11, 1
      %s215 = smul.u32 32, %s21
      %p216 = scmp.lt.s32.totalorder %s20, 1
      %s217 = scalar_select %p216, %s20, 1
      %p218 = scmp.lt.s32.totalorder %s215, 127
      %s219 = scalar_select %p218, %s215, 127
      %s220 = smul.addr %s219, 2
      %s221 = smul.addr %s217, 256
      %s222 = sadd.s32 %s220, %s221
      %s223 = smul.addr %s222, 8
      %s224 = scalar_lea.vmem %s0, %s223
      %p225 = pneg %p51
      %p226 = pneg %p48
      %p227 = pneg %p72
      %p228 = pneg %p69
      %p229 = pneg %p93
      %p230 = pneg %p90
      %p231 = pneg %p114
      %p232 = pneg %p111
      %p233 = pneg %p135
      %p234 = pneg %p132
      %p235 = pneg %p163
      %p236 = pneg %p160
      %s237 = smul.u32 8, %s21
      %p238 = scmp.lt.s32.totalorder %s20, 1
      %s239 = scalar_select %p238, %s20, 1
      %p240 = scmp.lt.s32.totalorder %s237, 31
      %s241 = scalar_select %p240, %s237, 31
      %s242 = smul.addr %s239, 32
      %s243 = sadd.s32 %s241, %s242
      %s244 = smul.addr %s243, 8
      %s245 = scalar_lea.vmem %s5, %s244
      %s246 = smul.u32 32, %s21
      %p247 = scmp.lt.s32.totalorder %s20, 1
      %s248 = scalar_select %p247, %s20, 1
      %p249 = scmp.lt.s32.totalorder %s246, 127
      %s250 = scalar_select %p249, %s246, 127
      %s251 = smul.addr %s250, 2
      %s252 = smul.addr %s248, 256
      %s253 = sadd.s32 %s251, %s252
      %s254 = smul.addr %s253, 8
      %s255 = scalar_lea.vmem %s0, %s254
      %s256 = smul.u32 32, %s21
      %s257 = smul.u32 8, %s21
      %p258 = scmp.lt.s32.totalorder %s20, 1
      %s259 = scalar_select %p258, %s20, 1
      %p260 = scmp.lt.s32.totalorder %s257, 31
      %s261 = scalar_select %p260, %s257, 31
      %s262 = smul.addr %s259, 32
      %s263 = sadd.s32 %s261, %s262
      %s264 = smul.addr %s263, 8
      %s265 = scalar_lea.vmem %s5, %s264
      %s266 = smul.u32 8, %s21
      %v267 = vld [vmem:[%s255] sm:$0xff]
      %v268 = vld [vmem:[%s255 + $0x8] sm:$0xff]
      %v269 = vld [vmem:[%s255 + $0x10] sm:$0xff]
      %v270 = vld [vmem:[%s255 + $0x18] sm:$0xff]
      %v271 = vld [vmem:[%s255 + $0x20] sm:$0xff]
      %v272 = vld [vmem:[%s255 + $0x28] sm:$0xff]
      %v273 = vld [vmem:[%s255 + $0x30] sm:$0xff]
      %v274 = vld [vmem:[%s255 + $0x38] sm:$0xff]
      %v275 = vld [vmem:[%s255 + $0x40] sm:$0xff]
      %v276 = vld [vmem:[%s255 + $0x48] sm:$0xff]
      %v277 = vld [vmem:[%s255 + $0x50] sm:$0xff]
      %v278 = vld [vmem:[%s255 + $0x58] sm:$0xff]
      %v279 = vld [vmem:[%s255 + $0x60] sm:$0xff]
      %v280 = vld [vmem:[%s255 + $0x68] sm:$0xff]
      %v281 = vld [vmem:[%s255 + $0x70] sm:$0xff]
      %v282 = vld [vmem:[%s255 + $0x78] sm:$0xff]
      %v283 = vld [vmem:[%s255 + $0x80] sm:$0xff]
      %v284 = vld [vmem:[%s255 + $0x88] sm:$0xff]
      %v285 = vld [vmem:[%s255 + $0x90] sm:$0xff]
      %v286 = vld [vmem:[%s255 + $0x98] sm:$0xff]
      %v287 = vld [vmem:[%s255 + $0xa0] sm:$0xff]
      %v288 = vld [vmem:[%s255 + $0xa8] sm:$0xff]
      %v289 = vld [vmem:[%s255 + $0xb0] sm:$0xff]
      %v290 = vld [vmem:[%s255 + $0xb8] sm:$0xff]
      %v291 = vld [vmem:[%s255 + $0xc0] sm:$0xff]
      %v292 = vld [vmem:[%s255 + $0xc8] sm:$0xff]
      %v293 = vld [vmem:[%s255 + $0xd0] sm:$0xff]
      %v294 = vld [vmem:[%s255 + $0xd8] sm:$0xff]
      %v295 = vld [vmem:[%s255 + $0xe0] sm:$0xff]
      %v296 = vld [vmem:[%s255 + $0xe8] sm:$0xff]
      %v297 = vld [vmem:[%s255 + $0xf0] sm:$0xff]
      %v298 = vld [vmem:[%s255 + $0xf8] sm:$0xff]
      %v299 = vld [vmem:[%s255 + $0x100] sm:$0xff]
      %v300 = vld [vmem:[%s255 + $0x108] sm:$0xff]
      %v301 = vld [vmem:[%s255 + $0x110] sm:$0xff]
      %v302 = vld [vmem:[%s255 + $0x118] sm:$0xff]
      %v303 = vld [vmem:[%s255 + $0x120] sm:$0xff]
      %v304 = vld [vmem:[%s255 + $0x128] sm:$0xff]
      %v305 = vld [vmem:[%s255 + $0x130] sm:$0xff]
      %v306 = vld [vmem:[%s255 + $0x138] sm:$0xff]
      %v307 = vld [vmem:[%s255 + $0x140] sm:$0xff]
      %v308 = vld [vmem:[%s255 + $0x148] sm:$0xff]
      %v309 = vld [vmem:[%s255 + $0x150] sm:$0xff]
      %v310 = vld [vmem:[%s255 + $0x158] sm:$0xff]
      %v311 = vld [vmem:[%s255 + $0x160] sm:$0xff]
      %v312 = vld [vmem:[%s255 + $0x168] sm:$0xff]
      %v313 = vld [vmem:[%s255 + $0x170] sm:$0xff]
      %v314 = vld [vmem:[%s255 + $0x178] sm:$0xff]
      %v315 = vld [vmem:[%s255 + $0x180] sm:$0xff]
      %v316 = vld [vmem:[%s255 + $0x188] sm:$0xff]
      %v317 = vld [vmem:[%s255 + $0x190] sm:$0xff]
      %v318 = vld [vmem:[%s255 + $0x198] sm:$0xff]
      %v319 = vld [vmem:[%s255 + $0x1a0] sm:$0xff]
      %v320 = vld [vmem:[%s255 + $0x1a8] sm:$0xff]
      %v321 = vld [vmem:[%s255 + $0x1b0] sm:$0xff]
      %v322 = vld [vmem:[%s255 + $0x1b8] sm:$0xff]
      %v323 = vld [vmem:[%s255 + $0x1c0] sm:$0xff]
      %v324 = vld [vmem:[%s255 + $0x1c8] sm:$0xff]
      %v325 = vld [vmem:[%s255 + $0x1d0] sm:$0xff]
      %v326 = vld [vmem:[%s255 + $0x1d8] sm:$0xff]
      %v327 = vld [vmem:[%s255 + $0x1e0] sm:$0xff]
      %v328 = vld [vmem:[%s255 + $0x1e8] sm:$0xff]
      %v329 = vld [vmem:[%s255 + $0x1f0] sm:$0xff]
      %v330 = vld [vmem:[%s255 + $0x1f8] sm:$0xff]
      %v331 = vld [vmem:[%s1] sm:$0xff]
      %v332 = vld [vmem:[%s1 + $0x8] sm:$0xff]
      %v333 = vld [vmem:[%s1 + $0x10] sm:$0xff]
      %v334 = vld [vmem:[%s1 + $0x18] sm:$0xff]
      %v335 = vld [vmem:[%s1 + $0x20] sm:$0xff]
      %v336 = vld [vmem:[%s1 + $0x28] sm:$0xff]
      %v337 = vld [vmem:[%s1 + $0x30] sm:$0xff]
      %v338 = vld [vmem:[%s1 + $0x38] sm:$0xff]
      %v339 = vld [vmem:[%s1 + $0x40] sm:$0xff]
      %v340 = vld [vmem:[%s1 + $0x48] sm:$0xff]
      %v341 = vld [vmem:[%s1 + $0x50] sm:$0xff]
      %v342 = vld [vmem:[%s1 + $0x58] sm:$0xff]
      %v343 = vld [vmem:[%s1 + $0x60] sm:$0xff]
      %v344 = vld [vmem:[%s1 + $0x68] sm:$0xff]
      %v345 = vld [vmem:[%s1 + $0x70] sm:$0xff]
      %v346 = vld [vmem:[%s1 + $0x78] sm:$0xff]
      %v347 = vld [vmem:[%s1 + $0x80] sm:$0xff]
      %v348 = vld [vmem:[%s1 + $0x88] sm:$0xff]
      %v349 = vld [vmem:[%s2] sm:$0x1]
      %v351 = vperm.slane %v349, 0
      %vm353 = vcmask 130048
      %v355 = vsel %vm353, %v268, 0
      %v358 = vsel %vm353, %v270, 0
      %v361 = vsel %vm353, %v272, 0
      %v364 = vsel %vm353, %v274, 0
      %v367 = vsel %vm353, %v276, 0
      %v370 = vsel %vm353, %v278, 0
      %v373 = vsel %vm353, %v280, 0
      %v376 = vsel %vm353, %v282, 0
      %v379 = vsel %vm353, %v284, 0
      %v382 = vsel %vm353, %v286, 0
      %v385 = vsel %vm353, %v288, 0
      %v388 = vsel %vm353, %v290, 0
      %v391 = vsel %vm353, %v292, 0
      %v394 = vsel %vm353, %v294, 0
      %v397 = vsel %vm353, %v296, 0
      %v400 = vsel %vm353, %v298, 0
      %v403 = vsel %vm353, %v300, 0
      %v406 = vsel %vm353, %v302, 0
      %v409 = vsel %vm353, %v304, 0
      %v412 = vsel %vm353, %v306, 0
      %v415 = vsel %vm353, %v308, 0
      %v418 = vsel %vm353, %v310, 0
      %v421 = vsel %vm353, %v312, 0
      %v424 = vsel %vm353, %v314, 0
      %v427 = vsel %vm353, %v316, 0
      %v430 = vsel %vm353, %v318, 0
      %v433 = vsel %vm353, %v320, 0
      %v436 = vsel %vm353, %v322, 0
      %v439 = vsel %vm353, %v324, 0
      %v442 = vsel %vm353, %v326, 0
      %v445 = vsel %vm353, %v328, 0
      %v448 = vsel %vm353, %v330, 0
      %450 = vmatpush.msra.mxu0 %v346
      %451 = vmatpush.msra.mxu0 %v345
      %452 = vmatpush.msra.mxu0 %v344
      %453 = vmatpush.msra.mxu0 %v343
      %454 = vmatpush.msra.mxu0 %v342
      %455 = vmatpush.msra.mxu0 %v341
      %456 = vmatpush.msra.mxu0 %v340
      %457 = vmatpush.msra.mxu0 %v339
      %458 = vmatpush.msra.mxu0 %v338
      %459 = vmatpush.msra.mxu0 %v337
      %460 = vmatpush.msra.mxu0 %v336
      %461 = vmatpush.msra.mxu0 %v335
      %462 = vmatpush.msra.mxu0 %v334
      %463 = vmatpush.msra.mxu0 %v333
      %464 = vmatpush.msra.mxu0 %v332
      %465 = vmatpush.msra.mxu0 %v331
      %466 = vmatmul.f32.gmra.mxu0 %v267
      %v467 = vpop.f32.mrf.mxu0
      %v468 = vadd.f32 %v351, %v467
      %469 = vmatmul.f32.gmra.mxu0 %v269
      %v470 = vpop.f32.mrf.mxu0
      %v471 = vadd.f32 %v351, %v470
      %472 = vmatmul.f32.gmra.mxu0 %v271
      %v473 = vpop.f32.mrf.mxu0
      %v474 = vadd.f32 %v351, %v473
      %475 = vmatmul.f32.gmra.mxu0 %v273
      %v476 = vpop.f32.mrf.mxu0
      %v477 = vadd.f32 %v351, %v476
      %478 = vmatmul.f32.gmra.mxu0 %v275
      %v479 = vpop.f32.mrf.mxu0
      %v480 = vadd.f32 %v351, %v479
      %481 = vmatmul.f32.gmra.mxu0 %v277
      %v482 = vpop.f32.mrf.mxu0
      %v483 = vadd.f32 %v351, %v482
      %484 = vmatmul.f32.gmra.mxu0 %v279
      %v485 = vpop.f32.mrf.mxu0
      %v486 = vadd.f32 %v351, %v485
      %487 = vmatmul.f32.gmra.mxu0 %v281
      %v488 = vpop.f32.mrf.mxu0
      %v489 = vadd.f32 %v351, %v488
      %490 = vmatmul.f32.gmra.mxu0 %v283
      %v491 = vpop.f32.mrf.mxu0
      %v492 = vadd.f32 %v351, %v491
      %493 = vmatmul.f32.gmra.mxu0 %v285
      %v494 = vpop.f32.mrf.mxu0
      %v495 = vadd.f32 %v351, %v494
      %496 = vmatmul.f32.gmra.mxu0 %v287
      %v497 = vpop.f32.mrf.mxu0
      %v498 = vadd.f32 %v351, %v497
      %499 = vmatmul.f32.gmra.mxu0 %v289
      %v500 = vpop.f32.mrf.mxu0
      %v501 = vadd.f32 %v351, %v500
      %502 = vmatmul.f32.gmra.mxu0 %v291
      %v503 = vpop.f32.mrf.mxu0
      %v504 = vadd.f32 %v351, %v503
      %505 = vmatmul.f32.gmra.mxu0 %v293
      %v506 = vpop.f32.mrf.mxu0
      %v507 = vadd.f32 %v351, %v506
      %508 = vmatmul.f32.gmra.mxu0 %v295
      %v509 = vpop.f32.mrf.mxu0
      %v510 = vadd.f32 %v351, %v509
      %511 = vmatmul.f32.gmra.mxu0 %v297
      %v512 = vpop.f32.mrf.mxu0
      %v513 = vadd.f32 %v351, %v512
      %514 = vmatmul.f32.gmra.mxu0 %v299
      %v515 = vpop.f32.mrf.mxu0
      %v516 = vadd.f32 %v351, %v515
      %517 = vmatmul.f32.gmra.mxu0 %v301
      %v518 = vpop.f32.mrf.mxu0
      %v519 = vadd.f32 %v351, %v518
      %520 = vmatmul.f32.gmra.mxu0 %v303
      %v521 = vpop.f32.mrf.mxu0
      %v522 = vadd.f32 %v351, %v521
      %523 = vmatmul.f32.gmra.mxu0 %v305
      %v524 = vpop.f32.mrf.mxu0
      %v525 = vadd.f32 %v351, %v524
      %526 = vmatmul.f32.gmra.mxu0 %v307
      %v527 = vpop.f32.mrf.mxu0
      %v528 = vadd.f32 %v351, %v527
      %529 = vmatmul.f32.gmra.mxu0 %v309
      %v530 = vpop.f32.mrf.mxu0
      %v531 = vadd.f32 %v351, %v530
      %532 = vmatmul.f32.gmra.mxu0 %v311
      %v533 = vpop.f32.mrf.mxu0
      %v534 = vadd.f32 %v351, %v533
      %535 = vmatmul.f32.gmra.mxu0 %v313
      %v536 = vpop.f32.mrf.mxu0
      %v537 = vadd.f32 %v351, %v536
      %538 = vmatmul.f32.gmra.mxu0 %v315
      %v539 = vpop.f32.mrf.mxu0
      %v540 = vadd.f32 %v351, %v539
      %541 = vmatmul.f32.gmra.mxu0 %v317
      %v542 = vpop.f32.mrf.mxu0
      %v543 = vadd.f32 %v351, %v542
      %544 = vmatmul.f32.gmra.mxu0 %v319
      %v545 = vpop.f32.mrf.mxu0
      %v546 = vadd.f32 %v351, %v545
      %547 = vmatmul.f32.gmra.mxu0 %v321
      %v548 = vpop.f32.mrf.mxu0
      %v549 = vadd.f32 %v351, %v548
      %550 = vmatmul.f32.gmra.mxu0 %v323
      %v551 = vpop.f32.mrf.mxu0
      %v552 = vadd.f32 %v351, %v551
      %553 = vmatmul.f32.gmra.mxu0 %v325
      %v554 = vpop.f32.mrf.mxu0
      %v555 = vadd.f32 %v351, %v554
      %556 = vmatmul.f32.gmra.mxu0 %v327
      %v557 = vpop.f32.mrf.mxu0
      %v558 = vadd.f32 %v351, %v557
      %559 = vmatmul.f32.gmra.mxu0 %v329
      %v560 = vpop.f32.mrf.mxu0
      %v561 = vadd.f32 %v351, %v560
      %562 = vdwg.mxu0
      %563 = vmatpush.msra.mxu0 0.0
      %564 = vmatpush.msra.mxu0 0.0
      %565 = vmatpush.msra.mxu0 0.0
      %566 = vmatpush.msra.mxu0 0.0
      %567 = vmatpush.msra.mxu0 0.0
      %568 = vmatpush.msra.mxu0 0.0
      %569 = vmatpush.msra.mxu0 0.0
      %570 = vmatpush.msra.mxu0 0.0
      %571 = vmatpush.msra.mxu0 0.0
      %572 = vmatpush.msra.mxu0 0.0
      %573 = vmatpush.msra.mxu0 0.0
      %574 = vmatpush.msra.mxu0 0.0
      %575 = vmatpush.msra.mxu0 0.0
      %576 = vmatpush.msra.mxu0 0.0
      %577 = vmatpush.msra.mxu0 %v348
      %578 = vmatpush.msra.mxu0 %v347
      %579 = vmatmul.f32.gmra.mxu0 %v355
      %v580 = vpop.f32.mrf.mxu0
      %v581 = vadd.f32 %v468, %v580
      %582 = vmatmul.f32.gmra.mxu0 %v358
      %v583 = vpop.f32.mrf.mxu0
      %v584 = vadd.f32 %v471, %v583
      %585 = vmatmul.f32.gmra.mxu0 %v361
      %v586 = vpop.f32.mrf.mxu0
      %v587 = vadd.f32 %v474, %v586
      %588 = vmatmul.f32.gmra.mxu0 %v364
      %v589 = vpop.f32.mrf.mxu0
      %v590 = vadd.f32 %v477, %v589
      %591 = vmatmul.f32.gmra.mxu0 %v367
      %v592 = vpop.f32.mrf.mxu0
      %v593 = vadd.f32 %v480, %v592
      %594 = vmatmul.f32.gmra.mxu0 %v370
      %v595 = vpop.f32.mrf.mxu0
      %v596 = vadd.f32 %v483, %v595
      %597 = vmatmul.f32.gmra.mxu0 %v373
      %v598 = vpop.f32.mrf.mxu0
      %v599 = vadd.f32 %v486, %v598
      %600 = vmatmul.f32.gmra.mxu0 %v376
      %v601 = vpop.f32.mrf.mxu0
      %v602 = vadd.f32 %v489, %v601
      %603 = vmatmul.f32.gmra.mxu0 %v379
      %v604 = vpop.f32.mrf.mxu0
      %v605 = vadd.f32 %v492, %v604
      %606 = vmatmul.f32.gmra.mxu0 %v382
      %v607 = vpop.f32.mrf.mxu0
      %v608 = vadd.f32 %v495, %v607
      %609 = vmatmul.f32.gmra.mxu0 %v385
      %v610 = vpop.f32.mrf.mxu0
      %v611 = vadd.f32 %v498, %v610
      %612 = vmatmul.f32.gmra.mxu0 %v388
      %v613 = vpop.f32.mrf.mxu0
      %v614 = vadd.f32 %v501, %v613
      %615 = vmatmul.f32.gmra.mxu0 %v391
      %v616 = vpop.f32.mrf.mxu0
      %v617 = vadd.f32 %v504, %v616
      %618 = vmatmul.f32.gmra.mxu0 %v394
      %v619 = vpop.f32.mrf.mxu0
      %v620 = vadd.f32 %v507, %v619
      %621 = vmatmul.f32.gmra.mxu0 %v397
      %v622 = vpop.f32.mrf.mxu0
      %v623 = vadd.f32 %v510, %v622
      %624 = vmatmul.f32.gmra.mxu0 %v400
      %v625 = vpop.f32.mrf.mxu0
      %v626 = vadd.f32 %v513, %v625
      %627 = vmatmul.f32.gmra.mxu0 %v403
      %v628 = vpop.f32.mrf.mxu0
      %v629 = vadd.f32 %v516, %v628
      %630 = vmatmul.f32.gmra.mxu0 %v406
      %v631 = vpop.f32.mrf.mxu0
      %v632 = vadd.f32 %v519, %v631
      %633 = vmatmul.f32.gmra.mxu0 %v409
      %v634 = vpop.f32.mrf.mxu0
      %v635 = vadd.f32 %v522, %v634
      %636 = vmatmul.f32.gmra.mxu0 %v412
      %v637 = vpop.f32.mrf.mxu0
      %v638 = vadd.f32 %v525, %v637
      %639 = vmatmul.f32.gmra.mxu0 %v415
      %v640 = vpop.f32.mrf.mxu0
      %v641 = vadd.f32 %v528, %v640
      %642 = vmatmul.f32.gmra.mxu0 %v418
      %v643 = vpop.f32.mrf.mxu0
      %v644 = vadd.f32 %v531, %v643
      %645 = vmatmul.f32.gmra.mxu0 %v421
      %v646 = vpop.f32.mrf.mxu0
      %v647 = vadd.f32 %v534, %v646
      %648 = vmatmul.f32.gmra.mxu0 %v424
      %v649 = vpop.f32.mrf.mxu0
      %v650 = vadd.f32 %v537, %v649
      %651 = vmatmul.f32.gmra.mxu0 %v427
      %v652 = vpop.f32.mrf.mxu0
      %v653 = vadd.f32 %v540, %v652
      %654 = vmatmul.f32.gmra.mxu0 %v430
      %v655 = vpop.f32.mrf.mxu0
      %v656 = vadd.f32 %v543, %v655
      %657 = vmatmul.f32.gmra.mxu0 %v433
      %v658 = vpop.f32.mrf.mxu0
      %v659 = vadd.f32 %v546, %v658
      %660 = vmatmul.f32.gmra.mxu0 %v436
      %v661 = vpop.f32.mrf.mxu0
      %v662 = vadd.f32 %v549, %v661
      %663 = vmatmul.f32.gmra.mxu0 %v439
      %v664 = vpop.f32.mrf.mxu0
      %v665 = vadd.f32 %v552, %v664
      %666 = vmatmul.f32.gmra.mxu0 %v442
      %v667 = vpop.f32.mrf.mxu0
      %v668 = vadd.f32 %v555, %v667
      %669 = vmatmul.f32.gmra.mxu0 %v445
      %v670 = vpop.f32.mrf.mxu0
      %v671 = vadd.f32 %v558, %v670
      %672 = vmatmul.f32.gmra.mxu0 %v448
      %v673 = vpop.f32.mrf.mxu0
      %v674 = vadd.f32 %v561, %v673
      %675 = vdwg.mxu0
      %v676 = vmax.f32 %v581, 0.0
      %v677 = vmax.f32 %v584, 0.0
      %v678 = vmax.f32 %v587, 0.0
      %v679 = vmax.f32 %v590, 0.0
      %v680 = vmax.f32 %v593, 0.0
      %v681 = vmax.f32 %v596, 0.0
      %v682 = vmax.f32 %v599, 0.0
      %v683 = vmax.f32 %v602, 0.0
      %v684 = vmax.f32 %v605, 0.0
      %v685 = vmax.f32 %v608, 0.0
      %v686 = vmax.f32 %v611, 0.0
      %v687 = vmax.f32 %v614, 0.0
      %v688 = vmax.f32 %v617, 0.0
      %v689 = vmax.f32 %v620, 0.0
      %v690 = vmax.f32 %v623, 0.0
      %v691 = vmax.f32 %v626, 0.0
      %v692 = vmax.f32 %v629, 0.0
      %v693 = vmax.f32 %v632, 0.0
      %v694 = vmax.f32 %v635, 0.0
      %v695 = vmax.f32 %v638, 0.0
      %v696 = vmax.f32 %v641, 0.0
      %v697 = vmax.f32 %v644, 0.0
      %v698 = vmax.f32 %v647, 0.0
      %v699 = vmax.f32 %v650, 0.0
      %v700 = vmax.f32 %v653, 0.0
      %v701 = vmax.f32 %v656, 0.0
      %v702 = vmax.f32 %v659, 0.0
      %v703 = vmax.f32 %v662, 0.0
      %v704 = vmax.f32 %v665, 0.0
      %v705 = vmax.f32 %v668, 0.0
      %v706 = vmax.f32 %v671, 0.0
      %v707 = vmax.f32 %v674, 0.0
      %v708 = vmax.f32 %v676, %v680
      %v709 = vmax.f32 %v677, %v681
      %v710 = vmax.f32 %v678, %v682
      %v711 = vmax.f32 %v679, %v683
      %v712 = vmax.f32 %v684, %v688
      %v713 = vmax.f32 %v685, %v689
      %v714 = vmax.f32 %v686, %v690
      %v715 = vmax.f32 %v687, %v691
      %v716 = vmax.f32 %v692, %v696
      %v717 = vmax.f32 %v693, %v697
      %v718 = vmax.f32 %v694, %v698
      %v719 = vmax.f32 %v695, %v699
      %v720 = vmax.f32 %v700, %v704
      %v721 = vmax.f32 %v701, %v705
      %v722 = vmax.f32 %v702, %v706
      %v723 = vmax.f32 %v703, %v707
      %v724 = vld [vmem:[%s3] sm:$0xff]
      %v725 = vld [vmem:[%s3 + $0x8] sm:$0xff]
      %v726 = vld [vmem:[%s3 + $0x10] sm:$0xff]
      %v727 = vld [vmem:[%s3 + $0x18] sm:$0xff]
      %v728 = vld [vmem:[%s3 + $0x20] sm:$0xff]
      %v729 = vld [vmem:[%s3 + $0x28] sm:$0xff]
      %v730 = vld [vmem:[%s3 + $0x30] sm:$0xff]
      %v731 = vld [vmem:[%s3 + $0x38] sm:$0xff]
      %732 = vmatpush.msra.mxu0 %v723
      %733 = vmatpush.msra.mxu0 %v722
      %734 = vmatpush.msra.mxu0 %v721
      %735 = vmatpush.msra.mxu0 %v720
      %736 = vmatpush.msra.mxu0 %v719
      %737 = vmatpush.msra.mxu0 %v718
      %738 = vmatpush.msra.mxu0 %v717
      %739 = vmatpush.msra.mxu0 %v716
      %740 = vmatpush.msra.mxu0 %v715
      %741 = vmatpush.msra.mxu0 %v714
      %742 = vmatpush.msra.mxu0 %v713
      %743 = vmatpush.msra.mxu0 %v712
      %744 = vmatpush.msra.mxu0 %v711
      %745 = vmatpush.msra.mxu0 %v710
      %746 = vmatpush.msra.mxu0 %v709
      %747 = vmatpush.msra.mxu0 %v708
      %748 = vmatmul.f32.gmra.mxu0 %v724
      %v749 = vpop.f32.mrf.mxu0
      %v750 = vadd.f32 0.0, %v749
      %751 = vmatmul.f32.gmra.mxu0 %v725
      %v752 = vpop.f32.mrf.mxu0
      %v753 = vadd.f32 0.0, %v752
      %754 = vmatmul.f32.gmra.mxu0 %v726
      %v755 = vpop.f32.mrf.mxu0
      %v756 = vadd.f32 0.0, %v755
      %757 = vmatmul.f32.gmra.mxu0 %v727
      %v758 = vpop.f32.mrf.mxu0
      %v759 = vadd.f32 0.0, %v758
      %760 = vmatmul.f32.gmra.mxu0 %v728
      %v761 = vpop.f32.mrf.mxu0
      %v762 = vadd.f32 0.0, %v761
      %763 = vmatmul.f32.gmra.mxu0 %v729
      %v764 = vpop.f32.mrf.mxu0
      %v765 = vadd.f32 0.0, %v764
      %766 = vmatmul.f32.gmra.mxu0 %v730
      %v767 = vpop.f32.mrf.mxu0
      %v768 = vadd.f32 0.0, %v767
      %769 = vmatmul.f32.gmra.mxu0 %v731
      %v770 = vpop.f32.mrf.mxu0
      %v771 = vadd.f32 0.0, %v770
      %772 = vdwg.mxu0
      %v773 = vld [vmem:[%s4] sm:$0xff]
      %v774 = vld [vmem:[%s4 + $0x8] sm:$0xff]
      %v775 = vld [vmem:[%s4 + $0x10] sm:$0xff]
      %v776 = vld [vmem:[%s4 + $0x18] sm:$0xff]
      %v777 = vld [vmem:[%s4 + $0x20] sm:$0xff]
      %v778 = vld [vmem:[%s4 + $0x28] sm:$0xff]
      %v779 = vld [vmem:[%s4 + $0x30] sm:$0xff]
      %v780 = vld [vmem:[%s4 + $0x38] sm:$0xff]
      %781 = vmatpush.msra.mxu0 %v723
      %782 = vmatpush.msra.mxu0 %v722
      %783 = vmatpush.msra.mxu0 %v721
      %784 = vmatpush.msra.mxu0 %v720
      %785 = vmatpush.msra.mxu0 %v719
      %786 = vmatpush.msra.mxu0 %v718
      %787 = vmatpush.msra.mxu0 %v717
      %788 = vmatpush.msra.mxu0 %v716
      %789 = vmatpush.msra.mxu0 %v715
      %790 = vmatpush.msra.mxu0 %v714
      %791 = vmatpush.msra.mxu0 %v713
      %792 = vmatpush.msra.mxu0 %v712
      %793 = vmatpush.msra.mxu0 %v711
      %794 = vmatpush.msra.mxu0 %v710
      %795 = vmatpush.msra.mxu0 %v709
      %796 = vmatpush.msra.mxu0 %v708
      %797 = vmatmul.f32.gmra.mxu0 %v773
      %v798 = vpop.f32.mrf.mxu0
      %v799 = vadd.f32 0.0, %v798
      %800 = vmatmul.f32.gmra.mxu0 %v774
      %v801 = vpop.f32.mrf.mxu0
      %v802 = vadd.f32 0.0, %v801
      %803 = vmatmul.f32.gmra.mxu0 %v775
      %v804 = vpop.f32.mrf.mxu0
      %v805 = vadd.f32 0.0, %v804
      %806 = vmatmul.f32.gmra.mxu0 %v776
      %v807 = vpop.f32.mrf.mxu0
      %v808 = vadd.f32 0.0, %v807
      %809 = vmatmul.f32.gmra.mxu0 %v777
      %v810 = vpop.f32.mrf.mxu0
      %v811 = vadd.f32 0.0, %v810
      %812 = vmatmul.f32.gmra.mxu0 %v778
      %v813 = vpop.f32.mrf.mxu0
      %v814 = vadd.f32 0.0, %v813
      %815 = vmatmul.f32.gmra.mxu0 %v779
      %v816 = vpop.f32.mrf.mxu0
      %v817 = vadd.f32 0.0, %v816
      %818 = vmatmul.f32.gmra.mxu0 %v780
      %v819 = vpop.f32.mrf.mxu0
      %v820 = vadd.f32 0.0, %v819
      %821 = vdwg.mxu0
      %v822 = vmax.f32 %v750, %v799
      %v823 = vmax.f32 %v753, %v802
      %v824 = vmax.f32 %v756, %v805
      %v825 = vmax.f32 %v759, %v808
      %v826 = vmax.f32 %v762, %v811
      %v827 = vmax.f32 %v765, %v814
      %v828 = vmax.f32 %v768, %v817
      %v829 = vmax.f32 %v771, %v820
      %vm830 = vcmask 261120
      %831 = vst.msk [vmem:[%s265] sm:$0xff] %vm830, %v822
      %832 = vst.msk [vmem:[%s265 + $0x8] sm:$0xff] %vm830, %v823
      %833 = vst.msk [vmem:[%s265 + $0x10] sm:$0xff] %vm830, %v824
      %834 = vst.msk [vmem:[%s265 + $0x18] sm:$0xff] %vm830, %v825
      %835 = vst.msk [vmem:[%s265 + $0x20] sm:$0xff] %vm830, %v826
      %836 = vst.msk [vmem:[%s265 + $0x28] sm:$0xff] %vm830, %v827
      %837 = vst.msk [vmem:[%s265 + $0x30] sm:$0xff] %vm830, %v828
      %838 = vst.msk [vmem:[%s265 + $0x38] sm:$0xff] %vm830, %v829
      %s839 = smul.u32 8, %s21
      %p840 = scmp.lt.s32.totalorder %s20, 1
      %s841 = scalar_select %p840, %s20, 1
      %p842 = scmp.lt.s32.totalorder %s839, 31
      %s843 = scalar_select %p842, %s839, 31
      %s844 = smul.addr %s841, 32
      %s845 = sadd.s32 %s843, %s844
      %s846 = smul.addr %s845, 8
      %s847 = scalar_lea.vmem %s5, %s846
      // Predicated region
      $region41: #{cnn_forward.4} parent=39 // pred_check
        %p848 = pneg %p160
      $region42: #{cnn_forward.4} parent=39 // pred_check_branch
        %850 = sbr.rel (%p848) target = $region44
      $region43: #{cnn_forward.4} parent=39 // pred_region
        %s851 = smul.u32 8, %s21
      $region44: #{cnn_forward.4} parent=39 // pred_fallthru
        _
    $region40: #{cnn_forward.4} parent=5 // pred_fallthru
      _
    %p852 = scmp.le.s32.totalorder 2, %s11
    // Predicated region
    $region45: #{cnn_forward.4} parent=5 // pred_check
      %p853 = pneg %p852
    $region46: #{cnn_forward.4} parent=5 // pred_check_branch
      %855 = sbr.rel (%p853) target = $region48
    $region47: #{cnn_forward.4} parent=5 // pred_region
      %s856 = ssub.s32 %s11, 2
      // Predicated region
      $region49: #{cnn_forward.4} parent=47 // pred_check
        %p857 = pneg %p166
      $region50: #{cnn_forward.4} parent=47 // pred_check_branch
        %859 = sbr.rel (%p857) target = $region52
      $region51: #{cnn_forward.4} parent=47 // pred_region
        %s860 = smul.u32 8, %s23
        %p861 = scmp.lt.s32.totalorder %s22, 1
        %s862 = scalar_select %p861, %s22, 1
        %p863 = scmp.lt.s32.totalorder %s860, 31
        %s864 = scalar_select %p863, %s860, 31
        %s865 = smul.addr %s862, 32
        %s866 = sadd.s32 %s864, %s865
        %s867 = smul.addr %s866, 8
        %s868 = scalar_lea.vmem %s5, %s867
      $region52: #{cnn_forward.4} parent=47 // pred_fallthru
        _
    $region48: #{cnn_forward.4} parent=5 // pred_fallthru
      _
  $region6: #{cnn_forward.4} parent=0 // loop_footer
    %s15 = sadd.s32 1, %s11
  $region7: #{cnn_forward.4} parent=0 // loop_footer_branch
    %10 = sbr.rel target = $region3
  $region8: #{cnn_forward.4} parent=0 // loop_exit
    _

// kernel: cnn_forward.5
$region0: #{cnn_forward.5}
  #allocation0 [shape = 'u32[]', space=smem, size = 0x4, offset = 0x4, fixed_abs, tag = 'smem constant byte address 0x4 - core index']
  #allocation1 [shape = 'u32[72,128]{1,0:T(1,128)}', space=vmem, size = 0x9000, scoped, tag = 'internal scratch']
  #allocation2 [shape = 'f32[2,256]{1,0:T(2,128)}', space=vmem, size = 0x800, scoped, tag = 'scratch operand']
  %s0 = inlined_call_operand.vmem [shape: f32[2,8192], index: 0, kind: input, shape index: {}]
  %s1 = inlined_call_operand.vmem [shape: bf16[8192,512], index: 1, kind: input, shape index: {}]
  %s2 = inlined_call_operand.vmem [shape: f32[1,512], index: 2, kind: input, shape index: {}]
  %s3 = inlined_call_operand.vmem [shape: f32[512,10], index: 3, kind: input, shape index: {}]
  %s4 = inlined_call_operand.vmem [shape: f32[2,2,10], index: 4, kind: output, shape index: {}]
  %s5 = sld [smem:[#allocation0]]
  $region109: #{cnn_forward.5} parent=0
    _
  %s7 = ssub.s32 1, %s5
  %s8 = scalar_select 0, %s7, %s5
  $region1: #{cnn_forward.5} parent=0
    #allocation3 [shape = 'u8[2097152]{0}', space=vmem, size = 0x200000, scoped, tag = 'input window, operand 1']
    loop: start=0, step=1, limit=10
    $region2: #{cnn_forward.5} parent=1 // loop_pre_header
      _
    $region3: #{cnn_forward.5} parent=1 // loop_header
      %s10 = sphi 0, %s14
      %p11 = scmp.ge.s32.totalorder %s10, 10
      %s17 = sphi 0, %s29
      %s18 = sphi 0, %s25
      %s19 = sphi 0, %s17
      %s20 = sphi 0, %s18
      %s21 = sphi 0, %s19
      %s22 = sphi 0, %s20
      %s32 = sphi 0, %s34
      %s35 = sphi 0, %s32
      %s36 = sphi 0, %s35
      %s52 = sphi 0, %s36
      %s60 = sphi 0, %s62
      %s63 = sphi 0, %s60
      %s64 = sphi 0, %s63
      %s80 = sphi 0, %s64
      %s86 = sphi 0, %s88
      %s89 = sphi 0, %s86
      %s90 = sphi 0, %s89
      %s106 = sphi 0, %s90
      %s112 = sphi 0, %s114
      %s115 = sphi 0, %s112
      %s116 = sphi 0, %s115
      %s132 = sphi 0, %s116
      %s138 = sphi 0, %s140
      %s141 = sphi 0, %s138
      %s142 = sphi 0, %s141
      %s158 = sphi 0, %s142
    $region4: #{cnn_forward.5} parent=1 // loop_header_branch
      %13 = sbr.rel (%p11) target = $region8
    $region5: #{cnn_forward.5} parent=1 // loop_body
      %s15 = ssub.s32 %s10, 1
      %s16 = ssub.s32 %s10, 2
      %s23 = sadd.s32 1, %s18
      %p24 = scmp.ge.s32.totalorder %s23, 4
      %s25 = scalar_select %p24, 0, %s23
      %s26 = sadd.s32 1, %s17
      %s27 = scalar_select %p24, %s26, %s17
      %p28 = scmp.ge.s32.totalorder %s27, 2
      %s29 = scalar_select %p28, 0, %s27
      %s30 = ssub.s32 %s18, %s25
      %p31 = scmp.eq.s32.totalorder %s30, 0
      %s33 = sadd.s32 %s32, 1
      %s34 = scalar_select %p31, %s32, %s33
      %p37 = pneg %p31
      %p38 = scmp.eq.s32.totalorder %s10, 7
      %p39 = por %p37, %p38
      %p40 = scmp.ne.s32.totalorder %s32, %s35
      %p41 = scmp.eq.s32.totalorder %s10, 0
      %p42 = por %p40, %p41
      %p43 = scmp.ne.s32.totalorder %s32, %s35
      %p44 = scmp.eq.s32.totalorder %s15, 7
      %p45 = por %p43, %p44
      %p46 = scmp.ne.s32.totalorder %s35, %s36
      %p47 = scmp.eq.s32.totalorder %s15, 0
      %p48 = por %p46, %p47
      %p49 = scmp.ne.s32.totalorder %s35, %s36
      %p50 = scmp.eq.s32.totalorder %s16, 7
      %p51 = por %p49, %p50
      %p53 = scmp.ne.s32.totalorder %s36, %s52
      %p54 = scmp.eq.s32.totalorder %s16, 0
      %p55 = por %p53, %p54
      %s56 = ssub.s32 %s18, %s25
      %s57 = ssub.s32 %s17, %s29
      %s58 = sor.u32 %s56, %s57
      %p59 = scmp.eq.s32.totalorder %s58, 0
      %s61 = sadd.s32 %s60, 1
      %s62 = scalar_select %p59, %s60, %s61
      %p65 = pneg %p59
      %p66 = scmp.eq.s32.totalorder %s10, 7
      %p67 = por %p65, %p66
      %p68 = scmp.ne.s32.totalorder %s60, %s63
      %p69 = scmp.eq.s32.totalorder %s10, 0
      %p70 = por %p68, %p69
      %p71 = scmp.ne.s32.totalorder %s60, %s63
      %p72 = scmp.eq.s32.totalorder %s15, 7
      %p73 = por %p71, %p72
      %p74 = scmp.ne.s32.totalorder %s63, %s64
      %p75 = scmp.eq.s32.totalorder %s15, 0
      %p76 = por %p74, %p75
      %p77 = scmp.ne.s32.totalorder %s63, %s64
      %p78 = scmp.eq.s32.totalorder %s16, 7
      %p79 = por %p77, %p78
      %p81 = scmp.ne.s32.totalorder %s64, %s80
      %p82 = scmp.eq.s32.totalorder %s16, 0
      %p83 = por %p81, %p82
      %s84 = ssub.s32 %s17, %s29
      %p85 = scmp.eq.s32.totalorder %s84, 0
      %s87 = sadd.s32 %s86, 1
      %s88 = scalar_select %p85, %s86, %s87
      %p91 = pneg %p85
      %p92 = scmp.eq.s32.totalorder %s10, 7
      %p93 = por %p91, %p92
      %p94 = scmp.ne.s32.totalorder %s86, %s89
      %p95 = scmp.eq.s32.totalorder %s10, 0
      %p96 = por %p94, %p95
      %p97 = scmp.ne.s32.totalorder %s86, %s89
      %p98 = scmp.eq.s32.totalorder %s15, 7
      %p99 = por %p97, %p98
      %p100 = scmp.ne.s32.totalorder %s89, %s90
      %p101 = scmp.eq.s32.totalorder %s15, 0
      %p102 = por %p100, %p101
      %p103 = scmp.ne.s32.totalorder %s89, %s90
      %p104 = scmp.eq.s32.totalorder %s16, 7
      %p105 = por %p103, %p104
      %p107 = scmp.ne.s32.totalorder %s90, %s106
      %p108 = scmp.eq.s32.totalorder %s16, 0
      %p109 = por %p107, %p108
      %s110 = ssub.s32 %s17, %s29
      %p111 = scmp.eq.s32.totalorder %s110, 0
      %s113 = sadd.s32 %s112, 1
      %s114 = scalar_select %p111, %s112, %s113
      %p117 = pneg %p111
      %p118 = scmp.eq.s32.totalorder %s10, 7
      %p119 = por %p117, %p118
      %p120 = scmp.ne.s32.totalorder %s112, %s115
      %p121 = scmp.eq.s32.totalorder %s10, 0
      %p122 = por %p120, %p121
      %p123 = scmp.ne.s32.totalorder %s112, %s115
      %p124 = scmp.eq.s32.totalorder %s15, 7
      %p125 = por %p123, %p124
      %p126 = scmp.ne.s32.totalorder %s115, %s116
      %p127 = scmp.eq.s32.totalorder %s15, 0
      %p128 = por %p126, %p127
      %p129 = scmp.ne.s32.totalorder %s115, %s116
      %p130 = scmp.eq.s32.totalorder %s16, 7
      %p131 = por %p129, %p130
      %p133 = scmp.ne.s32.totalorder %s116, %s132
      %p134 = scmp.eq.s32.totalorder %s16, 0
      %p135 = por %p133, %p134
      %s136 = ssub.s32 %s17, %s29
      %p137 = scmp.eq.s32.totalorder %s136, 0
      %s139 = sadd.s32 %s138, 1
      %s140 = scalar_select %p137, %s138, %s139
      %p143 = pneg %p137
      %p144 = scmp.eq.s32.totalorder %s10, 7
      %p145 = por %p143, %p144
      %p146 = scmp.ne.s32.totalorder %s138, %s141
      %p147 = scmp.eq.s32.totalorder %s10, 0
      %p148 = por %p146, %p147
      %p149 = scmp.ne.s32.totalorder %s138, %s141
      %p150 = scmp.eq.s32.totalorder %s15, 7
      %p151 = por %p149, %p150
      %p152 = scmp.ne.s32.totalorder %s141, %s142
      %p153 = scmp.eq.s32.totalorder %s15, 0
      %p154 = por %p152, %p153
      %p155 = scmp.ne.s32.totalorder %s141, %s142
      %p156 = scmp.eq.s32.totalorder %s16, 7
      %p157 = por %p155, %p156
      %p159 = scmp.ne.s32.totalorder %s142, %s158
      %p160 = scmp.eq.s32.totalorder %s16, 0
      %p161 = por %p159, %p160
      %p162 = scmp.le.s32.totalorder 1, %s10
      %p163 = scmp.lt.s32.totalorder %s10, 9
      %p164 = pnand %p162, %p163
      %p165 = pneg %p164
      // Predicated region
      $region9: #{cnn_forward.5} parent=5 // pred_check
        _
      $region10: #{cnn_forward.5} parent=5 // pred_check_branch
        %167 = sbr.rel (%p164) target = $region12
      $region11: #{cnn_forward.5} parent=5 // pred_region
        %s168 = ssub.s32 %s10, 1
      $region12: #{cnn_forward.5} parent=5 // pred_fallthru
        _
      %p169 = scmp.lt.s32.totalorder %s10, 8
      // Predicated region
      $region13: #{cnn_forward.5} parent=5 // pred_check
        %p170 = pneg %p169
      $region14: #{cnn_forward.5} parent=5 // pred_check_branch
        %172 = sbr.rel (%p170) target = $region16
      $region15: #{cnn_forward.5} parent=5 // pred_region
        // Predicated region
        $region17: #{cnn_forward.5} parent=15 // pred_check
          %p173 = pneg %p42
        $region18: #{cnn_forward.5} parent=15 // pred_check_branch
          %175 = sbr.rel (%p173) target = $region20
        $region19: #{cnn_forward.5} parent=15 // pred_region
          %s176 = smul.u32 16, %s18
          %p177 = scmp.lt.s32.totalorder %s176, 63
          %s178 = scalar_select %p177, %s176, 63
          %s179 = smul.addr %s178, 2
          %s180 = scalar_lea.vmem %s0, %s179
          %s181 = smul.u32 16, %s18
        $region20: #{cnn_forward.5} parent=15 // pred_fallthru
          _
        // Predicated region
        $region21: #{cnn_forward.5} parent=15 // pred_check
          %p182 = pneg %p70
        $region22: #{cnn_forward.5} parent=15 // pred_check_branch
          %184 = sbr.rel (%p182) target = $region24
        $region23: #{cnn_forward.5} parent=15 // pred_region
          %s185 = sand.u32 %s60, 1
          %s186 = sand.u32 %s60, 1
          %s187 = smul.addr %s186, 2048
          %s188 = scalar_lea.vmem [#allocation3], %s187
          %s189 = smul.u32 256, %s18
          %s190 = smul.u32 2, %s17
          %s191 = smul.addr %s189, 4
          %s192 = sadd.s32 %s190, %s191
          %s193 = smul.addr %s192, 4
          %s194 = scalar_lea.vmem %s1, %s193
          // Predicated region
          $region25: #{cnn_forward.5} parent=23 // pred_check
            _
          $region26: #{cnn_forward.5} parent=23 // pred_check_branch
            %196 = sbr.rel (0) target = $region28
          $region27: #{cnn_forward.5} parent=23 // pred_region
            // Predicated region
            $region29: #{cnn_forward.5} parent=27 // pred_check
              _
            $region30: #{cnn_forward.5} parent=27 // pred_check_branch
              %198 = sbr.rel (0) target = $region32
            $region31: #{cnn_forward.5} parent=27 // pred_region
              // Predicated region
              $region44: #{cnn_forward.5} parent=31 // pred_check
                _
              $region45: #{cnn_forward.5} parent=31 // pred_check_branch
                %724 = sbr.rel (0) target = $region47
              $region46: #{cnn_forward.5} parent=31 // pred_region
                loop: start=0, step=1, limit=1
                $region48: #{cnn_forward.5} parent=46 // loop_pre_header
                  _
                $region49: #{cnn_forward.5} parent=46 // loop_header
                  %s726 = sphi 0, %s730
                  %p727 = scmp.ge.s32.totalorder %s726, 1
                  %s731 = sphi 0, %s1248
                  %s732 = sphi %s194, %s1251
                  %s733 = sphi %s188, %s1252
                $region50: #{cnn_forward.5} parent=46 // loop_header_branch
                  %729 = sbr.rel (%p727) target = $region54
                $region51: #{cnn_forward.5} parent=46 // loop_body
                  %v734 = vld [vmem:[%s732] sm:$0xff]
                  %735 = vst [vmem:[%s733] sm:$0xff] %v734
                  %v736 = vld [vmem:[%s732 + $0x10] sm:$0xff]
                  %737 = vst [vmem:[%s733 + $0x8] sm:$0xff] %v736
                  %v738 = vld [vmem:[%s732 + $0x20] sm:$0xff]
                  %739 = vst [vmem:[%s733 + $0x10] sm:$0xff] %v738
                  %v740 = vld [vmem:[%s732 + $0x30] sm:$0xff]
                  %741 = vst [vmem:[%s733 + $0x18] sm:$0xff] %v740
                  %v742 = vld [vmem:[%s732 + $0x40] sm:$0xff]
                  %743 = vst [vmem:[%s733 + $0x20] sm:$0xff] %v742
                  %v744 = vld [vmem:[%s732 + $0x50] sm:$0xff]
                  %745 = vst [vmem:[%s733 + $0x28] sm:$0xff] %v744
                  %v746 = vld [vmem:[%s732 + $0x60] sm:$0xff]
                  %747 = vst [vmem:[%s733 + $0x30] sm:$0xff] %v746
                  %v748 = vld [vmem:[%s732 + $0x70] sm:$0xff]
                  %749 = vst [vmem:[%s733 + $0x38] sm:$0xff] %v748
                  %v750 = vld [vmem:[%s732 + $0x80] sm:$0xff]
                  %751 = vst [vmem:[%s733 + $0x40] sm:$0xff] %v750
                  %v752 = vld [vmem:[%s732 + $0x90] sm:$0xff]
                  %753 = vst [vmem:[%s733 + $0x48] sm:$0xff] %v752
                  %v754 = vld [vmem:[%s732 + $0xa0] sm:$0xff]
                  %755 = vst [vmem:[%s733 + $0x50] sm:$0xff] %v754
                  %v756 = vld [vmem:[%s732 + $0xb0] sm:$0xff]
                  %757 = vst [vmem:[%s733 + $0x58] sm:$0xff] %v756
                  %v758 = vld [vmem:[%s732 + $0xc0] sm:$0xff]
                  %759 = vst [vmem:[%s733 + $0x60] sm:$0xff] %v758
                  %v760 = vld [vmem:[%s732 + $0xd0] sm:$0xff]
                  %761 = vst [vmem:[%s733 + $0x68] sm:$0xff] %v760
                  %v762 = vld [vmem:[%s732 + $0xe0] sm:$0xff]
                  %763 = vst [vmem:[%s733 + $0x70] sm:$0xff] %v762
                  %v764 = vld [vmem:[%s732 + $0xf0] sm:$0xff]
                  %765 = vst [vmem:[%s733 + $0x78] sm:$0xff] %v764
                  %v766 = vld [vmem:[%s732 + $0x100] sm:$0xff]
                  %767 = vst [vmem:[%s733 + $0x80] sm:$0xff] %v766
                  %v768 = vld [vmem:[%s732 + $0x110] sm:$0xff]
                  %769 = vst [vmem:[%s733 + $0x88] sm:$0xff] %v768
                  %v770 = vld [vmem:[%s732 + $0x120] sm:$0xff]
                  %771 = vst [vmem:[%s733 + $0x90] sm:$0xff] %v770
                  %v772 = vld [vmem:[%s732 + $0x130] sm:$0xff]
                  %773 = vst [vmem:[%s733 + $0x98] sm:$0xff] %v772
                  %v774 = vld [vmem:[%s732 + $0x140] sm:$0xff]
                  %775 = vst [vmem:[%s733 + $0xa0] sm:$0xff] %v774
                  %v776 = vld [vmem:[%s732 + $0x150] sm:$0xff]
                  %777 = vst [vmem:[%s733 + $0xa8] sm:$0xff] %v776
                  %v778 = vld [vmem:[%s732 + $0x160] sm:$0xff]
                  %779 = vst [vmem:[%s733 + $0xb0] sm:$0xff] %v778
                  %v780 = vld [vmem:[%s732 + $0x170] sm:$0xff]
                  %781 = vst [vmem:[%s733 + $0xb8] sm:$0xff] %v780
                  %v782 = vld [vmem:[%s732 + $0x180] sm:$0xff]
                  %783 = vst [vmem:[%s733 + $0xc0] sm:$0xff] %v782
                  %v784 = vld [vmem:[%s732 + $0x190] sm:$0xff]
                  %785 = vst [vmem:[%s733 + $0xc8] sm:$0xff] %v784
                  %v786 = vld [vmem:[%s732 + $0x1a0] sm:$0xff]
                  %787 = vst [vmem:[%s733 + $0xd0] sm:$0xff] %v786
                  %v788 = vld [vmem:[%s732 + $0x1b0] sm:$0xff]
                  %789 = vst [vmem:[%s733 + $0xd8] sm:$0xff] %v788
                  %v790 = vld [vmem:[%s732 + $0x1c0] sm:$0xff]
                  %791 = vst [vmem:[%s733 + $0xe0] sm:$0xff] %v790
                  %v792 = vld [vmem:[%s732 + $0x1d0] sm:$0xff]
                  %793 = vst [vmem:[%s733 + $0xe8] sm:$0xff] %v792
                  %v794 = vld [vmem:[%s732 + $0x1e0] sm:$0xff]
                  %795 = vst [vmem:[%s733 + $0xf0] sm:$0xff] %v794
                  %v796 = vld [vmem:[%s732 + $0x1f0] sm:$0xff]
                  %797 = vst [vmem:[%s733 + $0xf8] sm:$0xff] %v796
                  %v798 = vld [vmem:[%s732 + $0x200] sm:$0xff]
                  %799 = vst [vmem:[%s733 + $0x100] sm:$0xff] %v798
                  %v800 = vld [vmem:[%s732 + $0x210] sm:$0xff]
                  %801 = vst [vmem:[%s733 + $0x108] sm:$0xff] %v800
                  %v802 = vld [vmem:[%s732 + $0x220] sm:$0xff]
                  %803 = vst [vmem:[%s733 + $0x110] sm:$0xff] %v802
                  %v804 = vld [vmem:[%s732 + $0x230] sm:$0xff]
                  %805 = vst [vmem:[%s733 + $0x118] sm:$0xff] %v804
                  %v806 = vld [vmem:[%s732 + $0x240] sm:$0xff]
                  %807 = vst [vmem:[%s733 + $0x120] sm:$0xff] %v806
                  %v808 = vld [vmem:[%s732 + $0x250] sm:$0xff]
                  %809 = vst [vmem:[%s733 + $0x128] sm:$0xff] %v808
                  %v810 = vld [vmem:[%s732 + $0x260] sm:$0xff]
                  %811 = vst [vmem:[%s733 + $0x130] sm:$0xff] %v810
                  %v812 = vld [vmem:[%s732 + $0x270] sm:$0xff]
                  %813 = vst [vmem:[%s733 + $0x138] sm:$0xff] %v812
                  %v814 = vld [vmem:[%s732 + $0x280] sm:$0xff]
                  %815 = vst [vmem:[%s733 + $0x140] sm:$0xff] %v814
                  %v816 = vld [vmem:[%s732 + $0x290] sm:$0xff]
                  %817 = vst [vmem:[%s733 + $0x148] sm:$0xff] %v816
                  %v818 = vld [vmem:[%s732 + $0x2a0] sm:$0xff]
                  %819 = vst [vmem:[%s733 + $0x150] sm:$0xff] %v818
                  %v820 = vld [vmem:[%s732 + $0x2b0] sm:$0xff]
                  %821 = vst [vmem:[%s733 + $0x158] sm:$0xff] %v820
                  %v822 = vld [vmem:[%s732 + $0x2c0] sm:$0xff]
                  %823 = vst [vmem:[%s733 + $0x160] sm:$0xff] %v822
                  %v824 = vld [vmem:[%s732 + $0x2d0] sm:$0xff]
                  %825 = vst [vmem:[%s733 + $0x168] sm:$0xff] %v824
                  %v826 = vld [vmem:[%s732 + $0x2e0] sm:$0xff]
                  %827 = vst [vmem:[%s733 + $0x170] sm:$0xff] %v826
                  %v828 = vld [vmem:[%s732 + $0x2f0] sm:$0xff]
                  %829 = vst [vmem:[%s733 + $0x178] sm:$0xff] %v828
                  %v830 = vld [vmem:[%s732 + $0x300] sm:$0xff]
                  %831 = vst [vmem:[%s733 + $0x180] sm:$0xff] %v830
                  %v832 = vld [vmem:[%s732 + $0x310] sm:$0xff]
                  %833 = vst [vmem:[%s733 + $0x188] sm:$0xff] %v832
                  %v834 = vld [vmem:[%s732 + $0x320] sm:$0xff]
                  %835 = vst [vmem:[%s733 + $0x190] sm:$0xff] %v834
                  %v836 = vld [vmem:[%s732 + $0x330] sm:$0xff]
                  %837 = vst [vmem:[%s733 + $0x198] sm:$0xff] %v836
                  %v838 = vld [vmem:[%s732 + $0x340] sm:$0xff]
                  %839 = vst [vmem:[%s733 + $0x1a0] sm:$0xff] %v838
                  %v840 = vld [vmem:[%s732 + $0x350] sm:$0xff]
                  %841 = vst [vmem:[%s733 + $0x1a8] sm:$0xff] %v840
                  %v842 = vld [vmem:[%s732 + $0x360] sm:$0xff]
                  %843 = vst [vmem:[%s733 + $0x1b0] sm:$0xff] %v842
                  %v844 = vld [vmem:[%s732 + $0x370] sm:$0xff]
                  %845 = vst [vmem:[%s733 + $0x1b8] sm:$0xff] %v844
                  %v846 = vld [vmem:[%s732 + $0x380] sm:$0xff]
                  %847 = vst [vmem:[%s733 + $0x1c0] sm:$0xff] %v846
                  %v848 = vld [vmem:[%s732 + $0x390] sm:$0xff]
                  %849 = vst [vmem:[%s733 + $0x1c8] sm:$0xff] %v848
                  %v850 = vld [vmem:[%s732 + $0x3a0] sm:$0xff]
                  %851 = vst [vmem:[%s733 + $0x1d0] sm:$0xff] %v850
                  %v852 = vld [vmem:[%s732 + $0x3b0] sm:$0xff]
                  %853 = vst [vmem:[%s733 + $0x1d8] sm:$0xff] %v852
                  %v854 = vld [vmem:[%s732 + $0x3c0] sm:$0xff]
                  %855 = vst [vmem:[%s733 + $0x1e0] sm:$0xff] %v854
                  %v856 = vld [vmem:[%s732 + $0x3d0] sm:$0xff]
                  %857 = vst [vmem:[%s733 + $0x1e8] sm:$0xff] %v856
                  %v858 = vld [vmem:[%s732 + $0x3e0] sm:$0xff]
                  %859 = vst [vmem:[%s733 + $0x1f0] sm:$0xff] %v858
                  %v860 = vld [vmem:[%s732 + $0x3f0] sm:$0xff]
                  %861 = vst [vmem:[%s733 + $0x1f8] sm:$0xff] %v860
                  %v862 = vld [vmem:[%s732 + $0x400] sm:$0xff]
                  %863 = vst [vmem:[%s733 + $0x200] sm:$0xff] %v862
                  %v864 = vld [vmem:[%s732 + $0x410] sm:$0xff]
                  %865 = vst [vmem:[%s733 + $0x208] sm:$0xff] %v864
                  %v866 = vld [vmem:[%s732 + $0x420] sm:$0xff]
                  %867 = vst [vmem:[%s733 + $0x210] sm:$0xff] %v866
                  %v868 = vld [vmem:[%s732 + $0x430] sm:$0xff]
                  %869 = vst [vmem:[%s733 + $0x218] sm:$0xff] %v868
                  %v870 = vld [vmem:[%s732 + $0x440] sm:$0xff]
                  %871 = vst [vmem:[%s733 + $0x220] sm:$0xff] %v870
                  %v872 = vld [vmem:[%s732 + $0x450] sm:$0xff]
                  %873 = vst [vmem:[%s733 + $0x228] sm:$0xff] %v872
                  %v874 = vld [vmem:[%s732 + $0x460] sm:$0xff]
                  %875 = vst [vmem:[%s733 + $0x230] sm:$0xff] %v874
                  %v876 = vld [vmem:[%s732 + $0x470] sm:$0xff]
                  %877 = vst [vmem:[%s733 + $0x238] sm:$0xff] %v876
                  %v878 = vld [vmem:[%s732 + $0x480] sm:$0xff]
                  %879 = vst [vmem:[%s733 + $0x240] sm:$0xff] %v878
                  %v880 = vld [vmem:[%s732 + $0x490] sm:$0xff]
                  %881 = vst [vmem:[%s733 + $0x248] sm:$0xff] %v880
                  %v882 = vld [vmem:[%s732 + $0x4a0] sm:$0xff]
                  %883 = vst [vmem:[%s733 + $0x250] sm:$0xff] %v882
                  %v884 = vld [vmem:[%s732 + $0x4b0] sm:$0xff]
                  %885 = vst [vmem:[%s733 + $0x258] sm:$0xff] %v884
                  %v886 = vld [vmem:[%s732 + $0x4c0] sm:$0xff]
                  %887 = vst [vmem:[%s733 + $0x260] sm:$0xff] %v886
                  %v888 = vld [vmem:[%s732 + $0x4d0] sm:$0xff]
                  %889 = vst [vmem:[%s733 + $0x268] sm:$0xff] %v888
                  %v890 = vld [vmem:[%s732 + $0x4e0] sm:$0xff]
                  %891 = vst [vmem:[%s733 + $0x270] sm:$0xff] %v890
                  %v892 = vld [vmem:[%s732 + $0x4f0] sm:$0xff]
                  %893 = vst [vmem:[%s733 + $0x278] sm:$0xff] %v892
                  %v894 = vld [vmem:[%s732 + $0x500] sm:$0xff]
                  %895 = vst [vmem:[%s733 + $0x280] sm:$0xff] %v894
                  %v896 = vld [vmem:[%s732 + $0x510] sm:$0xff]
                  %897 = vst [vmem:[%s733 + $0x288] sm:$0xff] %v896
                  %v898 = vld [vmem:[%s732 + $0x520] sm:$0xff]
                  %899 = vst [vmem:[%s733 + $0x290] sm:$0xff] %v898
                  %v900 = vld [vmem:[%s732 + $0x530] sm:$0xff]
                  %901 = vst [vmem:[%s733 + $0x298] sm:$0xff] %v900
                  %v902 = vld [vmem:[%s732 + $0x540] sm:$0xff]
                  %903 = vst [vmem:[%s733 + $0x2a0] sm:$0xff] %v902
                  %v904 = vld [vmem:[%s732 + $0x550] sm:$0xff]
                  %905 = vst [vmem:[%s733 + $0x2a8] sm:$0xff] %v904
                  %v906 = vld [vmem:[%s732 + $0x560] sm:$0xff]
                  %907 = vst [vmem:[%s733 + $0x2b0] sm:$0xff] %v906
                  %v908 = vld [vmem:[%s732 + $0x570] sm:$0xff]
                  %909 = vst [vmem:[%s733 + $0x2b8] sm:$0xff] %v908
                  %v910 = vld [vmem:[%s732 + $0x580] sm:$0xff]
                  %911 = vst [vmem:[%s733 + $0x2c0] sm:$0xff] %v910
                  %v912 = vld [vmem:[%s732 + $0x590] sm:$0xff]
                  %913 = vst [vmem:[%s733 + $0x2c8] sm:$0xff] %v912
                  %v914 = vld [vmem:[%s732 + $0x5a0] sm:$0xff]
                  %915 = vst [vmem:[%s733 + $0x2d0] sm:$0xff] %v914
                  %v916 = vld [vmem:[%s732 + $0x5b0] sm:$0xff]
                  %917 = vst [vmem:[%s733 + $0x2d8] sm:$0xff] %v916
                  %v918 = vld [vmem:[%s732 + $0x5c0] sm:$0xff]
                  %919 = vst [vmem:[%s733 + $0x2e0] sm:$0xff] %v918
                  %v920 = vld [vmem:[%s732 + $0x5d0] sm:$0xff]
                  %921 = vst [vmem:[%s733 + $0x2e8] sm:$0xff] %v920
                  %v922 = vld [vmem:[%s732 + $0x5e0] sm:$0xff]
                  %923 = vst [vmem:[%s733 + $0x2f0] sm:$0xff] %v922
                  %v924 = vld [vmem:[%s732 + $0x5f0] sm:$0xff]
                  %925 = vst [vmem:[%s733 + $0x2f8] sm:$0xff] %v924
                  %v926 = vld [vmem:[%s732 + $0x600] sm:$0xff]
                  %927 = vst [vmem:[%s733 + $0x300] sm:$0xff] %v926
                  %v928 = vld [vmem:[%s732 + $0x610] sm:$0xff]
                  %929 = vst [vmem:[%s733 + $0x308] sm:$0xff] %v928
                  %v930 = vld [vmem:[%s732 + $0x620] sm:$0xff]
                  %931 = vst [vmem:[%s733 + $0x310] sm:$0xff] %v930
                  %v932 = vld [vmem:[%s732 + $0x630] sm:$0xff]
                  %933 = vst [vmem:[%s733 + $0x318] sm:$0xff] %v932
                  %v934 = vld [vmem:[%s732 + $0x640] sm:$0xff]
                  %935 = vst [vmem:[%s733 + $0x320] sm:$0xff] %v934
                  %v936 = vld [vmem:[%s732 + $0x650] sm:$0xff]
                  %937 = vst [vmem:[%s733 + $0x328] sm:$0xff] %v936
                  %v938 = vld [vmem:[%s732 + $0x660] sm:$0xff]
                  %939 = vst [vmem:[%s733 + $0x330] sm:$0xff] %v938
                  %v940 = vld [vmem:[%s732 + $0x670] sm:$0xff]
                  %941 = vst [vmem:[%s733 + $0x338] sm:$0xff] %v940
                  %v942 = vld [vmem:[%s732 + $0x680] sm:$0xff]
                  %943 = vst [vmem:[%s733 + $0x340] sm:$0xff] %v942
                  %v944 = vld [vmem:[%s732 + $0x690] sm:$0xff]
                  %945 = vst [vmem:[%s733 + $0x348] sm:$0xff] %v944
                  %v946 = vld [vmem:[%s732 + $0x6a0] sm:$0xff]
                  %947 = vst [vmem:[%s733 + $0x350] sm:$0xff] %v946
                  %v948 = vld [vmem:[%s732 + $0x6b0] sm:$0xff]
                  %949 = vst [vmem:[%s733 + $0x358] sm:$0xff] %v948
                  %v950 = vld [vmem:[%s732 + $0x6c0] sm:$0xff]
                  %951 = vst [vmem:[%s733 + $0x360] sm:$0xff] %v950
                  %v952 = vld [vmem:[%s732 + $0x6d0] sm:$0xff]
                  %953 = vst [vmem:[%s733 + $0x368] sm:$0xff] %v952
                  %v954 = vld [vmem:[%s732 + $0x6e0] sm:$0xff]
                  %955 = vst [vmem:[%s733 + $0x370] sm:$0xff] %v954
                  %v956 = vld [vmem:[%s732 + $0x6f0] sm:$0xff]
                  %957 = vst [vmem:[%s733 + $0x378] sm:$0xff] %v956
                  %v958 = vld [vmem:[%s732 + $0x700] sm:$0xff]
                  %959 = vst [vmem:[%s733 + $0x380] sm:$0xff] %v958
                  %v960 = vld [vmem:[%s732 + $0x710] sm:$0xff]
                  %961 = vst [vmem:[%s733 + $0x388] sm:$0xff] %v960
                  %v962 = vld [vmem:[%s732 + $0x720] sm:$0xff]
                  %963 = vst [vmem:[%s733 + $0x390] sm:$0xff] %v962
                  %v964 = vld [vmem:[%s732 + $0x730] sm:$0xff]
                  %965 = vst [vmem:[%s733 + $0x398] sm:$0xff] %v964
                  %v966 = vld [vmem:[%s732 + $0x740] sm:$0xff]
                  %967 = vst [vmem:[%s733 + $0x3a0] sm:$0xff] %v966
                  %v968 = vld [vmem:[%s732 + $0x750] sm:$0xff]
                  %969 = vst [vmem:[%s733 + $0x3a8] sm:$0xff] %v968
                  %v970 = vld [vmem:[%s732 + $0x760] sm:$0xff]
                  %971 = vst [vmem:[%s733 + $0x3b0] sm:$0xff] %v970
                  %v972 = vld [vmem:[%s732 + $0x770] sm:$0xff]
                  %973 = vst [vmem:[%s733 + $0x3b8] sm:$0xff] %v972
                  %v974 = vld [vmem:[%s732 + $0x780] sm:$0xff]
                  %975 = vst [vmem:[%s733 + $0x3c0] sm:$0xff] %v974
                  %v976 = vld [vmem:[%s732 + $0x790] sm:$0xff]
                  %977 = vst [vmem:[%s733 + $0x3c8] sm:$0xff] %v976
                  %v978 = vld [vmem:[%s732 + $0x7a0] sm:$0xff]
                  %979 = vst [vmem:[%s733 + $0x3d0] sm:$0xff] %v978
                  %v980 = vld [vmem:[%s732 + $0x7b0] sm:$0xff]
                  %981 = vst [vmem:[%s733 + $0x3d8] sm:$0xff] %v980
                  %v982 = vld [vmem:[%s732 + $0x7c0] sm:$0xff]
                  %983 = vst [vmem:[%s733 + $0x3e0] sm:$0xff] %v982
                  %v984 = vld [vmem:[%s732 + $0x7d0] sm:$0xff]
                  %985 = vst [vmem:[%s733 + $0x3e8] sm:$0xff] %v984
                  %v986 = vld [vmem:[%s732 + $0x7e0] sm:$0xff]
                  %987 = vst [vmem:[%s733 + $0x3f0] sm:$0xff] %v986
                  %v988 = vld [vmem:[%s732 + $0x7f0] sm:$0xff]
                  %989 = vst [vmem:[%s733 + $0x3f8] sm:$0xff] %v988
                  %v990 = vld [vmem:[%s732 + $0x800] sm:$0xff]
                  %991 = vst [vmem:[%s733 + $0x400] sm:$0xff] %v990
                  %v992 = vld [vmem:[%s732 + $0x810] sm:$0xff]
                  %993 = vst [vmem:[%s733 + $0x408] sm:$0xff] %v992
                  %v994 = vld [vmem:[%s732 + $0x820] sm:$0xff]
                  %995 = vst [vmem:[%s733 + $0x410] sm:$0xff] %v994
                  %v996 = vld [vmem:[%s732 + $0x830] sm:$0xff]
                  %997 = vst [vmem:[%s733 + $0x418] sm:$0xff] %v996
                  %v998 = vld [vmem:[%s732 + $0x840] sm:$0xff]
                  %999 = vst [vmem:[%s733 + $0x420] sm:$0xff] %v998
                  %v1000 = vld [vmem:[%s732 + $0x850] sm:$0xff]
                  %1001 = vst [vmem:[%s733 + $0x428] sm:$0xff] %v1000
                  %v1002 = vld [vmem:[%s732 + $0x860] sm:$0xff]
                  %1003 = vst [vmem:[%s733 + $0x430] sm:$0xff] %v1002
                  %v1004 = vld [vmem:[%s732 + $0x870] sm:$0xff]
                  %1005 = vst [vmem:[%s733 + $0x438] sm:$0xff] %v1004
                  %v1006 = vld [vmem:[%s732 + $0x880] sm:$0xff]
                  %1007 = vst [vmem:[%s733 + $0x440] sm:$0xff] %v1006
                  %v1008 = vld [vmem:[%s732 + $0x890] sm:$0xff]
                  %1009 = vst [vmem:[%s733 + $0x448] sm:$0xff] %v1008
                  %v1010 = vld [vmem:[%s732 + $0x8a0] sm:$0xff]
                  %1011 = vst [vmem:[%s733 + $0x450] sm:$0xff] %v1010
                  %v1012 = vld [vmem:[%s732 + $0x8b0] sm:$0xff]
                  %1013 = vst [vmem:[%s733 + $0x458] sm:$0xff] %v1012
                  %v1014 = vld [vmem:[%s732 + $0x8c0] sm:$0xff]
                  %1015 = vst [vmem:[%s733 + $0x460] sm:$0xff] %v1014
                  %v1016 = vld [vmem:[%s732 + $0x8d0] sm:$0xff]
                  %1017 = vst [vmem:[%s733 + $0x468] sm:$0xff] %v1016
                  %v1018 = vld [vmem:[%s732 + $0x8e0] sm:$0xff]
                  %1019 = vst [vmem:[%s733 + $0x470] sm:$0xff] %v1018
                  %v1020 = vld [vmem:[%s732 + $0x8f0] sm:$0xff]
                  %1021 = vst [vmem:[%s733 + $0x478] sm:$0xff] %v1020
                  %v1022 = vld [vmem:[%s732 + $0x900] sm:$0xff]
                  %1023 = vst [vmem:[%s733 + $0x480] sm:$0xff] %v1022
                  %v1024 = vld [vmem:[%s732 + $0x910] sm:$0xff]
                  %1025 = vst [vmem:[%s733 + $0x488] sm:$0xff] %v1024
                  %v1026 = vld [vmem:[%s732 + $0x920] sm:$0xff]
                  %1027 = vst [vmem:[%s733 + $0x490] sm:$0xff] %v1026
                  %v1028 = vld [vmem:[%s732 + $0x930] sm:$0xff]
                  %1029 = vst [vmem:[%s733 + $0x498] sm:$0xff] %v1028
                  %v1030 = vld [vmem:[%s732 + $0x940] sm:$0xff]
                  %1031 = vst [vmem:[%s733 + $0x4a0] sm:$0xff] %v1030
                  %v1032 = vld [vmem:[%s732 + $0x950] sm:$0xff]
                  %1033 = vst [vmem:[%s733 + $0x4a8] sm:$0xff] %v1032
                  %v1034 = vld [vmem:[%s732 + $0x960] sm:$0xff]
                  %1035 = vst [vmem:[%s733 + $0x4b0] sm:$0xff] %v1034
                  %v1036 = vld [vmem:[%s732 + $0x970] sm:$0xff]
                  %1037 = vst [vmem:[%s733 + $0x4b8] sm:$0xff] %v1036
                  %v1038 = vld [vmem:[%s732 + $0x980] sm:$0xff]
                  %1039 = vst [vmem:[%s733 + $0x4c0] sm:$0xff] %v1038
                  %v1040 = vld [vmem:[%s732 + $0x990] sm:$0xff]
                  %1041 = vst [vmem:[%s733 + $0x4c8] sm:$0xff] %v1040
                  %v1042 = vld [vmem:[%s732 + $0x9a0] sm:$0xff]
                  %1043 = vst [vmem:[%s733 + $0x4d0] sm:$0xff] %v1042
                  %v1044 = vld [vmem:[%s732 + $0x9b0] sm:$0xff]
                  %1045 = vst [vmem:[%s733 + $0x4d8] sm:$0xff] %v1044
                  %v1046 = vld [vmem:[%s732 + $0x9c0] sm:$0xff]
                  %1047 = vst [vmem:[%s733 + $0x4e0] sm:$0xff] %v1046
                  %v1048 = vld [vmem:[%s732 + $0x9d0] sm:$0xff]
                  %1049 = vst [vmem:[%s733 + $0x4e8] sm:$0xff] %v1048
                  %v1050 = vld [vmem:[%s732 + $0x9e0] sm:$0xff]
                  %1051 = vst [vmem:[%s733 + $0x4f0] sm:$0xff] %v1050
                  %v1052 = vld [vmem:[%s732 + $0x9f0] sm:$0xff]
                  %1053 = vst [vmem:[%s733 + $0x4f8] sm:$0xff] %v1052
                  %v1054 = vld [vmem:[%s732 + $0xa00] sm:$0xff]
                  %1055 = vst [vmem:[%s733 + $0x500] sm:$0xff] %v1054
                  %v1056 = vld [vmem:[%s732 + $0xa10] sm:$0xff]
                  %1057 = vst [vmem:[%s733 + $0x508] sm:$0xff] %v1056
                  %v1058 = vld [vmem:[%s732 + $0xa20] sm:$0xff]
                  %1059 = vst [vmem:[%s733 + $0x510] sm:$0xff] %v1058
                  %v1060 = vld [vmem:[%s732 + $0xa30] sm:$0xff]
                  %1061 = vst [vmem:[%s733 + $0x518] sm:$0xff] %v1060
                  %v1062 = vld [vmem:[%s732 + $0xa40] sm:$0xff]
                  %1063 = vst [vmem:[%s733 + $0x520] sm:$0xff] %v1062
                  %v1064 = vld [vmem:[%s732 + $0xa50] sm:$0xff]
                  %1065 = vst [vmem:[%s733 + $0x528] sm:$0xff] %v1064
                  %v1066 = vld [vmem:[%s732 + $0xa60] sm:$0xff]
                  %1067 = vst [vmem:[%s733 + $0x530] sm:$0xff] %v1066
                  %v1068 = vld [vmem:[%s732 + $0xa70] sm:$0xff]
                  %1069 = vst [vmem:[%s733 + $0x538] sm:$0xff] %v1068
                  %v1070 = vld [vmem:[%s732 + $0xa80] sm:$0xff]
                  %1071 = vst [vmem:[%s733 + $0x540] sm:$0xff] %v1070
                  %v1072 = vld [vmem:[%s732 + $0xa90] sm:$0xff]
                  %1073 = vst [vmem:[%s733 + $0x548] sm:$0xff] %v1072
                  %v1074 = vld [vmem:[%s732 + $0xaa0] sm:$0xff]
                  %1075 = vst [vmem:[%s733 + $0x550] sm:$0xff] %v1074
                  %v1076 = vld [vmem:[%s732 + $0xab0] sm:$0xff]
                  %1077 = vst [vmem:[%s733 + $0x558] sm:$0xff] %v1076
                  %v1078 = vld [vmem:[%s732 + $0xac0] sm:$0xff]
                  %1079 = vst [vmem:[%s733 + $0x560] sm:$0xff] %v1078
                  %v1080 = vld [vmem:[%s732 + $0xad0] sm:$0xff]
                  %1081 = vst [vmem:[%s733 + $0x568] sm:$0xff] %v1080
                  %v1082 = vld [vmem:[%s732 + $0xae0] sm:$0xff]
                  %1083 = vst [vmem:[%s733 + $0x570] sm:$0xff] %v1082
                  %v1084 = vld [vmem:[%s732 + $0xaf0] sm:$0xff]
                  %1085 = vst [vmem:[%s733 + $0x578] sm:$0xff] %v1084
                  %v1086 = vld [vmem:[%s732 + $0xb00] sm:$0xff]
                  %1087 = vst [vmem:[%s733 + $0x580] sm:$0xff] %v1086
                  %v1088 = vld [vmem:[%s732 + $0xb10] sm:$0xff]
                  %1089 = vst [vmem:[%s733 + $0x588] sm:$0xff] %v1088
                  %v1090 = vld [vmem:[%s732 + $0xb20] sm:$0xff]
                  %1091 = vst [vmem:[%s733 + $0x590] sm:$0xff] %v1090
                  %v1092 = vld [vmem:[%s732 + $0xb30] sm:$0xff]
                  %1093 = vst [vmem:[%s733 + $0x598] sm:$0xff] %v1092
                  %v1094 = vld [vmem:[%s732 + $0xb40] sm:$0xff]
                  %1095 = vst [vmem:[%s733 + $0x5a0] sm:$0xff] %v1094
                  %v1096 = vld [vmem:[%s732 + $0xb50] sm:$0xff]
                  %1097 = vst [vmem:[%s733 + $0x5a8] sm:$0xff] %v1096
                  %v1098 = vld [vmem:[%s732 + $0xb60] sm:$0xff]
                  %1099 = vst [vmem:[%s733 + $0x5b0] sm:$0xff] %v1098
                  %v1100 = vld [vmem:[%s732 + $0xb70] sm:$0xff]
                  %1101 = vst [vmem:[%s733 + $0x5b8] sm:$0xff] %v1100
                  %v1102 = vld [vmem:[%s732 + $0xb80] sm:$0xff]
                  %1103 = vst [vmem:[%s733 + $0x5c0] sm:$0xff] %v1102
                  %v1104 = vld [vmem:[%s732 + $0xb90] sm:$0xff]
                  %1105 = vst [vmem:[%s733 + $0x5c8] sm:$0xff] %v1104
                  %v1106 = vld [vmem:[%s732 + $0xba0] sm:$0xff]
                  %1107 = vst [vmem:[%s733 + $0x5d0] sm:$0xff] %v1106
                  %v1108 = vld [vmem:[%s732 + $0xbb0] sm:$0xff]
                  %1109 = vst [vmem:[%s733 + $0x5d8] sm:$0xff] %v1108
                  %v1110 = vld [vmem:[%s732 + $0xbc0] sm:$0xff]
                  %1111 = vst [vmem:[%s733 + $0x5e0] sm:$0xff] %v1110
                  %v1112 = vld [vmem:[%s732 + $0xbd0] sm:$0xff]
                  %1113 = vst [vmem:[%s733 + $0x5e8] sm:$0xff] %v1112
                  %v1114 = vld [vmem:[%s732 + $0xbe0] sm:$0xff]
                  %1115 = vst [vmem:[%s733 + $0x5f0] sm:$0xff] %v1114
                  %v1116 = vld [vmem:[%s732 + $0xbf0] sm:$0xff]
                  %1117 = vst [vmem:[%s733 + $0x5f8] sm:$0xff] %v1116
                  %v1118 = vld [vmem:[%s732 + $0xc00] sm:$0xff]
                  %1119 = vst [vmem:[%s733 + $0x600] sm:$0xff] %v1118
                  %v1120 = vld [vmem:[%s732 + $0xc10] sm:$0xff]
                  %1121 = vst [vmem:[%s733 + $0x608] sm:$0xff] %v1120
                  %v1122 = vld [vmem:[%s732 + $0xc20] sm:$0xff]
                  %1123 = vst [vmem:[%s733 + $0x610] sm:$0xff] %v1122
                  %v1124 = vld [vmem:[%s732 + $0xc30] sm:$0xff]
                  %1125 = vst [vmem:[%s733 + $0x618] sm:$0xff] %v1124
                  %v1126 = vld [vmem:[%s732 + $0xc40] sm:$0xff]
                  %1127 = vst [vmem:[%s733 + $0x620] sm:$0xff] %v1126
                  %v1128 = vld [vmem:[%s732 + $0xc50] sm:$0xff]
                  %1129 = vst [vmem:[%s733 + $0x628] sm:$0xff] %v1128
                  %v1130 = vld [vmem:[%s732 + $0xc60] sm:$0xff]
                  %1131 = vst [vmem:[%s733 + $0x630] sm:$0xff] %v1130
                  %v1132 = vld [vmem:[%s732 + $0xc70] sm:$0xff]
                  %1133 = vst [vmem:[%s733 + $0x638] sm:$0xff] %v1132
                  %v1134 = vld [vmem:[%s732 + $0xc80] sm:$0xff]
                  %1135 = vst [vmem:[%s733 + $0x640] sm:$0xff] %v1134
                  %v1136 = vld [vmem:[%s732 + $0xc90] sm:$0xff]
                  %1137 = vst [vmem:[%s733 + $0x648] sm:$0xff] %v1136
                  %v1138 = vld [vmem:[%s732 + $0xca0] sm:$0xff]
                  %1139 = vst [vmem:[%s733 + $0x650] sm:$0xff] %v1138
                  %v1140 = vld [vmem:[%s732 + $0xcb0] sm:$0xff]
                  %1141 = vst [vmem:[%s733 + $0x658] sm:$0xff] %v1140
                  %v1142 = vld [vmem:[%s732 + $0xcc0] sm:$0xff]
                  %1143 = vst [vmem:[%s733 + $0x660] sm:$0xff] %v1142
                  %v1144 = vld [vmem:[%s732 + $0xcd0] sm:$0xff]
                  %1145 = vst [vmem:[%s733 + $0x668] sm:$0xff] %v1144
                  %v1146 = vld [vmem:[%s732 + $0xce0] sm:$0xff]
                  %1147 = vst [vmem:[%s733 + $0x670] sm:$0xff] %v1146
                  %v1148 = vld [vmem:[%s732 + $0xcf0] sm:$0xff]
                  %1149 = vst [vmem:[%s733 + $0x678] sm:$0xff] %v1148
                  %v1150 = vld [vmem:[%s732 + $0xd00] sm:$0xff]
                  %1151 = vst [vmem:[%s733 + $0x680] sm:$0xff] %v1150
                  %v1152 = vld [vmem:[%s732 + $0xd10] sm:$0xff]
                  %1153 = vst [vmem:[%s733 + $0x688] sm:$0xff] %v1152
                  %v1154 = vld [vmem:[%s732 + $0xd20] sm:$0xff]
                  %1155 = vst [vmem:[%s733 + $0x690] sm:$0xff] %v1154
                  %v1156 = vld [vmem:[%s732 + $0xd30] sm:$0xff]
                  %1157 = vst [vmem:[%s733 + $0x698] sm:$0xff] %v1156
                  %v1158 = vld [vmem:[%s732 + $0xd40] sm:$0xff]
                  %1159 = vst [vmem:[%s733 + $0x6a0] sm:$0xff] %v1158
                  %v1160 = vld [vmem:[%s732 + $0xd50] sm:$0xff]
                  %1161 = vst [vmem:[%s733 + $0x6a8] sm:$0xff] %v1160
                  %v1162 = vld [vmem:[%s732 + $0xd60] sm:$0xff]
                  %1163 = vst [vmem:[%s733 + $0x6b0] sm:$0xff] %v1162
                  %v1164 = vld [vmem:[%s732 + $0xd70] sm:$0xff]
                  %1165 = vst [vmem:[%s733 + $0x6b8] sm:$0xff] %v1164
                  %v1166 = vld [vmem:[%s732 + $0xd80] sm:$0xff]
                  %1167 = vst [vmem:[%s733 + $0x6c0] sm:$0xff] %v1166
                  %v1168 = vld [vmem:[%s732 + $0xd90] sm:$0xff]
                  %1169 = vst [vmem:[%s733 + $0x6c8] sm:$0xff] %v1168
                  %v1170 = vld [vmem:[%s732 + $0xda0] sm:$0xff]
                  %1171 = vst [vmem:[%s733 + $0x6d0] sm:$0xff] %v1170
                  %v1172 = vld [vmem:[%s732 + $0xdb0] sm:$0xff]
                  %1173 = vst [vmem:[%s733 + $0x6d8] sm:$0xff] %v1172
                  %v1174 = vld [vmem:[%s732 + $0xdc0] sm:$0xff]
                  %1175 = vst [vmem:[%s733 + $0x6e0] sm:$0xff] %v1174
                  %v1176 = vld [vmem:[%s732 + $0xdd0] sm:$0xff]
                  %1177 = vst [vmem:[%s733 + $0x6e8] sm:$0xff] %v1176
                  %v1178 = vld [vmem:[%s732 + $0xde0] sm:$0xff]
                  %1179 = vst [vmem:[%s733 + $0x6f0] sm:$0xff] %v1178
                  %v1180 = vld [vmem:[%s732 + $0xdf0] sm:$0xff]
                  %1181 = vst [vmem:[%s733 + $0x6f8] sm:$0xff] %v1180
                  %v1182 = vld [vmem:[%s732 + $0xe00] sm:$0xff]
                  %1183 = vst [vmem:[%s733 + $0x700] sm:$0xff] %v1182
                  %v1184 = vld [vmem:[%s732 + $0xe10] sm:$0xff]
                  %1185 = vst [vmem:[%s733 + $0x708] sm:$0xff] %v1184
                  %v1186 = vld [vmem:[%s732 + $0xe20] sm:$0xff]
                  %1187 = vst [vmem:[%s733 + $0x710] sm:$0xff] %v1186
                  %v1188 = vld [vmem:[%s732 + $0xe30] sm:$0xff]
                  %1189 = vst [vmem:[%s733 + $0x718] sm:$0xff] %v1188
                  %v1190 = vld [vmem:[%s732 + $0xe40] sm:$0xff]
                  %1191 = vst [vmem:[%s733 + $0x720] sm:$0xff] %v1190
                  %v1192 = vld [vmem:[%s732 + $0xe50] sm:$0xff]
                  %1193 = vst [vmem:[%s733 + $0x728] sm:$0xff] %v1192
                  %v1194 = vld [vmem:[%s732 + $0xe60] sm:$0xff]
                  %1195 = vst [vmem:[%s733 + $0x730] sm:$0xff] %v1194
                  %v1196 = vld [vmem:[%s732 + $0xe70] sm:$0xff]
                  %1197 = vst [vmem:[%s733 + $0x738] sm:$0xff] %v1196
                  %v1198 = vld [vmem:[%s732 + $0xe80] sm:$0xff]
                  %1199 = vst [vmem:[%s733 + $0x740] sm:$0xff] %v1198
                  %v1200 = vld [vmem:[%s732 + $0xe90] sm:$0xff]
                  %1201 = vst [vmem:[%s733 + $0x748] sm:$0xff] %v1200
                  %v1202 = vld [vmem:[%s732 + $0xea0] sm:$0xff]
                  %1203 = vst [vmem:[%s733 + $0x750] sm:$0xff] %v1202
                  %v1204 = vld [vmem:[%s732 + $0xeb0] sm:$0xff]
                  %1205 = vst [vmem:[%s733 + $0x758] sm:$0xff] %v1204
                  %v1206 = vld [vmem:[%s732 + $0xec0] sm:$0xff]
                  %1207 = vst [vmem:[%s733 + $0x760] sm:$0xff] %v1206
                  %v1208 = vld [vmem:[%s732 + $0xed0] sm:$0xff]
                  %1209 = vst [vmem:[%s733 + $0x768] sm:$0xff] %v1208
                  %v1210 = vld [vmem:[%s732 + $0xee0] sm:$0xff]
                  %1211 = vst [vmem:[%s733 + $0x770] sm:$0xff] %v1210
                  %v1212 = vld [vmem:[%s732 + $0xef0] sm:$0xff]
                  %1213 = vst [vmem:[%s733 + $0x778] sm:$0xff] %v1212
                  %v1214 = vld [vmem:[%s732 + $0xf00] sm:$0xff]
                  %1215 = vst [vmem:[%s733 + $0x780] sm:$0xff] %v1214
                  %v1216 = vld [vmem:[%s732 + $0xf10] sm:$0xff]
                  %1217 = vst [vmem:[%s733 + $0x788] sm:$0xff] %v1216
                  %v1218 = vld [vmem:[%s732 + $0xf20] sm:$0xff]
                  %1219 = vst [vmem:[%s733 + $0x790] sm:$0xff] %v1218
                  %v1220 = vld [vmem:[%s732 + $0xf30] sm:$0xff]
                  %1221 = vst [vmem:[%s733 + $0x798] sm:$0xff] %v1220
                  %v1222 = vld [vmem:[%s732 + $0xf40] sm:$0xff]
                  %1223 = vst [vmem:[%s733 + $0x7a0] sm:$0xff] %v1222
                  %v1224 = vld [vmem:[%s732 + $0xf50] sm:$0xff]
                  %1225 = vst [vmem:[%s733 + $0x7a8] sm:$0xff] %v1224
                  %v1226 = vld [vmem:[%s732 + $0xf60] sm:$0xff]
                  %1227 = vst [vmem:[%s733 + $0x7b0] sm:$0xff] %v1226
                  %v1228 = vld [vmem:[%s732 + $0xf70] sm:$0xff]
                  %1229 = vst [vmem:[%s733 + $0x7b8] sm:$0xff] %v1228
                  %v1230 = vld [vmem:[%s732 + $0xf80] sm:$0xff]
                  %1231 = vst [vmem:[%s733 + $0x7c0] sm:$0xff] %v1230
                  %v1232 = vld [vmem:[%s732 + $0xf90] sm:$0xff]
                  %1233 = vst [vmem:[%s733 + $0x7c8] sm:$0xff] %v1232
                  %v1234 = vld [vmem:[%s732 + $0xfa0] sm:$0xff]
                  %1235 = vst [vmem:[%s733 + $0x7d0] sm:$0xff] %v1234
                  %v1236 = vld [vmem:[%s732 + $0xfb0] sm:$0xff]
                  %1237 = vst [vmem:[%s733 + $0x7d8] sm:$0xff] %v1236
                  %v1238 = vld [vmem:[%s732 + $0xfc0] sm:$0xff]
                  %1239 = vst [vmem:[%s733 + $0x7e0] sm:$0xff] %v1238
                  %v1240 = vld [vmem:[%s732 + $0xfd0] sm:$0xff]
                  %1241 = vst [vmem:[%s733 + $0x7e8] sm:$0xff] %v1240
                  %v1242 = vld [vmem:[%s732 + $0xfe0] sm:$0xff]
                  %1243 = vst [vmem:[%s733 + $0x7f0] sm:$0xff] %v1242
                  %v1244 = vld [vmem:[%s732 + $0xff0] sm:$0xff]
                  %1245 = vst [vmem:[%s733 + $0x7f8] sm:$0xff] %v1244
                  %s1246 = sadd.s32 1, %s731
                  %p1247 = scmp.ge.s32.totalorder %s1246, 1
                  %s1248 = scalar_select %p1247, 0, %s1246
                  %s1249 = smul.u32 %s1248, 8
                  %s1250 = smul.u32 %s1248, 8
                  %s1251 = scalar_lea.vmem %s194, %s1249
                  %s1252 = scalar_lea.vmem %s188, %s1250 [#allocation3]
                $region52: #{cnn_forward.5} parent=46 // loop_footer
                  %s730 = sadd.s32 1, %s726
                $region53: #{cnn_forward.5} parent=46 // loop_footer_branch
                  %725 = sbr.rel target = $region49
                $region54: #{cnn_forward.5} parent=46 // loop_exit
                  _
              $region47: #{cnn_forward.5} parent=31 // pred_fallthru
                _
              // Predicated region
              $region55: #{cnn_forward.5} parent=31 // pred_check
                _
              $region56: #{cnn_forward.5} parent=31 // pred_check_branch
                %1254 = sbr.rel target = $region58
              $region57: #{cnn_forward.5} parent=31 // pred_region
                %s1255 = scalar_lea.vmem %s194, 8
                %s1256 = scalar_lea.vmem %s188, 8 [#allocation3]
                loop: start=0, step=1, limit=1
                $region59: #{cnn_forward.5} parent=57 // loop_pre_header
                  _
                $region60: #{cnn_forward.5} parent=57 // loop_header
                  %s1258 = sphi 0, %s1262
                  %p1259 = scmp.ge.s32.totalorder %s1258, 1
                  %s1263 = sphi 0, %s1780
                  %s1264 = sphi %s194, %s1783
                  %s1265 = sphi %s188, %s1784
                $region61: #{cnn_forward.5} parent=57 // loop_header_branch
                  %1261 = sbr.rel (%p1259) target = $region65
                $region62: #{cnn_forward.5} parent=57 // loop_body
                  %v1266 = vld [vmem:[%s1264] sm:$0xff]
                  %1267 = vst [vmem:[%s1265] sm:$0xff] %v1266
                  %v1268 = vld [vmem:[%s1264 + $0x10] sm:$0xff]
                  %1269 = vst [vmem:[%s1265 + $0x8] sm:$0xff] %v1268
                  %v1270 = vld [vmem:[%s1264 + $0x20] sm:$0xff]
                  %1271 = vst [vmem:[%s1265 + $0x10] sm:$0xff] %v1270
                  %v1272 = vld [vmem:[%s1264 + $0x30] sm:$0xff]
                  %1273 = vst [vmem:[%s1265 + $0x18] sm:$0xff] %v1272
                  %v1274 = vld [vmem:[%s1264 + $0x40] sm:$0xff]
                  %1275 = vst [vmem:[%s1265 + $0x20] sm:$0xff] %v1274
                  %v1276 = vld [vmem:[%s1264 + $0x50] sm:$0xff]
                  %1277 = vst [vmem:[%s1265 + $0x28] sm:$0xff] %v1276
                  %v1278 = vld [vmem:[%s1264 + $0x60] sm:$0xff]
                  %1279 = vst [vmem:[%s1265 + $0x30] sm:$0xff] %v1278
                  %v1280 = vld [vmem:[%s1264 + $0x70] sm:$0xff]
                  %1281 = vst [vmem:[%s1265 + $0x38] sm:$0xff] %v1280
                  %v1282 = vld [vmem:[%s1264 + $0x80] sm:$0xff]
                  %1283 = vst [vmem:[%s1265 + $0x40] sm:$0xff] %v1282
                  %v1284 = vld [vmem:[%s1264 + $0x90] sm:$0xff]
                  %1285 = vst [vmem:[%s1265 + $0x48] sm:$0xff] %v1284
                  %v1286 = vld [vmem:[%s1264 + $0xa0] sm:$0xff]
                  %1287 = vst [vmem:[%s1265 + $0x50] sm:$0xff] %v1286
                  %v1288 = vld [vmem:[%s1264 + $0xb0] sm:$0xff]
                  %1289 = vst [vmem:[%s1265 + $0x58] sm:$0xff] %v1288
                  %v1290 = vld [vmem:[%s1264 + $0xc0] sm:$0xff]
                  %1291 = vst [vmem:[%s1265 + $0x60] sm:$0xff] %v1290
                  %v1292 = vld [vmem:[%s1264 + $0xd0] sm:$0xff]
                  %1293 = vst [vmem:[%s1265 + $0x68] sm:$0xff] %v1292
                  %v1294 = vld [vmem:[%s1264 + $0xe0] sm:$0xff]
                  %1295 = vst [vmem:[%s1265 + $0x70] sm:$0xff] %v1294
                  %v1296 = vld [vmem:[%s1264 + $0xf0] sm:$0xff]
                  %1297 = vst [vmem:[%s1265 + $0x78] sm:$0xff] %v1296
                  %v1298 = vld [vmem:[%s1264 + $0x100] sm:$0xff]
                  %1299 = vst [vmem:[%s1265 + $0x80] sm:$0xff] %v1298
                  %v1300 = vld [vmem:[%s1264 + $0x110] sm:$0xff]
                  %1301 = vst [vmem:[%s1265 + $0x88] sm:$0xff] %v1300
                  %v1302 = vld [vmem:[%s1264 + $0x120] sm:$0xff]
                  %1303 = vst [vmem:[%s1265 + $0x90] sm:$0xff] %v1302
                  %v1304 = vld [vmem:[%s1264 + $0x130] sm:$0xff]
                  %1305 = vst [vmem:[%s1265 + $0x98] sm:$0xff] %v1304
                  %v1306 = vld [vmem:[%s1264 + $0x140] sm:$0xff]
                  %1307 = vst [vmem:[%s1265 + $0xa0] sm:$0xff] %v1306
                  %v1308 = vld [vmem:[%s1264 + $0x150] sm:$0xff]
                  %1309 = vst [vmem:[%s1265 + $0xa8] sm:$0xff] %v1308
                  %v1310 = vld [vmem:[%s1264 + $0x160] sm:$0xff]
                  %1311 = vst [vmem:[%s1265 + $0xb0] sm:$0xff] %v1310
                  %v1312 = vld [vmem:[%s1264 + $0x170] sm:$0xff]
                  %1313 = vst [vmem:[%s1265 + $0xb8] sm:$0xff] %v1312
                  %v1314 = vld [vmem:[%s1264 + $0x180] sm:$0xff]
                  %1315 = vst [vmem:[%s1265 + $0xc0] sm:$0xff] %v1314
                  %v1316 = vld [vmem:[%s1264 + $0x190] sm:$0xff]
                  %1317 = vst [vmem:[%s1265 + $0xc8] sm:$0xff] %v1316
                  %v1318 = vld [vmem:[%s1264 + $0x1a0] sm:$0xff]
                  %1319 = vst [vmem:[%s1265 + $0xd0] sm:$0xff] %v1318
                  %v1320 = vld [vmem:[%s1264 + $0x1b0] sm:$0xff]
                  %1321 = vst [vmem:[%s1265 + $0xd8] sm:$0xff] %v1320
                  %v1322 = vld [vmem:[%s1264 + $0x1c0] sm:$0xff]
                  %1323 = vst [vmem:[%s1265 + $0xe0] sm:$0xff] %v1322
                  %v1324 = vld [vmem:[%s1264 + $0x1d0] sm:$0xff]
                  %1325 = vst [vmem:[%s1265 + $0xe8] sm:$0xff] %v1324
                  %v1326 = vld [vmem:[%s1264 + $0x1e0] sm:$0xff]
                  %1327 = vst [vmem:[%s1265 + $0xf0] sm:$0xff] %v1326
                  %v1328 = vld [vmem:[%s1264 + $0x1f0] sm:$0xff]
                  %1329 = vst [vmem:[%s1265 + $0xf8] sm:$0xff] %v1328
                  %v1330 = vld [vmem:[%s1264 + $0x200] sm:$0xff]
                  %1331 = vst [vmem:[%s1265 + $0x100] sm:$0xff] %v1330
                  %v1332 = vld [vmem:[%s1264 + $0x210] sm:$0xff]
                  %1333 = vst [vmem:[%s1265 + $0x108] sm:$0xff] %v1332
                  %v1334 = vld [vmem:[%s1264 + $0x220] sm:$0xff]
                  %1335 = vst [vmem:[%s1265 + $0x110] sm:$0xff] %v1334
                  %v1336 = vld [vmem:[%s1264 + $0x230] sm:$0xff]
                  %1337 = vst [vmem:[%s1265 + $0x118] sm:$0xff] %v1336
                  %v1338 = vld [vmem:[%s1264 + $0x240] sm:$0xff]
                  %1339 = vst [vmem:[%s1265 + $0x120] sm:$0xff] %v1338
                  %v1340 = vld [vmem:[%s1264 + $0x250] sm:$0xff]
                  %1341 = vst [vmem:[%s1265 + $0x128] sm:$0xff] %v1340
                  %v1342 = vld [vmem:[%s1264 + $0x260] sm:$0xff]
                  %1343 = vst [vmem:[%s1265 + $0x130] sm:$0xff] %v1342
                  %v1344 = vld [vmem:[%s1264 + $0x270] sm:$0xff]
                  %1345 = vst [vmem:[%s1265 + $0x138] sm:$0xff] %v1344
                  %v1346 = vld [vmem:[%s1264 + $0x280] sm:$0xff]
                  %1347 = vst [vmem:[%s1265 + $0x140] sm:$0xff] %v1346
                  %v1348 = vld [vmem:[%s1264 + $0x290] sm:$0xff]
                  %1349 = vst [vmem:[%s1265 + $0x148] sm:$0xff] %v1348
                  %v1350 = vld [vmem:[%s1264 + $0x2a0] sm:$0xff]
                  %1351 = vst [vmem:[%s1265 + $0x150] sm:$0xff] %v1350
                  %v1352 = vld [vmem:[%s1264 + $0x2b0] sm:$0xff]
                  %1353 = vst [vmem:[%s1265 + $0x158] sm:$0xff] %v1352
                  %v1354 = vld [vmem:[%s1264 + $0x2c0] sm:$0xff]
                  %1355 = vst [vmem:[%s1265 + $0x160] sm:$0xff] %v1354
                  %v1356 = vld [vmem:[%s1264 + $0x2d0] sm:$0xff]
                  %1357 = vst [vmem:[%s1265 + $0x168] sm:$0xff] %v1356
                  %v1358 = vld [vmem:[%s1264 + $0x2e0] sm:$0xff]
                  %1359 = vst [vmem:[%s1265 + $0x170] sm:$0xff] %v1358
                  %v1360 = vld [vmem:[%s1264 + $0x2f0] sm:$0xff]
                  %1361 = vst [vmem:[%s1265 + $0x178] sm:$0xff] %v1360
                  %v1362 = vld [vmem:[%s1264 + $0x300] sm:$0xff]
                  %1363 = vst [vmem:[%s1265 + $0x180] sm:$0xff] %v1362
                  %v1364 = vld [vmem:[%s1264 + $0x310] sm:$0xff]
                  %1365 = vst [vmem:[%s1265 + $0x188] sm:$0xff] %v1364
                  %v1366 = vld [vmem:[%s1264 + $0x320] sm:$0xff]
                  %1367 = vst [vmem:[%s1265 + $0x190] sm:$0xff] %v1366
                  %v1368 = vld [vmem:[%s1264 + $0x330] sm:$0xff]
                  %1369 = vst [vmem:[%s1265 + $0x198] sm:$0xff] %v1368
                  %v1370 = vld [vmem:[%s1264 + $0x340] sm:$0xff]
                  %1371 = vst [vmem:[%s1265 + $0x1a0] sm:$0xff] %v1370
                  %v1372 = vld [vmem:[%s1264 + $0x350] sm:$0xff]
                  %1373 = vst [vmem:[%s1265 + $0x1a8] sm:$0xff] %v1372
                  %v1374 = vld [vmem:[%s1264 + $0x360] sm:$0xff]
                  %1375 = vst [vmem:[%s1265 + $0x1b0] sm:$0xff] %v1374
                  %v1376 = vld [vmem:[%s1264 + $0x370] sm:$0xff]
                  %1377 = vst [vmem:[%s1265 + $0x1b8] sm:$0xff] %v1376
                  %v1378 = vld [vmem:[%s1264 + $0x380] sm:$0xff]
                  %1379 = vst [vmem:[%s1265 + $0x1c0] sm:$0xff] %v1378
                  %v1380 = vld [vmem:[%s1264 + $0x390] sm:$0xff]
                  %1381 = vst [vmem:[%s1265 + $0x1c8] sm:$0xff] %v1380
                  %v1382 = vld [vmem:[%s1264 + $0x3a0] sm:$0xff]
                  %1383 = vst [vmem:[%s1265 + $0x1d0] sm:$0xff] %v1382
                  %v1384 = vld [vmem:[%s1264 + $0x3b0] sm:$0xff]
                  %1385 = vst [vmem:[%s1265 + $0x1d8] sm:$0xff] %v1384
                  %v1386 = vld [vmem:[%s1264 + $0x3c0] sm:$0xff]
                  %1387 = vst [vmem:[%s1265 + $0x1e0] sm:$0xff] %v1386
                  %v1388 = vld [vmem:[%s1264 + $0x3d0] sm:$0xff]
                  %1389 = vst [vmem:[%s1265 + $0x1e8] sm:$0xff] %v1388
                  %v1390 = vld [vmem:[%s1264 + $0x3e0] sm:$0xff]
                  %1391 = vst [vmem:[%s1265 + $0x1f0] sm:$0xff] %v1390
                  %v1392 = vld [vmem:[%s1264 + $0x3f0] sm:$0xff]
                  %1393 = vst [vmem:[%s1265 + $0x1f8] sm:$0xff] %v1392
                  %v1394 = vld [vmem:[%s1264 + $0x400] sm:$0xff]
                  %1395 = vst [vmem:[%s1265 + $0x200] sm:$0xff] %v1394
                  %v1396 = vld [vmem:[%s1264 + $0x410] sm:$0xff]
                  %1397 = vst [vmem:[%s1265 + $0x208] sm:$0xff] %v1396
                  %v1398 = vld [vmem:[%s1264 + $0x420] sm:$0xff]
                  %1399 = vst [vmem:[%s1265 + $0x210] sm:$0xff] %v1398
                  %v1400 = vld [vmem:[%s1264 + $0x430] sm:$0xff]
                  %1401 = vst [vmem:[%s1265 + $0x218] sm:$0xff] %v1400
                  %v1402 = vld [vmem:[%s1264 + $0x440] sm:$0xff]
                  %1403 = vst [vmem:[%s1265 + $0x220] sm:$0xff] %v1402
                  %v1404 = vld [vmem:[%s1264 + $0x450] sm:$0xff]
                  %1405 = vst [vmem:[%s1265 + $0x228] sm:$0xff] %v1404
                  %v1406 = vld [vmem:[%s1264 + $0x460] sm:$0xff]
                  %1407 = vst [vmem:[%s1265 + $0x230] sm:$0xff] %v1406
                  %v1408 = vld [vmem:[%s1264 + $0x470] sm:$0xff]
                  %1409 = vst [vmem:[%s1265 + $0x238] sm:$0xff] %v1408
                  %v1410 = vld [vmem:[%s1264 + $0x480] sm:$0xff]
                  %1411 = vst [vmem:[%s1265 + $0x240] sm:$0xff] %v1410
                  %v1412 = vld [vmem:[%s1264 + $0x490] sm:$0xff]
                  %1413 = vst [vmem:[%s1265 + $0x248] sm:$0xff] %v1412
                  %v1414 = vld [vmem:[%s1264 + $0x4a0] sm:$0xff]
                  %1415 = vst [vmem:[%s1265 + $0x250] sm:$0xff] %v1414
                  %v1416 = vld [vmem:[%s1264 + $0x4b0] sm:$0xff]
                  %1417 = vst [vmem:[%s1265 + $0x258] sm:$0xff] %v1416
                  %v1418 = vld [vmem:[%s1264 + $0x4c0] sm:$0xff]
                  %1419 = vst [vmem:[%s1265 + $0x260] sm:$0xff] %v1418
                  %v1420 = vld [vmem:[%s1264 + $0x4d0] sm:$0xff]
                  %1421 = vst [vmem:[%s1265 + $0x268] sm:$0xff] %v1420
                  %v1422 = vld [vmem:[%s1264 + $0x4e0] sm:$0xff]
                  %1423 = vst [vmem:[%s1265 + $0x270] sm:$0xff] %v1422
                  %v1424 = vld [vmem:[%s1264 + $0x4f0] sm:$0xff]
                  %1425 = vst [vmem:[%s1265 + $0x278] sm:$0xff] %v1424
                  %v1426 = vld [vmem:[%s1264 + $0x500] sm:$0xff]
                  %1427 = vst [vmem:[%s1265 + $0x280] sm:$0xff] %v1426
                  %v1428 = vld [vmem:[%s1264 + $0x510] sm:$0xff]
                  %1429 = vst [vmem:[%s1265 + $0x288] sm:$0xff] %v1428
                  %v1430 = vld [vmem:[%s1264 + $0x520] sm:$0xff]
                  %1431 = vst [vmem:[%s1265 + $0x290] sm:$0xff] %v1430
                  %v1432 = vld [vmem:[%s1264 + $0x530] sm:$0xff]
                  %1433 = vst [vmem:[%s1265 + $0x298] sm:$0xff] %v1432
                  %v1434 = vld [vmem:[%s1264 + $0x540] sm:$0xff]
                  %1435 = vst [vmem:[%s1265 + $0x2a0] sm:$0xff] %v1434
                  %v1436 = vld [vmem:[%s1264 + $0x550] sm:$0xff]
                  %1437 = vst [vmem:[%s1265 + $0x2a8] sm:$0xff] %v1436
                  %v1438 = vld [vmem:[%s1264 + $0x560] sm:$0xff]
                  %1439 = vst [vmem:[%s1265 + $0x2b0] sm:$0xff] %v1438
                  %v1440 = vld [vmem:[%s1264 + $0x570] sm:$0xff]
                  %1441 = vst [vmem:[%s1265 + $0x2b8] sm:$0xff] %v1440
                  %v1442 = vld [vmem:[%s1264 + $0x580] sm:$0xff]
                  %1443 = vst [vmem:[%s1265 + $0x2c0] sm:$0xff] %v1442
                  %v1444 = vld [vmem:[%s1264 + $0x590] sm:$0xff]
                  %1445 = vst [vmem:[%s1265 + $0x2c8] sm:$0xff] %v1444
                  %v1446 = vld [vmem:[%s1264 + $0x5a0] sm:$0xff]
                  %1447 = vst [vmem:[%s1265 + $0x2d0] sm:$0xff] %v1446
                  %v1448 = vld [vmem:[%s1264 + $0x5b0] sm:$0xff]
                  %1449 = vst [vmem:[%s1265 + $0x2d8] sm:$0xff] %v1448
                  %v1450 = vld [vmem:[%s1264 + $0x5c0] sm:$0xff]
                  %1451 = vst [vmem:[%s1265 + $0x2e0] sm:$0xff] %v1450
                  %v1452 = vld [vmem:[%s1264 + $0x5d0] sm:$0xff]
                  %1453 = vst [vmem:[%s1265 + $0x2e8] sm:$0xff] %v1452
                  %v1454 = vld [vmem:[%s1264 + $0x5e0] sm:$0xff]
                  %1455 = vst [vmem:[%s1265 + $0x2f0] sm:$0xff] %v1454
                  %v1456 = vld [vmem:[%s1264 + $0x5f0] sm:$0xff]
                  %1457 = vst [vmem:[%s1265 + $0x2f8] sm:$0xff] %v1456
                  %v1458 = vld [vmem:[%s1264 + $0x600] sm:$0xff]
                  %1459 = vst [vmem:[%s1265 + $0x300] sm:$0xff] %v1458
                  %v1460 = vld [vmem:[%s1264 + $0x610] sm:$0xff]
                  %1461 = vst [vmem:[%s1265 + $0x308] sm:$0xff] %v1460
                  %v1462 = vld [vmem:[%s1264 + $0x620] sm:$0xff]
                  %1463 = vst [vmem:[%s1265 + $0x310] sm:$0xff] %v1462
                  %v1464 = vld [vmem:[%s1264 + $0x630] sm:$0xff]
                  %1465 = vst [vmem:[%s1265 + $0x318] sm:$0xff] %v1464
                  %v1466 = vld [vmem:[%s1264 + $0x640] sm:$0xff]
                  %1467 = vst [vmem:[%s1265 + $0x320] sm:$0xff] %v1466
                  %v1468 = vld [vmem:[%s1264 + $0x650] sm:$0xff]
                  %1469 = vst [vmem:[%s1265 + $0x328] sm:$0xff] %v1468
                  %v1470 = vld [vmem:[%s1264 + $0x660] sm:$0xff]
                  %1471 = vst [vmem:[%s1265 + $0x330] sm:$0xff] %v1470
                  %v1472 = vld [vmem:[%s1264 + $0x670] sm:$0xff]
                  %1473 = vst [vmem:[%s1265 + $0x338] sm:$0xff] %v1472
                  %v1474 = vld [vmem:[%s1264 + $0x680] sm:$0xff]
                  %1475 = vst [vmem:[%s1265 + $0x340] sm:$0xff] %v1474
                  %v1476 = vld [vmem:[%s1264 + $0x690] sm:$0xff]
                  %1477 = vst [vmem:[%s1265 + $0x348] sm:$0xff] %v1476
                  %v1478 = vld [vmem:[%s1264 + $0x6a0] sm:$0xff]
                  %1479 = vst [vmem:[%s1265 + $0x350] sm:$0xff] %v1478
                  %v1480 = vld [vmem:[%s1264 + $0x6b0] sm:$0xff]
                  %1481 = vst [vmem:[%s1265 + $0x358] sm:$0xff] %v1480
                  %v1482 = vld [vmem:[%s1264 + $0x6c0] sm:$0xff]
                  %1483 = vst [vmem:[%s1265 + $0x360] sm:$0xff] %v1482
                  %v1484 = vld [vmem:[%s1264 + $0x6d0] sm:$0xff]
                  %1485 = vst [vmem:[%s1265 + $0x368] sm:$0xff] %v1484
                  %v1486 = vld [vmem:[%s1264 + $0x6e0] sm:$0xff]
                  %1487 = vst [vmem:[%s1265 + $0x370] sm:$0xff] %v1486
                  %v1488 = vld [vmem:[%s1264 + $0x6f0] sm:$0xff]
                  %1489 = vst [vmem:[%s1265 + $0x378] sm:$0xff] %v1488
                  %v1490 = vld [vmem:[%s1264 + $0x700] sm:$0xff]
                  %1491 = vst [vmem:[%s1265 + $0x380] sm:$0xff] %v1490
                  %v1492 = vld [vmem:[%s1264 + $0x710] sm:$0xff]
                  %1493 = vst [vmem:[%s1265 + $0x388] sm:$0xff] %v1492
                  %v1494 = vld [vmem:[%s1264 + $0x720] sm:$0xff]
                  %1495 = vst [vmem:[%s1265 + $0x390] sm:$0xff] %v1494
                  %v1496 = vld [vmem:[%s1264 + $0x730] sm:$0xff]
                  %1497 = vst [vmem:[%s1265 + $0x398] sm:$0xff] %v1496
                  %v1498 = vld [vmem:[%s1264 + $0x740] sm:$0xff]
                  %1499 = vst [vmem:[%s1265 + $0x3a0] sm:$0xff] %v1498
                  %v1500 = vld [vmem:[%s1264 + $0x750] sm:$0xff]
                  %1501 = vst [vmem:[%s1265 + $0x3a8] sm:$0xff] %v1500
                  %v1502 = vld [vmem:[%s1264 + $0x760] sm:$0xff]
                  %1503 = vst [vmem:[%s1265 + $0x3b0] sm:$0xff] %v1502
                  %v1504 = vld [vmem:[%s1264 + $0x770] sm:$0xff]
                  %1505 = vst [vmem:[%s1265 + $0x3b8] sm:$0xff] %v1504
                  %v1506 = vld [vmem:[%s1264 + $0x780] sm:$0xff]
                  %1507 = vst [vmem:[%s1265 + $0x3c0] sm:$0xff] %v1506
                  %v1508 = vld [vmem:[%s1264 + $0x790] sm:$0xff]
                  %1509 = vst [vmem:[%s1265 + $0x3c8] sm:$0xff] %v1508
                  %v1510 = vld [vmem:[%s1264 + $0x7a0] sm:$0xff]
                  %1511 = vst [vmem:[%s1265 + $0x3d0] sm:$0xff] %v1510
                  %v1512 = vld [vmem:[%s1264 + $0x7b0] sm:$0xff]
                  %1513 = vst [vmem:[%s1265 + $0x3d8] sm:$0xff] %v1512
                  %v1514 = vld [vmem:[%s1264 + $0x7c0] sm:$0xff]
                  %1515 = vst [vmem:[%s1265 + $0x3e0] sm:$0xff] %v1514
                  %v1516 = vld [vmem:[%s1264 + $0x7d0] sm:$0xff]
                  %1517 = vst [vmem:[%s1265 + $0x3e8] sm:$0xff] %v1516
                  %v1518 = vld [vmem:[%s1264 + $0x7e0] sm:$0xff]
                  %1519 = vst [vmem:[%s1265 + $0x3f0] sm:$0xff] %v1518
                  %v1520 = vld [vmem:[%s1264 + $0x7f0] sm:$0xff]
                  %1521 = vst [vmem:[%s1265 + $0x3f8] sm:$0xff] %v1520
                  %v1522 = vld [vmem:[%s1264 + $0x800] sm:$0xff]
                  %1523 = vst [vmem:[%s1265 + $0x400] sm:$0xff] %v1522
                  %v1524 = vld [vmem:[%s1264 + $0x810] sm:$0xff]
                  %1525 = vst [vmem:[%s1265 + $0x408] sm:$0xff] %v1524
                  %v1526 = vld [vmem:[%s1264 + $0x820] sm:$0xff]
                  %1527 = vst [vmem:[%s1265 + $0x410] sm:$0xff] %v1526
                  %v1528 = vld [vmem:[%s1264 + $0x830] sm:$0xff]
                  %1529 = vst [vmem:[%s1265 + $0x418] sm:$0xff] %v1528
                  %v1530 = vld [vmem:[%s1264 + $0x840] sm:$0xff]
                  %1531 = vst [vmem:[%s1265 + $0x420] sm:$0xff] %v1530
                  %v1532 = vld [vmem:[%s1264 + $0x850] sm:$0xff]
                  %1533 = vst [vmem:[%s1265 + $0x428] sm:$0xff] %v1532
                  %v1534 = vld [vmem:[%s1264 + $0x860] sm:$0xff]
                  %1535 = vst [vmem:[%s1265 + $0x430] sm:$0xff] %v1534
                  %v1536 = vld [vmem:[%s1264 + $0x870] sm:$0xff]
                  %1537 = vst [vmem:[%s1265 + $0x438] sm:$0xff] %v1536
                  %v1538 = vld [vmem:[%s1264 + $0x880] sm:$0xff]
                  %1539 = vst [vmem:[%s1265 + $0x440] sm:$0xff] %v1538
                  %v1540 = vld [vmem:[%s1264 + $0x890] sm:$0xff]
                  %1541 = vst [vmem:[%s1265 + $0x448] sm:$0xff] %v1540
                  %v1542 = vld [vmem:[%s1264 + $0x8a0] sm:$0xff]
                  %1543 = vst [vmem:[%s1265 + $0x450] sm:$0xff] %v1542
                  %v1544 = vld [vmem:[%s1264 + $0x8b0] sm:$0xff]
                  %1545 = vst [vmem:[%s1265 + $0x458] sm:$0xff] %v1544
                  %v1546 = vld [vmem:[%s1264 + $0x8c0] sm:$0xff]
                  %1547 = vst [vmem:[%s1265 + $0x460] sm:$0xff] %v1546
                  %v1548 = vld [vmem:[%s1264 + $0x8d0] sm:$0xff]
                  %1549 = vst [vmem:[%s1265 + $0x468] sm:$0xff] %v1548
                  %v1550 = vld [vmem:[%s1264 + $0x8e0] sm:$0xff]
                  %1551 = vst [vmem:[%s1265 + $0x470] sm:$0xff] %v1550
                  %v1552 = vld [vmem:[%s1264 + $0x8f0] sm:$0xff]
                  %1553 = vst [vmem:[%s1265 + $0x478] sm:$0xff] %v1552
                  %v1554 = vld [vmem:[%s1264 + $0x900] sm:$0xff]
                  %1555 = vst [vmem:[%s1265 + $0x480] sm:$0xff] %v1554
                  %v1556 = vld [vmem:[%s1264 + $0x910] sm:$0xff]
                  %1557 = vst [vmem:[%s1265 + $0x488] sm:$0xff] %v1556
                  %v1558 = vld [vmem:[%s1264 + $0x920] sm:$0xff]
                  %1559 = vst [vmem:[%s1265 + $0x490] sm:$0xff] %v1558
                  %v1560 = vld [vmem:[%s1264 + $0x930] sm:$0xff]
                  %1561 = vst [vmem:[%s1265 + $0x498] sm:$0xff] %v1560
                  %v1562 = vld [vmem:[%s1264 + $0x940] sm:$0xff]
                  %1563 = vst [vmem:[%s1265 + $0x4a0] sm:$0xff] %v1562
                  %v1564 = vld [vmem:[%s1264 + $0x950] sm:$0xff]
                  %1565 = vst [vmem:[%s1265 + $0x4a8] sm:$0xff] %v1564
                  %v1566 = vld [vmem:[%s1264 + $0x960] sm:$0xff]
                  %1567 = vst [vmem:[%s1265 + $0x4b0] sm:$0xff] %v1566
                  %v1568 = vld [vmem:[%s1264 + $0x970] sm:$0xff]
                  %1569 = vst [vmem:[%s1265 + $0x4b8] sm:$0xff] %v1568
                  %v1570 = vld [vmem:[%s1264 + $0x980] sm:$0xff]
                  %1571 = vst [vmem:[%s1265 + $0x4c0] sm:$0xff] %v1570
                  %v1572 = vld [vmem:[%s1264 + $0x990] sm:$0xff]
                  %1573 = vst [vmem:[%s1265 + $0x4c8] sm:$0xff] %v1572
                  %v1574 = vld [vmem:[%s1264 + $0x9a0] sm:$0xff]
                  %1575 = vst [vmem:[%s1265 + $0x4d0] sm:$0xff] %v1574
                  %v1576 = vld [vmem:[%s1264 + $0x9b0] sm:$0xff]
                  %1577 = vst [vmem:[%s1265 + $0x4d8] sm:$0xff] %v1576
                  %v1578 = vld [vmem:[%s1264 + $0x9c0] sm:$0xff]
                  %1579 = vst [vmem:[%s1265 + $0x4e0] sm:$0xff] %v1578
                  %v1580 = vld [vmem:[%s1264 + $0x9d0] sm:$0xff]
                  %1581 = vst [vmem:[%s1265 + $0x4e8] sm:$0xff] %v1580
                  %v1582 = vld [vmem:[%s1264 + $0x9e0] sm:$0xff]
                  %1583 = vst [vmem:[%s1265 + $0x4f0] sm:$0xff] %v1582
                  %v1584 = vld [vmem:[%s1264 + $0x9f0] sm:$0xff]
                  %1585 = vst [vmem:[%s1265 + $0x4f8] sm:$0xff] %v1584
                  %v1586 = vld [vmem:[%s1264 + $0xa00] sm:$0xff]
                  %1587 = vst [vmem:[%s1265 + $0x500] sm:$0xff] %v1586
                  %v1588 = vld [vmem:[%s1264 + $0xa10] sm:$0xff]
                  %1589 = vst [vmem:[%s1265 + $0x508] sm:$0xff] %v1588
                  %v1590 = vld [vmem:[%s1264 + $0xa20] sm:$0xff]
                  %1591 = vst [vmem:[%s1265 + $0x510] sm:$0xff] %v1590
                  %v1592 = vld [vmem:[%s1264 + $0xa30] sm:$0xff]
                  %1593 = vst [vmem:[%s1265 + $0x518] sm:$0xff] %v1592
                  %v1594 = vld [vmem:[%s1264 + $0xa40] sm:$0xff]
                  %1595 = vst [vmem:[%s1265 + $0x520] sm:$0xff] %v1594
                  %v1596 = vld [vmem:[%s1264 + $0xa50] sm:$0xff]
                  %1597 = vst [vmem:[%s1265 + $0x528] sm:$0xff] %v1596
                  %v1598 = vld [vmem:[%s1264 + $0xa60] sm:$0xff]
                  %1599 = vst [vmem:[%s1265 + $0x530] sm:$0xff] %v1598
                  %v1600 = vld [vmem:[%s1264 + $0xa70] sm:$0xff]
                  %1601 = vst [vmem:[%s1265 + $0x538] sm:$0xff] %v1600
                  %v1602 = vld [vmem:[%s1264 + $0xa80] sm:$0xff]
                  %1603 = vst [vmem:[%s1265 + $0x540] sm:$0xff] %v1602
                  %v1604 = vld [vmem:[%s1264 + $0xa90] sm:$0xff]
                  %1605 = vst [vmem:[%s1265 + $0x548] sm:$0xff] %v1604
                  %v1606 = vld [vmem:[%s1264 + $0xaa0] sm:$0xff]
                  %1607 = vst [vmem:[%s1265 + $0x550] sm:$0xff] %v1606
                  %v1608 = vld [vmem:[%s1264 + $0xab0] sm:$0xff]
                  %1609 = vst [vmem:[%s1265 + $0x558] sm:$0xff] %v1608
                  %v1610 = vld [vmem:[%s1264 + $0xac0] sm:$0xff]
                  %1611 = vst [vmem:[%s1265 + $0x560] sm:$0xff] %v1610
                  %v1612 = vld [vmem:[%s1264 + $0xad0] sm:$0xff]
                  %1613 = vst [vmem:[%s1265 + $0x568] sm:$0xff] %v1612
                  %v1614 = vld [vmem:[%s1264 + $0xae0] sm:$0xff]
                  %1615 = vst [vmem:[%s1265 + $0x570] sm:$0xff] %v1614
                  %v1616 = vld [vmem:[%s1264 + $0xaf0] sm:$0xff]
                  %1617 = vst [vmem:[%s1265 + $0x578] sm:$0xff] %v1616
                  %v1618 = vld [vmem:[%s1264 + $0xb00] sm:$0xff]
                  %1619 = vst [vmem:[%s1265 + $0x580] sm:$0xff] %v1618
                  %v1620 = vld [vmem:[%s1264 + $0xb10] sm:$0xff]
                  %1621 = vst [vmem:[%s1265 + $0x588] sm:$0xff] %v1620
                  %v1622 = vld [vmem:[%s1264 + $0xb20] sm:$0xff]
                  %1623 = vst [vmem:[%s1265 + $0x590] sm:$0xff] %v1622
                  %v1624 = vld [vmem:[%s1264 + $0xb30] sm:$0xff]
                  %1625 = vst [vmem:[%s1265 + $0x598] sm:$0xff] %v1624
                  %v1626 = vld [vmem:[%s1264 + $0xb40] sm:$0xff]
                  %1627 = vst [vmem:[%s1265 + $0x5a0] sm:$0xff] %v1626
                  %v1628 = vld [vmem:[%s1264 + $0xb50] sm:$0xff]
                  %1629 = vst [vmem:[%s1265 + $0x5a8] sm:$0xff] %v1628
                  %v1630 = vld [vmem:[%s1264 + $0xb60] sm:$0xff]
                  %1631 = vst [vmem:[%s1265 + $0x5b0] sm:$0xff] %v1630
                  %v1632 = vld [vmem:[%s1264 + $0xb70] sm:$0xff]
                  %1633 = vst [vmem:[%s1265 + $0x5b8] sm:$0xff] %v1632
                  %v1634 = vld [vmem:[%s1264 + $0xb80] sm:$0xff]
                  %1635 = vst [vmem:[%s1265 + $0x5c0] sm:$0xff] %v1634
                  %v1636 = vld [vmem:[%s1264 + $0xb90] sm:$0xff]
                  %1637 = vst [vmem:[%s1265 + $0x5c8] sm:$0xff] %v1636
                  %v1638 = vld [vmem:[%s1264 + $0xba0] sm:$0xff]
                  %1639 = vst [vmem:[%s1265 + $0x5d0] sm:$0xff] %v1638
                  %v1640 = vld [vmem:[%s1264 + $0xbb0] sm:$0xff]
                  %1641 = vst [vmem:[%s1265 + $0x5d8] sm:$0xff] %v1640
                  %v1642 = vld [vmem:[%s1264 + $0xbc0] sm:$0xff]
                  %1643 = vst [vmem:[%s1265 + $0x5e0] sm:$0xff] %v1642
                  %v1644 = vld [vmem:[%s1264 + $0xbd0] sm:$0xff]
                  %1645 = vst [vmem:[%s1265 + $0x5e8] sm:$0xff] %v1644
                  %v1646 = vld [vmem:[%s1264 + $0xbe0] sm:$0xff]
                  %1647 = vst [vmem:[%s1265 + $0x5f0] sm:$0xff] %v1646
                  %v1648 = vld [vmem:[%s1264 + $0xbf0] sm:$0xff]
                  %1649 = vst [vmem:[%s1265 + $0x5f8] sm:$0xff] %v1648
                  %v1650 = vld [vmem:[%s1264 + $0xc00] sm:$0xff]
                  %1651 = vst [vmem:[%s1265 + $0x600] sm:$0xff] %v1650
                  %v1652 = vld [vmem:[%s1264 + $0xc10] sm:$0xff]
                  %1653 = vst [vmem:[%s1265 + $0x608] sm:$0xff] %v1652
                  %v1654 = vld [vmem:[%s1264 + $0xc20] sm:$0xff]
                  %1655 = vst [vmem:[%s1265 + $0x610] sm:$0xff] %v1654
                  %v1656 = vld [vmem:[%s1264 + $0xc30] sm:$0xff]
                  %1657 = vst [vmem:[%s1265 + $0x618] sm:$0xff] %v1656
                  %v1658 = vld [vmem:[%s1264 + $0xc40] sm:$0xff]
                  %1659 = vst [vmem:[%s1265 + $0x620] sm:$0xff] %v1658
                  %v1660 = vld [vmem:[%s1264 + $0xc50] sm:$0xff]
                  %1661 = vst [vmem:[%s1265 + $0x628] sm:$0xff] %v1660
                  %v1662 = vld [vmem:[%s1264 + $0xc60] sm:$0xff]
                  %1663 = vst [vmem:[%s1265 + $0x630] sm:$0xff] %v1662
                  %v1664 = vld [vmem:[%s1264 + $0xc70] sm:$0xff]
                  %1665 = vst [vmem:[%s1265 + $0x638] sm:$0xff] %v1664
                  %v1666 = vld [vmem:[%s1264 + $0xc80] sm:$0xff]
                  %1667 = vst [vmem:[%s1265 + $0x640] sm:$0xff] %v1666
                  %v1668 = vld [vmem:[%s1264 + $0xc90] sm:$0xff]
                  %1669 = vst [vmem:[%s1265 + $0x648] sm:$0xff] %v1668
                  %v1670 = vld [vmem:[%s1264 + $0xca0] sm:$0xff]
                  %1671 = vst [vmem:[%s1265 + $0x650] sm:$0xff] %v1670
                  %v1672 = vld [vmem:[%s1264 + $0xcb0] sm:$0xff]
                  %1673 = vst [vmem:[%s1265 + $0x658] sm:$0xff] %v1672
                  %v1674 = vld [vmem:[%s1264 + $0xcc0] sm:$0xff]
                  %1675 = vst [vmem:[%s1265 + $0x660] sm:$0xff] %v1674
                  %v1676 = vld [vmem:[%s1264 + $0xcd0] sm:$0xff]
                  %1677 = vst [vmem:[%s1265 + $0x668] sm:$0xff] %v1676
                  %v1678 = vld [vmem:[%s1264 + $0xce0] sm:$0xff]
                  %1679 = vst [vmem:[%s1265 + $0x670] sm:$0xff] %v1678
                  %v1680 = vld [vmem:[%s1264 + $0xcf0] sm:$0xff]
                  %1681 = vst [vmem:[%s1265 + $0x678] sm:$0xff] %v1680
                  %v1682 = vld [vmem:[%s1264 + $0xd00] sm:$0xff]
                  %1683 = vst [vmem:[%s1265 + $0x680] sm:$0xff] %v1682
                  %v1684 = vld [vmem:[%s1264 + $0xd10] sm:$0xff]
                  %1685 = vst [vmem:[%s1265 + $0x688] sm:$0xff] %v1684
                  %v1686 = vld [vmem:[%s1264 + $0xd20] sm:$0xff]
                  %1687 = vst [vmem:[%s1265 + $0x690] sm:$0xff] %v1686
                  %v1688 = vld [vmem:[%s1264 + $0xd30] sm:$0xff]
                  %1689 = vst [vmem:[%s1265 + $0x698] sm:$0xff] %v1688
                  %v1690 = vld [vmem:[%s1264 + $0xd40] sm:$0xff]
                  %1691 = vst [vmem:[%s1265 + $0x6a0] sm:$0xff] %v1690
                  %v1692 = vld [vmem:[%s1264 + $0xd50] sm:$0xff]
                  %1693 = vst [vmem:[%s1265 + $0x6a8] sm:$0xff] %v1692
                  %v1694 = vld [vmem:[%s1264 + $0xd60] sm:$0xff]
                  %1695 = vst [vmem:[%s1265 + $0x6b0] sm:$0xff] %v1694
                  %v1696 = vld [vmem:[%s1264 + $0xd70] sm:$0xff]
                  %1697 = vst [vmem:[%s1265 + $0x6b8] sm:$0xff] %v1696
                  %v1698 = vld [vmem:[%s1264 + $0xd80] sm:$0xff]
                  %1699 = vst [vmem:[%s1265 + $0x6c0] sm:$0xff] %v1698
                  %v1700 = vld [vmem:[%s1264 + $0xd90] sm:$0xff]
                  %1701 = vst [vmem:[%s1265 + $0x6c8] sm:$0xff] %v1700
                  %v1702 = vld [vmem:[%s1264 + $0xda0] sm:$0xff]
                  %1703 = vst [vmem:[%s1265 + $0x6d0] sm:$0xff] %v1702
                  %v1704 = vld [vmem:[%s1264 + $0xdb0] sm:$0xff]
                  %1705 = vst [vmem:[%s1265 + $0x6d8] sm:$0xff] %v1704
                  %v1706 = vld [vmem:[%s1264 + $0xdc0] sm:$0xff]
                  %1707 = vst [vmem:[%s1265 + $0x6e0] sm:$0xff] %v1706
                  %v1708 = vld [vmem:[%s1264 + $0xdd0] sm:$0xff]
                  %1709 = vst [vmem:[%s1265 + $0x6e8] sm:$0xff] %v1708
                  %v1710 = vld [vmem:[%s1264 + $0xde0] sm:$0xff]
                  %1711 = vst [vmem:[%s1265 + $0x6f0] sm:$0xff] %v1710
                  %v1712 = vld [vmem:[%s1264 + $0xdf0] sm:$0xff]
                  %1713 = vst [vmem:[%s1265 + $0x6f8] sm:$0xff] %v1712
                  %v1714 = vld [vmem:[%s1264 + $0xe00] sm:$0xff]
                  %1715 = vst [vmem:[%s1265 + $0x700] sm:$0xff] %v1714
                  %v1716 = vld [vmem:[%s1264 + $0xe10] sm:$0xff]
                  %1717 = vst [vmem:[%s1265 + $0x708] sm:$0xff] %v1716
                  %v1718 = vld [vmem:[%s1264 + $0xe20] sm:$0xff]
                  %1719 = vst [vmem:[%s1265 + $0x710] sm:$0xff] %v1718
                  %v1720 = vld [vmem:[%s1264 + $0xe30] sm:$0xff]
                  %1721 = vst [vmem:[%s1265 + $0x718] sm:$0xff] %v1720
                  %v1722 = vld [vmem:[%s1264 + $0xe40] sm:$0xff]
                  %1723 = vst [vmem:[%s1265 + $0x720] sm:$0xff] %v1722
                  %v1724 = vld [vmem:[%s1264 + $0xe50] sm:$0xff]
                  %1725 = vst [vmem:[%s1265 + $0x728] sm:$0xff] %v1724
                  %v1726 = vld [vmem:[%s1264 + $0xe60] sm:$0xff]
                  %1727 = vst [vmem:[%s1265 + $0x730] sm:$0xff] %v1726
                  %v1728 = vld [vmem:[%s1264 + $0xe70] sm:$0xff]
                  %1729 = vst [vmem:[%s1265 + $0x738] sm:$0xff] %v1728
                  %v1730 = vld [vmem:[%s1264 + $0xe80] sm:$0xff]
                  %1731 = vst [vmem:[%s1265 + $0x740] sm:$0xff] %v1730
                  %v1732 = vld [vmem:[%s1264 + $0xe90] sm:$0xff]
                  %1733 = vst [vmem:[%s1265 + $0x748] sm:$0xff] %v1732
                  %v1734 = vld [vmem:[%s1264 + $0xea0] sm:$0xff]
                  %1735 = vst [vmem:[%s1265 + $0x750] sm:$0xff] %v1734
                  %v1736 = vld [vmem:[%s1264 + $0xeb0] sm:$0xff]
                  %1737 = vst [vmem:[%s1265 + $0x758] sm:$0xff] %v1736
                  %v1738 = vld [vmem:[%s1264 + $0xec0] sm:$0xff]
                  %1739 = vst [vmem:[%s1265 + $0x760] sm:$0xff] %v1738
                  %v1740 = vld [vmem:[%s1264 + $0xed0] sm:$0xff]
                  %1741 = vst [vmem:[%s1265 + $0x768] sm:$0xff] %v1740
                  %v1742 = vld [vmem:[%s1264 + $0xee0] sm:$0xff]
                  %1743 = vst [vmem:[%s1265 + $0x770] sm:$0xff] %v1742
                  %v1744 = vld [vmem:[%s1264 + $0xef0] sm:$0xff]
                  %1745 = vst [vmem:[%s1265 + $0x778] sm:$0xff] %v1744
                  %v1746 = vld [vmem:[%s1264 + $0xf00] sm:$0xff]
                  %1747 = vst [vmem:[%s1265 + $0x780] sm:$0xff] %v1746
                  %v1748 = vld [vmem:[%s1264 + $0xf10] sm:$0xff]
                  %1749 = vst [vmem:[%s1265 + $0x788] sm:$0xff] %v1748
                  %v1750 = vld [vmem:[%s1264 + $0xf20] sm:$0xff]
                  %1751 = vst [vmem:[%s1265 + $0x790] sm:$0xff] %v1750
                  %v1752 = vld [vmem:[%s1264 + $0xf30] sm:$0xff]
                  %1753 = vst [vmem:[%s1265 + $0x798] sm:$0xff] %v1752
                  %v1754 = vld [vmem:[%s1264 + $0xf40] sm:$0xff]
                  %1755 = vst [vmem:[%s1265 + $0x7a0] sm:$0xff] %v1754
                  %v1756 = vld [vmem:[%s1264 + $0xf50] sm:$0xff]
                  %1757 = vst [vmem:[%s1265 + $0x7a8] sm:$0xff] %v1756
                  %v1758 = vld [vmem:[%s1264 + $0xf60] sm:$0xff]
                  %1759 = vst [vmem:[%s1265 + $0x7b0] sm:$0xff] %v1758
                  %v1760 = vld [vmem:[%s1264 + $0xf70] sm:$0xff]
                  %1761 = vst [vmem:[%s1265 + $0x7b8] sm:$0xff] %v1760
                  %v1762 = vld [vmem:[%s1264 + $0xf80] sm:$0xff]
                  %1763 = vst [vmem:[%s1265 + $0x7c0] sm:$0xff] %v1762
                  %v1764 = vld [vmem:[%s1264 + $0xf90] sm:$0xff]
                  %1765 = vst [vmem:[%s1265 + $0x7c8] sm:$0xff] %v1764
                  %v1766 = vld [vmem:[%s1264 + $0xfa0] sm:$0xff]
                  %1767 = vst [vmem:[%s1265 + $0x7d0] sm:$0xff] %v1766
                  %v1768 = vld [vmem:[%s1264 + $0xfb0] sm:$0xff]
                  %1769 = vst [vmem:[%s1265 + $0x7d8] sm:$0xff] %v1768
                  %v1770 = vld [vmem:[%s1264 + $0xfc0] sm:$0xff]
                  %1771 = vst [vmem:[%s1265 + $0x7e0] sm:$0xff] %v1770
                  %v1772 = vld [vmem:[%s1264 + $0xfd0] sm:$0xff]
                  %1773 = vst [vmem:[%s1265 + $0x7e8] sm:$0xff] %v1772
                  %v1774 = vld [vmem:[%s1264 + $0xfe0] sm:$0xff]
                  %1775 = vst [vmem:[%s1265 + $0x7f0] sm:$0xff] %v1774
                  %v1776 = vld [vmem:[%s1264 + $0xff0] sm:$0xff]
                  %1777 = vst [vmem:[%s1265 + $0x7f8] sm:$0xff] %v1776
                  %s1778 = sadd.s32 1, %s1263
                  %p1779 = scmp.ge.s32.totalorder %s1778, 1
                  %s1780 = scalar_select %p1779, 0, %s1778
                  %s1781 = smul.u32 %s1780, 8
                  %s1782 = smul.u32 %s1780, 8
                  %s1783 = scalar_lea.vmem %s194, %s1781
                  %s1784 = scalar_lea.vmem %s188, %s1782 [#allocation3]
                $region63: #{cnn_forward.5} parent=57 // loop_footer
                  %s1262 = sadd.s32 1, %s1258
                $region64: #{cnn_forward.5} parent=57 // loop_footer_branch
                  %1257 = sbr.rel target = $region60
                $region65: #{cnn_forward.5} parent=57 // loop_exit
                  _
                %s1786 = ssub.s32 1, 1
                loop: start=0, step=1, limit=1
                $region66: #{cnn_forward.5} parent=57 // loop_pre_header
                  _
                $region67: #{cnn_forward.5} parent=57 // loop_header
                  %s1788 = sphi 0, %s1792
                  %p1789 = scmp.ge.s32.totalorder %s1788, 1
                  %s1793 = sphi %s1255, %s1255
                  %s1794 = sphi %s1256, %s1256
                $region68: #{cnn_forward.5} parent=57 // loop_header_branch
                  %1791 = sbr.rel (%p1789) target = $region72
                $region69: #{cnn_forward.5} parent=57 // loop_body
                  %v1795 = vld [vmem:[%s1793] sm:%s1786]
                  %1796 = vst [vmem:[%s1794] sm:%s1786] %v1795
                  %v1797 = vld [vmem:[%s1793 + $0x10] sm:%s1786]
                  %1798 = vst [vmem:[%s1794 + $0x8] sm:%s1786] %v1797
                  %v1799 = vld [vmem:[%s1793 + $0x20] sm:%s1786]
                  %1800 = vst [vmem:[%s1794 + $0x10] sm:%s1786] %v1799
                  %v1801 = vld [vmem:[%s1793 + $0x30] sm:%s1786]
                  %1802 = vst [vmem:[%s1794 + $0x18] sm:%s1786] %v1801
                  %v1803 = vld [vmem:[%s1793 + $0x40] sm:%s1786]
                  %1804 = vst [vmem:[%s1794 + $0x20] sm:%s1786] %v1803
                  %v1805 = vld [vmem:[%s1793 + $0x50] sm:%s1786]
                  %1806 = vst [vmem:[%s1794 + $0x28] sm:%s1786] %v1805
                  %v1807 = vld [vmem:[%s1793 + $0x60] sm:%s1786]
                  %1808 = vst [vmem:[%s1794 + $0x30] sm:%s1786] %v1807
                  %v1809 = vld [vmem:[%s1793 + $0x70] sm:%s1786]
                  %1810 = vst [vmem:[%s1794 + $0x38] sm:%s1786] %v1809
                  %v1811 = vld [vmem:[%s1793 + $0x80] sm:%s1786]
                  %1812 = vst [vmem:[%s1794 + $0x40] sm:%s1786] %v1811
                  %v1813 = vld [vmem:[%s1793 + $0x90] sm:%s1786]
                  %1814 = vst [vmem:[%s1794 + $0x48] sm:%s1786] %v1813
                  %v1815 = vld [vmem:[%s1793 + $0xa0] sm:%s1786]
                  %1816 = vst [vmem:[%s1794 + $0x50] sm:%s1786] %v1815
                  %v1817 = vld [vmem:[%s1793 + $0xb0] sm:%s1786]
                  %1818 = vst [vmem:[%s1794 + $0x58] sm:%s1786] %v1817
                  %v1819 = vld [vmem:[%s1793 + $0xc0] sm:%s1786]
                  %1820 = vst [vmem:[%s1794 + $0x60] sm:%s1786] %v1819
                  %v1821 = vld [vmem:[%s1793 + $0xd0] sm:%s1786]
                  %1822 = vst [vmem:[%s1794 + $0x68] sm:%s1786] %v1821
                  %v1823 = vld [vmem:[%s1793 + $0xe0] sm:%s1786]
                  %1824 = vst [vmem:[%s1794 + $0x70] sm:%s1786] %v1823
                  %v1825 = vld [vmem:[%s1793 + $0xf0] sm:%s1786]
                  %1826 = vst [vmem:[%s1794 + $0x78] sm:%s1786] %v1825
                  %v1827 = vld [vmem:[%s1793 + $0x100] sm:%s1786]
                  %1828 = vst [vmem:[%s1794 + $0x80] sm:%s1786] %v1827
                  %v1829 = vld [vmem:[%s1793 + $0x110] sm:%s1786]
                  %1830 = vst [vmem:[%s1794 + $0x88] sm:%s1786] %v1829
                  %v1831 = vld [vmem:[%s1793 + $0x120] sm:%s1786]
                  %1832 = vst [vmem:[%s1794 + $0x90] sm:%s1786] %v1831
                  %v1833 = vld [vmem:[%s1793 + $0x130] sm:%s1786]
                  %1834 = vst [vmem:[%s1794 + $0x98] sm:%s1786] %v1833
                  %v1835 = vld [vmem:[%s1793 + $0x140] sm:%s1786]
                  %1836 = vst [vmem:[%s1794 + $0xa0] sm:%s1786] %v1835
                  %v1837 = vld [vmem:[%s1793 + $0x150] sm:%s1786]
                  %1838 = vst [vmem:[%s1794 + $0xa8] sm:%s1786] %v1837
                  %v1839 = vld [vmem:[%s1793 + $0x160] sm:%s1786]
                  %1840 = vst [vmem:[%s1794 + $0xb0] sm:%s1786] %v1839
                  %v1841 = vld [vmem:[%s1793 + $0x170] sm:%s1786]
                  %1842 = vst [vmem:[%s1794 + $0xb8] sm:%s1786] %v1841
                  %v1843 = vld [vmem:[%s1793 + $0x180] sm:%s1786]
                  %1844 = vst [vmem:[%s1794 + $0xc0] sm:%s1786] %v1843
                  %v1845 = vld [vmem:[%s1793 + $0x190] sm:%s1786]
                  %1846 = vst [vmem:[%s1794 + $0xc8] sm:%s1786] %v1845
                  %v1847 = vld [vmem:[%s1793 + $0x1a0] sm:%s1786]
                  %1848 = vst [vmem:[%s1794 + $0xd0] sm:%s1786] %v1847
                  %v1849 = vld [vmem:[%s1793 + $0x1b0] sm:%s1786]
                  %1850 = vst [vmem:[%s1794 + $0xd8] sm:%s1786] %v1849
                  %v1851 = vld [vmem:[%s1793 + $0x1c0] sm:%s1786]
                  %1852 = vst [vmem:[%s1794 + $0xe0] sm:%s1786] %v1851
                  %v1853 = vld [vmem:[%s1793 + $0x1d0] sm:%s1786]
                  %1854 = vst [vmem:[%s1794 + $0xe8] sm:%s1786] %v1853
                  %v1855 = vld [vmem:[%s1793 + $0x1e0] sm:%s1786]
                  %1856 = vst [vmem:[%s1794 + $0xf0] sm:%s1786] %v1855
                  %v1857 = vld [vmem:[%s1793 + $0x1f0] sm:%s1786]
                  %1858 = vst [vmem:[%s1794 + $0xf8] sm:%s1786] %v1857
                  %v1859 = vld [vmem:[%s1793 + $0x200] sm:%s1786]
                  %1860 = vst [vmem:[%s1794 + $0x100] sm:%s1786] %v1859
                  %v1861 = vld [vmem:[%s1793 + $0x210] sm:%s1786]
                  %1862 = vst [vmem:[%s1794 + $0x108] sm:%s1786] %v1861
                  %v1863 = vld [vmem:[%s1793 + $0x220] sm:%s1786]
                  %1864 = vst [vmem:[%s1794 + $0x110] sm:%s1786] %v1863
                  %v1865 = vld [vmem:[%s1793 + $0x230] sm:%s1786]
                  %1866 = vst [vmem:[%s1794 + $0x118] sm:%s1786] %v1865
                  %v1867 = vld [vmem:[%s1793 + $0x240] sm:%s1786]
                  %1868 = vst [vmem:[%s1794 + $0x120] sm:%s1786] %v1867
                  %v1869 = vld [vmem:[%s1793 + $0x250] sm:%s1786]
                  %1870 = vst [vmem:[%s1794 + $0x128] sm:%s1786] %v1869
                  %v1871 = vld [vmem:[%s1793 + $0x260] sm:%s1786]
                  %1872 = vst [vmem:[%s1794 + $0x130] sm:%s1786] %v1871
                  %v1873 = vld [vmem:[%s1793 + $0x270] sm:%s1786]
                  %1874 = vst [vmem:[%s1794 + $0x138] sm:%s1786] %v1873
                  %v1875 = vld [vmem:[%s1793 + $0x280] sm:%s1786]
                  %1876 = vst [vmem:[%s1794 + $0x140] sm:%s1786] %v1875
                  %v1877 = vld [vmem:[%s1793 + $0x290] sm:%s1786]
                  %1878 = vst [vmem:[%s1794 + $0x148] sm:%s1786] %v1877
                  %v1879 = vld [vmem:[%s1793 + $0x2a0] sm:%s1786]
                  %1880 = vst [vmem:[%s1794 + $0x150] sm:%s1786] %v1879
                  %v1881 = vld [vmem:[%s1793 + $0x2b0] sm:%s1786]
                  %1882 = vst [vmem:[%s1794 + $0x158] sm:%s1786] %v1881
                  %v1883 = vld [vmem:[%s1793 + $0x2c0] sm:%s1786]
                  %1884 = vst [vmem:[%s1794 + $0x160] sm:%s1786] %v1883
                  %v1885 = vld [vmem:[%s1793 + $0x2d0] sm:%s1786]
                  %1886 = vst [vmem:[%s1794 + $0x168] sm:%s1786] %v1885
                  %v1887 = vld [vmem:[%s1793 + $0x2e0] sm:%s1786]
                  %1888 = vst [vmem:[%s1794 + $0x170] sm:%s1786] %v1887
                  %v1889 = vld [vmem:[%s1793 + $0x2f0] sm:%s1786]
                  %1890 = vst [vmem:[%s1794 + $0x178] sm:%s1786] %v1889
                  %v1891 = vld [vmem:[%s1793 + $0x300] sm:%s1786]
                  %1892 = vst [vmem:[%s1794 + $0x180] sm:%s1786] %v1891
                  %v1893 = vld [vmem:[%s1793 + $0x310] sm:%s1786]
                  %1894 = vst [vmem:[%s1794 + $0x188] sm:%s1786] %v1893
                  %v1895 = vld [vmem:[%s1793 + $0x320] sm:%s1786]
                  %1896 = vst [vmem:[%s1794 + $0x190] sm:%s1786] %v1895
                  %v1897 = vld [vmem:[%s1793 + $0x330] sm:%s1786]
                  %1898 = vst [vmem:[%s1794 + $0x198] sm:%s1786] %v1897
                  %v1899 = vld [vmem:[%s1793 + $0x340] sm:%s1786]
                  %1900 = vst [vmem:[%s1794 + $0x1a0] sm:%s1786] %v1899
                  %v1901 = vld [vmem:[%s1793 + $0x350] sm:%s1786]
                  %1902 = vst [vmem:[%s1794 + $0x1a8] sm:%s1786] %v1901
                  %v1903 = vld [vmem:[%s1793 + $0x360] sm:%s1786]
                  %1904 = vst [vmem:[%s1794 + $0x1b0] sm:%s1786] %v1903
                  %v1905 = vld [vmem:[%s1793 + $0x370] sm:%s1786]
                  %1906 = vst [vmem:[%s1794 + $0x1b8] sm:%s1786] %v1905
                  %v1907 = vld [vmem:[%s1793 + $0x380] sm:%s1786]
                  %1908 = vst [vmem:[%s1794 + $0x1c0] sm:%s1786] %v1907
                  %v1909 = vld [vmem:[%s1793 + $0x390] sm:%s1786]
                  %1910 = vst [vmem:[%s1794 + $0x1c8] sm:%s1786] %v1909
                  %v1911 = vld [vmem:[%s1793 + $0x3a0] sm:%s1786]
                  %1912 = vst [vmem:[%s1794 + $0x1d0] sm:%s1786] %v1911
                  %v1913 = vld [vmem:[%s1793 + $0x3b0] sm:%s1786]
                  %1914 = vst [vmem:[%s1794 + $0x1d8] sm:%s1786] %v1913
                  %v1915 = vld [vmem:[%s1793 + $0x3c0] sm:%s1786]
                  %1916 = vst [vmem:[%s1794 + $0x1e0] sm:%s1786] %v1915
                  %v1917 = vld [vmem:[%s1793 + $0x3d0] sm:%s1786]
                  %1918 = vst [vmem:[%s1794 + $0x1e8] sm:%s1786] %v1917
                  %v1919 = vld [vmem:[%s1793 + $0x3e0] sm:%s1786]
                  %1920 = vst [vmem:[%s1794 + $0x1f0] sm:%s1786] %v1919
                  %v1921 = vld [vmem:[%s1793 + $0x3f0] sm:%s1786]
                  %1922 = vst [vmem:[%s1794 + $0x1f8] sm:%s1786] %v1921
                  %v1923 = vld [vmem:[%s1793 + $0x400] sm:%s1786]
                  %1924 = vst [vmem:[%s1794 + $0x200] sm:%s1786] %v1923
                  %v1925 = vld [vmem:[%s1793 + $0x410] sm:%s1786]
                  %1926 = vst [vmem:[%s1794 + $0x208] sm:%s1786] %v1925
                  %v1927 = vld [vmem:[%s1793 + $0x420] sm:%s1786]
                  %1928 = vst [vmem:[%s1794 + $0x210] sm:%s1786] %v1927
                  %v1929 = vld [vmem:[%s1793 + $0x430] sm:%s1786]
                  %1930 = vst [vmem:[%s1794 + $0x218] sm:%s1786] %v1929
                  %v1931 = vld [vmem:[%s1793 + $0x440] sm:%s1786]
                  %1932 = vst [vmem:[%s1794 + $0x220] sm:%s1786] %v1931
                  %v1933 = vld [vmem:[%s1793 + $0x450] sm:%s1786]
                  %1934 = vst [vmem:[%s1794 + $0x228] sm:%s1786] %v1933
                  %v1935 = vld [vmem:[%s1793 + $0x460] sm:%s1786]
                  %1936 = vst [vmem:[%s1794 + $0x230] sm:%s1786] %v1935
                  %v1937 = vld [vmem:[%s1793 + $0x470] sm:%s1786]
                  %1938 = vst [vmem:[%s1794 + $0x238] sm:%s1786] %v1937
                  %v1939 = vld [vmem:[%s1793 + $0x480] sm:%s1786]
                  %1940 = vst [vmem:[%s1794 + $0x240] sm:%s1786] %v1939
                  %v1941 = vld [vmem:[%s1793 + $0x490] sm:%s1786]
                  %1942 = vst [vmem:[%s1794 + $0x248] sm:%s1786] %v1941
                  %v1943 = vld [vmem:[%s1793 + $0x4a0] sm:%s1786]
                  %1944 = vst [vmem:[%s1794 + $0x250] sm:%s1786] %v1943
                  %v1945 = vld [vmem:[%s1793 + $0x4b0] sm:%s1786]
                  %1946 = vst [vmem:[%s1794 + $0x258] sm:%s1786] %v1945
                  %v1947 = vld [vmem:[%s1793 + $0x4c0] sm:%s1786]
                  %1948 = vst [vmem:[%s1794 + $0x260] sm:%s1786] %v1947
                  %v1949 = vld [vmem:[%s1793 + $0x4d0] sm:%s1786]
                  %1950 = vst [vmem:[%s1794 + $0x268] sm:%s1786] %v1949
                  %v1951 = vld [vmem:[%s1793 + $0x4e0] sm:%s1786]
                  %1952 = vst [vmem:[%s1794 + $0x270] sm:%s1786] %v1951
                  %v1953 = vld [vmem:[%s1793 + $0x4f0] sm:%s1786]
                  %1954 = vst [vmem:[%s1794 + $0x278] sm:%s1786] %v1953
                  %v1955 = vld [vmem:[%s1793 + $0x500] sm:%s1786]
                  %1956 = vst [vmem:[%s1794 + $0x280] sm:%s1786] %v1955
                  %v1957 = vld [vmem:[%s1793 + $0x510] sm:%s1786]
                  %1958 = vst [vmem:[%s1794 + $0x288] sm:%s1786] %v1957
                  %v1959 = vld [vmem:[%s1793 + $0x520] sm:%s1786]
                  %1960 = vst [vmem:[%s1794 + $0x290] sm:%s1786] %v1959
                  %v1961 = vld [vmem:[%s1793 + $0x530] sm:%s1786]
                  %1962 = vst [vmem:[%s1794 + $0x298] sm:%s1786] %v1961
                  %v1963 = vld [vmem:[%s1793 + $0x540] sm:%s1786]
                  %1964 = vst [vmem:[%s1794 + $0x2a0] sm:%s1786] %v1963
                  %v1965 = vld [vmem:[%s1793 + $0x550] sm:%s1786]
                  %1966 = vst [vmem:[%s1794 + $0x2a8] sm:%s1786] %v1965
                  %v1967 = vld [vmem:[%s1793 + $0x560] sm:%s1786]
                  %1968 = vst [vmem:[%s1794 + $0x2b0] sm:%s1786] %v1967
                  %v1969 = vld [vmem:[%s1793 + $0x570] sm:%s1786]
                  %1970 = vst [vmem:[%s1794 + $0x2b8] sm:%s1786] %v1969
                  %v1971 = vld [vmem:[%s1793 + $0x580] sm:%s1786]
                  %1972 = vst [vmem:[%s1794 + $0x2c0] sm:%s1786] %v1971
                  %v1973 = vld [vmem:[%s1793 + $0x590] sm:%s1786]
                  %1974 = vst [vmem:[%s1794 + $0x2c8] sm:%s1786] %v1973
                  %v1975 = vld [vmem:[%s1793 + $0x5a0] sm:%s1786]
                  %1976 = vst [vmem:[%s1794 + $0x2d0] sm:%s1786] %v1975
                  %v1977 = vld [vmem:[%s1793 + $0x5b0] sm:%s1786]
                  %1978 = vst [vmem:[%s1794 + $0x2d8] sm:%s1786] %v1977
                  %v1979 = vld [vmem:[%s1793 + $0x5c0] sm:%s1786]
                  %1980 = vst [vmem:[%s1794 + $0x2e0] sm:%s1786] %v1979
                  %v1981 = vld [vmem:[%s1793 + $0x5d0] sm:%s1786]
                  %1982 = vst [vmem:[%s1794 + $0x2e8] sm:%s1786] %v1981
                  %v1983 = vld [vmem:[%s1793 + $0x5e0] sm:%s1786]
                  %1984 = vst [vmem:[%s1794 + $0x2f0] sm:%s1786] %v1983
                  %v1985 = vld [vmem:[%s1793 + $0x5f0] sm:%s1786]
                  %1986 = vst [vmem:[%s1794 + $0x2f8] sm:%s1786] %v1985
                  %v1987 = vld [vmem:[%s1793 + $0x600] sm:%s1786]
                  %1988 = vst [vmem:[%s1794 + $0x300] sm:%s1786] %v1987
                  %v1989 = vld [vmem:[%s1793 + $0x610] sm:%s1786]
                  %1990 = vst [vmem:[%s1794 + $0x308] sm:%s1786] %v1989
                  %v1991 = vld [vmem:[%s1793 + $0x620] sm:%s1786]
                  %1992 = vst [vmem:[%s1794 + $0x310] sm:%s1786] %v1991
                  %v1993 = vld [vmem:[%s1793 + $0x630] sm:%s1786]
                  %1994 = vst [vmem:[%s1794 + $0x318] sm:%s1786] %v1993
                  %v1995 = vld [vmem:[%s1793 + $0x640] sm:%s1786]
                  %1996 = vst [vmem:[%s1794 + $0x320] sm:%s1786] %v1995
                  %v1997 = vld [vmem:[%s1793 + $0x650] sm:%s1786]
                  %1998 = vst [vmem:[%s1794 + $0x328] sm:%s1786] %v1997
                  %v1999 = vld [vmem:[%s1793 + $0x660] sm:%s1786]
                  %2000 = vst [vmem:[%s1794 + $0x330] sm:%s1786] %v1999
                  %v2001 = vld [vmem:[%s1793 + $0x670] sm:%s1786]
                  %2002 = vst [vmem:[%s1794 + $0x338] sm:%s1786] %v2001
                  %v2003 = vld [vmem:[%s1793 + $0x680] sm:%s1786]
                  %2004 = vst [vmem:[%s1794 + $0x340] sm:%s1786] %v2003
                  %v2005 = vld [vmem:[%s1793 + $0x690] sm:%s1786]
                  %2006 = vst [vmem:[%s1794 + $0x348] sm:%s1786] %v2005
                  %v2007 = vld [vmem:[%s1793 + $0x6a0] sm:%s1786]
                  %2008 = vst [vmem:[%s1794 + $0x350] sm:%s1786] %v2007
                  %v2009 = vld [vmem:[%s1793 + $0x6b0] sm:%s1786]
                  %2010 = vst [vmem:[%s1794 + $0x358] sm:%s1786] %v2009
                  %v2011 = vld [vmem:[%s1793 + $0x6c0] sm:%s1786]
                  %2012 = vst [vmem:[%s1794 + $0x360] sm:%s1786] %v2011
                  %v2013 = vld [vmem:[%s1793 + $0x6d0] sm:%s1786]
                  %2014 = vst [vmem:[%s1794 + $0x368] sm:%s1786] %v2013
                  %v2015 = vld [vmem:[%s1793 + $0x6e0] sm:%s1786]
                  %2016 = vst [vmem:[%s1794 + $0x370] sm:%s1786] %v2015
                  %v2017 = vld [vmem:[%s1793 + $0x6f0] sm:%s1786]
                  %2018 = vst [vmem:[%s1794 + $0x378] sm:%s1786] %v2017
                  %v2019 = vld [vmem:[%s1793 + $0x700] sm:%s1786]
                  %2020 = vst [vmem:[%s1794 + $0x380] sm:%s1786] %v2019
                  %v2021 = vld [vmem:[%s1793 + $0x710] sm:%s1786]
                  %2022 = vst [vmem:[%s1794 + $0x388] sm:%s1786] %v2021
                  %v2023 = vld [vmem:[%s1793 + $0x720] sm:%s1786]
                  %2024 = vst [vmem:[%s1794 + $0x390] sm:%s1786] %v2023
                  %v2025 = vld [vmem:[%s1793 + $0x730] sm:%s1786]
                  %2026 = vst [vmem:[%s1794 + $0x398] sm:%s1786] %v2025
                  %v2027 = vld [vmem:[%s1793 + $0x740] sm:%s1786]
                  %2028 = vst [vmem:[%s1794 + $0x3a0] sm:%s1786] %v2027
                  %v2029 = vld [vmem:[%s1793 + $0x750] sm:%s1786]
                  %2030 = vst [vmem:[%s1794 + $0x3a8] sm:%s1786] %v2029
                  %v2031 = vld [vmem:[%s1793 + $0x760] sm:%s1786]
                  %2032 = vst [vmem:[%s1794 + $0x3b0] sm:%s1786] %v2031
                  %v2033 = vld [vmem:[%s1793 + $0x770] sm:%s1786]
                  %2034 = vst [vmem:[%s1794 + $0x3b8] sm:%s1786] %v2033
                  %v2035 = vld [vmem:[%s1793 + $0x780] sm:%s1786]
                  %2036 = vst [vmem:[%s1794 + $0x3c0] sm:%s1786] %v2035
                  %v2037 = vld [vmem:[%s1793 + $0x790] sm:%s1786]
                  %2038 = vst [vmem:[%s1794 + $0x3c8] sm:%s1786] %v2037
                  %v2039 = vld [vmem:[%s1793 + $0x7a0] sm:%s1786]
                  %2040 = vst [vmem:[%s1794 + $0x3d0] sm:%s1786] %v2039
                  %v2041 = vld [vmem:[%s1793 + $0x7b0] sm:%s1786]
                  %2042 = vst [vmem:[%s1794 + $0x3d8] sm:%s1786] %v2041
                  %v2043 = vld [vmem:[%s1793 + $0x7c0] sm:%s1786]
                  %2044 = vst [vmem:[%s1794 + $0x3e0] sm:%s1786] %v2043
                  %v2045 = vld [vmem:[%s1793 + $0x7d0] sm:%s1786]
                  %2046 = vst [vmem:[%s1794 + $0x3e8] sm:%s1786] %v2045
                  %v2047 = vld [vmem:[%s1793 + $0x7e0] sm:%s1786]
                  %2048 = vst [vmem:[%s1794 + $0x3f0] sm:%s1786] %v2047
                  %v2049 = vld [vmem:[%s1793 + $0x7f0] sm:%s1786]
                  %2050 = vst [vmem:[%s1794 + $0x3f8] sm:%s1786] %v2049
                  %v2051 = vld [vmem:[%s1793 + $0x800] sm:%s1786]
                  %2052 = vst [vmem:[%s1794 + $0x400] sm:%s1786] %v2051
                  %v2053 = vld [vmem:[%s1793 + $0x810] sm:%s1786]
                  %2054 = vst [vmem:[%s1794 + $0x408] sm:%s1786] %v2053
                  %v2055 = vld [vmem:[%s1793 + $0x820] sm:%s1786]
                  %2056 = vst [vmem:[%s1794 + $0x410] sm:%s1786] %v2055
                  %v2057 = vld [vmem:[%s1793 + $0x830] sm:%s1786]
                  %2058 = vst [vmem:[%s1794 + $0x418] sm:%s1786] %v2057
                  %v2059 = vld [vmem:[%s1793 + $0x840] sm:%s1786]
                  %2060 = vst [vmem:[%s1794 + $0x420] sm:%s1786] %v2059
                  %v2061 = vld [vmem:[%s1793 + $0x850] sm:%s1786]
                  %2062 = vst [vmem:[%s1794 + $0x428] sm:%s1786] %v2061
                  %v2063 = vld [vmem:[%s1793 + $0x860] sm:%s1786]
                  %2064 = vst [vmem:[%s1794 + $0x430] sm:%s1786] %v2063
                  %v2065 = vld [vmem:[%s1793 + $0x870] sm:%s1786]
                  %2066 = vst [vmem:[%s1794 + $0x438] sm:%s1786] %v2065
                  %v2067 = vld [vmem:[%s1793 + $0x880] sm:%s1786]
                  %2068 = vst [vmem:[%s1794 + $0x440] sm:%s1786] %v2067
                  %v2069 = vld [vmem:[%s1793 + $0x890] sm:%s1786]
                  %2070 = vst [vmem:[%s1794 + $0x448] sm:%s1786] %v2069
                  %v2071 = vld [vmem:[%s1793 + $0x8a0] sm:%s1786]
                  %2072 = vst [vmem:[%s1794 + $0x450] sm:%s1786] %v2071
                  %v2073 = vld [vmem:[%s1793 + $0x8b0] sm:%s1786]
                  %2074 = vst [vmem:[%s1794 + $0x458] sm:%s1786] %v2073
                  %v2075 = vld [vmem:[%s1793 + $0x8c0] sm:%s1786]
                  %2076 = vst [vmem:[%s1794 + $0x460] sm:%s1786] %v2075
                  %v2077 = vld [vmem:[%s1793 + $0x8d0] sm:%s1786]
                  %2078 = vst [vmem:[%s1794 + $0x468] sm:%s1786] %v2077
                  %v2079 = vld [vmem:[%s1793 + $0x8e0] sm:%s1786]
                  %2080 = vst [vmem:[%s1794 + $0x470] sm:%s1786] %v2079
                  %v2081 = vld [vmem:[%s1793 + $0x8f0] sm:%s1786]
                  %2082 = vst [vmem:[%s1794 + $0x478] sm:%s1786] %v2081
                  %v2083 = vld [vmem:[%s1793 + $0x900] sm:%s1786]
                  %2084 = vst [vmem:[%s1794 + $0x480] sm:%s1786] %v2083
                  %v2085 = vld [vmem:[%s1793 + $0x910] sm:%s1786]
                  %2086 = vst [vmem:[%s1794 + $0x488] sm:%s1786] %v2085
                  %v2087 = vld [vmem:[%s1793 + $0x920] sm:%s1786]
                  %2088 = vst [vmem:[%s1794 + $0x490] sm:%s1786] %v2087
                  %v2089 = vld [vmem:[%s1793 + $0x930] sm:%s1786]
                  %2090 = vst [vmem:[%s1794 + $0x498] sm:%s1786] %v2089
                  %v2091 = vld [vmem:[%s1793 + $0x940] sm:%s1786]
                  %2092 = vst [vmem:[%s1794 + $0x4a0] sm:%s1786] %v2091
                  %v2093 = vld [vmem:[%s1793 + $0x950] sm:%s1786]
                  %2094 = vst [vmem:[%s1794 + $0x4a8] sm:%s1786] %v2093
                  %v2095 = vld [vmem:[%s1793 + $0x960] sm:%s1786]
                  %2096 = vst [vmem:[%s1794 + $0x4b0] sm:%s1786] %v2095
                  %v2097 = vld [vmem:[%s1793 + $0x970] sm:%s1786]
                  %2098 = vst [vmem:[%s1794 + $0x4b8] sm:%s1786] %v2097
                  %v2099 = vld [vmem:[%s1793 + $0x980] sm:%s1786]
                  %2100 = vst [vmem:[%s1794 + $0x4c0] sm:%s1786] %v2099
                  %v2101 = vld [vmem:[%s1793 + $0x990] sm:%s1786]
                  %2102 = vst [vmem:[%s1794 + $0x4c8] sm:%s1786] %v2101
                  %v2103 = vld [vmem:[%s1793 + $0x9a0] sm:%s1786]
                  %2104 = vst [vmem:[%s1794 + $0x4d0] sm:%s1786] %v2103
                  %v2105 = vld [vmem:[%s1793 + $0x9b0] sm:%s1786]
                  %2106 = vst [vmem:[%s1794 + $0x4d8] sm:%s1786] %v2105
                  %v2107 = vld [vmem:[%s1793 + $0x9c0] sm:%s1786]
                  %2108 = vst [vmem:[%s1794 + $0x4e0] sm:%s1786] %v2107
                  %v2109 = vld [vmem:[%s1793 + $0x9d0] sm:%s1786]
                  %2110 = vst [vmem:[%s1794 + $0x4e8] sm:%s1786] %v2109
                  %v2111 = vld [vmem:[%s1793 + $0x9e0] sm:%s1786]
                  %2112 = vst [vmem:[%s1794 + $0x4f0] sm:%s1786] %v2111
                  %v2113 = vld [vmem:[%s1793 + $0x9f0] sm:%s1786]
                  %2114 = vst [vmem:[%s1794 + $0x4f8] sm:%s1786] %v2113
                  %v2115 = vld [vmem:[%s1793 + $0xa00] sm:%s1786]
                  %2116 = vst [vmem:[%s1794 + $0x500] sm:%s1786] %v2115
                  %v2117 = vld [vmem:[%s1793 + $0xa10] sm:%s1786]
                  %2118 = vst [vmem:[%s1794 + $0x508] sm:%s1786] %v2117
                  %v2119 = vld [vmem:[%s1793 + $0xa20] sm:%s1786]
                  %2120 = vst [vmem:[%s1794 + $0x510] sm:%s1786] %v2119
                  %v2121 = vld [vmem:[%s1793 + $0xa30] sm:%s1786]
                  %2122 = vst [vmem:[%s1794 + $0x518] sm:%s1786] %v2121
                  %v2123 = vld [vmem:[%s1793 + $0xa40] sm:%s1786]
                  %2124 = vst [vmem:[%s1794 + $0x520] sm:%s1786] %v2123
                  %v2125 = vld [vmem:[%s1793 + $0xa50] sm:%s1786]
                  %2126 = vst [vmem:[%s1794 + $0x528] sm:%s1786] %v2125
                  %v2127 = vld [vmem:[%s1793 + $0xa60] sm:%s1786]
                  %2128 = vst [vmem:[%s1794 + $0x530] sm:%s1786] %v2127
                  %v2129 = vld [vmem:[%s1793 + $0xa70] sm:%s1786]
                  %2130 = vst [vmem:[%s1794 + $0x538] sm:%s1786] %v2129
                  %v2131 = vld [vmem:[%s1793 + $0xa80] sm:%s1786]
                  %2132 = vst [vmem:[%s1794 + $0x540] sm:%s1786] %v2131
                  %v2133 = vld [vmem:[%s1793 + $0xa90] sm:%s1786]
                  %2134 = vst [vmem:[%s1794 + $0x548] sm:%s1786] %v2133
                  %v2135 = vld [vmem:[%s1793 + $0xaa0] sm:%s1786]
                  %2136 = vst [vmem:[%s1794 + $0x550] sm:%s1786] %v2135
                  %v2137 = vld [vmem:[%s1793 + $0xab0] sm:%s1786]
                  %2138 = vst [vmem:[%s1794 + $0x558] sm:%s1786] %v2137
                  %v2139 = vld [vmem:[%s1793 + $0xac0] sm:%s1786]
                  %2140 = vst [vmem:[%s1794 + $0x560] sm:%s1786] %v2139
                  %v2141 = vld [vmem:[%s1793 + $0xad0] sm:%s1786]
                  %2142 = vst [vmem:[%s1794 + $0x568] sm:%s1786] %v2141
                  %v2143 = vld [vmem:[%s1793 + $0xae0] sm:%s1786]
                  %2144 = vst [vmem:[%s1794 + $0x570] sm:%s1786] %v2143
                  %v2145 = vld [vmem:[%s1793 + $0xaf0] sm:%s1786]
                  %2146 = vst [vmem:[%s1794 + $0x578] sm:%s1786] %v2145
                  %v2147 = vld [vmem:[%s1793 + $0xb00] sm:%s1786]
                  %2148 = vst [vmem:[%s1794 + $0x580] sm:%s1786] %v2147
                  %v2149 = vld [vmem:[%s1793 + $0xb10] sm:%s1786]
                  %2150 = vst [vmem:[%s1794 + $0x588] sm:%s1786] %v2149
                  %v2151 = vld [vmem:[%s1793 + $0xb20] sm:%s1786]
                  %2152 = vst [vmem:[%s1794 + $0x590] sm:%s1786] %v2151
                  %v2153 = vld [vmem:[%s1793 + $0xb30] sm:%s1786]
                  %2154 = vst [vmem:[%s1794 + $0x598] sm:%s1786] %v2153
                  %v2155 = vld [vmem:[%s1793 + $0xb40] sm:%s1786]
                  %2156 = vst [vmem:[%s1794 + $0x5a0] sm:%s1786] %v2155
                  %v2157 = vld [vmem:[%s1793 + $0xb50] sm:%s1786]
                  %2158 = vst [vmem:[%s1794 + $0x5a8] sm:%s1786] %v2157
                  %v2159 = vld [vmem:[%s1793 + $0xb60] sm:%s1786]
                  %2160 = vst [vmem:[%s1794 + $0x5b0] sm:%s1786] %v2159
                  %v2161 = vld [vmem:[%s1793 + $0xb70] sm:%s1786]
                  %2162 = vst [vmem:[%s1794 + $0x5b8] sm:%s1786] %v2161
                  %v2163 = vld [vmem:[%s1793 + $0xb80] sm:%s1786]
                  %2164 = vst [vmem:[%s1794 + $0x5c0] sm:%s1786] %v2163
                  %v2165 = vld [vmem:[%s1793 + $0xb90] sm:%s1786]
                  %2166 = vst [vmem:[%s1794 + $0x5c8] sm:%s1786] %v2165
                  %v2167 = vld [vmem:[%s1793 + $0xba0] sm:%s1786]
                  %2168 = vst [vmem:[%s1794 + $0x5d0] sm:%s1786] %v2167
                  %v2169 = vld [vmem:[%s1793 + $0xbb0] sm:%s1786]
                  %2170 = vst [vmem:[%s1794 + $0x5d8] sm:%s1786] %v2169
                  %v2171 = vld [vmem:[%s1793 + $0xbc0] sm:%s1786]
                  %2172 = vst [vmem:[%s1794 + $0x5e0] sm:%s1786] %v2171
                  %v2173 = vld [vmem:[%s1793 + $0xbd0] sm:%s1786]
                  %2174 = vst [vmem:[%s1794 + $0x5e8] sm:%s1786] %v2173
                  %v2175 = vld [vmem:[%s1793 + $0xbe0] sm:%s1786]
                  %2176 = vst [vmem:[%s1794 + $0x5f0] sm:%s1786] %v2175
                  %v2177 = vld [vmem:[%s1793 + $0xbf0] sm:%s1786]
                  %2178 = vst [vmem:[%s1794 + $0x5f8] sm:%s1786] %v2177
                  %v2179 = vld [vmem:[%s1793 + $0xc00] sm:%s1786]
                  %2180 = vst [vmem:[%s1794 + $0x600] sm:%s1786] %v2179
                  %v2181 = vld [vmem:[%s1793 + $0xc10] sm:%s1786]
                  %2182 = vst [vmem:[%s1794 + $0x608] sm:%s1786] %v2181
                  %v2183 = vld [vmem:[%s1793 + $0xc20] sm:%s1786]
                  %2184 = vst [vmem:[%s1794 + $0x610] sm:%s1786] %v2183
                  %v2185 = vld [vmem:[%s1793 + $0xc30] sm:%s1786]
                  %2186 = vst [vmem:[%s1794 + $0x618] sm:%s1786] %v2185
                  %v2187 = vld [vmem:[%s1793 + $0xc40] sm:%s1786]
                  %2188 = vst [vmem:[%s1794 + $0x620] sm:%s1786] %v2187
                  %v2189 = vld [vmem:[%s1793 + $0xc50] sm:%s1786]
                  %2190 = vst [vmem:[%s1794 + $0x628] sm:%s1786] %v2189
                  %v2191 = vld [vmem:[%s1793 + $0xc60] sm:%s1786]
                  %2192 = vst [vmem:[%s1794 + $0x630] sm:%s1786] %v2191
                  %v2193 = vld [vmem:[%s1793 + $0xc70] sm:%s1786]
                  %2194 = vst [vmem:[%s1794 + $0x638] sm:%s1786] %v2193
                  %v2195 = vld [vmem:[%s1793 + $0xc80] sm:%s1786]
                  %2196 = vst [vmem:[%s1794 + $0x640] sm:%s1786] %v2195
                  %v2197 = vld [vmem:[%s1793 + $0xc90] sm:%s1786]
                  %2198 = vst [vmem:[%s1794 + $0x648] sm:%s1786] %v2197
                  %v2199 = vld [vmem:[%s1793 + $0xca0] sm:%s1786]
                  %2200 = vst [vmem:[%s1794 + $0x650] sm:%s1786] %v2199
                  %v2201 = vld [vmem:[%s1793 + $0xcb0] sm:%s1786]
                  %2202 = vst [vmem:[%s1794 + $0x658] sm:%s1786] %v2201
                  %v2203 = vld [vmem:[%s1793 + $0xcc0] sm:%s1786]
                  %2204 = vst [vmem:[%s1794 + $0x660] sm:%s1786] %v2203
                  %v2205 = vld [vmem:[%s1793 + $0xcd0] sm:%s1786]
                  %2206 = vst [vmem:[%s1794 + $0x668] sm:%s1786] %v2205
                  %v2207 = vld [vmem:[%s1793 + $0xce0] sm:%s1786]
                  %2208 = vst [vmem:[%s1794 + $0x670] sm:%s1786] %v2207
                  %v2209 = vld [vmem:[%s1793 + $0xcf0] sm:%s1786]
                  %2210 = vst [vmem:[%s1794 + $0x678] sm:%s1786] %v2209
                  %v2211 = vld [vmem:[%s1793 + $0xd00] sm:%s1786]
                  %2212 = vst [vmem:[%s1794 + $0x680] sm:%s1786] %v2211
                  %v2213 = vld [vmem:[%s1793 + $0xd10] sm:%s1786]
                  %2214 = vst [vmem:[%s1794 + $0x688] sm:%s1786] %v2213
                  %v2215 = vld [vmem:[%s1793 + $0xd20] sm:%s1786]
                  %2216 = vst [vmem:[%s1794 + $0x690] sm:%s1786] %v2215
                  %v2217 = vld [vmem:[%s1793 + $0xd30] sm:%s1786]
                  %2218 = vst [vmem:[%s1794 + $0x698] sm:%s1786] %v2217
                  %v2219 = vld [vmem:[%s1793 + $0xd40] sm:%s1786]
                  %2220 = vst [vmem:[%s1794 + $0x6a0] sm:%s1786] %v2219
                  %v2221 = vld [vmem:[%s1793 + $0xd50] sm:%s1786]
                  %2222 = vst [vmem:[%s1794 + $0x6a8] sm:%s1786] %v2221
                  %v2223 = vld [vmem:[%s1793 + $0xd60] sm:%s1786]
                  %2224 = vst [vmem:[%s1794 + $0x6b0] sm:%s1786] %v2223
                  %v2225 = vld [vmem:[%s1793 + $0xd70] sm:%s1786]
                  %2226 = vst [vmem:[%s1794 + $0x6b8] sm:%s1786] %v2225
                  %v2227 = vld [vmem:[%s1793 + $0xd80] sm:%s1786]
                  %2228 = vst [vmem:[%s1794 + $0x6c0] sm:%s1786] %v2227
                  %v2229 = vld [vmem:[%s1793 + $0xd90] sm:%s1786]
                  %2230 = vst [vmem:[%s1794 + $0x6c8] sm:%s1786] %v2229
                  %v2231 = vld [vmem:[%s1793 + $0xda0] sm:%s1786]
                  %2232 = vst [vmem:[%s1794 + $0x6d0] sm:%s1786] %v2231
                  %v2233 = vld [vmem:[%s1793 + $0xdb0] sm:%s1786]
                  %2234 = vst [vmem:[%s1794 + $0x6d8] sm:%s1786] %v2233
                  %v2235 = vld [vmem:[%s1793 + $0xdc0] sm:%s1786]
                  %2236 = vst [vmem:[%s1794 + $0x6e0] sm:%s1786] %v2235
                  %v2237 = vld [vmem:[%s1793 + $0xdd0] sm:%s1786]
                  %2238 = vst [vmem:[%s1794 + $0x6e8] sm:%s1786] %v2237
                  %v2239 = vld [vmem:[%s1793 + $0xde0] sm:%s1786]
                  %2240 = vst [vmem:[%s1794 + $0x6f0] sm:%s1786] %v2239
                  %v2241 = vld [vmem:[%s1793 + $0xdf0] sm:%s1786]
                  %2242 = vst [vmem:[%s1794 + $0x6f8] sm:%s1786] %v2241
                  %v2243 = vld [vmem:[%s1793 + $0xe00] sm:%s1786]
                  %2244 = vst [vmem:[%s1794 + $0x700] sm:%s1786] %v2243
                  %v2245 = vld [vmem:[%s1793 + $0xe10] sm:%s1786]
                  %2246 = vst [vmem:[%s1794 + $0x708] sm:%s1786] %v2245
                  %v2247 = vld [vmem:[%s1793 + $0xe20] sm:%s1786]
                  %2248 = vst [vmem:[%s1794 + $0x710] sm:%s1786] %v2247
                  %v2249 = vld [vmem:[%s1793 + $0xe30] sm:%s1786]
                  %2250 = vst [vmem:[%s1794 + $0x718] sm:%s1786] %v2249
                  %v2251 = vld [vmem:[%s1793 + $0xe40] sm:%s1786]
                  %2252 = vst [vmem:[%s1794 + $0x720] sm:%s1786] %v2251
                  %v2253 = vld [vmem:[%s1793 + $0xe50] sm:%s1786]
                  %2254 = vst [vmem:[%s1794 + $0x728] sm:%s1786] %v2253
                  %v2255 = vld [vmem:[%s1793 + $0xe60] sm:%s1786]
                  %2256 = vst [vmem:[%s1794 + $0x730] sm:%s1786] %v2255
                  %v2257 = vld [vmem:[%s1793 + $0xe70] sm:%s1786]
                  %2258 = vst [vmem:[%s1794 + $0x738] sm:%s1786] %v2257
                  %v2259 = vld [vmem:[%s1793 + $0xe80] sm:%s1786]
                  %2260 = vst [vmem:[%s1794 + $0x740] sm:%s1786] %v2259
                  %v2261 = vld [vmem:[%s1793 + $0xe90] sm:%s1786]
                  %2262 = vst [vmem:[%s1794 + $0x748] sm:%s1786] %v2261
                  %v2263 = vld [vmem:[%s1793 + $0xea0] sm:%s1786]
                  %2264 = vst [vmem:[%s1794 + $0x750] sm:%s1786] %v2263
                  %v2265 = vld [vmem:[%s1793 + $0xeb0] sm:%s1786]
                  %2266 = vst [vmem:[%s1794 + $0x758] sm:%s1786] %v2265
                  %v2267 = vld [vmem:[%s1793 + $0xec0] sm:%s1786]
                  %2268 = vst [vmem:[%s1794 + $0x760] sm:%s1786] %v2267
                  %v2269 = vld [vmem:[%s1793 + $0xed0] sm:%s1786]
                  %2270 = vst [vmem:[%s1794 + $0x768] sm:%s1786] %v2269
                  %v2271 = vld [vmem:[%s1793 + $0xee0] sm:%s1786]
                  %2272 = vst [vmem:[%s1794 + $0x770] sm:%s1786] %v2271
                  %v2273 = vld [vmem:[%s1793 + $0xef0] sm:%s1786]
                  %2274 = vst [vmem:[%s1794 + $0x778] sm:%s1786] %v2273
                  %v2275 = vld [vmem:[%s1793 + $0xf00] sm:%s1786]
                  %2276 = vst [vmem:[%s1794 + $0x780] sm:%s1786] %v2275
                  %v2277 = vld [vmem:[%s1793 + $0xf10] sm:%s1786]
                  %2278 = vst [vmem:[%s1794 + $0x788] sm:%s1786] %v2277
                  %v2279 = vld [vmem:[%s1793 + $0xf20] sm:%s1786]
                  %2280 = vst [vmem:[%s1794 + $0x790] sm:%s1786] %v2279
                  %v2281 = vld [vmem:[%s1793 + $0xf30] sm:%s1786]
                  %2282 = vst [vmem:[%s1794 + $0x798] sm:%s1786] %v2281
                  %v2283 = vld [vmem:[%s1793 + $0xf40] sm:%s1786]
                  %2284 = vst [vmem:[%s1794 + $0x7a0] sm:%s1786] %v2283
                  %v2285 = vld [vmem:[%s1793 + $0xf50] sm:%s1786]
                  %2286 = vst [vmem:[%s1794 + $0x7a8] sm:%s1786] %v2285
                  %v2287 = vld [vmem:[%s1793 + $0xf60] sm:%s1786]
                  %2288 = vst [vmem:[%s1794 + $0x7b0] sm:%s1786] %v2287
                  %v2289 = vld [vmem:[%s1793 + $0xf70] sm:%s1786]
                  %2290 = vst [vmem:[%s1794 + $0x7b8] sm:%s1786] %v2289
                  %v2291 = vld [vmem:[%s1793 + $0xf80] sm:%s1786]
                  %2292 = vst [vmem:[%s1794 + $0x7c0] sm:%s1786] %v2291
                  %v2293 = vld [vmem:[%s1793 + $0xf90] sm:%s1786]
                  %2294 = vst [vmem:[%s1794 + $0x7c8] sm:%s1786] %v2293
                  %v2295 = vld [vmem:[%s1793 + $0xfa0] sm:%s1786]
                  %2296 = vst [vmem:[%s1794 + $0x7d0] sm:%s1786] %v2295
                  %v2297 = vld [vmem:[%s1793 + $0xfb0] sm:%s1786]
                  %2298 = vst [vmem:[%s1794 + $0x7d8] sm:%s1786] %v2297
                  %v2299 = vld [vmem:[%s1793 + $0xfc0] sm:%s1786]
                  %2300 = vst [vmem:[%s1794 + $0x7e0] sm:%s1786] %v2299
                  %v2301 = vld [vmem:[%s1793 + $0xfd0] sm:%s1786]
                  %2302 = vst [vmem:[%s1794 + $0x7e8] sm:%s1786] %v2301
                  %v2303 = vld [vmem:[%s1793 + $0xfe0] sm:%s1786]
                  %2304 = vst [vmem:[%s1794 + $0x7f0] sm:%s1786] %v2303
                  %v2305 = vld [vmem:[%s1793 + $0xff0] sm:%s1786]
                  %2306 = vst [vmem:[%s1794 + $0x7f8] sm:%s1786] %v2305
                $region70: #{cnn_forward.5} parent=57 // loop_footer
                  %s1792 = sadd.s32 1, %s1788
                $region71: #{cnn_forward.5} parent=57 // loop_footer_branch
                  %1787 = sbr.rel target = $region67
                $region72: #{cnn_forward.5} parent=57 // loop_exit
                  _
              $region58: #{cnn_forward.5} parent=31 // pred_fallthru
                _
            $region32: #{cnn_forward.5} parent=27 // pred_fallthru
              _
            // Predicated region
            $region33: #{cnn_forward.5} parent=27 // pred_check
              _
            $region34: #{cnn_forward.5} parent=27 // pred_check_branch
              %200 = sbr.rel target = $region36
            $region35: #{cnn_forward.5} parent=27 // pred_region
              %s202 = ssub.s32 256, 1
              loop: start=0, step=1, limit=1
              $region37: #{cnn_forward.5} parent=35 // loop_pre_header
                _
              $region38: #{cnn_forward.5} parent=35 // loop_header
                %s204 = sphi 0, %s208
                %p205 = scmp.ge.s32.totalorder %s204, 1
                %s209 = sphi %s194, %s194
                %s210 = sphi %s188, %s188
              $region39: #{cnn_forward.5} parent=35 // loop_header_branch
                %207 = sbr.rel (%p205) target = $region43
              $region40: #{cnn_forward.5} parent=35 // loop_body
                %v211 = vld [vmem:[%s209] sm:%s202]
                %212 = vst [vmem:[%s210] sm:%s202] %v211
                %v213 = vld [vmem:[%s209 + $0x10] sm:%s202]
                %214 = vst [vmem:[%s210 + $0x8] sm:%s202] %v213
                %v215 = vld [vmem:[%s209 + $0x20] sm:%s202]
                %216 = vst [vmem:[%s210 + $0x10] sm:%s202] %v215
                %v217 = vld [vmem:[%s209 + $0x30] sm:%s202]
                %218 = vst [vmem:[%s210 + $0x18] sm:%s202] %v217
                %v219 = vld [vmem:[%s209 + $0x40] sm:%s202]
                %220 = vst [vmem:[%s210 + $0x20] sm:%s202] %v219
                %v221 = vld [vmem:[%s209 + $0x50] sm:%s202]
                %222 = vst [vmem:[%s210 + $0x28] sm:%s202] %v221
                %v223 = vld [vmem:[%s209 + $0x60] sm:%s202]
                %224 = vst [vmem:[%s210 + $0x30] sm:%s202] %v223
                %v225 = vld [vmem:[%s209 + $0x70] sm:%s202]
                %226 = vst [vmem:[%s210 + $0x38] sm:%s202] %v225
                %v227 = vld [vmem:[%s209 + $0x80] sm:%s202]
                %228 = vst [vmem:[%s210 + $0x40] sm:%s202] %v227
                %v229 = vld [vmem:[%s209 + $0x90] sm:%s202]
                %230 = vst [vmem:[%s210 + $0x48] sm:%s202] %v229
                %v231 = vld [vmem:[%s209 + $0xa0] sm:%s202]
                %232 = vst [vmem:[%s210 + $0x50] sm:%s202] %v231
                %v233 = vld [vmem:[%s209 + $0xb0] sm:%s202]
                %234 = vst [vmem:[%s210 + $0x58] sm:%s202] %v233
                %v235 = vld [vmem:[%s209 + $0xc0] sm:%s202]
                %236 = vst [vmem:[%s210 + $0x60] sm:%s202] %v235
                %v237 = vld [vmem:[%s209 + $0xd0] sm:%s202]
                %238 = vst [vmem:[%s210 + $0x68] sm:%s202] %v237
                %v239 = vld [vmem:[%s209 + $0xe0] sm:%s202]
                %240 = vst [vmem:[%s210 + $0x70] sm:%s202] %v239
                %v241 = vld [vmem:[%s209 + $0xf0] sm:%s202]
                %242 = vst [vmem:[%s210 + $0x78] sm:%s202] %v241
                %v243 = vld [vmem:[%s209 + $0x100] sm:%s202]
                %244 = vst [vmem:[%s210 + $0x80] sm:%s202] %v243
                %v245 = vld [vmem:[%s209 + $0x110] sm:%s202]
                %246 = vst [vmem:[%s210 + $0x88] sm:%s202] %v245
                %v247 = vld [vmem:[%s209 + $0x120] sm:%s202]
                %248 = vst [vmem:[%s210 + $0x90] sm:%s202] %v247
                %v249 = vld [vmem:[%s209 + $0x130] sm:%s202]
                %250 = vst [vmem:[%s210 + $0x98] sm:%s202] %v249
                %v251 = vld [vmem:[%s209 + $0x140] sm:%s202]
                %252 = vst [vmem:[%s210 + $0xa0] sm:%s202] %v251
                %v253 = vld [vmem:[%s209 + $0x150] sm:%s202]
                %254 = vst [vmem:[%s210 + $0xa8] sm:%s202] %v253
                %v255 = vld [vmem:[%s209 + $0x160] sm:%s202]
                %256 = vst [vmem:[%s210 + $0xb0] sm:%s202] %v255
                %v257 = vld [vmem:[%s209 + $0x170] sm:%s202]
                %258 = vst [vmem:[%s210 + $0xb8] sm:%s202] %v257
                %v259 = vld [vmem:[%s209 + $0x180] sm:%s202]
                %260 = vst [vmem:[%s210 + $0xc0] sm:%s202] %v259
                %v261 = vld [vmem:[%s209 + $0x190] sm:%s202]
                %262 = vst [vmem:[%s210 + $0xc8] sm:%s202] %v261
                %v263 = vld [vmem:[%s209 + $0x1a0] sm:%s202]
                %264 = vst [vmem:[%s210 + $0xd0] sm:%s202] %v263
                %v265 = vld [vmem:[%s209 + $0x1b0] sm:%s202]
                %266 = vst [vmem:[%s210 + $0xd8] sm:%s202] %v265
                %v267 = vld [vmem:[%s209 + $0x1c0] sm:%s202]
                %268 = vst [vmem:[%s210 + $0xe0] sm:%s202] %v267
                %v269 = vld [vmem:[%s209 + $0x1d0] sm:%s202]
                %270 = vst [vmem:[%s210 + $0xe8] sm:%s202] %v269
                %v271 = vld [vmem:[%s209 + $0x1e0] sm:%s202]
                %272 = vst [vmem:[%s210 + $0xf0] sm:%s202] %v271
                %v273 = vld [vmem:[%s209 + $0x1f0] sm:%s202]
                %274 = vst [vmem:[%s210 + $0xf8] sm:%s202] %v273
                %v275 = vld [vmem:[%s209 + $0x200] sm:%s202]
                %276 = vst [vmem:[%s210 + $0x100] sm:%s202] %v275
                %v277 = vld [vmem:[%s209 + $0x210] sm:%s202]
                %278 = vst [vmem:[%s210 + $0x108] sm:%s202] %v277
                %v279 = vld [vmem:[%s209 + $0x220] sm:%s202]
                %280 = vst [vmem:[%s210 + $0x110] sm:%s202] %v279
                %v281 = vld [vmem:[%s209 + $0x230] sm:%s202]
                %282 = vst [vmem:[%s210 + $0x118] sm:%s202] %v281
                %v283 = vld [vmem:[%s209 + $0x240] sm:%s202]
                %284 = vst [vmem:[%s210 + $0x120] sm:%s202] %v283
                %v285 = vld [vmem:[%s209 + $0x250] sm:%s202]
                %286 = vst [vmem:[%s210 + $0x128] sm:%s202] %v285
                %v287 = vld [vmem:[%s209 + $0x260] sm:%s202]
                %288 = vst [vmem:[%s210 + $0x130] sm:%s202] %v287
                %v289 = vld [vmem:[%s209 + $0x270] sm:%s202]
                %290 = vst [vmem:[%s210 + $0x138] sm:%s202] %v289
                %v291 = vld [vmem:[%s209 + $0x280] sm:%s202]
                %292 = vst [vmem:[%s210 + $0x140] sm:%s202] %v291
                %v293 = vld [vmem:[%s209 + $0x290] sm:%s202]
                %294 = vst [vmem:[%s210 + $0x148] sm:%s202] %v293
                %v295 = vld [vmem:[%s209 + $0x2a0] sm:%s202]
                %296 = vst [vmem:[%s210 + $0x150] sm:%s202] %v295
                %v297 = vld [vmem:[%s209 + $0x2b0] sm:%s202]
                %298 = vst [vmem:[%s210 + $0x158] sm:%s202] %v297
                %v299 = vld [vmem:[%s209 + $0x2c0] sm:%s202]
                %300 = vst [vmem:[%s210 + $0x160] sm:%s202] %v299
                %v301 = vld [vmem:[%s209 + $0x2d0] sm:%s202]
                %302 = vst [vmem:[%s210 + $0x168] sm:%s202] %v301
                %v303 = vld [vmem:[%s209 + $0x2e0] sm:%s202]
                %304 = vst [vmem:[%s210 + $0x170] sm:%s202] %v303
                %v305 = vld [vmem:[%s209 + $0x2f0] sm:%s202]
                %306 = vst [vmem:[%s210 + $0x178] sm:%s202] %v305
                %v307 = vld [vmem:[%s209 + $0x300] sm:%s202]
                %308 = vst [vmem:[%s210 + $0x180] sm:%s202] %v307
                %v309 = vld [vmem:[%s209 + $0x310] sm:%s202]
                %310 = vst [vmem:[%s210 + $0x188] sm:%s202] %v309
                %v311 = vld [vmem:[%s209 + $0x320] sm:%s202]
                %312 = vst [vmem:[%s210 + $0x190] sm:%s202] %v311
                %v313 = vld [vmem:[%s209 + $0x330] sm:%s202]
                %314 = vst [vmem:[%s210 + $0x198] sm:%s202] %v313
                %v315 = vld [vmem:[%s209 + $0x340] sm:%s202]
                %316 = vst [vmem:[%s210 + $0x1a0] sm:%s202] %v315
                %v317 = vld [vmem:[%s209 + $0x350] sm:%s202]
                %318 = vst [vmem:[%s210 + $0x1a8] sm:%s202] %v317
                %v319 = vld [vmem:[%s209 + $0x360] sm:%s202]
                %320 = vst [vmem:[%s210 + $0x1b0] sm:%s202] %v319
                %v321 = vld [vmem:[%s209 + $0x370] sm:%s202]
                %322 = vst [vmem:[%s210 + $0x1b8] sm:%s202] %v321
                %v323 = vld [vmem:[%s209 + $0x380] sm:%s202]
                %324 = vst [vmem:[%s210 + $0x1c0] sm:%s202] %v323
                %v325 = vld [vmem:[%s209 + $0x390] sm:%s202]
                %326 = vst [vmem:[%s210 + $0x1c8] sm:%s202] %v325
                %v327 = vld [vmem:[%s209 + $0x3a0] sm:%s202]
                %328 = vst [vmem:[%s210 + $0x1d0] sm:%s202] %v327
                %v329 = vld [vmem:[%s209 + $0x3b0] sm:%s202]
                %330 = vst [vmem:[%s210 + $0x1d8] sm:%s202] %v329
                %v331 = vld [vmem:[%s209 + $0x3c0] sm:%s202]
                %332 = vst [vmem:[%s210 + $0x1e0] sm:%s202] %v331
                %v333 = vld [vmem:[%s209 + $0x3d0] sm:%s202]
                %334 = vst [vmem:[%s210 + $0x1e8] sm:%s202] %v333
                %v335 = vld [vmem:[%s209 + $0x3e0] sm:%s202]
                %336 = vst [vmem:[%s210 + $0x1f0] sm:%s202] %v335
                %v337 = vld [vmem:[%s209 + $0x3f0] sm:%s202]
                %338 = vst [vmem:[%s210 + $0x1f8] sm:%s202] %v337
                %v339 = vld [vmem:[%s209 + $0x400] sm:%s202]
                %340 = vst [vmem:[%s210 + $0x200] sm:%s202] %v339
                %v341 = vld [vmem:[%s209 + $0x410] sm:%s202]
                %342 = vst [vmem:[%s210 + $0x208] sm:%s202] %v341
                %v343 = vld [vmem:[%s209 + $0x420] sm:%s202]
                %344 = vst [vmem:[%s210 + $0x210] sm:%s202] %v343
                %v345 = vld [vmem:[%s209 + $0x430] sm:%s202]
                %346 = vst [vmem:[%s210 + $0x218] sm:%s202] %v345
                %v347 = vld [vmem:[%s209 + $0x440] sm:%s202]
                %348 = vst [vmem:[%s210 + $0x220] sm:%s202] %v347
                %v349 = vld [vmem:[%s209 + $0x450] sm:%s202]
                %350 = vst [vmem:[%s210 + $0x228] sm:%s202] %v349
                %v351 = vld [vmem:[%s209 + $0x460] sm:%s202]
                %352 = vst [vmem:[%s210 + $0x230] sm:%s202] %v351
                %v353 = vld [vmem:[%s209 + $0x470] sm:%s202]
                %354 = vst [vmem:[%s210 + $0x238] sm:%s202] %v353
                %v355 = vld [vmem:[%s209 + $0x480] sm:%s202]
                %356 = vst [vmem:[%s210 + $0x240] sm:%s202] %v355
                %v357 = vld [vmem:[%s209 + $0x490] sm:%s202]
                %358 = vst [vmem:[%s210 + $0x248] sm:%s202] %v357
                %v359 = vld [vmem:[%s209 + $0x4a0] sm:%s202]
                %360 = vst [vmem:[%s210 + $0x250] sm:%s202] %v359
                %v361 = vld [vmem:[%s209 + $0x4b0] sm:%s202]
                %362 = vst [vmem:[%s210 + $0x258] sm:%s202] %v361
                %v363 = vld [vmem:[%s209 + $0x4c0] sm:%s202]
                %364 = vst [vmem:[%s210 + $0x260] sm:%s202] %v363
                %v365 = vld [vmem:[%s209 + $0x4d0] sm:%s202]
                %366 = vst [vmem:[%s210 + $0x268] sm:%s202] %v365
                %v367 = vld [vmem:[%s209 + $0x4e0] sm:%s202]
                %368 = vst [vmem:[%s210 + $0x270] sm:%s202] %v367
                %v369 = vld [vmem:[%s209 + $0x4f0] sm:%s202]
                %370 = vst [vmem:[%s210 + $0x278] sm:%s202] %v369
                %v371 = vld [vmem:[%s209 + $0x500] sm:%s202]
                %372 = vst [vmem:[%s210 + $0x280] sm:%s202] %v371
                %v373 = vld [vmem:[%s209 + $0x510] sm:%s202]
                %374 = vst [vmem:[%s210 + $0x288] sm:%s202] %v373
                %v375 = vld [vmem:[%s209 + $0x520] sm:%s202]
                %376 = vst [vmem:[%s210 + $0x290] sm:%s202] %v375
                %v377 = vld [vmem:[%s209 + $0x530] sm:%s202]
                %378 = vst [vmem:[%s210 + $0x298] sm:%s202] %v377
                %v379 = vld [vmem:[%s209 + $0x540] sm:%s202]
                %380 = vst [vmem:[%s210 + $0x2a0] sm:%s202] %v379
                %v381 = vld [vmem:[%s209 + $0x550] sm:%s202]
                %382 = vst [vmem:[%s210 + $0x2a8] sm:%s202] %v381
                %v383 = vld [vmem:[%s209 + $0x560] sm:%s202]
                %384 = vst [vmem:[%s210 + $0x2b0] sm:%s202] %v383
                %v385 = vld [vmem:[%s209 + $0x570] sm:%s202]
                %386 = vst [vmem:[%s210 + $0x2b8] sm:%s202] %v385
                %v387 = vld [vmem:[%s209 + $0x580] sm:%s202]
                %388 = vst [vmem:[%s210 + $0x2c0] sm:%s202] %v387
                %v389 = vld [vmem:[%s209 + $0x590] sm:%s202]
                %390 = vst [vmem:[%s210 + $0x2c8] sm:%s202] %v389
                %v391 = vld [vmem:[%s209 + $0x5a0] sm:%s202]
                %392 = vst [vmem:[%s210 + $0x2d0] sm:%s202] %v391
                %v393 = vld [vmem:[%s209 + $0x5b0] sm:%s202]
                %394 = vst [vmem:[%s210 + $0x2d8] sm:%s202] %v393
                %v395 = vld [vmem:[%s209 + $0x5c0] sm:%s202]
                %396 = vst [vmem:[%s210 + $0x2e0] sm:%s202] %v395
                %v397 = vld [vmem:[%s209 + $0x5d0] sm:%s202]
                %398 = vst [vmem:[%s210 + $0x2e8] sm:%s202] %v397
                %v399 = vld [vmem:[%s209 + $0x5e0] sm:%s202]
                %400 = vst [vmem:[%s210 + $0x2f0] sm:%s202] %v399
                %v401 = vld [vmem:[%s209 + $0x5f0] sm:%s202]
                %402 = vst [vmem:[%s210 + $0x2f8] sm:%s202] %v401
                %v403 = vld [vmem:[%s209 + $0x600] sm:%s202]
                %404 = vst [vmem:[%s210 + $0x300] sm:%s202] %v403
                %v405 = vld [vmem:[%s209 + $0x610] sm:%s202]
                %406 = vst [vmem:[%s210 + $0x308] sm:%s202] %v405
                %v407 = vld [vmem:[%s209 + $0x620] sm:%s202]
                %408 = vst [vmem:[%s210 + $0x310] sm:%s202] %v407
                %v409 = vld [vmem:[%s209 + $0x630] sm:%s202]
                %410 = vst [vmem:[%s210 + $0x318] sm:%s202] %v409
                %v411 = vld [vmem:[%s209 + $0x640] sm:%s202]
                %412 = vst [vmem:[%s210 + $0x320] sm:%s202] %v411
                %v413 = vld [vmem:[%s209 + $0x650] sm:%s202]
                %414 = vst [vmem:[%s210 + $0x328] sm:%s202] %v413
                %v415 = vld [vmem:[%s209 + $0x660] sm:%s202]
                %416 = vst [vmem:[%s210 + $0x330] sm:%s202] %v415
                %v417 = vld [vmem:[%s209 + $0x670] sm:%s202]
                %418 = vst [vmem:[%s210 + $0x338] sm:%s202] %v417
                %v419 = vld [vmem:[%s209 + $0x680] sm:%s202]
                %420 = vst [vmem:[%s210 + $0x340] sm:%s202] %v419
                %v421 = vld [vmem:[%s209 + $0x690] sm:%s202]
                %422 = vst [vmem:[%s210 + $0x348] sm:%s202] %v421
                %v423 = vld [vmem:[%s209 + $0x6a0] sm:%s202]
                %424 = vst [vmem:[%s210 + $0x350] sm:%s202] %v423
                %v425 = vld [vmem:[%s209 + $0x6b0] sm:%s202]
                %426 = vst [vmem:[%s210 + $0x358] sm:%s202] %v425
                %v427 = vld [vmem:[%s209 + $0x6c0] sm:%s202]
                %428 = vst [vmem:[%s210 + $0x360] sm:%s202] %v427
                %v429 = vld [vmem:[%s209 + $0x6d0] sm:%s202]
                %430 = vst [vmem:[%s210 + $0x368] sm:%s202] %v429
                %v431 = vld [vmem:[%s209 + $0x6e0] sm:%s202]
                %432 = vst [vmem:[%s210 + $0x370] sm:%s202] %v431
                %v433 = vld [vmem:[%s209 + $0x6f0] sm:%s202]
                %434 = vst [vmem:[%s210 + $0x378] sm:%s202] %v433
                %v435 = vld [vmem:[%s209 + $0x700] sm:%s202]
                %436 = vst [vmem:[%s210 + $0x380] sm:%s202] %v435
                %v437 = vld [vmem:[%s209 + $0x710] sm:%s202]
                %438 = vst [vmem:[%s210 + $0x388] sm:%s202] %v437
                %v439 = vld [vmem:[%s209 + $0x720] sm:%s202]
                %440 = vst [vmem:[%s210 + $0x390] sm:%s202] %v439
                %v441 = vld [vmem:[%s209 + $0x730] sm:%s202]
                %442 = vst [vmem:[%s210 + $0x398] sm:%s202] %v441
                %v443 = vld [vmem:[%s209 + $0x740] sm:%s202]
                %444 = vst [vmem:[%s210 + $0x3a0] sm:%s202] %v443
                %v445 = vld [vmem:[%s209 + $0x750] sm:%s202]
                %446 = vst [vmem:[%s210 + $0x3a8] sm:%s202] %v445
                %v447 = vld [vmem:[%s209 + $0x760] sm:%s202]
                %448 = vst [vmem:[%s210 + $0x3b0] sm:%s202] %v447
                %v449 = vld [vmem:[%s209 + $0x770] sm:%s202]
                %450 = vst [vmem:[%s210 + $0x3b8] sm:%s202] %v449
                %v451 = vld [vmem:[%s209 + $0x780] sm:%s202]
                %452 = vst [vmem:[%s210 + $0x3c0] sm:%s202] %v451
                %v453 = vld [vmem:[%s209 + $0x790] sm:%s202]
                %454 = vst [vmem:[%s210 + $0x3c8] sm:%s202] %v453
                %v455 = vld [vmem:[%s209 + $0x7a0] sm:%s202]
                %456 = vst [vmem:[%s210 + $0x3d0] sm:%s202] %v455
                %v457 = vld [vmem:[%s209 + $0x7b0] sm:%s202]
                %458 = vst [vmem:[%s210 + $0x3d8] sm:%s202] %v457
                %v459 = vld [vmem:[%s209 + $0x7c0] sm:%s202]
                %460 = vst [vmem:[%s210 + $0x3e0] sm:%s202] %v459
                %v461 = vld [vmem:[%s209 + $0x7d0] sm:%s202]
                %462 = vst [vmem:[%s210 + $0x3e8] sm:%s202] %v461
                %v463 = vld [vmem:[%s209 + $0x7e0] sm:%s202]
                %464 = vst [vmem:[%s210 + $0x3f0] sm:%s202] %v463
                %v465 = vld [vmem:[%s209 + $0x7f0] sm:%s202]
                %466 = vst [vmem:[%s210 + $0x3f8] sm:%s202] %v465
                %v467 = vld [vmem:[%s209 + $0x800] sm:%s202]
                %468 = vst [vmem:[%s210 + $0x400] sm:%s202] %v467
                %v469 = vld [vmem:[%s209 + $0x810] sm:%s202]
                %470 = vst [vmem:[%s210 + $0x408] sm:%s202] %v469
                %v471 = vld [vmem:[%s209 + $0x820] sm:%s202]
                %472 = vst [vmem:[%s210 + $0x410] sm:%s202] %v471
                %v473 = vld [vmem:[%s209 + $0x830] sm:%s202]
                %474 = vst [vmem:[%s210 + $0x418] sm:%s202] %v473
                %v475 = vld [vmem:[%s209 + $0x840] sm:%s202]
                %476 = vst [vmem:[%s210 + $0x420] sm:%s202] %v475
                %v477 = vld [vmem:[%s209 + $0x850] sm:%s202]
                %478 = vst [vmem:[%s210 + $0x428] sm:%s202] %v477
                %v479 = vld [vmem:[%s209 + $0x860] sm:%s202]
                %480 = vst [vmem:[%s210 + $0x430] sm:%s202] %v479
                %v481 = vld [vmem:[%s209 + $0x870] sm:%s202]
                %482 = vst [vmem:[%s210 + $0x438] sm:%s202] %v481
                %v483 = vld [vmem:[%s209 + $0x880] sm:%s202]
                %484 = vst [vmem:[%s210 + $0x440] sm:%s202] %v483
                %v485 = vld [vmem:[%s209 + $0x890] sm:%s202]
                %486 = vst [vmem:[%s210 + $0x448] sm:%s202] %v485
                %v487 = vld [vmem:[%s209 + $0x8a0] sm:%s202]
                %488 = vst [vmem:[%s210 + $0x450] sm:%s202] %v487
                %v489 = vld [vmem:[%s209 + $0x8b0] sm:%s202]
                %490 = vst [vmem:[%s210 + $0x458] sm:%s202] %v489
                %v491 = vld [vmem:[%s209 + $0x8c0] sm:%s202]
                %492 = vst [vmem:[%s210 + $0x460] sm:%s202] %v491
                %v493 = vld [vmem:[%s209 + $0x8d0] sm:%s202]
                %494 = vst [vmem:[%s210 + $0x468] sm:%s202] %v493
                %v495 = vld [vmem:[%s209 + $0x8e0] sm:%s202]
                %496 = vst [vmem:[%s210 + $0x470] sm:%s202] %v495
                %v497 = vld [vmem:[%s209 + $0x8f0] sm:%s202]
                %498 = vst [vmem:[%s210 + $0x478] sm:%s202] %v497
                %v499 = vld [vmem:[%s209 + $0x900] sm:%s202]
                %500 = vst [vmem:[%s210 + $0x480] sm:%s202] %v499
                %v501 = vld [vmem:[%s209 + $0x910] sm:%s202]
                %502 = vst [vmem:[%s210 + $0x488] sm:%s202] %v501
                %v503 = vld [vmem:[%s209 + $0x920] sm:%s202]
                %504 = vst [vmem:[%s210 + $0x490] sm:%s202] %v503
                %v505 = vld [vmem:[%s209 + $0x930] sm:%s202]
                %506 = vst [vmem:[%s210 + $0x498] sm:%s202] %v505
                %v507 = vld [vmem:[%s209 + $0x940] sm:%s202]
                %508 = vst [vmem:[%s210 + $0x4a0] sm:%s202] %v507
                %v509 = vld [vmem:[%s209 + $0x950] sm:%s202]
                %510 = vst [vmem:[%s210 + $0x4a8] sm:%s202] %v509
                %v511 = vld [vmem:[%s209 + $0x960] sm:%s202]
                %512 = vst [vmem:[%s210 + $0x4b0] sm:%s202] %v511
                %v513 = vld [vmem:[%s209 + $0x970] sm:%s202]
                %514 = vst [vmem:[%s210 + $0x4b8] sm:%s202] %v513
                %v515 = vld [vmem:[%s209 + $0x980] sm:%s202]
                %516 = vst [vmem:[%s210 + $0x4c0] sm:%s202] %v515
                %v517 = vld [vmem:[%s209 + $0x990] sm:%s202]
                %518 = vst [vmem:[%s210 + $0x4c8] sm:%s202] %v517
                %v519 = vld [vmem:[%s209 + $0x9a0] sm:%s202]
                %520 = vst [vmem:[%s210 + $0x4d0] sm:%s202] %v519
                %v521 = vld [vmem:[%s209 + $0x9b0] sm:%s202]
                %522 = vst [vmem:[%s210 + $0x4d8] sm:%s202] %v521
                %v523 = vld [vmem:[%s209 + $0x9c0] sm:%s202]
                %524 = vst [vmem:[%s210 + $0x4e0] sm:%s202] %v523
                %v525 = vld [vmem:[%s209 + $0x9d0] sm:%s202]
                %526 = vst [vmem:[%s210 + $0x4e8] sm:%s202] %v525
                %v527 = vld [vmem:[%s209 + $0x9e0] sm:%s202]
                %528 = vst [vmem:[%s210 + $0x4f0] sm:%s202] %v527
                %v529 = vld [vmem:[%s209 + $0x9f0] sm:%s202]
                %530 = vst [vmem:[%s210 + $0x4f8] sm:%s202] %v529
                %v531 = vld [vmem:[%s209 + $0xa00] sm:%s202]
                %532 = vst [vmem:[%s210 + $0x500] sm:%s202] %v531
                %v533 = vld [vmem:[%s209 + $0xa10] sm:%s202]
                %534 = vst [vmem:[%s210 + $0x508] sm:%s202] %v533
                %v535 = vld [vmem:[%s209 + $0xa20] sm:%s202]
                %536 = vst [vmem:[%s210 + $0x510] sm:%s202] %v535
                %v537 = vld [vmem:[%s209 + $0xa30] sm:%s202]
                %538 = vst [vmem:[%s210 + $0x518] sm:%s202] %v537
                %v539 = vld [vmem:[%s209 + $0xa40] sm:%s202]
                %540 = vst [vmem:[%s210 + $0x520] sm:%s202] %v539
                %v541 = vld [vmem:[%s209 + $0xa50] sm:%s202]
                %542 = vst [vmem:[%s210 + $0x528] sm:%s202] %v541
                %v543 = vld [vmem:[%s209 + $0xa60] sm:%s202]
                %544 = vst [vmem:[%s210 + $0x530] sm:%s202] %v543
                %v545 = vld [vmem:[%s209 + $0xa70] sm:%s202]
                %546 = vst [vmem:[%s210 + $0x538] sm:%s202] %v545
                %v547 = vld [vmem:[%s209 + $0xa80] sm:%s202]
                %548 = vst [vmem:[%s210 + $0x540] sm:%s202] %v547
                %v549 = vld [vmem:[%s209 + $0xa90] sm:%s202]
                %550 = vst [vmem:[%s210 + $0x548] sm:%s202] %v549
                %v551 = vld [vmem:[%s209 + $0xaa0] sm:%s202]
                %552 = vst [vmem:[%s210 + $0x550] sm:%s202] %v551
                %v553 = vld [vmem:[%s209 + $0xab0] sm:%s202]
                %554 = vst [vmem:[%s210 + $0x558] sm:%s202] %v553
                %v555 = vld [vmem:[%s209 + $0xac0] sm:%s202]
                %556 = vst [vmem:[%s210 + $0x560] sm:%s202] %v555
                %v557 = vld [vmem:[%s209 + $0xad0] sm:%s202]
                %558 = vst [vmem:[%s210 + $0x568] sm:%s202] %v557
                %v559 = vld [vmem:[%s209 + $0xae0] sm:%s202]
                %560 = vst [vmem:[%s210 + $0x570] sm:%s202] %v559
                %v561 = vld [vmem:[%s209 + $0xaf0] sm:%s202]
                %562 = vst [vmem:[%s210 + $0x578] sm:%s202] %v561
                %v563 = vld [vmem:[%s209 + $0xb00] sm:%s202]
                %564 = vst [vmem:[%s210 + $0x580] sm:%s202] %v563
                %v565 = vld [vmem:[%s209 + $0xb10] sm:%s202]
                %566 = vst [vmem:[%s210 + $0x588] sm:%s202] %v565
                %v567 = vld [vmem:[%s209 + $0xb20] sm:%s202]
                %568 = vst [vmem:[%s210 + $0x590] sm:%s202] %v567
                %v569 = vld [vmem:[%s209 + $0xb30] sm:%s202]
                %570 = vst [vmem:[%s210 + $0x598] sm:%s202] %v569
                %v571 = vld [vmem:[%s209 + $0xb40] sm:%s202]
                %572 = vst [vmem:[%s210 + $0x5a0] sm:%s202] %v571
                %v573 = vld [vmem:[%s209 + $0xb50] sm:%s202]
                %574 = vst [vmem:[%s210 + $0x5a8] sm:%s202] %v573
                %v575 = vld [vmem:[%s209 + $0xb60] sm:%s202]
                %576 = vst [vmem:[%s210 + $0x5b0] sm:%s202] %v575
                %v577 = vld [vmem:[%s209 + $0xb70] sm:%s202]
                %578 = vst [vmem:[%s210 + $0x5b8] sm:%s202] %v577
                %v579 = vld [vmem:[%s209 + $0xb80] sm:%s202]
                %580 = vst [vmem:[%s210 + $0x5c0] sm:%s202] %v579
                %v581 = vld [vmem:[%s209 + $0xb90] sm:%s202]
                %582 = vst [vmem:[%s210 + $0x5c8] sm:%s202] %v581
                %v583 = vld [vmem:[%s209 + $0xba0] sm:%s202]
                %584 = vst [vmem:[%s210 + $0x5d0] sm:%s202] %v583
                %v585 = vld [vmem:[%s209 + $0xbb0] sm:%s202]
                %586 = vst [vmem:[%s210 + $0x5d8] sm:%s202] %v585
                %v587 = vld [vmem:[%s209 + $0xbc0] sm:%s202]
                %588 = vst [vmem:[%s210 + $0x5e0] sm:%s202] %v587
                %v589 = vld [vmem:[%s209 + $0xbd0] sm:%s202]
                %590 = vst [vmem:[%s210 + $0x5e8] sm:%s202] %v589
                %v591 = vld [vmem:[%s209 + $0xbe0] sm:%s202]
                %592 = vst [vmem:[%s210 + $0x5f0] sm:%s202] %v591
                %v593 = vld [vmem:[%s209 + $0xbf0] sm:%s202]
                %594 = vst [vmem:[%s210 + $0x5f8] sm:%s202] %v593
                %v595 = vld [vmem:[%s209 + $0xc00] sm:%s202]
                %596 = vst [vmem:[%s210 + $0x600] sm:%s202] %v595
                %v597 = vld [vmem:[%s209 + $0xc10] sm:%s202]
                %598 = vst [vmem:[%s210 + $0x608] sm:%s202] %v597
                %v599 = vld [vmem:[%s209 + $0xc20] sm:%s202]
                %600 = vst [vmem:[%s210 + $0x610] sm:%s202] %v599
                %v601 = vld [vmem:[%s209 + $0xc30] sm:%s202]
                %602 = vst [vmem:[%s210 + $0x618] sm:%s202] %v601
                %v603 = vld [vmem:[%s209 + $0xc40] sm:%s202]
                %604 = vst [vmem:[%s210 + $0x620] sm:%s202] %v603
                %v605 = vld [vmem:[%s209 + $0xc50] sm:%s202]
                %606 = vst [vmem:[%s210 + $0x628] sm:%s202] %v605
                %v607 = vld [vmem:[%s209 + $0xc60] sm:%s202]
                %608 = vst [vmem:[%s210 + $0x630] sm:%s202] %v607
                %v609 = vld [vmem:[%s209 + $0xc70] sm:%s202]
                %610 = vst [vmem:[%s210 + $0x638] sm:%s202] %v609
                %v611 = vld [vmem:[%s209 + $0xc80] sm:%s202]
                %612 = vst [vmem:[%s210 + $0x640] sm:%s202] %v611
                %v613 = vld [vmem:[%s209 + $0xc90] sm:%s202]
                %614 = vst [vmem:[%s210 + $0x648] sm:%s202] %v613
                %v615 = vld [vmem:[%s209 + $0xca0] sm:%s202]
                %616 = vst [vmem:[%s210 + $0x650] sm:%s202] %v615
                %v617 = vld [vmem:[%s209 + $0xcb0] sm:%s202]
                %618 = vst [vmem:[%s210 + $0x658] sm:%s202] %v617
                %v619 = vld [vmem:[%s209 + $0xcc0] sm:%s202]
                %620 = vst [vmem:[%s210 + $0x660] sm:%s202] %v619
                %v621 = vld [vmem:[%s209 + $0xcd0] sm:%s202]
                %622 = vst [vmem:[%s210 + $0x668] sm:%s202] %v621
                %v623 = vld [vmem:[%s209 + $0xce0] sm:%s202]
                %624 = vst [vmem:[%s210 + $0x670] sm:%s202] %v623
                %v625 = vld [vmem:[%s209 + $0xcf0] sm:%s202]
                %626 = vst [vmem:[%s210 + $0x678] sm:%s202] %v625
                %v627 = vld [vmem:[%s209 + $0xd00] sm:%s202]
                %628 = vst [vmem:[%s210 + $0x680] sm:%s202] %v627
                %v629 = vld [vmem:[%s209 + $0xd10] sm:%s202]
                %630 = vst [vmem:[%s210 + $0x688] sm:%s202] %v629
                %v631 = vld [vmem:[%s209 + $0xd20] sm:%s202]
                %632 = vst [vmem:[%s210 + $0x690] sm:%s202] %v631
                %v633 = vld [vmem:[%s209 + $0xd30] sm:%s202]
                %634 = vst [vmem:[%s210 + $0x698] sm:%s202] %v633
                %v635 = vld [vmem:[%s209 + $0xd40] sm:%s202]
                %636 = vst [vmem:[%s210 + $0x6a0] sm:%s202] %v635
                %v637 = vld [vmem:[%s209 + $0xd50] sm:%s202]
                %638 = vst [vmem:[%s210 + $0x6a8] sm:%s202] %v637
                %v639 = vld [vmem:[%s209 + $0xd60] sm:%s202]
                %640 = vst [vmem:[%s210 + $0x6b0] sm:%s202] %v639
                %v641 = vld [vmem:[%s209 + $0xd70] sm:%s202]
                %642 = vst [vmem:[%s210 + $0x6b8] sm:%s202] %v641
                %v643 = vld [vmem:[%s209 + $0xd80] sm:%s202]
                %644 = vst [vmem:[%s210 + $0x6c0] sm:%s202] %v643
                %v645 = vld [vmem:[%s209 + $0xd90] sm:%s202]
                %646 = vst [vmem:[%s210 + $0x6c8] sm:%s202] %v645
                %v647 = vld [vmem:[%s209 + $0xda0] sm:%s202]
                %648 = vst [vmem:[%s210 + $0x6d0] sm:%s202] %v647
                %v649 = vld [vmem:[%s209 + $0xdb0] sm:%s202]
                %650 = vst [vmem:[%s210 + $0x6d8] sm:%s202] %v649
                %v651 = vld [vmem:[%s209 + $0xdc0] sm:%s202]
                %652 = vst [vmem:[%s210 + $0x6e0] sm:%s202] %v651
                %v653 = vld [vmem:[%s209 + $0xdd0] sm:%s202]
                %654 = vst [vmem:[%s210 + $0x6e8] sm:%s202] %v653
                %v655 = vld [vmem:[%s209 + $0xde0] sm:%s202]
                %656 = vst [vmem:[%s210 + $0x6f0] sm:%s202] %v655
                %v657 = vld [vmem:[%s209 + $0xdf0] sm:%s202]
                %658 = vst [vmem:[%s210 + $0x6f8] sm:%s202] %v657
                %v659 = vld [vmem:[%s209 + $0xe00] sm:%s202]
                %660 = vst [vmem:[%s210 + $0x700] sm:%s202] %v659
                %v661 = vld [vmem:[%s209 + $0xe10] sm:%s202]
                %662 = vst [vmem:[%s210 + $0x708] sm:%s202] %v661
                %v663 = vld [vmem:[%s209 + $0xe20] sm:%s202]
                %664 = vst [vmem:[%s210 + $0x710] sm:%s202] %v663
                %v665 = vld [vmem:[%s209 + $0xe30] sm:%s202]
                %666 = vst [vmem:[%s210 + $0x718] sm:%s202] %v665
                %v667 = vld [vmem:[%s209 + $0xe40] sm:%s202]
                %668 = vst [vmem:[%s210 + $0x720] sm:%s202] %v667
                %v669 = vld [vmem:[%s209 + $0xe50] sm:%s202]
                %670 = vst [vmem:[%s210 + $0x728] sm:%s202] %v669
                %v671 = vld [vmem:[%s209 + $0xe60] sm:%s202]
                %672 = vst [vmem:[%s210 + $0x730] sm:%s202] %v671
                %v673 = vld [vmem:[%s209 + $0xe70] sm:%s202]
                %674 = vst [vmem:[%s210 + $0x738] sm:%s202] %v673
                %v675 = vld [vmem:[%s209 + $0xe80] sm:%s202]
                %676 = vst [vmem:[%s210 + $0x740] sm:%s202] %v675
                %v677 = vld [vmem:[%s209 + $0xe90] sm:%s202]
                %678 = vst [vmem:[%s210 + $0x748] sm:%s202] %v677
                %v679 = vld [vmem:[%s209 + $0xea0] sm:%s202]
                %680 = vst [vmem:[%s210 + $0x750] sm:%s202] %v679
                %v681 = vld [vmem:[%s209 + $0xeb0] sm:%s202]
                %682 = vst [vmem:[%s210 + $0x758] sm:%s202] %v681
                %v683 = vld [vmem:[%s209 + $0xec0] sm:%s202]
                %684 = vst [vmem:[%s210 + $0x760] sm:%s202] %v683
                %v685 = vld [vmem:[%s209 + $0xed0] sm:%s202]
                %686 = vst [vmem:[%s210 + $0x768] sm:%s202] %v685
                %v687 = vld [vmem:[%s209 + $0xee0] sm:%s202]
                %688 = vst [vmem:[%s210 + $0x770] sm:%s202] %v687
                %v689 = vld [vmem:[%s209 + $0xef0] sm:%s202]
                %690 = vst [vmem:[%s210 + $0x778] sm:%s202] %v689
                %v691 = vld [vmem:[%s209 + $0xf00] sm:%s202]
                %692 = vst [vmem:[%s210 + $0x780] sm:%s202] %v691
                %v693 = vld [vmem:[%s209 + $0xf10] sm:%s202]
                %694 = vst [vmem:[%s210 + $0x788] sm:%s202] %v693
                %v695 = vld [vmem:[%s209 + $0xf20] sm:%s202]
                %696 = vst [vmem:[%s210 + $0x790] sm:%s202] %v695
                %v697 = vld [vmem:[%s209 + $0xf30] sm:%s202]
                %698 = vst [vmem:[%s210 + $0x798] sm:%s202] %v697
                %v699 = vld [vmem:[%s209 + $0xf40] sm:%s202]
                %700 = vst [vmem:[%s210 + $0x7a0] sm:%s202] %v699
                %v701 = vld [vmem:[%s209 + $0xf50] sm:%s202]
                %702 = vst [vmem:[%s210 + $0x7a8] sm:%s202] %v701
                %v703 = vld [vmem:[%s209 + $0xf60] sm:%s202]
                %704 = vst [vmem:[%s210 + $0x7b0] sm:%s202] %v703
                %v705 = vld [vmem:[%s209 + $0xf70] sm:%s202]
                %706 = vst [vmem:[%s210 + $0x7b8] sm:%s202] %v705
                %v707 = vld [vmem:[%s209 + $0xf80] sm:%s202]
                %708 = vst [vmem:[%s210 + $0x7c0] sm:%s202] %v707
                %v709 = vld [vmem:[%s209 + $0xf90] sm:%s202]
                %710 = vst [vmem:[%s210 + $0x7c8] sm:%s202] %v709
                %v711 = vld [vmem:[%s209 + $0xfa0] sm:%s202]
                %712 = vst [vmem:[%s210 + $0x7d0] sm:%s202] %v711
                %v713 = vld [vmem:[%s209 + $0xfb0] sm:%s202]
                %714 = vst [vmem:[%s210 + $0x7d8] sm:%s202] %v713
                %v715 = vld [vmem:[%s209 + $0xfc0] sm:%s202]
                %716 = vst [vmem:[%s210 + $0x7e0] sm:%s202] %v715
                %v717 = vld [vmem:[%s209 + $0xfd0] sm:%s202]
                %718 = vst [vmem:[%s210 + $0x7e8] sm:%s202] %v717
                %v719 = vld [vmem:[%s209 + $0xfe0] sm:%s202]
                %720 = vst [vmem:[%s210 + $0x7f0] sm:%s202] %v719
                %v721 = vld [vmem:[%s209 + $0xff0] sm:%s202]
                %722 = vst [vmem:[%s210 + $0x7f8] sm:%s202] %v721
              $region41: #{cnn_forward.5} parent=35 // loop_footer
                %s208 = sadd.s32 1, %s204
              $region42: #{cnn_forward.5} parent=35 // loop_footer_branch
                %203 = sbr.rel target = $region38
              $region43: #{cnn_forward.5} parent=35 // loop_exit
                _
            $region36: #{cnn_forward.5} parent=27 // pred_fallthru
              _
          $region28: #{cnn_forward.5} parent=23 // pred_fallthru
            _
          %2307 = vnop
        $region24: #{cnn_forward.5} parent=15 // pred_fallthru
          _
        // Predicated region
        $region73: #{cnn_forward.5} parent=15 // pred_check
          %p2308 = pneg %p96
        $region74: #{cnn_forward.5} parent=15 // pred_check_branch
          %2310 = sbr.rel (%p2308) target = $region76
        $region75: #{cnn_forward.5} parent=15 // pred_region
          %s2311 = smul.u32 2, %s17
          %p2312 = scmp.lt.s32.totalorder %s2311, 3
          %s2313 = scalar_select %p2312, %s2311, 3
          %s2314 = scalar_lea.vmem %s2, %s2313
          %s2315 = smul.u32 2, %s17
        $region76: #{cnn_forward.5} parent=15 // pred_fallthru
          _
        // Predicated region
        $region77: #{cnn_forward.5} parent=15 // pred_check
          %p2316 = pneg %p122
        $region78: #{cnn_forward.5} parent=15 // pred_check_branch
          %2318 = sbr.rel (%p2316) target = $region80
        $region79: #{cnn_forward.5} parent=15 // pred_region
          %s2319 = smul.u32 32, %s17
          %p2320 = scmp.lt.s32.totalorder %s2319, 63
          %s2321 = scalar_select %p2320, %s2319, 63
          %s2322 = smul.addr %s2321, 8
          %s2323 = scalar_lea.vmem %s3, %s2322
          %s2324 = smul.u32 32, %s17
        $region80: #{cnn_forward.5} parent=15 // pred_fallthru
          _
      $region16: #{cnn_forward.5} parent=5 // pred_fallthru
        _
      %p2325 = scmp.le.s32.totalorder 1, %s10
      %p2326 = scmp.lt.s32.totalorder %s10, 9
      %p2327 = pnand %p2325, %p2326
      %p2328 = pneg %p2327
      // Predicated region
      $region81: #{cnn_forward.5} parent=5 // pred_check
        _
      $region82: #{cnn_forward.5} parent=5 // pred_check_branch
        %2330 = sbr.rel (%p2327) target = $region84
      $region83: #{cnn_forward.5} parent=5 // pred_region
        %s2331 = ssub.s32 %s10, 1
        %s2332 = sand.u32 %s63, 1
        %s2333 = sand.u32 %s63, 1
        %s2334 = smul.addr %s2333, 2048
        %s2335 = scalar_lea.vmem [#allocation3], %s2334
        // Predicated region
        $region85: #{cnn_forward.5} parent=83 // pred_check
          %p2336 = pneg %p76
        $region86: #{cnn_forward.5} parent=83 // pred_check_branch
          %2338 = sbr.rel (%p2336) target = $region88
        $region87: #{cnn_forward.5} parent=83 // pred_region
          _
        $region88: #{cnn_forward.5} parent=83 // pred_fallthru
          _
        %s2339 = smul.u32 16, %s20
        %p2340 = scmp.lt.s32.totalorder %s2339, 63
        %s2341 = scalar_select %p2340, %s2339, 63
        %s2342 = smul.addr %s2341, 2
        %s2343 = scalar_lea.vmem %s0, %s2342
        %p2344 = pneg %p48
        %p2345 = pneg %p45
        %s2346 = sand.u32 %s63, 1
        %s2347 = sand.u32 %s63, 1
        %s2348 = smul.addr %s2347, 2048
        %s2349 = scalar_lea.vmem [#allocation3], %s2348
        %p2350 = pneg %p76
        %p2351 = pneg %p73
        %s2352 = smul.u32 2, %s19
        %p2353 = scmp.lt.s32.totalorder %s2352, 3
        %s2354 = scalar_select %p2353, %s2352, 3
        %s2355 = scalar_lea.vmem %s2, %s2354
        %p2356 = pneg %p102
        %p2357 = pneg %p99
        %s2358 = smul.u32 32, %s19
        %p2359 = scmp.lt.s32.totalorder %s2358, 63
        %s2360 = scalar_select %p2359, %s2358, 63
        %s2361 = smul.addr %s2360, 8
        %s2362 = scalar_lea.vmem %s3, %s2361
        %p2363 = pneg %p128
        %p2364 = pneg %p125
        %p2365 = pneg %p154
        %p2366 = pneg %p151
        %p2367 = scmp.lt.s32.totalorder %s19, 1
        %s2368 = scalar_select %p2367, %s19, 1
        %s2369 = smul.addr %s2368, 2
        %s2370 = scalar_lea.vmem %s4, %s2369
        %s2371 = smul.u32 16, %s20
        %p2372 = scmp.lt.s32.totalorder %s2371, 63
        %s2373 = scalar_select %p2372, %s2371, 63
        %s2374 = smul.addr %s2373, 2
        %s2375 = scalar_lea.vmem %s0, %s2374
        %s2376 = smul.u32 16, %s20
        %s2377 = smul.u32 256, %s20
        %s2378 = smul.u32 2, %s19
        %s2379 = smul.u32 2, %s19
        %p2380 = scmp.lt.s32.totalorder %s2379, 3
        %s2381 = scalar_select %p2380, %s2379, 3
        %s2382 = scalar_lea.vmem %s2, %s2381
        %s2383 = smul.u32 2, %s19
        %s2384 = smul.u32 32, %s19
        %p2385 = scmp.lt.s32.totalorder %s2384, 63
        %s2386 = scalar_select %p2385, %s2384, 63
        %s2387 = smul.addr %s2386, 8
        %s2388 = scalar_lea.vmem %s3, %s2387
        %s2389 = smul.u32 32, %s19
        %p2390 = scmp.lt.s32.totalorder %s19, 1
        %s2391 = scalar_select %p2390, %s19, 1
        %s2392 = smul.addr %s2391, 2
        %s2393 = scalar_lea.vmem %s4, %s2392
        %p2394 = scmp.eq.s32.totalorder %s20, 0
        // Predicated region
        $region89: #{cnn_forward.5} parent=83 // pred_check
          %p2395 = pneg %p2394
        $region90: #{cnn_forward.5} parent=83 // pred_check_branch
          %2397 = sbr.rel (%p2395) target = $region92
        $region91: #{cnn_forward.5} parent=83 // pred_region
          %2398 = vst [vmem:[#allocation2] sm:$0xf] 0.0
        $region92: #{cnn_forward.5} parent=83 // pred_fallthru
          _
        %v2399 = vld [vmem:[#allocation2] sm:$0xf]
        %v2400 = vld [vmem:[%s2375] sm:$0xff]
        %v2401 = vld [vmem:[%s2375 + $0x8] sm:$0xff]
        %v2402 = vld [vmem:[%s2375 + $0x10] sm:$0xff]
        %v2403 = vld [vmem:[%s2375 + $0x18] sm:$0xff]
        %2408 = vst [vmem:[#allocation1] ss:$4 sm:$0xff] %v2400
        %s2409 = scalar_lea.vmem [#allocation1], 32
        %2410 = vst [vmem:[%s2409] ss:$4 sm:$0xff] %v2401
        %v2411 = vld.sshfl [vmem:[#allocation1] sm:$0xff pattern:$0x73625140]
        %v2412 = vld.sshfl [vmem:[#allocation1 + $0x8] sm:$0xff pattern:$0x73625140]
        %v2413 = vld.sshfl [vmem:[#allocation1 + $0x10] sm:$0xff pattern:$0x73625140]
        %v2414 = vld.sshfl [vmem:[#allocation1 + $0x18] sm:$0xff pattern:$0x73625140]
        %v2415 = vld.sshfl [vmem:[#allocation1 + $0x20] sm:$0xff pattern:$0x73625140]
        %v2416 = vld.sshfl [vmem:[#allocation1 + $0x28] sm:$0xff pattern:$0x73625140]
        %v2417 = vld.sshfl [vmem:[#allocation1 + $0x30] sm:$0xff pattern:$0x73625140]
        %v2418 = vld.sshfl [vmem:[#allocation1 + $0x38] sm:$0xff pattern:$0x73625140]
        %2419 = vst [vmem:[#allocation1] ss:$4 sm:$0xff] %v2402
        %2420 = vst [vmem:[%s2409] ss:$4 sm:$0xff] %v2403
        %v2421 = vld.sshfl [vmem:[#allocation1] sm:$0xff pattern:$0x73625140]
        %v2422 = vld.sshfl [vmem:[#allocation1 + $0x8] sm:$0xff pattern:$0x73625140]
        %v2423 = vld.sshfl [vmem:[#allocation1 + $0x10] sm:$0xff pattern:$0x73625140]
        %v2424 = vld.sshfl [vmem:[#allocation1 + $0x18] sm:$0xff pattern:$0x73625140]
        %v2425 = vld.sshfl [vmem:[#allocation1 + $0x20] sm:$0xff pattern:$0x73625140]
        %v2426 = vld.sshfl [vmem:[#allocation1 + $0x28] sm:$0xff pattern:$0x73625140]
        %v2427 = vld.sshfl [vmem:[#allocation1 + $0x30] sm:$0xff pattern:$0x73625140]
        %v2428 = vld.sshfl [vmem:[#allocation1 + $0x38] sm:$0xff pattern:$0x73625140]
        %v2445 = vpack.c.bf16 %v2411, %v2411
        %v2446 = vpack.c.bf16 %v2412, %v2412
        %v2447 = vpack.c.bf16 %v2413, %v2413
        %v2448 = vpack.c.bf16 %v2414, %v2414
        %v2449 = vpack.c.bf16 %v2415, %v2415
        %v2450 = vpack.c.bf16 %v2416, %v2416
        %v2451 = vpack.c.bf16 %v2417, %v2417
        %v2452 = vpack.c.bf16 %v2418, %v2418
        %v2453 = vpack.c.bf16 %v2421, %v2421
        %v2454 = vpack.c.bf16 %v2422, %v2422
        %v2455 = vpack.c.bf16 %v2423, %v2423
        %v2456 = vpack.c.bf16 %v2424, %v2424
        %v2457 = vpack.c.bf16 %v2425, %v2425
        %v2458 = vpack.c.bf16 %v2426, %v2426
        %v2459 = vpack.c.bf16 %v2427, %v2427
        %v2460 = vpack.c.bf16 %v2428, %v2428
        %v2461 = vld [vmem:[%s2335] sm:$0xff]
        %v2462 = vld [vmem:[%s2335 + $0x8] sm:$0xff]
        %v2463 = vld [vmem:[%s2335 + $0x10] sm:$0xff]
        %v2464 = vld [vmem:[%s2335 + $0x18] sm:$0xff]
        %v2465 = vld [vmem:[%s2335 + $0x20] sm:$0xff]
        %v2466 = vld [vmem:[%s2335 + $0x28] sm:$0xff]
        %v2467 = vld [vmem:[%s2335 + $0x30] sm:$0xff]
        %v2468 = vld [vmem:[%s2335 + $0x38] sm:$0xff]
        %v2469 = vld [vmem:[%s2335 + $0x40] sm:$0xff]
        %v2470 = vld [vmem:[%s2335 + $0x48] sm:$0xff]
        %v2471 = vld [vmem:[%s2335 + $0x50] sm:$0xff]
        %v2472 = vld [vmem:[%s2335 + $0x58] sm:$0xff]
        %v2473 = vld [vmem:[%s2335 + $0x60] sm:$0xff]
        %v2474 = vld [vmem:[%s2335 + $0x68] sm:$0xff]
        %v2475 = vld [vmem:[%s2335 + $0x70] sm:$0xff]
        %v2476 = vld [vmem:[%s2335 + $0x78] sm:$0xff]
        %v2477 = vld [vmem:[%s2335 + $0x80] sm:$0xff]
        %v2478 = vld [vmem:[%s2335 + $0x88] sm:$0xff]
        %v2479 = vld [vmem:[%s2335 + $0x90] sm:$0xff]
        %v2480 = vld [vmem:[%s2335 + $0x98] sm:$0xff]
        %v2481 = vld [vmem:[%s2335 + $0xa0] sm:$0xff]
        %v2482 = vld [vmem:[%s2335 + $0xa8] sm:$0xff]
        %v2483 = vld [vmem:[%s2335 + $0xb0] sm:$0xff]
        %v2484 = vld [vmem:[%s2335 + $0xb8] sm:$0xff]
        %v2485 = vld [vmem:[%s2335 + $0xc0] sm:$0xff]
        %v2486 = vld [vmem:[%s2335 + $0xc8] sm:$0xff]
        %v2487 = vld [vmem:[%s2335 + $0xd0] sm:$0xff]
        %v2488 = vld [vmem:[%s2335 + $0xd8] sm:$0xff]
        %v2489 = vld [vmem:[%s2335 + $0xe0] sm:$0xff]
        %v2490 = vld [vmem:[%s2335 + $0xe8] sm:$0xff]
        %v2491 = vld [vmem:[%s2335 + $0xf0] sm:$0xff]
        %v2492 = vld [vmem:[%s2335 + $0xf8] sm:$0xff]
        %v2493 = vld [vmem:[%s2335 + $0x100] sm:$0xff]
        %v2494 = vld [vmem:[%s2335 + $0x108] sm:$0xff]
        %v2495 = vld [vmem:[%s2335 + $0x110] sm:$0xff]
        %v2496 = vld [vmem:[%s2335 + $0x118] sm:$0xff]
        %v2497 = vld [vmem:[%s2335 + $0x120] sm:$0xff]
        %v2498 = vld [vmem:[%s2335 + $0x128] sm:$0xff]
        %v2499 = vld [vmem:[%s2335 + $0x130] sm:$0xff]
        %v2500 = vld [vmem:[%s2335 + $0x138] sm:$0xff]
        %v2501 = vld [vmem:[%s2335 + $0x140] sm:$0xff]
        %v2502 = vld [vmem:[%s2335 + $0x148] sm:$0xff]
        %v2503 = vld [vmem:[%s2335 + $0x150] sm:$0xff]
        %v2504 = vld [vmem:[%s2335 + $0x158] sm:$0xff]
        %v2505 = vld [vmem:[%s2335 + $0x160] sm:$0xff]
        %v2506 = vld [vmem:[%s2335 + $0x168] sm:$0xff]
        %v2507 = vld [vmem:[%s2335 + $0x170] sm:$0xff]
        %v2508 = vld [vmem:[%s2335 + $0x178] sm:$0xff]
        %v2509 = vld [vmem:[%s2335 + $0x180] sm:$0xff]
        %v2510 = vld [vmem:[%s2335 + $0x188] sm:$0xff]
        %v2511 = vld [vmem:[%s2335 + $0x190] sm:$0xff]
        %v2512 = vld [vmem:[%s2335 + $0x198] sm:$0xff]
        %v2513 = vld [vmem:[%s2335 + $0x1a0] sm:$0xff]
        %v2514 = vld [vmem:[%s2335 + $0x1a8] sm:$0xff]
        %v2515 = vld [vmem:[%s2335 + $0x1b0] sm:$0xff]
        %v2516 = vld [vmem:[%s2335 + $0x1b8] sm:$0xff]
        %v2517 = vld [vmem:[%s2335 + $0x1c0] sm:$0xff]
        %v2518 = vld [vmem:[%s2335 + $0x1c8] sm:$0xff]
        %v2519 = vld [vmem:[%s2335 + $0x1d0] sm:$0xff]
        %v2520 = vld [vmem:[%s2335 + $0x1d8] sm:$0xff]
        %v2521 = vld [vmem:[%s2335 + $0x1e0] sm:$0xff]
        %v2522 = vld [vmem:[%s2335 + $0x1e8] sm:$0xff]
        %v2523 = vld [vmem:[%s2335 + $0x1f0] sm:$0xff]
        %v2524 = vld [vmem:[%s2335 + $0x1f8] sm:$0xff]
        %v2525 = vld [vmem:[%s2335 + $0x200] sm:$0xff]
        %v2526 = vld [vmem:[%s2335 + $0x208] sm:$0xff]
        %v2527 = vld [vmem:[%s2335 + $0x210] sm:$0xff]
        %v2528 = vld [vmem:[%s2335 + $0x218] sm:$0xff]
        %v2529 = vld [vmem:[%s2335 + $0x220] sm:$0xff]
        %v2530 = vld [vmem:[%s2335 + $0x228] sm:$0xff]
        %v2531 = vld [vmem:[%s2335 + $0x230] sm:$0xff]
        %v2532 = vld [vmem:[%s2335 + $0x238] sm:$0xff]
        %v2533 = vld [vmem:[%s2335 + $0x240] sm:$0xff]
        %v2534 = vld [vmem:[%s2335 + $0x248] sm:$0xff]
        %v2535 = vld [vmem:[%s2335 + $0x250] sm:$0xff]
        %v2536 = vld [vmem:[%s2335 + $0x258] sm:$0xff]
        %v2537 = vld [vmem:[%s2335 + $0x260] sm:$0xff]
        %v2538 = vld [vmem:[%s2335 + $0x268] sm:$0xff]
        %v2539 = vld [vmem:[%s2335 + $0x270] sm:$0xff]
        %v2540 = vld [vmem:[%s2335 + $0x278] sm:$0xff]
        %v2541 = vld [vmem:[%s2335 + $0x280] sm:$0xff]
        %v2542 = vld [vmem:[%s2335 + $0x288] sm:$0xff]
        %v2543 = vld [vmem:[%s2335 + $0x290] sm:$0xff]
        %v2544 = vld [vmem:[%s2335 + $0x298] sm:$0xff]
        %v2545 = vld [vmem:[%s2335 + $0x2a0] sm:$0xff]
        %v2546 = vld [vmem:[%s2335 + $0x2a8] sm:$0xff]
        %v2547 = vld [vmem:[%s2335 + $0x2b0] sm:$0xff]
        %v2548 = vld [vmem:[%s2335 + $0x2b8] sm:$0xff]
        %v2549 = vld [vmem:[%s2335 + $0x2c0] sm:$0xff]
        %v2550 = vld [vmem:[%s2335 + $0x2c8] sm:$0xff]
        %v2551 = vld [vmem:[%s2335 + $0x2d0] sm:$0xff]
        %v2552 = vld [vmem:[%s2335 + $0x2d8] sm:$0xff]
        %v2553 = vld [vmem:[%s2335 + $0x2e0] sm:$0xff]
        %v2554 = vld [vmem:[%s2335 + $0x2e8] sm:$0xff]
        %v2555 = vld [vmem:[%s2335 + $0x2f0] sm:$0xff]
        %v2556 = vld [vmem:[%s2335 + $0x2f8] sm:$0xff]
        %v2557 = vld [vmem:[%s2335 + $0x300] sm:$0xff]
        %v2558 = vld [vmem:[%s2335 + $0x308] sm:$0xff]
        %v2559 = vld [vmem:[%s2335 + $0x310] sm:$0xff]
        %v2560 = vld [vmem:[%s2335 + $0x318] sm:$0xff]
        %v2561 = vld [vmem:[%s2335 + $0x320] sm:$0xff]
        %v2562 = vld [vmem:[%s2335 + $0x328] sm:$0xff]
        %v2563 = vld [vmem:[%s2335 + $0x330] sm:$0xff]
        %v2564 = vld [vmem:[%s2335 + $0x338] sm:$0xff]
        %v2565 = vld [vmem:[%s2335 + $0x340] sm:$0xff]
        %v2566 = vld [vmem:[%s2335 + $0x348] sm:$0xff]
        %v2567 = vld [vmem:[%s2335 + $0x350] sm:$0xff]
        %v2568 = vld [vmem:[%s2335 + $0x358] sm:$0xff]
        %v2569 = vld [vmem:[%s2335 + $0x360] sm:$0xff]
        %v2570 = vld [vmem:[%s2335 + $0x368] sm:$0xff]
        %v2571 = vld [vmem:[%s2335 + $0x370] sm:$0xff]
        %v2572 = vld [vmem:[%s2335 + $0x378] sm:$0xff]
        %v2573 = vld [vmem:[%s2335 + $0x380] sm:$0xff]
        %v2574 = vld [vmem:[%s2335 + $0x388] sm:$0xff]
        %v2575 = vld [vmem:[%s2335 + $0x390] sm:$0xff]
        %v2576 = vld [vmem:[%s2335 + $0x398] sm:$0xff]
        %v2577 = vld [vmem:[%s2335 + $0x3a0] sm:$0xff]
        %v2578 = vld [vmem:[%s2335 + $0x3a8] sm:$0xff]
        %v2579 = vld [vmem:[%s2335 + $0x3b0] sm:$0xff]
        %v2580 = vld [vmem:[%s2335 + $0x3b8] sm:$0xff]
        %v2581 = vld [vmem:[%s2335 + $0x3c0] sm:$0xff]
        %v2582 = vld [vmem:[%s2335 + $0x3c8] sm:$0xff]
        %v2583 = vld [vmem:[%s2335 + $0x3d0] sm:$0xff]
        %v2584 = vld [vmem:[%s2335 + $0x3d8] sm:$0xff]
        %v2585 = vld [vmem:[%s2335 + $0x3e0] sm:$0xff]
        %v2586 = vld [vmem:[%s2335 + $0x3e8] sm:$0xff]
        %v2587 = vld [vmem:[%s2335 + $0x3f0] sm:$0xff]
        %v2588 = vld [vmem:[%s2335 + $0x3f8] sm:$0xff]
        %v2589 = vld [vmem:[%s2335 + $0x400] sm:$0xff]
        %v2590 = vld [vmem:[%s2335 + $0x408] sm:$0xff]
        %v2591 = vld [vmem:[%s2335 + $0x410] sm:$0xff]
        %v2592 = vld [vmem:[%s2335 + $0x418] sm:$0xff]
        %v2593 = vld [vmem:[%s2335 + $0x420] sm:$0xff]
        %v2594 = vld [vmem:[%s2335 + $0x428] sm:$0xff]
        %v2595 = vld [vmem:[%s2335 + $0x430] sm:$0xff]
        %v2596 = vld [vmem:[%s2335 + $0x438] sm:$0xff]
        %v2597 = vld [vmem:[%s2335 + $0x440] sm:$0xff]
        %v2598 = vld [vmem:[%s2335 + $0x448] sm:$0xff]
        %v2599 = vld [vmem:[%s2335 + $0x450] sm:$0xff]
        %v2600 = vld [vmem:[%s2335 + $0x458] sm:$0xff]
        %v2601 = vld [vmem:[%s2335 + $0x460] sm:$0xff]
        %v2602 = vld [vmem:[%s2335 + $0x468] sm:$0xff]
        %v2603 = vld [vmem:[%s2335 + $0x470] sm:$0xff]
        %v2604 = vld [vmem:[%s2335 + $0x478] sm:$0xff]
        %v2605 = vld [vmem:[%s2335 + $0x480] sm:$0xff]
        %v2606 = vld [vmem:[%s2335 + $0x488] sm:$0xff]
        %v2607 = vld [vmem:[%s2335 + $0x490] sm:$0xff]
        %v2608 = vld [vmem:[%s2335 + $0x498] sm:$0xff]
        %v2609 = vld [vmem:[%s2335 + $0x4a0] sm:$0xff]
        %v2610 = vld [vmem:[%s2335 + $0x4a8] sm:$0xff]
        %v2611 = vld [vmem:[%s2335 + $0x4b0] sm:$0xff]
        %v2612 = vld [vmem:[%s2335 + $0x4b8] sm:$0xff]
        %v2613 = vld [vmem:[%s2335 + $0x4c0] sm:$0xff]
        %v2614 = vld [vmem:[%s2335 + $0x4c8] sm:$0xff]
        %v2615 = vld [vmem:[%s2335 + $0x4d0] sm:$0xff]
        %v2616 = vld [vmem:[%s2335 + $0x4d8] sm:$0xff]
        %v2617 = vld [vmem:[%s2335 + $0x4e0] sm:$0xff]
        %v2618 = vld [vmem:[%s2335 + $0x4e8] sm:$0xff]
        %v2619 = vld [vmem:[%s2335 + $0x4f0] sm:$0xff]
        %v2620 = vld [vmem:[%s2335 + $0x4f8] sm:$0xff]
        %v2621 = vld [vmem:[%s2335 + $0x500] sm:$0xff]
        %v2622 = vld [vmem:[%s2335 + $0x508] sm:$0xff]
        %v2623 = vld [vmem:[%s2335 + $0x510] sm:$0xff]
        %v2624 = vld [vmem:[%s2335 + $0x518] sm:$0xff]
        %v2625 = vld [vmem:[%s2335 + $0x520] sm:$0xff]
        %v2626 = vld [vmem:[%s2335 + $0x528] sm:$0xff]
        %v2627 = vld [vmem:[%s2335 + $0x530] sm:$0xff]
        %v2628 = vld [vmem:[%s2335 + $0x538] sm:$0xff]
        %v2629 = vld [vmem:[%s2335 + $0x540] sm:$0xff]
        %v2630 = vld [vmem:[%s2335 + $0x548] sm:$0xff]
        %v2631 = vld [vmem:[%s2335 + $0x550] sm:$0xff]
        %v2632 = vld [vmem:[%s2335 + $0x558] sm:$0xff]
        %v2633 = vld [vmem:[%s2335 + $0x560] sm:$0xff]
        %v2634 = vld [vmem:[%s2335 + $0x568] sm:$0xff]
        %v2635 = vld [vmem:[%s2335 + $0x570] sm:$0xff]
        %v2636 = vld [vmem:[%s2335 + $0x578] sm:$0xff]
        %v2637 = vld [vmem:[%s2335 + $0x580] sm:$0xff]
        %v2638 = vld [vmem:[%s2335 + $0x588] sm:$0xff]
        %v2639 = vld [vmem:[%s2335 + $0x590] sm:$0xff]
        %v2640 = vld [vmem:[%s2335 + $0x598] sm:$0xff]
        %v2641 = vld [vmem:[%s2335 + $0x5a0] sm:$0xff]
        %v2642 = vld [vmem:[%s2335 + $0x5a8] sm:$0xff]
        %v2643 = vld [vmem:[%s2335 + $0x5b0] sm:$0xff]
        %v2644 = vld [vmem:[%s2335 + $0x5b8] sm:$0xff]
        %v2645 = vld [vmem:[%s2335 + $0x5c0] sm:$0xff]
        %v2646 = vld [vmem:[%s2335 + $0x5c8] sm:$0xff]
        %v2647 = vld [vmem:[%s2335 + $0x5d0] sm:$0xff]
        %v2648 = vld [vmem:[%s2335 + $0x5d8] sm:$0xff]
        %v2649 = vld [vmem:[%s2335 + $0x5e0] sm:$0xff]
        %v2650 = vld [vmem:[%s2335 + $0x5e8] sm:$0xff]
        %v2651 = vld [vmem:[%s2335 + $0x5f0] sm:$0xff]
        %v2652 = vld [vmem:[%s2335 + $0x5f8] sm:$0xff]
        %v2653 = vld [vmem:[%s2335 + $0x600] sm:$0xff]
        %v2654 = vld [vmem:[%s2335 + $0x608] sm:$0xff]
        %v2655 = vld [vmem:[%s2335 + $0x610] sm:$0xff]
        %v2656 = vld [vmem:[%s2335 + $0x618] sm:$0xff]
        %v2657 = vld [vmem:[%s2335 + $0x620] sm:$0xff]
        %v2658 = vld [vmem:[%s2335 + $0x628] sm:$0xff]
        %v2659 = vld [vmem:[%s2335 + $0x630] sm:$0xff]
        %v2660 = vld [vmem:[%s2335 + $0x638] sm:$0xff]
        %v2661 = vld [vmem:[%s2335 + $0x640] sm:$0xff]
        %v2662 = vld [vmem:[%s2335 + $0x648] sm:$0xff]
        %v2663 = vld [vmem:[%s2335 + $0x650] sm:$0xff]
        %v2664 = vld [vmem:[%s2335 + $0x658] sm:$0xff]
        %v2665 = vld [vmem:[%s2335 + $0x660] sm:$0xff]
        %v2666 = vld [vmem:[%s2335 + $0x668] sm:$0xff]
        %v2667 = vld [vmem:[%s2335 + $0x670] sm:$0xff]
        %v2668 = vld [vmem:[%s2335 + $0x678] sm:$0xff]
        %v2669 = vld [vmem:[%s2335 + $0x680] sm:$0xff]
        %v2670 = vld [vmem:[%s2335 + $0x688] sm:$0xff]
        %v2671 = vld [vmem:[%s2335 + $0x690] sm:$0xff]
        %v2672 = vld [vmem:[%s2335 + $0x698] sm:$0xff]
        %v2673 = vld [vmem:[%s2335 + $0x6a0] sm:$0xff]
        %v2674 = vld [vmem:[%s2335 + $0x6a8] sm:$0xff]
        %v2675 = vld [vmem:[%s2335 + $0x6b0] sm:$0xff]
        %v2676 = vld [vmem:[%s2335 + $0x6b8] sm:$0xff]
        %v2677 = vld [vmem:[%s2335 + $0x6c0] sm:$0xff]
        %v2678 = vld [vmem:[%s2335 + $0x6c8] sm:$0xff]
        %v2679 = vld [vmem:[%s2335 + $0x6d0] sm:$0xff]
        %v2680 = vld [vmem:[%s2335 + $0x6d8] sm:$0xff]
        %v2681 = vld [vmem:[%s2335 + $0x6e0] sm:$0xff]
        %v2682 = vld [vmem:[%s2335 + $0x6e8] sm:$0xff]
        %v2683 = vld [vmem:[%s2335 + $0x6f0] sm:$0xff]
        %v2684 = vld [vmem:[%s2335 + $0x6f8] sm:$0xff]
        %v2685 = vld [vmem:[%s2335 + $0x700] sm:$0xff]
        %v2686 = vld [vmem:[%s2335 + $0x708] sm:$0xff]
        %v2687 = vld [vmem:[%s2335 + $0x710] sm:$0xff]
        %v2688 = vld [vmem:[%s2335 + $0x718] sm:$0xff]
        %v2689 = vld [vmem:[%s2335 + $0x720] sm:$0xff]
        %v2690 = vld [vmem:[%s2335 + $0x728] sm:$0xff]
        %v2691 = vld [vmem:[%s2335 + $0x730] sm:$0xff]
        %v2692 = vld [vmem:[%s2335 + $0x738] sm:$0xff]
        %v2693 = vld [vmem:[%s2335 + $0x740] sm:$0xff]
        %v2694 = vld [vmem:[%s2335 + $0x748] sm:$0xff]
        %v2695 = vld [vmem:[%s2335 + $0x750] sm:$0xff]
        %v2696 = vld [vmem:[%s2335 + $0x758] sm:$0xff]
        %v2697 = vld [vmem:[%s2335 + $0x760] sm:$0xff]
        %v2698 = vld [vmem:[%s2335 + $0x768] sm:$0xff]
        %v2699 = vld [vmem:[%s2335 + $0x770] sm:$0xff]
        %v2700 = vld [vmem:[%s2335 + $0x778] sm:$0xff]
        %v2701 = vld [vmem:[%s2335 + $0x780] sm:$0xff]
        %v2702 = vld [vmem:[%s2335 + $0x788] sm:$0xff]
        %v2703 = vld [vmem:[%s2335 + $0x790] sm:$0xff]
        %v2704 = vld [vmem:[%s2335 + $0x798] sm:$0xff]
        %v2705 = vld [vmem:[%s2335 + $0x7a0] sm:$0xff]
        %v2706 = vld [vmem:[%s2335 + $0x7a8] sm:$0xff]
        %v2707 = vld [vmem:[%s2335 + $0x7b0] sm:$0xff]
        %v2708 = vld [vmem:[%s2335 + $0x7b8] sm:$0xff]
        %v2709 = vld [vmem:[%s2335 + $0x7c0] sm:$0xff]
        %v2710 = vld [vmem:[%s2335 + $0x7c8] sm:$0xff]
        %v2711 = vld [vmem:[%s2335 + $0x7d0] sm:$0xff]
        %v2712 = vld [vmem:[%s2335 + $0x7d8] sm:$0xff]
        %v2713 = vld [vmem:[%s2335 + $0x7e0] sm:$0xff]
        %v2714 = vld [vmem:[%s2335 + $0x7e8] sm:$0xff]
        %v2715 = vld [vmem:[%s2335 + $0x7f0] sm:$0xff]
        %v2716 = vld [vmem:[%s2335 + $0x7f8] sm:$0xff]
        %v2973 = vunpack.c.l.b16 %v2461
        %v2974 = vunpack.c.h.b16 %v2461
        %v2975 = vunpack.c.l.b16 %v2462
        %v2976 = vunpack.c.h.b16 %v2462
        %v2977 = vunpack.c.l.b16 %v2463
        %v2978 = vunpack.c.h.b16 %v2463
        %v2979 = vunpack.c.l.b16 %v2464
        %v2980 = vunpack.c.h.b16 %v2464
        %v2981 = vunpack.c.l.b16 %v2465
        %v2982 = vunpack.c.h.b16 %v2465
        %v2983 = vunpack.c.l.b16 %v2466
        %v2984 = vunpack.c.h.b16 %v2466
        %v2985 = vunpack.c.l.b16 %v2467
        %v2986 = vunpack.c.h.b16 %v2467
        %v2987 = vunpack.c.l.b16 %v2468
        %v2988 = vunpack.c.h.b16 %v2468
        %v2989 = vunpack.c.l.b16 %v2469
        %v2990 = vunpack.c.h.b16 %v2469
        %v2991 = vunpack.c.l.b16 %v2470
        %v2992 = vunpack.c.h.b16 %v2470
        %v2993 = vunpack.c.l.b16 %v2471
        %v2994 = vunpack.c.h.b16 %v2471
        %v2995 = vunpack.c.l.b16 %v2472
        %v2996 = vunpack.c.h.b16 %v2472
        %v2997 = vunpack.c.l.b16 %v2473
        %v2998 = vunpack.c.h.b16 %v2473
        %v2999 = vunpack.c.l.b16 %v2474
        %v3000 = vunpack.c.h.b16 %v2474
        %v3001 = vunpack.c.l.b16 %v2475
        %v3002 = vunpack.c.h.b16 %v2475
        %v3003 = vunpack.c.l.b16 %v2476
        %v3004 = vunpack.c.h.b16 %v2476
        %v3005 = vunpack.c.l.b16 %v2477
        %v3006 = vunpack.c.h.b16 %v2477
        %v3007 = vunpack.c.l.b16 %v2478
        %v3008 = vunpack.c.h.b16 %v2478
        %v3009 = vunpack.c.l.b16 %v2479
        %v3010 = vunpack.c.h.b16 %v2479
        %v3011 = vunpack.c.l.b16 %v2480
        %v3012 = vunpack.c.h.b16 %v2480
        %v3013 = vunpack.c.l.b16 %v2481
        %v3014 = vunpack.c.h.b16 %v2481
        %v3015 = vunpack.c.l.b16 %v2482
        %v3016 = vunpack.c.h.b16 %v2482
        %v3017 = vunpack.c.l.b16 %v2483
        %v3018 = vunpack.c.h.b16 %v2483
        %v3019 = vunpack.c.l.b16 %v2484
        %v3020 = vunpack.c.h.b16 %v2484
        %v3021 = vunpack.c.l.b16 %v2485
        %v3022 = vunpack.c.h.b16 %v2485
        %v3023 = vunpack.c.l.b16 %v2486
        %v3024 = vunpack.c.h.b16 %v2486
        %v3025 = vunpack.c.l.b16 %v2487
        %v3026 = vunpack.c.h.b16 %v2487
        %v3027 = vunpack.c.l.b16 %v2488
        %v3028 = vunpack.c.h.b16 %v2488
        %v3029 = vunpack.c.l.b16 %v2489
        %v3030 = vunpack.c.h.b16 %v2489
        %v3031 = vunpack.c.l.b16 %v2490
        %v3032 = vunpack.c.h.b16 %v2490
        %v3033 = vunpack.c.l.b16 %v2491
        %v3034 = vunpack.c.h.b16 %v2491
        %v3035 = vunpack.c.l.b16 %v2492
        %v3036 = vunpack.c.h.b16 %v2492
        %v3037 = vunpack.c.l.b16 %v2493
        %v3038 = vunpack.c.h.b16 %v2493
        %v3039 = vunpack.c.l.b16 %v2494
        %v3040 = vunpack.c.h.b16 %v2494
        %v3041 = vunpack.c.l.b16 %v2495
        %v3042 = vunpack.c.h.b16 %v2495
        %v3043 = vunpack.c.l.b16 %v2496
        %v3044 = vunpack.c.h.b16 %v2496
        %v3045 = vunpack.c.l.b16 %v2497
        %v3046 = vunpack.c.h.b16 %v2497
        %v3047 = vunpack.c.l.b16 %v2498
        %v3048 = vunpack.c.h.b16 %v2498
        %v3049 = vunpack.c.l.b16 %v2499
        %v3050 = vunpack.c.h.b16 %v2499
        %v3051 = vunpack.c.l.b16 %v2500
        %v3052 = vunpack.c.h.b16 %v2500
        %v3053 = vunpack.c.l.b16 %v2501
        %v3054 = vunpack.c.h.b16 %v2501
        %v3055 = vunpack.c.l.b16 %v2502
        %v3056 = vunpack.c.h.b16 %v2502
        %v3057 = vunpack.c.l.b16 %v2503
        %v3058 = vunpack.c.h.b16 %v2503
        %v3059 = vunpack.c.l.b16 %v2504
        %v3060 = vunpack.c.h.b16 %v2504
        %v3061 = vunpack.c.l.b16 %v2505
        %v3062 = vunpack.c.h.b16 %v2505
        %v3063 = vunpack.c.l.b16 %v2506
        %v3064 = vunpack.c.h.b16 %v2506
        %v3065 = vunpack.c.l.b16 %v2507
        %v3066 = vunpack.c.h.b16 %v2507
        %v3067 = vunpack.c.l.b16 %v2508
        %v3068 = vunpack.c.h.b16 %v2508
        %v3069 = vunpack.c.l.b16 %v2509
        %v3070 = vunpack.c.h.b16 %v2509
        %v3071 = vunpack.c.l.b16 %v2510
        %v3072 = vunpack.c.h.b16 %v2510
        %v3073 = vunpack.c.l.b16 %v2511
        %v3074 = vunpack.c.h.b16 %v2511
        %v3075 = vunpack.c.l.b16 %v2512
        %v3076 = vunpack.c.h.b16 %v2512
        %v3077 = vunpack.c.l.b16 %v2513
        %v3078 = vunpack.c.h.b16 %v2513
        %v3079 = vunpack.c.l.b16 %v2514
        %v3080 = vunpack.c.h.b16 %v2514
        %v3081 = vunpack.c.l.b16 %v2515
        %v3082 = vunpack.c.h.b16 %v2515
        %v3083 = vunpack.c.l.b16 %v2516
        %v3084 = vunpack.c.h.b16 %v2516
        %v3085 = vunpack.c.l.b16 %v2517
        %v3086 = vunpack.c.h.b16 %v2517
        %v3087 = vunpack.c.l.b16 %v2518
        %v3088 = vunpack.c.h.b16 %v2518
        %v3089 = vunpack.c.l.b16 %v2519
        %v3090 = vunpack.c.h.b16 %v2519
        %v3091 = vunpack.c.l.b16 %v2520
        %v3092 = vunpack.c.h.b16 %v2520
        %v3093 = vunpack.c.l.b16 %v2521
        %v3094 = vunpack.c.h.b16 %v2521
        %v3095 = vunpack.c.l.b16 %v2522
        %v3096 = vunpack.c.h.b16 %v2522
        %v3097 = vunpack.c.l.b16 %v2523
        %v3098 = vunpack.c.h.b16 %v2523
        %v3099 = vunpack.c.l.b16 %v2524
        %v3100 = vunpack.c.h.b16 %v2524
        %v3101 = vunpack.c.l.b16 %v2525
        %v3102 = vunpack.c.h.b16 %v2525
        %v3103 = vunpack.c.l.b16 %v2526
        %v3104 = vunpack.c.h.b16 %v2526
        %v3105 = vunpack.c.l.b16 %v2527
        %v3106 = vunpack.c.h.b16 %v2527
        %v3107 = vunpack.c.l.b16 %v2528
        %v3108 = vunpack.c.h.b16 %v2528
        %v3109 = vunpack.c.l.b16 %v2529
        %v3110 = vunpack.c.h.b16 %v2529
        %v3111 = vunpack.c.l.b16 %v2530
        %v3112 = vunpack.c.h.b16 %v2530
        %v3113 = vunpack.c.l.b16 %v2531
        %v3114 = vunpack.c.h.b16 %v2531
        %v3115 = vunpack.c.l.b16 %v2532
        %v3116 = vunpack.c.h.b16 %v2532
        %v3117 = vunpack.c.l.b16 %v2533
        %v3118 = vunpack.c.h.b16 %v2533
        %v3119 = vunpack.c.l.b16 %v2534
        %v3120 = vunpack.c.h.b16 %v2534
        %v3121 = vunpack.c.l.b16 %v2535
        %v3122 = vunpack.c.h.b16 %v2535
        %v3123 = vunpack.c.l.b16 %v2536
        %v3124 = vunpack.c.h.b16 %v2536
        %v3125 = vunpack.c.l.b16 %v2537
        %v3126 = vunpack.c.h.b16 %v2537
        %v3127 = vunpack.c.l.b16 %v2538
        %v3128 = vunpack.c.h.b16 %v2538
        %v3129 = vunpack.c.l.b16 %v2539
        %v3130 = vunpack.c.h.b16 %v2539
        %v3131 = vunpack.c.l.b16 %v2540
        %v3132 = vunpack.c.h.b16 %v2540
        %v3133 = vunpack.c.l.b16 %v2541
        %v3134 = vunpack.c.h.b16 %v2541
        %v3135 = vunpack.c.l.b16 %v2542
        %v3136 = vunpack.c.h.b16 %v2542
        %v3137 = vunpack.c.l.b16 %v2543
        %v3138 = vunpack.c.h.b16 %v2543
        %v3139 = vunpack.c.l.b16 %v2544
        %v3140 = vunpack.c.h.b16 %v2544
        %v3141 = vunpack.c.l.b16 %v2545
        %v3142 = vunpack.c.h.b16 %v2545
        %v3143 = vunpack.c.l.b16 %v2546
        %v3144 = vunpack.c.h.b16 %v2546
        %v3145 = vunpack.c.l.b16 %v2547
        %v3146 = vunpack.c.h.b16 %v2547
        %v3147 = vunpack.c.l.b16 %v2548
        %v3148 = vunpack.c.h.b16 %v2548
        %v3149 = vunpack.c.l.b16 %v2549
        %v3150 = vunpack.c.h.b16 %v2549
        %v3151 = vunpack.c.l.b16 %v2550
        %v3152 = vunpack.c.h.b16 %v2550
        %v3153 = vunpack.c.l.b16 %v2551
        %v3154 = vunpack.c.h.b16 %v2551
        %v3155 = vunpack.c.l.b16 %v2552
        %v3156 = vunpack.c.h.b16 %v2552
        %v3157 = vunpack.c.l.b16 %v2553
        %v3158 = vunpack.c.h.b16 %v2553
        %v3159 = vunpack.c.l.b16 %v2554
        %v3160 = vunpack.c.h.b16 %v2554
        %v3161 = vunpack.c.l.b16 %v2555
        %v3162 = vunpack.c.h.b16 %v2555
        %v3163 = vunpack.c.l.b16 %v2556
        %v3164 = vunpack.c.h.b16 %v2556
        %v3165 = vunpack.c.l.b16 %v2557
        %v3166 = vunpack.c.h.b16 %v2557
        %v3167 = vunpack.c.l.b16 %v2558
        %v3168 = vunpack.c.h.b16 %v2558
        %v3169 = vunpack.c.l.b16 %v2559
        %v3170 = vunpack.c.h.b16 %v2559
        %v3171 = vunpack.c.l.b16 %v2560
        %v3172 = vunpack.c.h.b16 %v2560
        %v3173 = vunpack.c.l.b16 %v2561
        %v3174 = vunpack.c.h.b16 %v2561
        %v3175 = vunpack.c.l.b16 %v2562
        %v3176 = vunpack.c.h.b16 %v2562
        %v3177 = vunpack.c.l.b16 %v2563
        %v3178 = vunpack.c.h.b16 %v2563
        %v3179 = vunpack.c.l.b16 %v2564
        %v3180 = vunpack.c.h.b16 %v2564
        %v3181 = vunpack.c.l.b16 %v2565
        %v3182 = vunpack.c.h.b16 %v2565
        %v3183 = vunpack.c.l.b16 %v2566
        %v3184 = vunpack.c.h.b16 %v2566
        %v3185 = vunpack.c.l.b16 %v2567
        %v3186 = vunpack.c.h.b16 %v2567
        %v3187 = vunpack.c.l.b16 %v2568
        %v3188 = vunpack.c.h.b16 %v2568
        %v3189 = vunpack.c.l.b16 %v2569
        %v3190 = vunpack.c.h.b16 %v2569
        %v3191 = vunpack.c.l.b16 %v2570
        %v3192 = vunpack.c.h.b16 %v2570
        %v3193 = vunpack.c.l.b16 %v2571
        %v3194 = vunpack.c.h.b16 %v2571
        %v3195 = vunpack.c.l.b16 %v2572
        %v3196 = vunpack.c.h.b16 %v2572
        %v3197 = vunpack.c.l.b16 %v2573
        %v3198 = vunpack.c.h.b16 %v2573
        %v3199 = vunpack.c.l.b16 %v2574
        %v3200 = vunpack.c.h.b16 %v2574
        %v3201 = vunpack.c.l.b16 %v2575
        %v3202 = vunpack.c.h.b16 %v2575
        %v3203 = vunpack.c.l.b16 %v2576
        %v3204 = vunpack.c.h.b16 %v2576
        %v3205 = vunpack.c.l.b16 %v2577
        %v3206 = vunpack.c.h.b16 %v2577
        %v3207 = vunpack.c.l.b16 %v2578
        %v3208 = vunpack.c.h.b16 %v2578
        %v3209 = vunpack.c.l.b16 %v2579
        %v3210 = vunpack.c.h.b16 %v2579
        %v3211 = vunpack.c.l.b16 %v2580
        %v3212 = vunpack.c.h.b16 %v2580
        %v3213 = vunpack.c.l.b16 %v2581
        %v3214 = vunpack.c.h.b16 %v2581
        %v3215 = vunpack.c.l.b16 %v2582
        %v3216 = vunpack.c.h.b16 %v2582
        %v3217 = vunpack.c.l.b16 %v2583
        %v3218 = vunpack.c.h.b16 %v2583
        %v3219 = vunpack.c.l.b16 %v2584
        %v3220 = vunpack.c.h.b16 %v2584
        %v3221 = vunpack.c.l.b16 %v2585
        %v3222 = vunpack.c.h.b16 %v2585
        %v3223 = vunpack.c.l.b16 %v2586
        %v3224 = vunpack.c.h.b16 %v2586
        %v3225 = vunpack.c.l.b16 %v2587
        %v3226 = vunpack.c.h.b16 %v2587
        %v3227 = vunpack.c.l.b16 %v2588
        %v3228 = vunpack.c.h.b16 %v2588
        %v3229 = vunpack.c.l.b16 %v2589
        %v3230 = vunpack.c.h.b16 %v2589
        %v3231 = vunpack.c.l.b16 %v2590
        %v3232 = vunpack.c.h.b16 %v2590
        %v3233 = vunpack.c.l.b16 %v2591
        %v3234 = vunpack.c.h.b16 %v2591
        %v3235 = vunpack.c.l.b16 %v2592
        %v3236 = vunpack.c.h.b16 %v2592
        %v3237 = vunpack.c.l.b16 %v2593
        %v3238 = vunpack.c.h.b16 %v2593
        %v3239 = vunpack.c.l.b16 %v2594
        %v3240 = vunpack.c.h.b16 %v2594
        %v3241 = vunpack.c.l.b16 %v2595
        %v3242 = vunpack.c.h.b16 %v2595
        %v3243 = vunpack.c.l.b16 %v2596
        %v3244 = vunpack.c.h.b16 %v2596
        %v3245 = vunpack.c.l.b16 %v2597
        %v3246 = vunpack.c.h.b16 %v2597
        %v3247 = vunpack.c.l.b16 %v2598
        %v3248 = vunpack.c.h.b16 %v2598
        %v3249 = vunpack.c.l.b16 %v2599
        %v3250 = vunpack.c.h.b16 %v2599
        %v3251 = vunpack.c.l.b16 %v2600
        %v3252 = vunpack.c.h.b16 %v2600
        %v3253 = vunpack.c.l.b16 %v2601
        %v3254 = vunpack.c.h.b16 %v2601
        %v3255 = vunpack.c.l.b16 %v2602
        %v3256 = vunpack.c.h.b16 %v2602
        %v3257 = vunpack.c.l.b16 %v2603
        %v3258 = vunpack.c.h.b16 %v2603
        %v3259 = vunpack.c.l.b16 %v2604
        %v3260 = vunpack.c.h.b16 %v2604
        %v3261 = vunpack.c.l.b16 %v2605
        %v3262 = vunpack.c.h.b16 %v2605
        %v3263 = vunpack.c.l.b16 %v2606
        %v3264 = vunpack.c.h.b16 %v2606
        %v3265 = vunpack.c.l.b16 %v2607
        %v3266 = vunpack.c.h.b16 %v2607
        %v3267 = vunpack.c.l.b16 %v2608
        %v3268 = vunpack.c.h.b16 %v2608
        %v3269 = vunpack.c.l.b16 %v2609
        %v3270 = vunpack.c.h.b16 %v2609
        %v3271 = vunpack.c.l.b16 %v2610
        %v3272 = vunpack.c.h.b16 %v2610
        %v3273 = vunpack.c.l.b16 %v2611
        %v3274 = vunpack.c.h.b16 %v2611
        %v3275 = vunpack.c.l.b16 %v2612
        %v3276 = vunpack.c.h.b16 %v2612
        %v3277 = vunpack.c.l.b16 %v2613
        %v3278 = vunpack.c.h.b16 %v2613
        %v3279 = vunpack.c.l.b16 %v2614
        %v3280 = vunpack.c.h.b16 %v2614
        %v3281 = vunpack.c.l.b16 %v2615
        %v3282 = vunpack.c.h.b16 %v2615
        %v3283 = vunpack.c.l.b16 %v2616
        %v3284 = vunpack.c.h.b16 %v2616
        %v3285 = vunpack.c.l.b16 %v2617
        %v3286 = vunpack.c.h.b16 %v2617
        %v3287 = vunpack.c.l.b16 %v2618
        %v3288 = vunpack.c.h.b16 %v2618
        %v3289 = vunpack.c.l.b16 %v2619
        %v3290 = vunpack.c.h.b16 %v2619
        %v3291 = vunpack.c.l.b16 %v2620
        %v3292 = vunpack.c.h.b16 %v2620
        %v3293 = vunpack.c.l.b16 %v2621
        %v3294 = vunpack.c.h.b16 %v2621
        %v3295 = vunpack.c.l.b16 %v2622
        %v3296 = vunpack.c.h.b16 %v2622
        %v3297 = vunpack.c.l.b16 %v2623
        %v3298 = vunpack.c.h.b16 %v2623
        %v3299 = vunpack.c.l.b16 %v2624
        %v3300 = vunpack.c.h.b16 %v2624
        %v3301 = vunpack.c.l.b16 %v2625
        %v3302 = vunpack.c.h.b16 %v2625
        %v3303 = vunpack.c.l.b16 %v2626
        %v3304 = vunpack.c.h.b16 %v2626
        %v3305 = vunpack.c.l.b16 %v2627
        %v3306 = vunpack.c.h.b16 %v2627
        %v3307 = vunpack.c.l.b16 %v2628
        %v3308 = vunpack.c.h.b16 %v2628
        %v3309 = vunpack.c.l.b16 %v2629
        %v3310 = vunpack.c.h.b16 %v2629
        %v3311 = vunpack.c.l.b16 %v2630
        %v3312 = vunpack.c.h.b16 %v2630
        %v3313 = vunpack.c.l.b16 %v2631
        %v3314 = vunpack.c.h.b16 %v2631
        %v3315 = vunpack.c.l.b16 %v2632
        %v3316 = vunpack.c.h.b16 %v2632
        %v3317 = vunpack.c.l.b16 %v2633
        %v3318 = vunpack.c.h.b16 %v2633
        %v3319 = vunpack.c.l.b16 %v2634
        %v3320 = vunpack.c.h.b16 %v2634
        %v3321 = vunpack.c.l.b16 %v2635
        %v3322 = vunpack.c.h.b16 %v2635
        %v3323 = vunpack.c.l.b16 %v2636
        %v3324 = vunpack.c.h.b16 %v2636
        %v3325 = vunpack.c.l.b16 %v2637
        %v3326 = vunpack.c.h.b16 %v2637
        %v3327 = vunpack.c.l.b16 %v2638
        %v3328 = vunpack.c.h.b16 %v2638
        %v3329 = vunpack.c.l.b16 %v2639
        %v3330 = vunpack.c.h.b16 %v2639
        %v3331 = vunpack.c.l.b16 %v2640
        %v3332 = vunpack.c.h.b16 %v2640
        %v3333 = vunpack.c.l.b16 %v2641
        %v3334 = vunpack.c.h.b16 %v2641
        %v3335 = vunpack.c.l.b16 %v2642
        %v3336 = vunpack.c.h.b16 %v2642
        %v3337 = vunpack.c.l.b16 %v2643
        %v3338 = vunpack.c.h.b16 %v2643
        %v3339 = vunpack.c.l.b16 %v2644
        %v3340 = vunpack.c.h.b16 %v2644
        %v3341 = vunpack.c.l.b16 %v2645
        %v3342 = vunpack.c.h.b16 %v2645
        %v3343 = vunpack.c.l.b16 %v2646
        %v3344 = vunpack.c.h.b16 %v2646
        %v3345 = vunpack.c.l.b16 %v2647
        %v3346 = vunpack.c.h.b16 %v2647
        %v3347 = vunpack.c.l.b16 %v2648
        %v3348 = vunpack.c.h.b16 %v2648
        %v3349 = vunpack.c.l.b16 %v2649
        %v3350 = vunpack.c.h.b16 %v2649
        %v3351 = vunpack.c.l.b16 %v2650
        %v3352 = vunpack.c.h.b16 %v2650
        %v3353 = vunpack.c.l.b16 %v2651
        %v3354 = vunpack.c.h.b16 %v2651
        %v3355 = vunpack.c.l.b16 %v2652
        %v3356 = vunpack.c.h.b16 %v2652
        %v3357 = vunpack.c.l.b16 %v2653
        %v3358 = vunpack.c.h.b16 %v2653
        %v3359 = vunpack.c.l.b16 %v2654
        %v3360 = vunpack.c.h.b16 %v2654
        %v3361 = vunpack.c.l.b16 %v2655
        %v3362 = vunpack.c.h.b16 %v2655
        %v3363 = vunpack.c.l.b16 %v2656
        %v3364 = vunpack.c.h.b16 %v2656
        %v3365 = vunpack.c.l.b16 %v2657
        %v3366 = vunpack.c.h.b16 %v2657
        %v3367 = vunpack.c.l.b16 %v2658
        %v3368 = vunpack.c.h.b16 %v2658
        %v3369 = vunpack.c.l.b16 %v2659
        %v3370 = vunpack.c.h.b16 %v2659
        %v3371 = vunpack.c.l.b16 %v2660
        %v3372 = vunpack.c.h.b16 %v2660
        %v3373 = vunpack.c.l.b16 %v2661
        %v3374 = vunpack.c.h.b16 %v2661
        %v3375 = vunpack.c.l.b16 %v2662
        %v3376 = vunpack.c.h.b16 %v2662
        %v3377 = vunpack.c.l.b16 %v2663
        %v3378 = vunpack.c.h.b16 %v2663
        %v3379 = vunpack.c.l.b16 %v2664
        %v3380 = vunpack.c.h.b16 %v2664
        %v3381 = vunpack.c.l.b16 %v2665
        %v3382 = vunpack.c.h.b16 %v2665
        %v3383 = vunpack.c.l.b16 %v2666
        %v3384 = vunpack.c.h.b16 %v2666
        %v3385 = vunpack.c.l.b16 %v2667
        %v3386 = vunpack.c.h.b16 %v2667
        %v3387 = vunpack.c.l.b16 %v2668
        %v3388 = vunpack.c.h.b16 %v2668
        %v3389 = vunpack.c.l.b16 %v2669
        %v3390 = vunpack.c.h.b16 %v2669
        %v3391 = vunpack.c.l.b16 %v2670
        %v3392 = vunpack.c.h.b16 %v2670
        %v3393 = vunpack.c.l.b16 %v2671
        %v3394 = vunpack.c.h.b16 %v2671
        %v3395 = vunpack.c.l.b16 %v2672
        %v3396 = vunpack.c.h.b16 %v2672
        %v3397 = vunpack.c.l.b16 %v2673
        %v3398 = vunpack.c.h.b16 %v2673
        %v3399 = vunpack.c.l.b16 %v2674
        %v3400 = vunpack.c.h.b16 %v2674
        %v3401 = vunpack.c.l.b16 %v2675
        %v3402 = vunpack.c.h.b16 %v2675
        %v3403 = vunpack.c.l.b16 %v2676
        %v3404 = vunpack.c.h.b16 %v2676
        %v3405 = vunpack.c.l.b16 %v2677
        %v3406 = vunpack.c.h.b16 %v2677
        %v3407 = vunpack.c.l.b16 %v2678
        %v3408 = vunpack.c.h.b16 %v2678
        %v3409 = vunpack.c.l.b16 %v2679
        %v3410 = vunpack.c.h.b16 %v2679
        %v3411 = vunpack.c.l.b16 %v2680
        %v3412 = vunpack.c.h.b16 %v2680
        %v3413 = vunpack.c.l.b16 %v2681
        %v3414 = vunpack.c.h.b16 %v2681
        %v3415 = vunpack.c.l.b16 %v2682
        %v3416 = vunpack.c.h.b16 %v2682
        %v3417 = vunpack.c.l.b16 %v2683
        %v3418 = vunpack.c.h.b16 %v2683
        %v3419 = vunpack.c.l.b16 %v2684
        %v3420 = vunpack.c.h.b16 %v2684
        %v3421 = vunpack.c.l.b16 %v2685
        %v3422 = vunpack.c.h.b16 %v2685
        %v3423 = vunpack.c.l.b16 %v2686
        %v3424 = vunpack.c.h.b16 %v2686
        %v3425 = vunpack.c.l.b16 %v2687
        %v3426 = vunpack.c.h.b16 %v2687
        %v3427 = vunpack.c.l.b16 %v2688
        %v3428 = vunpack.c.h.b16 %v2688
        %v3429 = vunpack.c.l.b16 %v2689
        %v3430 = vunpack.c.h.b16 %v2689
        %v3431 = vunpack.c.l.b16 %v2690
        %v3432 = vunpack.c.h.b16 %v2690
        %v3433 = vunpack.c.l.b16 %v2691
        %v3434 = vunpack.c.h.b16 %v2691
        %v3435 = vunpack.c.l.b16 %v2692
        %v3436 = vunpack.c.h.b16 %v2692
        %v3437 = vunpack.c.l.b16 %v2693
        %v3438 = vunpack.c.h.b16 %v2693
        %v3439 = vunpack.c.l.b16 %v2694
        %v3440 = vunpack.c.h.b16 %v2694
        %v3441 = vunpack.c.l.b16 %v2695
        %v3442 = vunpack.c.h.b16 %v2695
        %v3443 = vunpack.c.l.b16 %v2696
        %v3444 = vunpack.c.h.b16 %v2696
        %v3445 = vunpack.c.l.b16 %v2697
        %v3446 = vunpack.c.h.b16 %v2697
        %v3447 = vunpack.c.l.b16 %v2698
        %v3448 = vunpack.c.h.b16 %v2698
        %v3449 = vunpack.c.l.b16 %v2699
        %v3450 = vunpack.c.h.b16 %v2699
        %v3451 = vunpack.c.l.b16 %v2700
        %v3452 = vunpack.c.h.b16 %v2700
        %v3453 = vunpack.c.l.b16 %v2701
        %v3454 = vunpack.c.h.b16 %v2701
        %v3455 = vunpack.c.l.b16 %v2702
        %v3456 = vunpack.c.h.b16 %v2702
        %v3457 = vunpack.c.l.b16 %v2703
        %v3458 = vunpack.c.h.b16 %v2703
        %v3459 = vunpack.c.l.b16 %v2704
        %v3460 = vunpack.c.h.b16 %v2704
        %v3461 = vunpack.c.l.b16 %v2705
        %v3462 = vunpack.c.h.b16 %v2705
        %v3463 = vunpack.c.l.b16 %v2706
        %v3464 = vunpack.c.h.b16 %v2706
        %v3465 = vunpack.c.l.b16 %v2707
        %v3466 = vunpack.c.h.b16 %v2707
        %v3467 = vunpack.c.l.b16 %v2708
        %v3468 = vunpack.c.h.b16 %v2708
        %v3469 = vunpack.c.l.b16 %v2709
        %v3470 = vunpack.c.h.b16 %v2709
        %v3471 = vunpack.c.l.b16 %v2710
        %v3472 = vunpack.c.h.b16 %v2710
        %v3473 = vunpack.c.l.b16 %v2711
        %v3474 = vunpack.c.h.b16 %v2711
        %v3475 = vunpack.c.l.b16 %v2712
        %v3476 = vunpack.c.h.b16 %v2712
        %v3477 = vunpack.c.l.b16 %v2713
        %v3478 = vunpack.c.h.b16 %v2713
        %v3479 = vunpack.c.l.b16 %v2714
        %v3480 = vunpack.c.h.b16 %v2714
        %v3481 = vunpack.c.l.b16 %v2715
        %v3482 = vunpack.c.h.b16 %v2715
        %v3483 = vunpack.c.l.b16 %v2716
        %v3484 = vunpack.c.h.b16 %v2716
        %v3485 = vpack.c.b16 %v2975, %v2973
        %v3486 = vpack.c.b16 %v2976, %v2974
        %v3487 = vpack.c.b16 %v2979, %v2977
        %v3488 = vpack.c.b16 %v2980, %v2978
        %v3489 = vpack.c.b16 %v2983, %v2981
        %v3490 = vpack.c.b16 %v2984, %v2982
        %v3491 = vpack.c.b16 %v2987, %v2985
        %v3492 = vpack.c.b16 %v2988, %v2986
        %v3493 = vpack.c.b16 %v2991, %v2989
        %v3494 = vpack.c.b16 %v2992, %v2990
        %v3495 = vpack.c.b16 %v2995, %v2993
        %v3496 = vpack.c.b16 %v2996, %v2994
        %v3497 = vpack.c.b16 %v2999, %v2997
        %v3498 = vpack.c.b16 %v3000, %v2998
        %v3499 = vpack.c.b16 %v3003, %v3001
        %v3500 = vpack.c.b16 %v3004, %v3002
        %v3501 = vpack.c.b16 %v3007, %v3005
        %v3502 = vpack.c.b16 %v3008, %v3006
        %v3503 = vpack.c.b16 %v3011, %v3009
        %v3504 = vpack.c.b16 %v3012, %v3010
        %v3505 = vpack.c.b16 %v3015, %v3013
        %v3506 = vpack.c.b16 %v3016, %v3014
        %v3507 = vpack.c.b16 %v3019, %v3017
        %v3508 = vpack.c.b16 %v3020, %v3018
        %v3509 = vpack.c.b16 %v3023, %v3021
        %v3510 = vpack.c.b16 %v3024, %v3022
        %v3511 = vpack.c.b16 %v3027, %v3025
        %v3512 = vpack.c.b16 %v3028, %v3026
        %v3513 = vpack.c.b16 %v3031, %v3029
        %v3514 = vpack.c.b16 %v3032, %v3030
        %v3515 = vpack.c.b16 %v3035, %v3033
        %v3516 = vpack.c.b16 %v3036, %v3034
        %v3517 = vpack.c.b16 %v3039, %v3037
        %v3518 = vpack.c.b16 %v3040, %v3038
        %v3519 = vpack.c.b16 %v3043, %v3041
        %v3520 = vpack.c.b16 %v3044, %v3042
        %v3521 = vpack.c.b16 %v3047, %v3045
        %v3522 = vpack.c.b16 %v3048, %v3046
        %v3523 = vpack.c.b16 %v3051, %v3049
        %v3524 = vpack.c.b16 %v3052, %v3050
        %v3525 = vpack.c.b16 %v3055, %v3053
        %v3526 = vpack.c.b16 %v3056, %v3054
        %v3527 = vpack.c.b16 %v3059, %v3057
        %v3528 = vpack.c.b16 %v3060, %v3058
        %v3529 = vpack.c.b16 %v3063, %v3061
        %v3530 = vpack.c.b16 %v3064, %v3062
        %v3531 = vpack.c.b16 %v3067, %v3065
        %v3532 = vpack.c.b16 %v3068, %v3066
        %v3533 = vpack.c.b16 %v3071, %v3069
        %v3534 = vpack.c.b16 %v3072, %v3070
        %v3535 = vpack.c.b16 %v3075, %v3073
        %v3536 = vpack.c.b16 %v3076, %v3074
        %v3537 = vpack.c.b16 %v3079, %v3077
        %v3538 = vpack.c.b16 %v3080, %v3078
        %v3539 = vpack.c.b16 %v3083, %v3081
        %v3540 = vpack.c.b16 %v3084, %v3082
        %v3541 = vpack.c.b16 %v3087, %v3085
        %v3542 = vpack.c.b16 %v3088, %v3086
        %v3543 = vpack.c.b16 %v3091, %v3089
        %v3544 = vpack.c.b16 %v3092, %v3090
        %v3545 = vpack.c.b16 %v3095, %v3093
        %v3546 = vpack.c.b16 %v3096, %v3094
        %v3547 = vpack.c.b16 %v3099, %v3097
        %v3548 = vpack.c.b16 %v3100, %v3098
        %v3549 = vpack.c.b16 %v3103, %v3101
        %v3550 = vpack.c.b16 %v3104, %v3102
        %v3551 = vpack.c.b16 %v3107, %v3105
        %v3552 = vpack.c.b16 %v3108, %v3106
        %v3553 = vpack.c.b16 %v3111, %v3109
        %v3554 = vpack.c.b16 %v3112, %v3110
        %v3555 = vpack.c.b16 %v3115, %v3113
        %v3556 = vpack.c.b16 %v3116, %v3114
        %v3557 = vpack.c.b16 %v3119, %v3117
        %v3558 = vpack.c.b16 %v3120, %v3118
        %v3559 = vpack.c.b16 %v3123, %v3121
        %v3560 = vpack.c.b16 %v3124, %v3122
        %v3561 = vpack.c.b16 %v3127, %v3125
        %v3562 = vpack.c.b16 %v3128, %v3126
        %v3563 = vpack.c.b16 %v3131, %v3129
        %v3564 = vpack.c.b16 %v3132, %v3130
        %v3565 = vpack.c.b16 %v3135, %v3133
        %v3566 = vpack.c.b16 %v3136, %v3134
        %v3567 = vpack.c.b16 %v3139, %v3137
        %v3568 = vpack.c.b16 %v3140, %v3138
        %v3569 = vpack.c.b16 %v3143, %v3141
        %v3570 = vpack.c.b16 %v3144, %v3142
        %v3571 = vpack.c.b16 %v3147, %v3145
        %v3572 = vpack.c.b16 %v3148, %v3146
        %v3573 = vpack.c.b16 %v3151, %v3149
        %v3574 = vpack.c.b16 %v3152, %v3150
        %v3575 = vpack.c.b16 %v3155, %v3153
        %v3576 = vpack.c.b16 %v3156, %v3154
        %v3577 = vpack.c.b16 %v3159, %v3157
        %v3578 = vpack.c.b16 %v3160, %v3158
        %v3579 = vpack.c.b16 %v3163, %v3161
        %v3580 = vpack.c.b16 %v3164, %v3162
        %v3581 = vpack.c.b16 %v3167, %v3165
        %v3582 = vpack.c.b16 %v3168, %v3166
        %v3583 = vpack.c.b16 %v3171, %v3169
        %v3584 = vpack.c.b16 %v3172, %v3170
        %v3585 = vpack.c.b16 %v3175, %v3173
        %v3586 = vpack.c.b16 %v3176, %v3174
        %v3587 = vpack.c.b16 %v3179, %v3177
        %v3588 = vpack.c.b16 %v3180, %v3178
        %v3589 = vpack.c.b16 %v3183, %v3181
        %v3590 = vpack.c.b16 %v3184, %v3182
        %v3591 = vpack.c.b16 %v3187, %v3185
        %v3592 = vpack.c.b16 %v3188, %v3186
        %v3593 = vpack.c.b16 %v3191, %v3189
        %v3594 = vpack.c.b16 %v3192, %v3190
        %v3595 = vpack.c.b16 %v3195, %v3193
        %v3596 = vpack.c.b16 %v3196, %v3194
        %v3597 = vpack.c.b16 %v3199, %v3197
        %v3598 = vpack.c.b16 %v3200, %v3198
        %v3599 = vpack.c.b16 %v3203, %v3201
        %v3600 = vpack.c.b16 %v3204, %v3202
        %v3601 = vpack.c.b16 %v3207, %v3205
        %v3602 = vpack.c.b16 %v3208, %v3206
        %v3603 = vpack.c.b16 %v3211, %v3209
        %v3604 = vpack.c.b16 %v3212, %v3210
        %v3605 = vpack.c.b16 %v3215, %v3213
        %v3606 = vpack.c.b16 %v3216, %v3214
        %v3607 = vpack.c.b16 %v3219, %v3217
        %v3608 = vpack.c.b16 %v3220, %v3218
        %v3609 = vpack.c.b16 %v3223, %v3221
        %v3610 = vpack.c.b16 %v3224, %v3222
        %v3611 = vpack.c.b16 %v3227, %v3225
        %v3612 = vpack.c.b16 %v3228, %v3226
        %v3613 = vpack.c.b16 %v3231, %v3229
        %v3614 = vpack.c.b16 %v3232, %v3230
        %v3615 = vpack.c.b16 %v3235, %v3233
        %v3616 = vpack.c.b16 %v3236, %v3234
        %v3617 = vpack.c.b16 %v3239, %v3237
        %v3618 = vpack.c.b16 %v3240, %v3238
        %v3619 = vpack.c.b16 %v3243, %v3241
        %v3620 = vpack.c.b16 %v3244, %v3242
        %v3621 = vpack.c.b16 %v3247, %v3245
        %v3622 = vpack.c.b16 %v3248, %v3246
        %v3623 = vpack.c.b16 %v3251, %v3249
        %v3624 = vpack.c.b16 %v3252, %v3250
        %v3625 = vpack.c.b16 %v3255, %v3253
        %v3626 = vpack.c.b16 %v3256, %v3254
        %v3627 = vpack.c.b16 %v3259, %v3257
        %v3628 = vpack.c.b16 %v3260, %v3258
        %v3629 = vpack.c.b16 %v3263, %v3261
        %v3630 = vpack.c.b16 %v3264, %v3262
        %v3631 = vpack.c.b16 %v3267, %v3265
        %v3632 = vpack.c.b16 %v3268, %v3266
        %v3633 = vpack.c.b16 %v3271, %v3269
        %v3634 = vpack.c.b16 %v3272, %v3270
        %v3635 = vpack.c.b16 %v3275, %v3273
        %v3636 = vpack.c.b16 %v3276, %v3274
        %v3637 = vpack.c.b16 %v3279, %v3277
        %v3638 = vpack.c.b16 %v3280, %v3278
        %v3639 = vpack.c.b16 %v3283, %v3281
        %v3640 = vpack.c.b16 %v3284, %v3282
        %v3641 = vpack.c.b16 %v3287, %v3285
        %v3642 = vpack.c.b16 %v3288, %v3286
        %v3643 = vpack.c.b16 %v3291, %v3289
        %v3644 = vpack.c.b16 %v3292, %v3290
        %v3645 = vpack.c.b16 %v3295, %v3293
        %v3646 = vpack.c.b16 %v3296, %v3294
        %v3647 = vpack.c.b16 %v3299, %v3297
        %v3648 = vpack.c.b16 %v3300, %v3298
        %v3649 = vpack.c.b16 %v3303, %v3301
        %v3650 = vpack.c.b16 %v3304, %v3302
        %v3651 = vpack.c.b16 %v3307, %v3305
        %v3652 = vpack.c.b16 %v3308, %v3306
        %v3653 = vpack.c.b16 %v3311, %v3309
        %v3654 = vpack.c.b16 %v3312, %v3310
        %v3655 = vpack.c.b16 %v3315, %v3313
        %v3656 = vpack.c.b16 %v3316, %v3314
        %v3657 = vpack.c.b16 %v3319, %v3317
        %v3658 = vpack.c.b16 %v3320, %v3318
        %v3659 = vpack.c.b16 %v3323, %v3321
        %v3660 = vpack.c.b16 %v3324, %v3322
        %v3661 = vpack.c.b16 %v3327, %v3325
        %v3662 = vpack.c.b16 %v3328, %v3326
        %v3663 = vpack.c.b16 %v3331, %v3329
        %v3664 = vpack.c.b16 %v3332, %v3330
        %v3665 = vpack.c.b16 %v3335, %v3333
        %v3666 = vpack.c.b16 %v3336, %v3334
        %v3667 = vpack.c.b16 %v3339, %v3337
        %v3668 = vpack.c.b16 %v3340, %v3338
        %v3669 = vpack.c.b16 %v3343, %v3341
        %v3670 = vpack.c.b16 %v3344, %v3342
        %v3671 = vpack.c.b16 %v3347, %v3345
        %v3672 = vpack.c.b16 %v3348, %v3346
        %v3673 = vpack.c.b16 %v3351, %v3349
        %v3674 = vpack.c.b16 %v3352, %v3350
        %v3675 = vpack.c.b16 %v3355, %v3353
        %v3676 = vpack.c.b16 %v3356, %v3354
        %v3677 = vpack.c.b16 %v3359, %v3357
        %v3678 = vpack.c.b16 %v3360, %v3358
        %v3679 = vpack.c.b16 %v3363, %v3361
        %v3680 = vpack.c.b16 %v3364, %v3362
        %v3681 = vpack.c.b16 %v3367, %v3365
        %v3682 = vpack.c.b16 %v3368, %v3366
        %v3683 = vpack.c.b16 %v3371, %v3369
        %v3684 = vpack.c.b16 %v3372, %v3370
        %v3685 = vpack.c.b16 %v3375, %v3373
        %v3686 = vpack.c.b16 %v3376, %v3374
        %v3687 = vpack.c.b16 %v3379, %v3377
        %v3688 = vpack.c.b16 %v3380, %v3378
        %v3689 = vpack.c.b16 %v3383, %v3381
        %v3690 = vpack.c.b16 %v3384, %v3382
        %v3691 = vpack.c.b16 %v3387, %v3385
        %v3692 = vpack.c.b16 %v3388, %v3386
        %v3693 = vpack.c.b16 %v3391, %v3389
        %v3694 = vpack.c.b16 %v3392, %v3390
        %v3695 = vpack.c.b16 %v3395, %v3393
        %v3696 = vpack.c.b16 %v3396, %v3394
        %v3697 = vpack.c.b16 %v3399, %v3397
        %v3698 = vpack.c.b16 %v3400, %v3398
        %v3699 = vpack.c.b16 %v3403, %v3401
        %v3700 = vpack.c.b16 %v3404, %v3402
        %v3701 = vpack.c.b16 %v3407, %v3405
        %v3702 = vpack.c.b16 %v3408, %v3406
        %v3703 = vpack.c.b16 %v3411, %v3409
        %v3704 = vpack.c.b16 %v3412, %v3410
        %v3705 = vpack.c.b16 %v3415, %v3413
        %v3706 = vpack.c.b16 %v3416, %v3414
        %v3707 = vpack.c.b16 %v3419, %v3417
        %v3708 = vpack.c.b16 %v3420, %v3418
        %v3709 = vpack.c.b16 %v3423, %v3421
        %v3710 = vpack.c.b16 %v3424, %v3422
        %v3711 = vpack.c.b16 %v3427, %v3425
        %v3712 = vpack.c.b16 %v3428, %v3426
        %v3713 = vpack.c.b16 %v3431, %v3429
        %v3714 = vpack.c.b16 %v3432, %v3430
        %v3715 = vpack.c.b16 %v3435, %v3433
        %v3716 = vpack.c.b16 %v3436, %v3434
        %v3717 = vpack.c.b16 %v3439, %v3437
        %v3718 = vpack.c.b16 %v3440, %v3438
        %v3719 = vpack.c.b16 %v3443, %v3441
        %v3720 = vpack.c.b16 %v3444, %v3442
        %v3721 = vpack.c.b16 %v3447, %v3445
        %v3722 = vpack.c.b16 %v3448, %v3446
        %v3723 = vpack.c.b16 %v3451, %v3449
        %v3724 = vpack.c.b16 %v3452, %v3450
        %v3725 = vpack.c.b16 %v3455, %v3453
        %v3726 = vpack.c.b16 %v3456, %v3454
        %v3727 = vpack.c.b16 %v3459, %v3457
        %v3728 = vpack.c.b16 %v3460, %v3458
        %v3729 = vpack.c.b16 %v3463, %v3461
        %v3730 = vpack.c.b16 %v3464, %v3462
        %v3731 = vpack.c.b16 %v3467, %v3465
        %v3732 = vpack.c.b16 %v3468, %v3466
        %v3733 = vpack.c.b16 %v3471, %v3469
        %v3734 = vpack.c.b16 %v3472, %v3470
        %v3735 = vpack.c.b16 %v3475, %v3473
        %v3736 = vpack.c.b16 %v3476, %v3474
        %v3737 = vpack.c.b16 %v3479, %v3477
        %v3738 = vpack.c.b16 %v3480, %v3478
        %v3739 = vpack.c.b16 %v3483, %v3481
        %v3740 = vpack.c.b16 %v3484, %v3482
        %3997 = vmatpush.bf16.msra.mxu0 %v3499
        %3998 = vmatpush.bf16.msra.mxu0 %v3497
        %3999 = vmatpush.bf16.msra.mxu0 %v3495
        %4000 = vmatpush.bf16.msra.mxu0 %v3493
        %4001 = vmatpush.bf16.msra.mxu0 %v3491
        %4002 = vmatpush.bf16.msra.mxu0 %v3489
        %4003 = vmatpush.bf16.msra.mxu0 %v3487
        %4004 = vmatpush.bf16.msra.mxu0 %v3485
        %4005 = vmatmul.bf16.gmra.mxu0 %v2445
        %v4006 = vpop.f32.mrf.mxu0
        %v4007 = vadd.f32 0.0, %v4006
        %v4008 = vpop.f32.mrf.mxu0
        %4009 = vdwg.mxu0
        %4010 = vmatpush.bf16.msra.mxu0 %v3515
        %4011 = vmatpush.bf16.msra.mxu0 %v3513
        %4012 = vmatpush.bf16.msra.mxu0 %v3511
        %4013 = vmatpush.bf16.msra.mxu0 %v3509
        %4014 = vmatpush.bf16.msra.mxu0 %v3507
        %4015 = vmatpush.bf16.msra.mxu0 %v3505
        %4016 = vmatpush.bf16.msra.mxu0 %v3503
        %4017 = vmatpush.bf16.msra.mxu0 %v3501
        %4018 = vmatmul.bf16.gmra.mxu0 %v2446
        %v4019 = vpop.f32.mrf.mxu0
        %v4020 = vadd.f32 %v4007, %v4019
        %v4021 = vpop.f32.mrf.mxu0
        %4022 = vdwg.mxu0
        %4023 = vmatpush.bf16.msra.mxu0 %v3531
        %4024 = vmatpush.bf16.msra.mxu0 %v3529
        %4025 = vmatpush.bf16.msra.mxu0 %v3527
        %4026 = vmatpush.bf16.msra.mxu0 %v3525
        %4027 = vmatpush.bf16.msra.mxu0 %v3523
        %4028 = vmatpush.bf16.msra.mxu0 %v3521
        %4029 = vmatpush.bf16.msra.mxu0 %v3519
        %4030 = vmatpush.bf16.msra.mxu0 %v3517
        %4031 = vmatmul.bf16.gmra.mxu0 %v2447
        %v4032 = vpop.f32.mrf.mxu0
        %v4033 = vadd.f32 %v4020, %v4032
        %v4034 = vpop.f32.mrf.mxu0
        %4035 = vdwg.mxu0
        %4036 = vmatpush.bf16.msra.mxu0 %v3547
        %4037 = vmatpush.bf16.msra.mxu0 %v3545
        %4038 = vmatpush.bf16.msra.mxu0 %v3543
        %4039 = vmatpush.bf16.msra.mxu0 %v3541
        %4040 = vmatpush.bf16.msra.mxu0 %v3539
        %4041 = vmatpush.bf16.msra.mxu0 %v3537
        %4042 = vmatpush.bf16.msra.mxu0 %v3535
        %4043 = vmatpush.bf16.msra.mxu0 %v3533
        %4044 = vmatmul.bf16.gmra.mxu0 %v2448
        %v4045 = vpop.f32.mrf.mxu0
        %v4046 = vadd.f32 %v4033, %v4045
        %v4047 = vpop.f32.mrf.mxu0
        %4048 = vdwg.mxu0
        %4049 = vmatpush.bf16.msra.mxu0 %v3563
        %4050 = vmatpush.bf16.msra.mxu0 %v3561
        %4051 = vmatpush.bf16.msra.mxu0 %v3559
        %4052 = vmatpush.bf16.msra.mxu0 %v3557
        %4053 = vmatpush.bf16.msra.mxu0 %v3555
        %4054 = vmatpush.bf16.msra.mxu0 %v3553
        %4055 = vmatpush.bf16.msra.mxu0 %v3551
        %4056 = vmatpush.bf16.msra.mxu0 %v3549
        %4057 = vmatmul.bf16.gmra.mxu0 %v2449
        %v4058 = vpop.f32.mrf.mxu0
        %v4059 = vadd.f32 %v4046, %v4058
        %v4060 = vpop.f32.mrf.mxu0
        %4061 = vdwg.mxu0
        %4062 = vmatpush.bf16.msra.mxu0 %v3579
        %4063 = vmatpush.bf16.msra.mxu0 %v3577
        %4064 = vmatpush.bf16.msra.mxu0 %v3575
        %4065 = vmatpush.bf16.msra.mxu0 %v3573
        %4066 = vmatpush.bf16.msra.mxu0 %v3571
        %4067 = vmatpush.bf16.msra.mxu0 %v3569
        %4068 = vmatpush.bf16.msra.mxu0 %v3567
        %4069 = vmatpush.bf16.msra.mxu0 %v3565
        %4070 = vmatmul.bf16.gmra.mxu0 %v2450
        %v4071 = vpop.f32.mrf.mxu0
        %v4072 = vadd.f32 %v4059, %v4071
        %v4073 = vpop.f32.mrf.mxu0
        %4074 = vdwg.mxu0
        %4075 = vmatpush.bf16.msra.mxu0 %v3595
        %4076 = vmatpush.bf16.msra.mxu0 %v3593
        %4077 = vmatpush.bf16.msra.mxu0 %v3591
        %4078 = vmatpush.bf16.msra.mxu0 %v3589
        %4079 = vmatpush.bf16.msra.mxu0 %v3587
        %4080 = vmatpush.bf16.msra.mxu0 %v3585
        %4081 = vmatpush.bf16.msra.mxu0 %v3583
        %4082 = vmatpush.bf16.msra.mxu0 %v3581
        %4083 = vmatmul.bf16.gmra.mxu0 %v2451
        %v4084 = vpop.f32.mrf.mxu0
        %v4085 = vadd.f32 %v4072, %v4084
        %v4086 = vpop.f32.mrf.mxu0
        %4087 = vdwg.mxu0
        %4088 = vmatpush.bf16.msra.mxu0 %v3611
        %4089 = vmatpush.bf16.msra.mxu0 %v3609
        %4090 = vmatpush.bf16.msra.mxu0 %v3607
        %4091 = vmatpush.bf16.msra.mxu0 %v3605
        %4092 = vmatpush.bf16.msra.mxu0 %v3603
        %4093 = vmatpush.bf16.msra.mxu0 %v3601
        %4094 = vmatpush.bf16.msra.mxu0 %v3599
        %4095 = vmatpush.bf16.msra.mxu0 %v3597
        %4096 = vmatmul.bf16.gmra.mxu0 %v2452
        %v4097 = vpop.f32.mrf.mxu0
        %v4098 = vadd.f32 %v4085, %v4097
        %v4099 = vpop.f32.mrf.mxu0
        %4100 = vdwg.mxu0
        %4101 = vmatpush.bf16.msra.mxu0 %v3627
        %4102 = vmatpush.bf16.msra.mxu0 %v3625
        %4103 = vmatpush.bf16.msra.mxu0 %v3623
        %4104 = vmatpush.bf16.msra.mxu0 %v3621
        %4105 = vmatpush.bf16.msra.mxu0 %v3619
        %4106 = vmatpush.bf16.msra.mxu0 %v3617
        %4107 = vmatpush.bf16.msra.mxu0 %v3615
        %4108 = vmatpush.bf16.msra.mxu0 %v3613
        %4109 = vmatmul.bf16.gmra.mxu0 %v2453
        %v4110 = vpop.f32.mrf.mxu0
        %v4111 = vadd.f32 %v4098, %v4110
        %v4112 = vpop.f32.mrf.mxu0
        %4113 = vdwg.mxu0
        %4114 = vmatpush.bf16.msra.mxu0 %v3643
        %4115 = vmatpush.bf16.msra.mxu0 %v3641
        %4116 = vmatpush.bf16.msra.mxu0 %v3639
        %4117 = vmatpush.bf16.msra.mxu0 %v3637
        %4118 = vmatpush.bf16.msra.mxu0 %v3635
        %4119 = vmatpush.bf16.msra.mxu0 %v3633
        %4120 = vmatpush.bf16.msra.mxu0 %v3631
        %4121 = vmatpush.bf16.msra.mxu0 %v3629
        %4122 = vmatmul.bf16.gmra.mxu0 %v2454
        %v4123 = vpop.f32.mrf.mxu0
        %v4124 = vadd.f32 %v4111, %v4123
        %v4125 = vpop.f32.mrf.mxu0
        %4126 = vdwg.mxu0
        %4127 = vmatpush.bf16.msra.mxu0 %v3659
        %4128 = vmatpush.bf16.msra.mxu0 %v3657
        %4129 = vmatpush.bf16.msra.mxu0 %v3655
        %4130 = vmatpush.bf16.msra.mxu0 %v3653
        %4131 = vmatpush.bf16.msra.mxu0 %v3651
        %4132 = vmatpush.bf16.msra.mxu0 %v3649
        %4133 = vmatpush.bf16.msra.mxu0 %v3647
        %4134 = vmatpush.bf16.msra.mxu0 %v3645
        %4135 = vmatmul.bf16.gmra.mxu0 %v2455
        %v4136 = vpop.f32.mrf.mxu0
        %v4137 = vadd.f32 %v4124, %v4136
        %v4138 = vpop.f32.mrf.mxu0
        %4139 = vdwg.mxu0
        %4140 = vmatpush.bf16.msra.mxu0 %v3675
        %4141 = vmatpush.bf16.msra.mxu0 %v3673
        %4142 = vmatpush.bf16.msra.mxu0 %v3671
        %4143 = vmatpush.bf16.msra.mxu0 %v3669
        %4144 = vmatpush.bf16.msra.mxu0 %v3667
        %4145 = vmatpush.bf16.msra.mxu0 %v3665
        %4146 = vmatpush.bf16.msra.mxu0 %v3663
        %4147 = vmatpush.bf16.msra.mxu0 %v3661
        %4148 = vmatmul.bf16.gmra.mxu0 %v2456
        %v4149 = vpop.f32.mrf.mxu0
        %v4150 = vadd.f32 %v4137, %v4149
        %v4151 = vpop.f32.mrf.mxu0
        %4152 = vdwg.mxu0
        %4153 = vmatpush.bf16.msra.mxu0 %v3691
        %4154 = vmatpush.bf16.msra.mxu0 %v3689
        %4155 = vmatpush.bf16.msra.mxu0 %v3687
        %4156 = vmatpush.bf16.msra.mxu0 %v3685
        %4157 = vmatpush.bf16.msra.mxu0 %v3683
        %4158 = vmatpush.bf16.msra.mxu0 %v3681
        %4159 = vmatpush.bf16.msra.mxu0 %v3679
        %4160 = vmatpush.bf16.msra.mxu0 %v3677
        %4161 = vmatmul.bf16.gmra.mxu0 %v2457
        %v4162 = vpop.f32.mrf.mxu0
        %v4163 = vadd.f32 %v4150, %v4162
        %v4164 = vpop.f32.mrf.mxu0
        %4165 = vdwg.mxu0
        %4166 = vmatpush.bf16.msra.mxu0 %v3707
        %4167 = vmatpush.bf16.msra.mxu0 %v3705
        %4168 = vmatpush.bf16.msra.mxu0 %v3703
        %4169 = vmatpush.bf16.msra.mxu0 %v3701
        %4170 = vmatpush.bf16.msra.mxu0 %v3699
        %4171 = vmatpush.bf16.msra.mxu0 %v3697
        %4172 = vmatpush.bf16.msra.mxu0 %v3695
        %4173 = vmatpush.bf16.msra.mxu0 %v3693
        %4174 = vmatmul.bf16.gmra.mxu0 %v2458
        %v4175 = vpop.f32.mrf.mxu0
        %v4176 = vadd.f32 %v4163, %v4175
        %v4177 = vpop.f32.mrf.mxu0
        %4178 = vdwg.mxu0
        %4179 = vmatpush.bf16.msra.mxu0 %v3723
        %4180 = vmatpush.bf16.msra.mxu0 %v3721
        %4181 = vmatpush.bf16.msra.mxu0 %v3719
        %4182 = vmatpush.bf16.msra.mxu0 %v3717
        %4183 = vmatpush.bf16.msra.mxu0 %v3715
        %4184 = vmatpush.bf16.msra.mxu0 %v3713
        %4185 = vmatpush.bf16.msra.mxu0 %v3711
        %4186 = vmatpush.bf16.msra.mxu0 %v3709
        %4187 = vmatmul.bf16.gmra.mxu0 %v2459
        %v4188 = vpop.f32.mrf.mxu0
        %v4189 = vadd.f32 %v4176, %v4188
        %v4190 = vpop.f32.mrf.mxu0
        %4191 = vdwg.mxu0
        %4192 = vmatpush.bf16.msra.mxu0 %v3739
        %4193 = vmatpush.bf16.msra.mxu0 %v3737
        %4194 = vmatpush.bf16.msra.mxu0 %v3735
        %4195 = vmatpush.bf16.msra.mxu0 %v3733
        %4196 = vmatpush.bf16.msra.mxu0 %v3731
        %4197 = vmatpush.bf16.msra.mxu0 %v3729
        %4198 = vmatpush.bf16.msra.mxu0 %v3727
        %4199 = vmatpush.bf16.msra.mxu0 %v3725
        %4200 = vmatmul.bf16.gmra.mxu0 %v2460
        %v4201 = vpop.f32.mrf.mxu0
        %v4202 = vadd.f32 %v4189, %v4201
        %v4203 = vpop.f32.mrf.mxu0
        %4204 = vdwg.mxu0
        %4205 = vmatpush.bf16.msra.mxu0 %v3500
        %4206 = vmatpush.bf16.msra.mxu0 %v3498
        %4207 = vmatpush.bf16.msra.mxu0 %v3496
        %4208 = vmatpush.bf16.msra.mxu0 %v3494
        %4209 = vmatpush.bf16.msra.mxu0 %v3492
        %4210 = vmatpush.bf16.msra.mxu0 %v3490
        %4211 = vmatpush.bf16.msra.mxu0 %v3488
        %4212 = vmatpush.bf16.msra.mxu0 %v3486
        %4213 = vmatmul.bf16.gmra.mxu0 %v2445
        %v4214 = vpop.f32.mrf.mxu0
        %v4215 = vadd.f32 0.0, %v4214
        %v4216 = vpop.f32.mrf.mxu0
        %4217 = vdwg.mxu0
        %4218 = vmatpush.bf16.msra.mxu0 %v3516
        %4219 = vmatpush.bf16.msra.mxu0 %v3514
        %4220 = vmatpush.bf16.msra.mxu0 %v3512
        %4221 = vmatpush.bf16.msra.mxu0 %v3510
        %4222 = vmatpush.bf16.msra.mxu0 %v3508
        %4223 = vmatpush.bf16.msra.mxu0 %v3506
        %4224 = vmatpush.bf16.msra.mxu0 %v3504
        %4225 = vmatpush.bf16.msra.mxu0 %v3502
        %4226 = vmatmul.bf16.gmra.mxu0 %v2446
        %v4227 = vpop.f32.mrf.mxu0
        %v4228 = vadd.f32 %v4215, %v4227
        %v4229 = vpop.f32.mrf.mxu0
        %4230 = vdwg.mxu0
        %4231 = vmatpush.bf16.msra.mxu0 %v3532
        %4232 = vmatpush.bf16.msra.mxu0 %v3530
        %4233 = vmatpush.bf16.msra.mxu0 %v3528
        %4234 = vmatpush.bf16.msra.mxu0 %v3526
        %4235 = vmatpush.bf16.msra.mxu0 %v3524
        %4236 = vmatpush.bf16.msra.mxu0 %v3522
        %4237 = vmatpush.bf16.msra.mxu0 %v3520
        %4238 = vmatpush.bf16.msra.mxu0 %v3518
        %4239 = vmatmul.bf16.gmra.mxu0 %v2447
        %v4240 = vpop.f32.mrf.mxu0
        %v4241 = vadd.f32 %v4228, %v4240
        %v4242 = vpop.f32.mrf.mxu0
        %4243 = vdwg.mxu0
        %4244 = vmatpush.bf16.msra.mxu0 %v3548
        %4245 = vmatpush.bf16.msra.mxu0 %v3546
        %4246 = vmatpush.bf16.msra.mxu0 %v3544
        %4247 = vmatpush.bf16.msra.mxu0 %v3542
        %4248 = vmatpush.bf16.msra.mxu0 %v3540
        %4249 = vmatpush.bf16.msra.mxu0 %v3538
        %4250 = vmatpush.bf16.msra.mxu0 %v3536
        %4251 = vmatpush.bf16.msra.mxu0 %v3534
        %4252 = vmatmul.bf16.gmra.mxu0 %v2448
        %v4253 = vpop.f32.mrf.mxu0
        %v4254 = vadd.f32 %v4241, %v4253
        %v4255 = vpop.f32.mrf.mxu0
        %4256 = vdwg.mxu0
        %4257 = vmatpush.bf16.msra.mxu0 %v3564
        %4258 = vmatpush.bf16.msra.mxu0 %v3562
        %4259 = vmatpush.bf16.msra.mxu0 %v3560
        %4260 = vmatpush.bf16.msra.mxu0 %v3558
        %4261 = vmatpush.bf16.msra.mxu0 %v3556
        %4262 = vmatpush.bf16.msra.mxu0 %v3554
        %4263 = vmatpush.bf16.msra.mxu0 %v3552
        %4264 = vmatpush.bf16.msra.mxu0 %v3550
        %4265 = vmatmul.bf16.gmra.mxu0 %v2449
        %v4266 = vpop.f32.mrf.mxu0
        %v4267 = vadd.f32 %v4254, %v4266
        %v4268 = vpop.f32.mrf.mxu0
        %4269 = vdwg.mxu0
        %4270 = vmatpush.bf16.msra.mxu0 %v3580
        %4271 = vmatpush.bf16.msra.mxu0 %v3578
        %4272 = vmatpush.bf16.msra.mxu0 %v3576
        %4273 = vmatpush.bf16.msra.mxu0 %v3574
        %4274 = vmatpush.bf16.msra.mxu0 %v3572
        %4275 = vmatpush.bf16.msra.mxu0 %v3570
        %4276 = vmatpush.bf16.msra.mxu0 %v3568
        %4277 = vmatpush.bf16.msra.mxu0 %v3566
        %4278 = vmatmul.bf16.gmra.mxu0 %v2450
        %v4279 = vpop.f32.mrf.mxu0
        %v4280 = vadd.f32 %v4267, %v4279
        %v4281 = vpop.f32.mrf.mxu0
        %4282 = vdwg.mxu0
        %4283 = vmatpush.bf16.msra.mxu0 %v3596
        %4284 = vmatpush.bf16.msra.mxu0 %v3594
        %4285 = vmatpush.bf16.msra.mxu0 %v3592
        %4286 = vmatpush.bf16.msra.mxu0 %v3590
        %4287 = vmatpush.bf16.msra.mxu0 %v3588
        %4288 = vmatpush.bf16.msra.mxu0 %v3586
        %4289 = vmatpush.bf16.msra.mxu0 %v3584
        %4290 = vmatpush.bf16.msra.mxu0 %v3582
        %4291 = vmatmul.bf16.gmra.mxu0 %v2451
        %v4292 = vpop.f32.mrf.mxu0
        %v4293 = vadd.f32 %v4280, %v4292
        %v4294 = vpop.f32.mrf.mxu0
        %4295 = vdwg.mxu0
        %4296 = vmatpush.bf16.msra.mxu0 %v3612
        %4297 = vmatpush.bf16.msra.mxu0 %v3610
        %4298 = vmatpush.bf16.msra.mxu0 %v3608
        %4299 = vmatpush.bf16.msra.mxu0 %v3606
        %4300 = vmatpush.bf16.msra.mxu0 %v3604
        %4301 = vmatpush.bf16.msra.mxu0 %v3602
        %4302 = vmatpush.bf16.msra.mxu0 %v3600
        %4303 = vmatpush.bf16.msra.mxu0 %v3598
        %4304 = vmatmul.bf16.gmra.mxu0 %v2452
        %v4305 = vpop.f32.mrf.mxu0
        %v4306 = vadd.f32 %v4293, %v4305
        %v4307 = vpop.f32.mrf.mxu0
        %4308 = vdwg.mxu0
        %4309 = vmatpush.bf16.msra.mxu0 %v3628
        %4310 = vmatpush.bf16.msra.mxu0 %v3626
        %4311 = vmatpush.bf16.msra.mxu0 %v3624
        %4312 = vmatpush.bf16.msra.mxu0 %v3622
        %4313 = vmatpush.bf16.msra.mxu0 %v3620
        %4314 = vmatpush.bf16.msra.mxu0 %v3618
        %4315 = vmatpush.bf16.msra.mxu0 %v3616
        %4316 = vmatpush.bf16.msra.mxu0 %v3614
        %4317 = vmatmul.bf16.gmra.mxu0 %v2453
        %v4318 = vpop.f32.mrf.mxu0
        %v4319 = vadd.f32 %v4306, %v4318
        %v4320 = vpop.f32.mrf.mxu0
        %4321 = vdwg.mxu0
        %4322 = vmatpush.bf16.msra.mxu0 %v3644
        %4323 = vmatpush.bf16.msra.mxu0 %v3642
        %4324 = vmatpush.bf16.msra.mxu0 %v3640
        %4325 = vmatpush.bf16.msra.mxu0 %v3638
        %4326 = vmatpush.bf16.msra.mxu0 %v3636
        %4327 = vmatpush.bf16.msra.mxu0 %v3634
        %4328 = vmatpush.bf16.msra.mxu0 %v3632
        %4329 = vmatpush.bf16.msra.mxu0 %v3630
        %4330 = vmatmul.bf16.gmra.mxu0 %v2454
        %v4331 = vpop.f32.mrf.mxu0
        %v4332 = vadd.f32 %v4319, %v4331
        %v4333 = vpop.f32.mrf.mxu0
        %4334 = vdwg.mxu0
        %4335 = vmatpush.bf16.msra.mxu0 %v3660
        %4336 = vmatpush.bf16.msra.mxu0 %v3658
        %4337 = vmatpush.bf16.msra.mxu0 %v3656
        %4338 = vmatpush.bf16.msra.mxu0 %v3654
        %4339 = vmatpush.bf16.msra.mxu0 %v3652
        %4340 = vmatpush.bf16.msra.mxu0 %v3650
        %4341 = vmatpush.bf16.msra.mxu0 %v3648
        %4342 = vmatpush.bf16.msra.mxu0 %v3646
        %4343 = vmatmul.bf16.gmra.mxu0 %v2455
        %v4344 = vpop.f32.mrf.mxu0
        %v4345 = vadd.f32 %v4332, %v4344
        %v4346 = vpop.f32.mrf.mxu0
        %4347 = vdwg.mxu0
        %4348 = vmatpush.bf16.msra.mxu0 %v3676
        %4349 = vmatpush.bf16.msra.mxu0 %v3674
        %4350 = vmatpush.bf16.msra.mxu0 %v3672
        %4351 = vmatpush.bf16.msra.mxu0 %v3670
        %4352 = vmatpush.bf16.msra.mxu0 %v3668
        %4353 = vmatpush.bf16.msra.mxu0 %v3666
        %4354 = vmatpush.bf16.msra.mxu0 %v3664
        %4355 = vmatpush.bf16.msra.mxu0 %v3662
        %4356 = vmatmul.bf16.gmra.mxu0 %v2456
        %v4357 = vpop.f32.mrf.mxu0
        %v4358 = vadd.f32 %v4345, %v4357
        %v4359 = vpop.f32.mrf.mxu0
        %4360 = vdwg.mxu0
        %4361 = vmatpush.bf16.msra.mxu0 %v3692
        %4362 = vmatpush.bf16.msra.mxu0 %v3690
        %4363 = vmatpush.bf16.msra.mxu0 %v3688
        %4364 = vmatpush.bf16.msra.mxu0 %v3686
        %4365 = vmatpush.bf16.msra.mxu0 %v3684
        %4366 = vmatpush.bf16.msra.mxu0 %v3682
        %4367 = vmatpush.bf16.msra.mxu0 %v3680
        %4368 = vmatpush.bf16.msra.mxu0 %v3678
        %4369 = vmatmul.bf16.gmra.mxu0 %v2457
        %v4370 = vpop.f32.mrf.mxu0
        %v4371 = vadd.f32 %v4358, %v4370
        %v4372 = vpop.f32.mrf.mxu0
        %4373 = vdwg.mxu0
        %4374 = vmatpush.bf16.msra.mxu0 %v3708
        %4375 = vmatpush.bf16.msra.mxu0 %v3706
        %4376 = vmatpush.bf16.msra.mxu0 %v3704
        %4377 = vmatpush.bf16.msra.mxu0 %v3702
        %4378 = vmatpush.bf16.msra.mxu0 %v3700
        %4379 = vmatpush.bf16.msra.mxu0 %v3698
        %4380 = vmatpush.bf16.msra.mxu0 %v3696
        %4381 = vmatpush.bf16.msra.mxu0 %v3694
        %4382 = vmatmul.bf16.gmra.mxu0 %v2458
        %v4383 = vpop.f32.mrf.mxu0
        %v4384 = vadd.f32 %v4371, %v4383
        %v4385 = vpop.f32.mrf.mxu0
        %4386 = vdwg.mxu0
        %4387 = vmatpush.bf16.msra.mxu0 %v3724
        %4388 = vmatpush.bf16.msra.mxu0 %v3722
        %4389 = vmatpush.bf16.msra.mxu0 %v3720
        %4390 = vmatpush.bf16.msra.mxu0 %v3718
        %4391 = vmatpush.bf16.msra.mxu0 %v3716
        %4392 = vmatpush.bf16.msra.mxu0 %v3714
        %4393 = vmatpush.bf16.msra.mxu0 %v3712
        %4394 = vmatpush.bf16.msra.mxu0 %v3710
        %4395 = vmatmul.bf16.gmra.mxu0 %v2459
        %v4396 = vpop.f32.mrf.mxu0
        %v4397 = vadd.f32 %v4384, %v4396
        %v4398 = vpop.f32.mrf.mxu0
        %4399 = vdwg.mxu0
        %4400 = vmatpush.bf16.msra.mxu0 %v3740
        %4401 = vmatpush.bf16.msra.mxu0 %v3738
        %4402 = vmatpush.bf16.msra.mxu0 %v3736
        %4403 = vmatpush.bf16.msra.mxu0 %v3734
        %4404 = vmatpush.bf16.msra.mxu0 %v3732
        %4405 = vmatpush.bf16.msra.mxu0 %v3730
        %4406 = vmatpush.bf16.msra.mxu0 %v3728
        %4407 = vmatpush.bf16.msra.mxu0 %v3726
        %4408 = vmatmul.bf16.gmra.mxu0 %v2460
        %v4409 = vpop.f32.mrf.mxu0
        %v4410 = vadd.f32 %v4397, %v4409
        %v4411 = vpop.f32.mrf.mxu0
        %4412 = vdwg.mxu0
        %v4415 = vrot.slane %v4410, 6
        %vm4416 = vcmask 1041408
        %v4417 = vsel %vm4416, %v4202, %v4415
        %v4419 = vadd.f32 %v2399, %v4417
        %4420 = vst [vmem:[#allocation2] sm:$0xf] %v4419
        %p4421 = scmp.eq.s32.totalorder %s20, 3
        // Predicated region
        $region93: #{cnn_forward.5} parent=83 // pred_check
          %p4422 = pneg %p4421
        $region94: #{cnn_forward.5} parent=83 // pred_check_branch
          %4424 = sbr.rel (%p4422) target = $region96
        $region95: #{cnn_forward.5} parent=83 // pred_region
          %v4425 = vld [vmem:[#allocation2] sm:$0xf]
          %v4426 = vld [vmem:[%s2382] sm:$0x3]
          %v4428 = vperm.slane %v4426, 0
          %v4429 = vperm.slane %v4426, 1
          %v4430 = vrot.slane %v4429, 6
          %v4431 = vsel %vm4416, %v4428, %v4430
          %v4433 = vadd.f32 %v4425, %v4431
          %v4434 = vmax.f32 %v4433, 0.0
          %v4435 = vld [vmem:[%s2388] sm:$0xff]
          %v4436 = vld [vmem:[%s2388 + $0x8] sm:$0xff]
          %v4437 = vld [vmem:[%s2388 + $0x10] sm:$0xff]
          %v4438 = vld [vmem:[%s2388 + $0x18] sm:$0xff]
          %v4439 = vld [vmem:[%s2388 + $0x20] sm:$0xff]
          %v4440 = vld [vmem:[%s2388 + $0x28] sm:$0xff]
          %v4441 = vld [vmem:[%s2388 + $0x30] sm:$0xff]
          %v4442 = vld [vmem:[%s2388 + $0x38] sm:$0xff]
          %v4443 = vld [vmem:[%s2388 + $0x40] sm:$0xff]
          %v4444 = vld [vmem:[%s2388 + $0x48] sm:$0xff]
          %v4445 = vld [vmem:[%s2388 + $0x50] sm:$0xff]
          %v4446 = vld [vmem:[%s2388 + $0x58] sm:$0xff]
          %v4447 = vld [vmem:[%s2388 + $0x60] sm:$0xff]
          %v4448 = vld [vmem:[%s2388 + $0x68] sm:$0xff]
          %v4449 = vld [vmem:[%s2388 + $0x70] sm:$0xff]
          %v4450 = vld [vmem:[%s2388 + $0x78] sm:$0xff]
          %v4451 = vld [vmem:[%s2388 + $0x80] sm:$0xff]
          %v4452 = vld [vmem:[%s2388 + $0x88] sm:$0xff]
          %v4453 = vld [vmem:[%s2388 + $0x90] sm:$0xff]
          %v4454 = vld [vmem:[%s2388 + $0x98] sm:$0xff]
          %v4455 = vld [vmem:[%s2388 + $0xa0] sm:$0xff]
          %v4456 = vld [vmem:[%s2388 + $0xa8] sm:$0xff]
          %v4457 = vld [vmem:[%s2388 + $0xb0] sm:$0xff]
          %v4458 = vld [vmem:[%s2388 + $0xb8] sm:$0xff]
          %v4459 = vld [vmem:[%s2388 + $0xc0] sm:$0xff]
          %v4460 = vld [vmem:[%s2388 + $0xc8] sm:$0xff]
          %v4461 = vld [vmem:[%s2388 + $0xd0] sm:$0xff]
          %v4462 = vld [vmem:[%s2388 + $0xd8] sm:$0xff]
          %v4463 = vld [vmem:[%s2388 + $0xe0] sm:$0xff]
          %v4464 = vld [vmem:[%s2388 + $0xe8] sm:$0xff]
          %v4465 = vld [vmem:[%s2388 + $0xf0] sm:$0xff]
          %v4466 = vld [vmem:[%s2388 + $0xf8] sm:$0xff]
          %4468 = vst [vmem:[#allocation1] ss:$4 sm:$0xff] %v4434
          %v4469 = vld.sshfl [vmem:[#allocation1] sm:$0xff pattern:$0x73625140]
          %v4470 = vld.sshfl [vmem:[#allocation1 + $0x8] sm:$0xff pattern:$0x73625140]
          %4473 = vmatpush.msra.mxu0 %v4450
          %4474 = vmatpush.msra.mxu0 %v4449
          %4475 = vmatpush.msra.mxu0 %v4448
          %4476 = vmatpush.msra.mxu0 %v4447
          %4477 = vmatpush.msra.mxu0 %v4446
          %4478 = vmatpush.msra.mxu0 %v4445
          %4479 = vmatpush.msra.mxu0 %v4444
          %4480 = vmatpush.msra.mxu0 %v4443
          %4481 = vmatpush.msra.mxu0 %v4442
          %4482 = vmatpush.msra.mxu0 %v4441
          %4483 = vmatpush.msra.mxu0 %v4440
          %4484 = vmatpush.msra.mxu0 %v4439
          %4485 = vmatpush.msra.mxu0 %v4438
          %4486 = vmatpush.msra.mxu0 %v4437
          %4487 = vmatpush.msra.mxu0 %v4436
          %4488 = vmatpush.msra.mxu0 %v4435
          %4489 = vmatmul.f32.gmra.mxu0 %v4469
          %v4490 = vpop.f32.mrf.mxu0
          %v4491 = vadd.f32 0.0, %v4490
          %4492 = vdwg.mxu0
          %4493 = vmatpush.msra.mxu0 %v4466
          %4494 = vmatpush.msra.mxu0 %v4465
          %4495 = vmatpush.msra.mxu0 %v4464
          %4496 = vmatpush.msra.mxu0 %v4463
          %4497 = vmatpush.msra.mxu0 %v4462
          %4498 = vmatpush.msra.mxu0 %v4461
          %4499 = vmatpush.msra.mxu0 %v4460
          %4500 = vmatpush.msra.mxu0 %v4459
          %4501 = vmatpush.msra.mxu0 %v4458
          %4502 = vmatpush.msra.mxu0 %v4457
          %4503 = vmatpush.msra.mxu0 %v4456
          %4504 = vmatpush.msra.mxu0 %v4455
          %4505 = vmatpush.msra.mxu0 %v4454
          %4506 = vmatpush.msra.mxu0 %v4453
          %4507 = vmatpush.msra.mxu0 %v4452
          %4508 = vmatpush.msra.mxu0 %v4451
          %4509 = vmatmul.f32.gmra.mxu0 %v4470
          %v4510 = vpop.f32.mrf.mxu0
          %v4511 = vadd.f32 %v4491, %v4510
          %4512 = vdwg.mxu0
          %vm4513 = vcmask 74752
          %4514 = vst.msk [vmem:[%s2393] sm:$0x3] %vm4513, %v4511
        $region96: #{cnn_forward.5} parent=83 // pred_fallthru
          _
        %p4515 = scmp.lt.s32.totalorder %s19, 1
        %s4516 = scalar_select %p4515, %s19, 1
        %s4517 = smul.addr %s4516, 2
        %s4518 = scalar_lea.vmem %s4, %s4517
        // Predicated region
        $region97: #{cnn_forward.5} parent=83 // pred_check
          %p4519 = pneg %p151
        $region98: #{cnn_forward.5} parent=83 // pred_check_branch
          %4521 = sbr.rel (%p4519) target = $region100
        $region99: #{cnn_forward.5} parent=83 // pred_region
          _
        $region100: #{cnn_forward.5} parent=83 // pred_fallthru
          _
      $region84: #{cnn_forward.5} parent=5 // pred_fallthru
        _
      %p4522 = scmp.le.s32.totalorder 2, %s10
      // Predicated region
      $region101: #{cnn_forward.5} parent=5 // pred_check
        %p4523 = pneg %p4522
      $region102: #{cnn_forward.5} parent=5 // pred_check_branch
        %4525 = sbr.rel (%p4523) target = $region104
      $region103: #{cnn_forward.5} parent=5 // pred_region
        %s4526 = ssub.s32 %s10, 2
        // Predicated region
        $region105: #{cnn_forward.5} parent=103 // pred_check
          %p4527 = pneg %p157
        $region106: #{cnn_forward.5} parent=103 // pred_check_branch
          %4529 = sbr.rel (%p4527) target = $region108
        $region107: #{cnn_forward.5} parent=103 // pred_region
          %p4530 = scmp.lt.s32.totalorder %s21, 1
          %s4531 = scalar_select %p4530, %s21, 1
          %s4532 = smul.addr %s4531, 2
          %s4533 = scalar_lea.vmem %s4, %s4532
        $region108: #{cnn_forward.5} parent=103 // pred_fallthru
          _
      $region104: #{cnn_forward.5} parent=5 // pred_fallthru
        _
    $region6: #{cnn_forward.5} parent=1 // loop_footer
      %s14 = sadd.s32 1, %s10
    $region7: #{cnn_forward.5} parent=1 // loop_footer_branch
      %9 = sbr.rel target = $region3
    $region8: #{cnn_forward.5} parent=1 // loop_exit
      _

</llo_original>
